<compile_context>
chip_gen: v5e
topology: v5e:2x2
jax: 0.10.0
libtpu: 0.0.40
codegen_flags: <defaults>
</compile_context>

<pallas_src>
import functools

import numpy as np

import jax
import jax.numpy as jnp
from jax.experimental import pallas as pl
from jax.experimental.pallas import tpu as pltpu


def _round_up(n, m):
    return ((n + m - 1) // m) * m


def _make_operators(H, W, HWFp):
    """Shared real 2-D ortho-DFT operators (forward + Hermitian inverse).

    Spectral layout: flat index s = k_h * wf + k_w, zero-padded to HWFp.
      forward :  Re X = x_flat @ F_re ,  Im X = x_flat @ F_im
      inverse :  out_flat = ReY @ G_re + ImY @ G_im   (== irfft2(Y, ortho))
    """
    wf = W // 2 + 1
    p = np.arange(H, dtype=np.float64)[:, None, None, None]
    q = np.arange(W, dtype=np.float64)[None, :, None, None]
    a = np.arange(H, dtype=np.float64)[None, None, :, None]
    b = np.arange(wf, dtype=np.float64)[None, None, None, :]
    theta = 2.0 * np.pi * (a * p / H + b * q / W)        # (H, W, H, wf)
    scale = 1.0 / np.sqrt(H * W)
    cos_t = np.cos(theta) * scale
    sin_t = np.sin(theta) * scale

    hw, hwf = H * W, H * wf
    f_re = cos_t.reshape(hw, hwf)                        # row = p*W+q
    f_im = -sin_t.reshape(hw, hwf)                       # col = k_h*wf+k_w

    # irfft2 Hermitian fold along W: doubled bins except DC / Nyquist (their
    # imaginary parts drop out automatically because sin == 0 there, matching
    # numpy / torch irfft2 semantics exactly).
    alpha = np.full((wf,), 2.0)
    alpha[0] = 1.0
    if W % 2 == 0:
        alpha[W // 2] = 1.0
    g_re = (alpha * cos_t).reshape(hw, hwf).T            # (hwf, hw)
    g_im = (-alpha * sin_t).reshape(hw, hwf).T

    pad_c = ((0, 0), (0, HWFp - hwf))
    pad_r = ((0, HWFp - hwf), (0, 0))
    mats = (np.pad(f_re, pad_c), np.pad(f_im, pad_c),
            np.pad(g_re, pad_r), np.pad(g_im, pad_r))
    return tuple(jnp.asarray(m, dtype=jnp.float32) for m in mats)


def _choose_blocks(B, C, target_rows=256):
    """Pick (b_block, c_block) so M=b*c ~ target MXU rows, (8,128)-legal tiles,
    and (when the problem allows) >=2 grid steps for pipelining / 2 TCs."""
    c_block = None
    for d in range(min(C, target_rows), 0, -1):
        if C % d == 0 and d % 8 == 0:          # sublane-quantum channel block
            c_block = d
            break
    if c_block is None:
        c_block = C                            # full extent is always legal
    b_block = 1
    for d in range(min(B, max(1, target_rows // c_block)), 0, -1):
        if B % d == 0:
            b_block = d
            break
    while (C // c_block) * (B // b_block) < 2 and b_block > 1:
        b_block = next(d for d in range(b_block - 1, 0, -1) if B % d == 0)
    return b_block, c_block


def _block_fft_kernel(x_ref, wre_ref, wim_ref, fre_ref, fim_ref,
                      gre_ref, gim_ref, o_ref, *, precision):
    f32 = jnp.float32
    bb, cb, hw = x_ref.shape

    def mm(a, b):
        return jnp.dot(a, b, preferred_element_type=f32, precision=precision)

    x = x_ref[...].astype(f32).reshape(bb * cb, hw)          # (M, HW)

    # Forward 2-D ortho rFFT as two lane-dense matmuls against shared operators.
    sp_re = mm(x, fre_ref[...])                              # (M, HWFp)
    sp_im = mm(x, fim_ref[...])

    # Per-channel complex weight, broadcast across the batch sub-block
    # (row m of the flattened tile corresponds to channel m % cb).
    wre = wre_ref[...]                                       # (cb, HWFp)
    wim = wim_ref[...]
    if bb > 1:
        wre = jnp.concatenate([wre] * bb, axis=0)            # (M, HWFp)
        wim = jnp.concatenate([wim] * bb, axis=0)

    y_re = sp_re * wre - sp_im * wim                         # f32 VPU
    y_im = sp_re * wim + sp_im * wre

    # Inverse 2-D ortho rFFT (Hermitian fold baked into G).
    out = mm(y_re, gre_ref[...]) + mm(y_im, gim_ref[...])    # (M, HW)
    o_ref[...] = out.reshape(bb, cb, hw).astype(o_ref.dtype)


def block_fft_pallas(x, w_re, w_im, *, precision=jax.lax.Precision.HIGHEST):
    """BlockFFT forward: irfft2(rfft2(x, ortho) * (w_re + i*w_im), ortho)."""
    B, C, H, W = x.shape
    wf = W // 2 + 1
    assert w_re.shape == (C, H, wf) and w_im.shape == (C, H, wf)

    HW = H * W
    HWFp = _round_up(H * wf, 128)                 # lane-dense spectral width

    f_re, f_im, g_re, g_im = _make_operators(H, W, HWFp)

    pad = ((0, 0), (0, HWFp - H * wf))
    w_re_p = jnp.pad(w_re.astype(jnp.float32).reshape(C, H * wf), pad)
    w_im_p = jnp.pad(w_im.astype(jnp.float32).reshape(C, H * wf), pad)

    x2 = x.reshape(B, C, HW)                      # free, lane-dense last dim

    b_block, c_block = _choose_blocks(B, C)
    grid = (C // c_block, B // b_block)           # batch innermost -> weight tiles reused

    # Padding-aware VMEM estimate: shared operators + double-buffered I/O and
    # weight tiles + live f32 intermediates.  Used to set an explicit limit
    # (v5e default scoped VMEM is only 16 MiB; v7x physical is 64 MiB).
    itemsize = x.dtype.itemsize
    rows = b_block * c_block
    op_bytes = 4 * HW * HWFp * 4
    io_bytes = 2 * 2 * rows * HW * itemsize
    w_bytes = 2 * 2 * c_block * HWFp * 4
    tmp_bytes = 12 * rows * max(HW, HWFp) * 4
    vmem_est = 2 * op_bytes + io_bytes + w_bytes + tmp_bytes
    vmem_limit = int(min(64 * 1024 * 1024, max(32 * 1024 * 1024, 1.5 * vmem_est)))

    flops = B * C * (8 * HW * HWFp + 6 * HWFp)
    bytes_accessed = (2 * B * C * HW * itemsize       # x + out
                      + 2 * C * HWFp * 4              # weights, once per c block
                      + 4 * HW * HWFp * 4)            # shared operators, once
    cost = pl.CostEstimate(flops=int(flops), transcendentals=0,
                           bytes_accessed=int(bytes_accessed))

    kernel = functools.partial(_block_fft_kernel, precision=precision)

    out2 = pl.pallas_call(
        kernel,
        out_shape=jax.ShapeDtypeStruct((B, C, HW), x.dtype),
        grid=grid,
        in_specs=[
            pl.BlockSpec((b_block, c_block, HW), lambda c, b: (b, c, 0)),
            pl.BlockSpec((c_block, HWFp), lambda c, b: (c, 0)),
            pl.BlockSpec((c_block, HWFp), lambda c, b: (c, 0)),
            pl.BlockSpec((HW, HWFp), lambda c, b: (0, 0)),
            pl.BlockSpec((HW, HWFp), lambda c, b: (0, 0)),
            pl.BlockSpec((HWFp, HW), lambda c, b: (0, 0)),
            pl.BlockSpec((HWFp, HW), lambda c, b: (0, 0)),
        ],
        out_specs=pl.BlockSpec((b_block, c_block, HW), lambda c, b: (b, c, 0)),
        compiler_params=pltpu.CompilerParams(
            dimension_semantics=("parallel", "parallel"),
            vmem_limit_bytes=vmem_limit),
        cost_estimate=cost,
    )(x2, w_re_p, w_im_p, f_re, f_im, g_re, g_im)

    return out2.reshape(B, C, H, W)


if __name__ == "__main__":
    key = jax.random.PRNGKey(0)
    kx, kw = jax.random.split(key)

    B, C, H, W = 2, 4, 16, 16
    wf = W // 2 + 1

    x = jax.random.normal(kx, (B, C, H, W), dtype=jnp.float32)
    # nn.Parameter(torch.randn(dim, h, w//2+1, 2) * 0.02)
    weight = jax.random.normal(kw, (C, H, wf, 2), dtype=jnp.float32) * 0.02
    w_re, w_im = weight[..., 0], weight[..., 1]

    try:
        y = jax.block_until_ready(block_fft_pallas(x, w_re, w_im))
    except Exception:
        # TODO(synk): some Mosaic builds may reject Precision.HIGHEST on
        # tpu.matmul; fall back to default dot precision in that case.
        y = jax.block_until_ready(
            block_fft_pallas(x, w_re, w_im,
                             precision=jax.lax.Precision.DEFAULT))

    # Reference: same math as torch.fft.rfft2 / irfft2 with norm='ortho'.
    x_np = np.asarray(x, dtype=np.float64)
    w_np = np.asarray(w_re, dtype=np.float64) + 1j * np.asarray(w_im, dtype=np.float64)
    xf = np.fft.rfft2(x_np, axes=(2, 3), norm="ortho")
    ref = np.fft.irfft2(xf * w_np[None], s=(H, W), axes=(2, 3), norm="ortho")

    assert y.shape == (B, C, H, W) and y.dtype == x.dtype
    err = float(np.max(np.abs(np.asarray(y, dtype=np.float64) - ref)))
    scale = float(np.max(np.abs(ref))) + 1e-12
    assert err <= 2e-3 * scale + 5e-4, (err, scale)
    print("KERNEL_OK")
</pallas_src>

<mosaic_0001>
module attributes {stable_mosaic.version = 11 : i64} {
  func.func @_block_fft_kernel(%arg0: i32, %arg1: i32, %arg2: memref<1x4x256xf32, #tpu.memory_space<vmem>>, %arg3: memref<4x256xf32, #tpu.memory_space<vmem>>, %arg4: memref<4x256xf32, #tpu.memory_space<vmem>>, %arg5: memref<256x256xf32, #tpu.memory_space<vmem>>, %arg6: memref<256x256xf32, #tpu.memory_space<vmem>>, %arg7: memref<256x256xf32, #tpu.memory_space<vmem>>, %arg8: memref<256x256xf32, #tpu.memory_space<vmem>>, %arg9: memref<1x4x256xf32, #tpu.memory_space<vmem>>) attributes {dimension_semantics = [#tpu.dimension_semantics<parallel>, #tpu.dimension_semantics<parallel>], iteration_bounds = array<i64: 1, 2>, scalar_prefetch = 0 : i64, scratch_operands = 0 : i64, tpu.core_type = #tpu.core_type<tc>, window_params = [{transform_indices = @transform_0, window_bounds = array<i64: 1, 4, 256>}, {transform_indices = @transform_1, window_bounds = array<i64: 4, 256>}, {transform_indices = @transform_2, window_bounds = array<i64: 4, 256>}, {pipeline_mode = #tpu.pipeline_mode<synchronous>, transform_indices = @transform_3, window_bounds = array<i64: 256, 256>}, {pipeline_mode = #tpu.pipeline_mode<synchronous>, transform_indices = @transform_4, window_bounds = array<i64: 256, 256>}, {pipeline_mode = #tpu.pipeline_mode<synchronous>, transform_indices = @transform_5, window_bounds = array<i64: 256, 256>}, {pipeline_mode = #tpu.pipeline_mode<synchronous>, transform_indices = @transform_6, window_bounds = array<i64: 256, 256>}, {transform_indices = @transform_7, window_bounds = array<i64: 1, 4, 256>}]} {
    %c0 = arith.constant 0 : index
    %c0_0 = arith.constant 0 : index
    %c0_1 = arith.constant 0 : index
    %0 = vector.load %arg2[%c0, %c0_0, %c0_1] : memref<1x4x256xf32, #tpu.memory_space<vmem>>, vector<1x4x256xf32>
    %1 = vector.shape_cast %0 : vector<1x4x256xf32> to vector<4x256xf32>
    %c0_2 = arith.constant 0 : index
    %c0_3 = arith.constant 0 : index
    %2 = vector.load %arg5[%c0_2, %c0_3] : memref<256x256xf32, #tpu.memory_space<vmem>>, vector<256x256xf32>
    %cst = arith.constant dense<0.000000e+00> : vector<4x256xf32>
    %3 = tpu.matmul %1, %2, %cst {dimension_numbers = #tpu.dot_dimension_numbers<[1], [0], [0], [1], [0, 0, 1, 1], [], []>, precision = #tpu.contract_precision<fp32>} : vector<4x256xf32>, vector<256x256xf32>, vector<4x256xf32> -> vector<4x256xf32>
    %c0_4 = arith.constant 0 : index
    %c0_5 = arith.constant 0 : index
    %4 = vector.load %arg6[%c0_4, %c0_5] : memref<256x256xf32, #tpu.memory_space<vmem>>, vector<256x256xf32>
    %cst_6 = arith.constant dense<0.000000e+00> : vector<4x256xf32>
    %5 = tpu.matmul %1, %4, %cst_6 {dimension_numbers = #tpu.dot_dimension_numbers<[1], [0], [0], [1], [0, 0, 1, 1], [], []>, precision = #tpu.contract_precision<fp32>} : vector<4x256xf32>, vector<256x256xf32>, vector<4x256xf32> -> vector<4x256xf32>
    %c0_7 = arith.constant 0 : index
    %c0_8 = arith.constant 0 : index
    %6 = vector.load %arg3[%c0_7, %c0_8] : memref<4x256xf32, #tpu.memory_space<vmem>>, vector<4x256xf32>
    %c0_9 = arith.constant 0 : index
    %c0_10 = arith.constant 0 : index
    %7 = vector.load %arg4[%c0_9, %c0_10] : memref<4x256xf32, #tpu.memory_space<vmem>>, vector<4x256xf32>
    %8 = arith.mulf %3, %6 : vector<4x256xf32>
    %9 = arith.mulf %5, %7 : vector<4x256xf32>
    %10 = arith.subf %8, %9 : vector<4x256xf32>
    %11 = arith.mulf %3, %7 : vector<4x256xf32>
    %12 = arith.mulf %5, %6 : vector<4x256xf32>
    %13 = arith.addf %11, %12 : vector<4x256xf32>
    %c0_11 = arith.constant 0 : index
    %c0_12 = arith.constant 0 : index
    %14 = vector.load %arg7[%c0_11, %c0_12] : memref<256x256xf32, #tpu.memory_space<vmem>>, vector<256x256xf32>
    %cst_13 = arith.constant dense<0.000000e+00> : vector<4x256xf32>
    %15 = tpu.matmul %10, %14, %cst_13 {dimension_numbers = #tpu.dot_dimension_numbers<[1], [0], [0], [1], [0, 0, 1, 1], [], []>, precision = #tpu.contract_precision<fp32>} : vector<4x256xf32>, vector<256x256xf32>, vector<4x256xf32> -> vector<4x256xf32>
    %c0_14 = arith.constant 0 : index
    %c0_15 = arith.constant 0 : index
    %16 = vector.load %arg8[%c0_14, %c0_15] : memref<256x256xf32, #tpu.memory_space<vmem>>, vector<256x256xf32>
    %cst_16 = arith.constant dense<0.000000e+00> : vector<4x256xf32>
    %17 = tpu.matmul %13, %16, %cst_16 {dimension_numbers = #tpu.dot_dimension_numbers<[1], [0], [0], [1], [0, 0, 1, 1], [], []>, precision = #tpu.contract_precision<fp32>} : vector<4x256xf32>, vector<256x256xf32>, vector<4x256xf32> -> vector<4x256xf32>
    %18 = arith.addf %15, %17 : vector<4x256xf32>
    %19 = vector.shape_cast %18 : vector<4x256xf32> to vector<1x4x256xf32>
    %c0_17 = arith.constant 0 : index
    %c0_18 = arith.constant 0 : index
    %c0_19 = arith.constant 0 : index
    %20 = vector.load %arg9[%c0_17, %c0_18, %c0_19] : memref<1x4x256xf32, #tpu.memory_space<vmem>>, vector<1x4x256xf32>
    tpu.vector_store %arg9[%c0_17, %c0_18, %c0_19], %19 {strides = array<i32>} : memref<1x4x256xf32, #tpu.memory_space<vmem>>, vector<1x4x256xf32>,
    return
  }
  func.func @transform_0(%arg0: i32, %arg1: i32) -> (i32, i32, i32) {
    %c0_i32 = arith.constant 0 : i32
    %c0_i32_0 = arith.constant 0 : i32
    return %arg1, %arg0, %c0_i32 : i32, i32, i32
  }
  func.func @transform_1(%arg0: i32, %arg1: i32) -> (i32, i32) {
    %c0_i32 = arith.constant 0 : i32
    %c0_i32_0 = arith.constant 0 : i32
    return %arg0, %c0_i32 : i32, i32
  }
  func.func @transform_2(%arg0: i32, %arg1: i32) -> (i32, i32) {
    %c0_i32 = arith.constant 0 : i32
    %c0_i32_0 = arith.constant 0 : i32
    return %arg0, %c0_i32 : i32, i32
  }
  func.func @transform_3(%arg0: i32, %arg1: i32) -> (i32, i32) {
    %c0_i32 = arith.constant 0 : i32
    %c0_i32_0 = arith.constant 0 : i32
    %c0_i32_1 = arith.constant 0 : i32
    return %c0_i32, %c0_i32_0 : i32, i32
  }
  func.func @transform_4(%arg0: i32, %arg1: i32) -> (i32, i32) {
    %c0_i32 = arith.constant 0 : i32
    %c0_i32_0 = arith.constant 0 : i32
    %c0_i32_1 = arith.constant 0 : i32
    return %c0_i32, %c0_i32_0 : i32, i32
  }
  func.func @transform_5(%arg0: i32, %arg1: i32) -> (i32, i32) {
    %c0_i32 = arith.constant 0 : i32
    %c0_i32_0 = arith.constant 0 : i32
    %c0_i32_1 = arith.constant 0 : i32
    return %c0_i32, %c0_i32_0 : i32, i32
  }
  func.func @transform_6(%arg0: i32, %arg1: i32) -> (i32, i32) {
    %c0_i32 = arith.constant 0 : i32
    %c0_i32_0 = arith.constant 0 : i32
    %c0_i32_1 = arith.constant 0 : i32
    return %c0_i32, %c0_i32_0 : i32, i32
  }
  func.func @transform_7(%arg0: i32, %arg1: i32) -> (i32, i32, i32) {
    %c0_i32 = arith.constant 0 : i32
    %c0_i32_0 = arith.constant 0 : i32
    return %arg1, %arg0, %c0_i32 : i32, i32, i32
  }
}

module attributes {stable_mosaic.version = 11 : i64} {
  func.func @_block_fft_kernel(%arg0: i32, %arg1: i32, %arg2: memref<1x4x256xf32, #tpu.memory_space<vmem>>, %arg3: memref<4x256xf32, #tpu.memory_space<vmem>>, %arg4: memref<4x256xf32, #tpu.memory_space<vmem>>, %arg5: memref<256x256xf32, #tpu.memory_space<vmem>>, %arg6: memref<256x256xf32, #tpu.memory_space<vmem>>, %arg7: memref<256x256xf32, #tpu.memory_space<vmem>>, %arg8: memref<256x256xf32, #tpu.memory_space<vmem>>, %arg9: memref<1x4x256xf32, #tpu.memory_space<vmem>>) attributes {dimension_semantics = [#tpu.dimension_semantics<parallel>, #tpu.dimension_semantics<parallel>], iteration_bounds = array<i64: 1, 2>, scalar_prefetch = 0 : i64, scratch_operands = 0 : i64, tpu.core_type = #tpu.core_type<tc>, window_params = [{transform_indices = @transform_0, window_bounds = array<i64: 1, 4, 256>}, {transform_indices = @transform_1, window_bounds = array<i64: 4, 256>}, {transform_indices = @transform_2, window_bounds = array<i64: 4, 256>}, {pipeline_mode = #tpu.pipeline_mode<synchronous>, transform_indices = @transform_3, window_bounds = array<i64: 256, 256>}, {pipeline_mode = #tpu.pipeline_mode<synchronous>, transform_indices = @transform_4, window_bounds = array<i64: 256, 256>}, {pipeline_mode = #tpu.pipeline_mode<synchronous>, transform_indices = @transform_5, window_bounds = array<i64: 256, 256>}, {pipeline_mode = #tpu.pipeline_mode<synchronous>, transform_indices = @transform_6, window_bounds = array<i64: 256, 256>}, {transform_indices = @transform_7, window_bounds = array<i64: 1, 4, 256>}]} {
    %c0 = arith.constant 0 : index
    %c0_0 = arith.constant 0 : index
    %c0_1 = arith.constant 0 : index
    %0 = vector.load %arg2[%c0, %c0_0, %c0_1] : memref<1x4x256xf32, #tpu.memory_space<vmem>>, vector<1x4x256xf32>
    %1 = vector.shape_cast %0 : vector<1x4x256xf32> to vector<4x256xf32>
    %c0_2 = arith.constant 0 : index
    %c0_3 = arith.constant 0 : index
    %2 = vector.load %arg5[%c0_2, %c0_3] : memref<256x256xf32, #tpu.memory_space<vmem>>, vector<256x256xf32>
    %cst = arith.constant dense<0.000000e+00> : vector<4x256xf32>
    %3 = tpu.matmul %1, %2, %cst {dimension_numbers = #tpu.dot_dimension_numbers<[1], [0], [0], [1], [0, 0, 1, 1], [], []>} : vector<4x256xf32>, vector<256x256xf32>, vector<4x256xf32> -> vector<4x256xf32>
    %c0_4 = arith.constant 0 : index
    %c0_5 = arith.constant 0 : index
    %4 = vector.load %arg6[%c0_4, %c0_5] : memref<256x256xf32, #tpu.memory_space<vmem>>, vector<256x256xf32>
    %cst_6 = arith.constant dense<0.000000e+00> : vector<4x256xf32>
    %5 = tpu.matmul %1, %4, %cst_6 {dimension_numbers = #tpu.dot_dimension_numbers<[1], [0], [0], [1], [0, 0, 1, 1], [], []>} : vector<4x256xf32>, vector<256x256xf32>, vector<4x256xf32> -> vector<4x256xf32>
    %c0_7 = arith.constant 0 : index
    %c0_8 = arith.constant 0 : index
    %6 = vector.load %arg3[%c0_7, %c0_8] : memref<4x256xf32, #tpu.memory_space<vmem>>, vector<4x256xf32>
    %c0_9 = arith.constant 0 : index
    %c0_10 = arith.constant 0 : index
    %7 = vector.load %arg4[%c0_9, %c0_10] : memref<4x256xf32, #tpu.memory_space<vmem>>, vector<4x256xf32>
    %8 = arith.mulf %3, %6 : vector<4x256xf32>
    %9 = arith.mulf %5, %7 : vector<4x256xf32>
    %10 = arith.subf %8, %9 : vector<4x256xf32>
    %11 = arith.mulf %3, %7 : vector<4x256xf32>
    %12 = arith.mulf %5, %6 : vector<4x256xf32>
    %13 = arith.addf %11, %12 : vector<4x256xf32>
    %c0_11 = arith.constant 0 : index
    %c0_12 = arith.constant 0 : index
    %14 = vector.load %arg7[%c0_11, %c0_12] : memref<256x256xf32, #tpu.memory_space<vmem>>, vector<256x256xf32>
    %cst_13 = arith.constant dense<0.000000e+00> : vector<4x256xf32>
    %15 = tpu.matmul %10, %14, %cst_13 {dimension_numbers = #tpu.dot_dimension_numbers<[1], [0], [0], [1], [0, 0, 1, 1], [], []>} : vector<4x256xf32>, vector<256x256xf32>, vector<4x256xf32> -> vector<4x256xf32>
    %c0_14 = arith.constant 0 : index
    %c0_15 = arith.constant 0 : index
    %16 = vector.load %arg8[%c0_14, %c0_15] : memref<256x256xf32, #tpu.memory_space<vmem>>, vector<256x256xf32>
    %cst_16 = arith.constant dense<0.000000e+00> : vector<4x256xf32>
    %17 = tpu.matmul %13, %16, %cst_16 {dimension_numbers = #tpu.dot_dimension_numbers<[1], [0], [0], [1], [0, 0, 1, 1], [], []>} : vector<4x256xf32>, vector<256x256xf32>, vector<4x256xf32> -> vector<4x256xf32>
    %18 = arith.addf %15, %17 : vector<4x256xf32>
    %19 = vector.shape_cast %18 : vector<4x256xf32> to vector<1x4x256xf32>
    %c0_17 = arith.constant 0 : index
    %c0_18 = arith.constant 0 : index
    %c0_19 = arith.constant 0 : index
    %20 = vector.load %arg9[%c0_17, %c0_18, %c0_19] : memref<1x4x256xf32, #tpu.memory_space<vmem>>, vector<1x4x256xf32>
    tpu.vector_store %arg9[%c0_17, %c0_18, %c0_19], %19 {strides = array<i32>} : memref<1x4x256xf32, #tpu.memory_space<vmem>>, vector<1x4x256xf32>,
    return
  }
  func.func @transform_0(%arg0: i32, %arg1: i32) -> (i32, i32, i32) {
    %c0_i32 = arith.constant 0 : i32
    %c0_i32_0 = arith.constant 0 : i32
    return %arg1, %arg0, %c0_i32 : i32, i32, i32
  }
  func.func @transform_1(%arg0: i32, %arg1: i32) -> (i32, i32) {
    %c0_i32 = arith.constant 0 : i32
    %c0_i32_0 = arith.constant 0 : i32
    return %arg0, %c0_i32 : i32, i32
  }
  func.func @transform_2(%arg0: i32, %arg1: i32) -> (i32, i32) {
    %c0_i32 = arith.constant 0 : i32
    %c0_i32_0 = arith.constant 0 : i32
    return %arg0, %c0_i32 : i32, i32
  }
  func.func @transform_3(%arg0: i32, %arg1: i32) -> (i32, i32) {
    %c0_i32 = arith.constant 0 : i32
    %c0_i32_0 = arith.constant 0 : i32
    %c0_i32_1 = arith.constant 0 : i32
    return %c0_i32, %c0_i32_0 : i32, i32
  }
  func.func @transform_4(%arg0: i32, %arg1: i32) -> (i32, i32) {
    %c0_i32 = arith.constant 0 : i32
    %c0_i32_0 = arith.constant 0 : i32
    %c0_i32_1 = arith.constant 0 : i32
    return %c0_i32, %c0_i32_0 : i32, i32
  }
  func.func @transform_5(%arg0: i32, %arg1: i32) -> (i32, i32) {
    %c0_i32 = arith.constant 0 : i32
    %c0_i32_0 = arith.constant 0 : i32
    %c0_i32_1 = arith.constant 0 : i32
    return %c0_i32, %c0_i32_0 : i32, i32
  }
  func.func @transform_6(%arg0: i32, %arg1: i32) -> (i32, i32) {
    %c0_i32 = arith.constant 0 : i32
    %c0_i32_0 = arith.constant 0 : i32
    %c0_i32_1 = arith.constant 0 : i32
    return %c0_i32, %c0_i32_0 : i32, i32
  }
  func.func @transform_7(%arg0: i32, %arg1: i32) -> (i32, i32, i32) {
    %c0_i32 = arith.constant 0 : i32
    %c0_i32_0 = arith.constant 0 : i32
    return %arg1, %arg0, %c0_i32 : i32, i32, i32
  }
}

</mosaic_0001>

<llo_original>
// kernel: tpu_custom_call.1
$region0: #{tpu_custom_call.1}
  #allocation0 [shape = 'u32[]', space=smem, size = 0x4, offset = 0x4, fixed_abs, tag = 'smem constant byte address 0x4 - core index']
  #allocation1 [shape = 'u32[72,128]{1,0:T(1,128)}', space=vmem, size = 0x9000, scoped, tag = 'internal scratch']
  %s0 = inlined_call_operand.hbm [shape: f32[2,4,256], index: 0, kind: input, shape index: {}]
  %s1 = inlined_call_operand.hbm [shape: f32[4,256], index: 1, kind: input, shape index: {}]
  %s2 = inlined_call_operand.hbm [shape: f32[4,256], index: 2, kind: input, shape index: {}]
  %s3 = inlined_call_operand.hbm [shape: f32[256,256], index: 3, kind: input, shape index: {}]
  %s4 = inlined_call_operand.hbm [shape: f32[256,256], index: 4, kind: input, shape index: {}]
  %s5 = inlined_call_operand.hbm [shape: f32[256,256], index: 5, kind: input, shape index: {}]
  %s6 = inlined_call_operand.hbm [shape: f32[256,256], index: 6, kind: input, shape index: {}]
  %s7 = inlined_call_operand.hbm [shape: f32[2,4,256], index: 7, kind: output, shape index: {}]
  %s8 = sld [smem:[#allocation0]]
  $region89: #{tpu_custom_call.1} parent=0
    _
  %s10 = ssub.s32 1, %s8
  %s11 = scalar_select 0, %s10, %s8
  $region1: #{tpu_custom_call.1} parent=0
    #allocation2 [shape = 'u8[8192]{0}', space=vmem, size = 0x2000, scoped, tag = 'input window, operand 0']
    #allocation3 [shape = 's32[2]{0}', space=sflag, size = 0x8, scoped, tag = 'scoped memory for tpu_custom_call.1']
    #allocation4 [shape = 's32[2]{0}', space=sflag, size = 0x8, scoped, tag = 'scoped memory for tpu_custom_call.1']
    #allocation5 [shape = 'u8[4096]{0}', space=vmem, size = 0x1000, scoped, tag = 'input window, operand 1, single buffered']
    #allocation6 [shape = 's32[1]{0}', space=sflag, size = 0x4, scoped, tag = 'scoped memory for tpu_custom_call.1']
    #allocation7 [shape = 'u8[4096]{0}', space=vmem, size = 0x1000, scoped, tag = 'input window, operand 2, single buffered']
    #allocation8 [shape = 'u8[262144]{0}', space=vmem, size = 0x40000, scoped, tag = 'input window, operand 3, single buffered']
    #allocation9 [shape = 's32[1]{0}', space=sflag, size = 0x4, scoped, tag = 'scoped memory for tpu_custom_call.1']
    #allocation10 [shape = 'u8[262144]{0}', space=vmem, size = 0x40000, scoped, tag = 'input window, operand 4, single buffered']
    #allocation11 [shape = 'u8[262144]{0}', space=vmem, size = 0x40000, scoped, tag = 'input window, operand 5, single buffered']
    #allocation12 [shape = 's32[1]{0}', space=sflag, size = 0x4, scoped, tag = 'scoped memory for tpu_custom_call.1']
    #allocation13 [shape = 'u8[262144]{0}', space=vmem, size = 0x40000, scoped, tag = 'input window, operand 6, single buffered']
    #allocation14 [shape = 'u8[8192]{0}', space=vmem, size = 0x2000, scoped, tag = 'output window, operand 0']
    %12 = vsyncpa [#allocation3], 0
    %s13 = scalar_lea.sflag [#allocation3], 1
    %14 = vsyncpa %s13, 0
    %15 = vsyncpa [#allocation6], 0
    %16 = vsyncpa [#allocation9], 0
    %17 = vsyncpa [#allocation12], 0
    %18 = vsyncpa [#allocation4], 0
    %s19 = scalar_lea.sflag [#allocation4], 1
    %20 = vsyncpa %s19, 0
    loop: start=0, step=1, limit=4
    $region2: #{tpu_custom_call.1} parent=1 // loop_pre_header
      _
    $region3: #{tpu_custom_call.1} parent=1 // loop_header
      %s22 = sphi 0, %s26
      %p23 = scmp.ge.s32.totalorder %s22, 4
      %s29 = sphi 0, %s41
      %s30 = sphi 0, %s37
      %s31 = sphi 0, %s29
      %s32 = sphi 0, %s30
      %s33 = sphi 0, %s31
      %s34 = sphi 0, %s32
      %s46 = sphi 0, %s48
      %s49 = sphi 0, %s46
      %s50 = sphi 0, %s49
      %s66 = sphi 0, %s50
      %s72 = sphi 0, %s74
      %s75 = sphi 0, %s72
      %s76 = sphi 0, %s75
      %s92 = sphi 0, %s76
      %s98 = sphi 0, %s100
      %s101 = sphi 0, %s98
      %s102 = sphi 0, %s101
      %s118 = sphi 0, %s102
      %s122 = sphi 0, %s122
      %s124 = sphi 0, %s122
      %s125 = sphi 0, %s124
      %s139 = sphi 0, %s125
      %s143 = sphi 0, %s143
      %s145 = sphi 0, %s143
      %s146 = sphi 0, %s145
      %s160 = sphi 0, %s146
      %s164 = sphi 0, %s164
      %s166 = sphi 0, %s164
      %s167 = sphi 0, %s166
      %s181 = sphi 0, %s167
      %s185 = sphi 0, %s185
      %s187 = sphi 0, %s185
      %s188 = sphi 0, %s187
      %s202 = sphi 0, %s188
      %s210 = sphi 0, %s212
      %s213 = sphi 0, %s210
      %s214 = sphi 0, %s213
      %s230 = sphi 0, %s214
    $region4: #{tpu_custom_call.1} parent=1 // loop_header_branch
      %25 = sbr.rel (%p23) target = $region8
    $region5: #{tpu_custom_call.1} parent=1 // loop_body
      %s27 = ssub.s32 %s22, 1
      %s28 = ssub.s32 %s22, 2
      %s35 = sadd.s32 1, %s30
      %p36 = scmp.ge.s32.totalorder %s35, 2
      %s37 = scalar_select %p36, 0, %s35
      %s38 = sadd.s32 1, %s29
      %s39 = scalar_select %p36, %s38, %s29
      %p40 = scmp.ge.s32.totalorder %s39, 1
      %s41 = scalar_select %p40, 0, %s39
      %s42 = ssub.s32 %s30, %s37
      %s43 = ssub.s32 %s29, %s41
      %s44 = sor.u32 %s42, %s43
      %p45 = scmp.eq.s32.totalorder %s44, 0
      %s47 = sadd.s32 %s46, 1
      %s48 = scalar_select %p45, %s46, %s47
      %p51 = pneg %p45
      %p52 = scmp.eq.s32.totalorder %s22, 1
      %p53 = por %p51, %p52
      %p54 = scmp.ne.s32.totalorder %s46, %s49
      %p55 = scmp.eq.s32.totalorder %s22, 0
      %p56 = por %p54, %p55
      %p57 = scmp.ne.s32.totalorder %s46, %s49
      %p58 = scmp.eq.s32.totalorder %s27, 1
      %p59 = por %p57, %p58
      %p60 = scmp.ne.s32.totalorder %s49, %s50
      %p61 = scmp.eq.s32.totalorder %s27, 0
      %p62 = por %p60, %p61
      %p63 = scmp.ne.s32.totalorder %s49, %s50
      %p64 = scmp.eq.s32.totalorder %s28, 1
      %p65 = por %p63, %p64
      %p67 = scmp.ne.s32.totalorder %s50, %s66
      %p68 = scmp.eq.s32.totalorder %s28, 0
      %p69 = por %p67, %p68
      %s70 = ssub.s32 %s29, %s41
      %p71 = scmp.eq.s32.totalorder %s70, 0
      %s73 = sadd.s32 %s72, 1
      %s74 = scalar_select %p71, %s72, %s73
      %p77 = pneg %p71
      %p78 = scmp.eq.s32.totalorder %s22, 1
      %p79 = por %p77, %p78
      %p80 = scmp.ne.s32.totalorder %s72, %s75
      %p81 = scmp.eq.s32.totalorder %s22, 0
      %p82 = por %p80, %p81
      %p83 = scmp.ne.s32.totalorder %s72, %s75
      %p84 = scmp.eq.s32.totalorder %s27, 1
      %p85 = por %p83, %p84
      %p86 = scmp.ne.s32.totalorder %s75, %s76
      %p87 = scmp.eq.s32.totalorder %s27, 0
      %p88 = por %p86, %p87
      %p89 = scmp.ne.s32.totalorder %s75, %s76
      %p90 = scmp.eq.s32.totalorder %s28, 1
      %p91 = por %p89, %p90
      %p93 = scmp.ne.s32.totalorder %s76, %s92
      %p94 = scmp.eq.s32.totalorder %s28, 0
      %p95 = por %p93, %p94
      %s96 = ssub.s32 %s29, %s41
      %p97 = scmp.eq.s32.totalorder %s96, 0
      %s99 = sadd.s32 %s98, 1
      %s100 = scalar_select %p97, %s98, %s99
      %p103 = pneg %p97
      %p104 = scmp.eq.s32.totalorder %s22, 1
      %p105 = por %p103, %p104
      %p106 = scmp.ne.s32.totalorder %s98, %s101
      %p107 = scmp.eq.s32.totalorder %s22, 0
      %p108 = por %p106, %p107
      %p109 = scmp.ne.s32.totalorder %s98, %s101
      %p110 = scmp.eq.s32.totalorder %s27, 1
      %p111 = por %p109, %p110
      %p112 = scmp.ne.s32.totalorder %s101, %s102
      %p113 = scmp.eq.s32.totalorder %s27, 0
      %p114 = por %p112, %p113
      %p115 = scmp.ne.s32.totalorder %s101, %s102
      %p116 = scmp.eq.s32.totalorder %s28, 1
      %p117 = por %p115, %p116
      %p119 = scmp.ne.s32.totalorder %s102, %s118
      %p120 = scmp.eq.s32.totalorder %s28, 0
      %p121 = por %p119, %p120
      %s123 = sadd.s32 %s122, 1
      %p126 = scmp.eq.s32.totalorder %s22, 1
      %p127 = scmp.ne.s32.totalorder %s122, %s124
      %p128 = scmp.eq.s32.totalorder %s22, 0
      %p129 = por %p127, %p128
      %p130 = scmp.ne.s32.totalorder %s122, %s124
      %p131 = scmp.eq.s32.totalorder %s27, 1
      %p132 = por %p130, %p131
      %p133 = scmp.ne.s32.totalorder %s124, %s125
      %p134 = scmp.eq.s32.totalorder %s27, 0
      %p135 = por %p133, %p134
      %p136 = scmp.ne.s32.totalorder %s124, %s125
      %p137 = scmp.eq.s32.totalorder %s28, 1
      %p138 = por %p136, %p137
      %p140 = scmp.ne.s32.totalorder %s125, %s139
      %p141 = scmp.eq.s32.totalorder %s28, 0
      %p142 = por %p140, %p141
      %s144 = sadd.s32 %s143, 1
      %p147 = scmp.eq.s32.totalorder %s22, 1
      %p148 = scmp.ne.s32.totalorder %s143, %s145
      %p149 = scmp.eq.s32.totalorder %s22, 0
      %p150 = por %p148, %p149
      %p151 = scmp.ne.s32.totalorder %s143, %s145
      %p152 = scmp.eq.s32.totalorder %s27, 1
      %p153 = por %p151, %p152
      %p154 = scmp.ne.s32.totalorder %s145, %s146
      %p155 = scmp.eq.s32.totalorder %s27, 0
      %p156 = por %p154, %p155
      %p157 = scmp.ne.s32.totalorder %s145, %s146
      %p158 = scmp.eq.s32.totalorder %s28, 1
      %p159 = por %p157, %p158
      %p161 = scmp.ne.s32.totalorder %s146, %s160
      %p162 = scmp.eq.s32.totalorder %s28, 0
      %p163 = por %p161, %p162
      %s165 = sadd.s32 %s164, 1
      %p168 = scmp.eq.s32.totalorder %s22, 1
      %p169 = scmp.ne.s32.totalorder %s164, %s166
      %p170 = scmp.eq.s32.totalorder %s22, 0
      %p171 = por %p169, %p170
      %p172 = scmp.ne.s32.totalorder %s164, %s166
      %p173 = scmp.eq.s32.totalorder %s27, 1
      %p174 = por %p172, %p173
      %p175 = scmp.ne.s32.totalorder %s166, %s167
      %p176 = scmp.eq.s32.totalorder %s27, 0
      %p177 = por %p175, %p176
      %p178 = scmp.ne.s32.totalorder %s166, %s167
      %p179 = scmp.eq.s32.totalorder %s28, 1
      %p180 = por %p178, %p179
      %p182 = scmp.ne.s32.totalorder %s167, %s181
      %p183 = scmp.eq.s32.totalorder %s28, 0
      %p184 = por %p182, %p183
      %s186 = sadd.s32 %s185, 1
      %p189 = scmp.eq.s32.totalorder %s22, 1
      %p190 = scmp.ne.s32.totalorder %s185, %s187
      %p191 = scmp.eq.s32.totalorder %s22, 0
      %p192 = por %p190, %p191
      %p193 = scmp.ne.s32.totalorder %s185, %s187
      %p194 = scmp.eq.s32.totalorder %s27, 1
      %p195 = por %p193, %p194
      %p196 = scmp.ne.s32.totalorder %s187, %s188
      %p197 = scmp.eq.s32.totalorder %s27, 0
      %p198 = por %p196, %p197
      %p199 = scmp.ne.s32.totalorder %s187, %s188
      %p200 = scmp.eq.s32.totalorder %s28, 1
      %p201 = por %p199, %p200
      %p203 = scmp.ne.s32.totalorder %s188, %s202
      %p204 = scmp.eq.s32.totalorder %s28, 0
      %p205 = por %p203, %p204
      %s206 = ssub.s32 %s30, %s37
      %s207 = ssub.s32 %s29, %s41
      %s208 = sor.u32 %s206, %s207
      %p209 = scmp.eq.s32.totalorder %s208, 0
      %s211 = sadd.s32 %s210, 1
      %s212 = scalar_select %p209, %s210, %s211
      %p215 = pneg %p209
      %p216 = scmp.eq.s32.totalorder %s22, 1
      %p217 = por %p215, %p216
      %p218 = scmp.ne.s32.totalorder %s210, %s213
      %p219 = scmp.eq.s32.totalorder %s22, 0
      %p220 = por %p218, %p219
      %p221 = scmp.ne.s32.totalorder %s210, %s213
      %p222 = scmp.eq.s32.totalorder %s27, 1
      %p223 = por %p221, %p222
      %p224 = scmp.ne.s32.totalorder %s213, %s214
      %p225 = scmp.eq.s32.totalorder %s27, 0
      %p226 = por %p224, %p225
      %p227 = scmp.ne.s32.totalorder %s213, %s214
      %p228 = scmp.eq.s32.totalorder %s28, 1
      %p229 = por %p227, %p228
      %p231 = scmp.ne.s32.totalorder %s214, %s230
      %p232 = scmp.eq.s32.totalorder %s28, 0
      %p233 = por %p231, %p232
      %p234 = scmp.le.s32.totalorder 1, %s22
      %p235 = scmp.lt.s32.totalorder %s22, 3
      %p236 = pnand %p234, %p235
      %p237 = pneg %p236
      // Predicated region
      $region9: #{tpu_custom_call.1} parent=5 // pred_check
        _
      $region10: #{tpu_custom_call.1} parent=5 // pred_check_branch
        %239 = sbr.rel (%p236) target = $region12
      $region11: #{tpu_custom_call.1} parent=5 // pred_region
        %s240 = ssub.s32 %s22, 1
        // Predicated region
        $region13: #{tpu_custom_call.1} parent=11 // pred_check
          %p241 = pneg %p88
        $region14: #{tpu_custom_call.1} parent=11 // pred_check_branch
          %243 = sbr.rel (%p241) target = $region16
        $region15: #{tpu_custom_call.1} parent=11 // pred_region
          %245 = vsyncadd [#allocation6], 0
          %s246 = smul.addr %s31, 2
          %s247 = smul.addr %s246, 4
          %s248 = scalar_lea.hbm %s1, %s247
          %s250 = sshll.u32 %s248, 4
          %s251 = int_to_ptr.hbm [resolvable:$true] %s250
          %s252 = sshll.u32 [#allocation5], 4
          %s253 = int_to_ptr.vmem [resolvable:$true] %s252
          %255 = dma.hbm_to_vmem [thread:$0]  %s251, 128, %s253, [#allocation6]
        $region16: #{tpu_custom_call.1} parent=11 // pred_fallthru
          _
        // Predicated region
        $region17: #{tpu_custom_call.1} parent=11 // pred_check
          %p256 = pneg %p114
        $region18: #{tpu_custom_call.1} parent=11 // pred_check_branch
          %258 = sbr.rel (%p256) target = $region20
        $region19: #{tpu_custom_call.1} parent=11 // pred_region
          %260 = vsyncadd [#allocation6], 0
          %s261 = smul.addr %s31, 2
          %s262 = smul.addr %s261, 4
          %s263 = scalar_lea.hbm %s2, %s262
          %s265 = sshll.u32 %s263, 4
          %s266 = int_to_ptr.hbm [resolvable:$true] %s265
          %s267 = sshll.u32 [#allocation7], 4
          %s268 = int_to_ptr.vmem [resolvable:$true] %s267
          %270 = dma.hbm_to_vmem [thread:$0]  %s266, 128, %s268, [#allocation6]
        $region20: #{tpu_custom_call.1} parent=11 // pred_fallthru
          _
        // Predicated region
        $region21: #{tpu_custom_call.1} parent=11 // pred_check
          %p271 = pneg %p135
        $region22: #{tpu_custom_call.1} parent=11 // pred_check_branch
          %273 = sbr.rel (%p271) target = $region24
        $region23: #{tpu_custom_call.1} parent=11 // pred_region
          %275 = vsyncadd [#allocation9], 0
          %s276 = sshll.u32 %s3, 4
          %s277 = int_to_ptr.hbm [resolvable:$true] %s276
          %s278 = sshll.u32 [#allocation8], 4
          %s279 = int_to_ptr.vmem [resolvable:$true] %s278
          %284 = dma.hbm_to_vmem [thread:$0]  %s277, 8192, %s279, [#allocation9], 256, 256, 16
        $region24: #{tpu_custom_call.1} parent=11 // pred_fallthru
          _
        // Predicated region
        $region25: #{tpu_custom_call.1} parent=11 // pred_check
          %p285 = pneg %p156
        $region26: #{tpu_custom_call.1} parent=11 // pred_check_branch
          %287 = sbr.rel (%p285) target = $region28
        $region27: #{tpu_custom_call.1} parent=11 // pred_region
          %289 = vsyncadd [#allocation9], 0
          %s290 = sshll.u32 %s4, 4
          %s291 = int_to_ptr.hbm [resolvable:$true] %s290
          %s292 = sshll.u32 [#allocation10], 4
          %s293 = int_to_ptr.vmem [resolvable:$true] %s292
          %298 = dma.hbm_to_vmem [thread:$0]  %s291, 8192, %s293, [#allocation9], 256, 256, 16
        $region28: #{tpu_custom_call.1} parent=11 // pred_fallthru
          _
        // Predicated region
        $region29: #{tpu_custom_call.1} parent=11 // pred_check
          %p299 = pneg %p177
        $region30: #{tpu_custom_call.1} parent=11 // pred_check_branch
          %301 = sbr.rel (%p299) target = $region32
        $region31: #{tpu_custom_call.1} parent=11 // pred_region
          %303 = vsyncadd [#allocation12], 0
          %s304 = sshll.u32 %s5, 4
          %s305 = int_to_ptr.hbm [resolvable:$true] %s304
          %s306 = sshll.u32 [#allocation11], 4
          %s307 = int_to_ptr.vmem [resolvable:$true] %s306
          %312 = dma.hbm_to_vmem [thread:$0]  %s305, 8192, %s307, [#allocation12], 256, 256, 16
        $region32: #{tpu_custom_call.1} parent=11 // pred_fallthru
          _
        // Predicated region
        $region33: #{tpu_custom_call.1} parent=11 // pred_check
          %p313 = pneg %p198
        $region34: #{tpu_custom_call.1} parent=11 // pred_check_branch
          %315 = sbr.rel (%p313) target = $region36
        $region35: #{tpu_custom_call.1} parent=11 // pred_region
          %317 = vsyncadd [#allocation12], 0
          %s318 = sshll.u32 %s6, 4
          %s319 = int_to_ptr.hbm [resolvable:$true] %s318
          %s320 = sshll.u32 [#allocation13], 4
          %s321 = int_to_ptr.vmem [resolvable:$true] %s320
          %326 = dma.hbm_to_vmem [thread:$0]  %s319, 8192, %s321, [#allocation12], 256, 256, 16
        $region36: #{tpu_custom_call.1} parent=11 // pred_fallthru
          _
      $region12: #{tpu_custom_call.1} parent=5 // pred_fallthru
        _
      %p327 = scmp.lt.s32.totalorder %s22, 2
      // Predicated region
      $region37: #{tpu_custom_call.1} parent=5 // pred_check
        %p328 = pneg %p327
      $region38: #{tpu_custom_call.1} parent=5 // pred_check_branch
        %330 = sbr.rel (%p328) target = $region40
      $region39: #{tpu_custom_call.1} parent=5 // pred_region
        // Predicated region
        $region41: #{tpu_custom_call.1} parent=39 // pred_check
          %p331 = pneg %p56
        $region42: #{tpu_custom_call.1} parent=39 // pred_check_branch
          %333 = sbr.rel (%p331) target = $region44
        $region43: #{tpu_custom_call.1} parent=39 // pred_region
          %s334 = sand.u32 %s46, 1
          %s335 = scalar_lea.sflag [#allocation3], %s334
          %s336 = sand.u32 %s46, 1
          %s337 = smul.addr %s336, 8
          %s338 = scalar_lea.vmem [#allocation2], %s337
          %340 = vsyncadd %s335, 0
          %s341 = smul.addr %s29, 2
          %s342 = smul.addr %s30, 2
          %s343 = sadd.s32 %s341, %s342
          %s344 = smul.addr %s343, 4
          %s345 = scalar_lea.hbm %s0, %s344
          %s347 = sshll.u32 %s345, 4
          %s348 = int_to_ptr.hbm [resolvable:$true] %s347
          %s349 = sshll.u32 %s338, 4
          %s350 = int_to_ptr.vmem [resolvable:$true] %s349
          %352 = dma.hbm_to_vmem [thread:$0]  %s348, 128, %s350, %s335
        $region44: #{tpu_custom_call.1} parent=39 // pred_fallthru
          _
      $region40: #{tpu_custom_call.1} parent=5 // pred_fallthru
        _
      %p353 = scmp.le.s32.totalorder 1, %s22
      %p354 = scmp.lt.s32.totalorder %s22, 3
      %p355 = pnand %p353, %p354
      %p356 = pneg %p355
      // Predicated region
      $region45: #{tpu_custom_call.1} parent=5 // pred_check
        _
      $region46: #{tpu_custom_call.1} parent=5 // pred_check_branch
        %358 = sbr.rel (%p355) target = $region48
      $region47: #{tpu_custom_call.1} parent=5 // pred_region
        %s359 = ssub.s32 %s22, 1
        %s360 = sand.u32 %s49, 1
        %s361 = scalar_lea.sflag [#allocation3], %s360
        %s362 = sand.u32 %s49, 1
        %s363 = smul.addr %s362, 8
        %s364 = scalar_lea.vmem [#allocation2], %s363
        // Predicated region
        $region49: #{tpu_custom_call.1} parent=47 // pred_check
          %p365 = pneg %p62
        $region50: #{tpu_custom_call.1} parent=47 // pred_check_branch
          %367 = sbr.rel (%p365) target = $region52
        $region51: #{tpu_custom_call.1} parent=47 // pred_region
          %369 = dma.done %s361, 128
        $region52: #{tpu_custom_call.1} parent=47 // pred_fallthru
          _
        // Predicated region
        $region53: #{tpu_custom_call.1} parent=47 // pred_check
          %p370 = pneg %p88
        $region54: #{tpu_custom_call.1} parent=47 // pred_check_branch
          %372 = sbr.rel (%p370) target = $region56
        $region55: #{tpu_custom_call.1} parent=47 // pred_region
          %374 = dma.done [#allocation6], 128
        $region56: #{tpu_custom_call.1} parent=47 // pred_fallthru
          _
        // Predicated region
        $region57: #{tpu_custom_call.1} parent=47 // pred_check
          %p375 = pneg %p114
        $region58: #{tpu_custom_call.1} parent=47 // pred_check_branch
          %377 = sbr.rel (%p375) target = $region60
        $region59: #{tpu_custom_call.1} parent=47 // pred_region
          %379 = dma.done [#allocation6], 128
        $region60: #{tpu_custom_call.1} parent=47 // pred_fallthru
          _
        // Predicated region
        $region61: #{tpu_custom_call.1} parent=47 // pred_check
          %p380 = pneg %p135
        $region62: #{tpu_custom_call.1} parent=47 // pred_check_branch
          %382 = sbr.rel (%p380) target = $region64
        $region63: #{tpu_custom_call.1} parent=47 // pred_region
          %384 = dma.done [#allocation9], 8192
        $region64: #{tpu_custom_call.1} parent=47 // pred_fallthru
          _
        // Predicated region
        $region65: #{tpu_custom_call.1} parent=47 // pred_check
          %p385 = pneg %p156
        $region66: #{tpu_custom_call.1} parent=47 // pred_check_branch
          %387 = sbr.rel (%p385) target = $region68
        $region67: #{tpu_custom_call.1} parent=47 // pred_region
          %389 = dma.done [#allocation9], 8192
        $region68: #{tpu_custom_call.1} parent=47 // pred_fallthru
          _
        // Predicated region
        $region69: #{tpu_custom_call.1} parent=47 // pred_check
          %p390 = pneg %p177
        $region70: #{tpu_custom_call.1} parent=47 // pred_check_branch
          %392 = sbr.rel (%p390) target = $region72
        $region71: #{tpu_custom_call.1} parent=47 // pred_region
          %394 = dma.done [#allocation12], 8192
        $region72: #{tpu_custom_call.1} parent=47 // pred_fallthru
          _
        // Predicated region
        $region73: #{tpu_custom_call.1} parent=47 // pred_check
          %p395 = pneg %p198
        $region74: #{tpu_custom_call.1} parent=47 // pred_check_branch
          %397 = sbr.rel (%p395) target = $region76
        $region75: #{tpu_custom_call.1} parent=47 // pred_region
          %399 = dma.done [#allocation12], 8192
        $region76: #{tpu_custom_call.1} parent=47 // pred_fallthru
          _
        %s400 = sand.u32 %s49, 1
        %s401 = scalar_lea.sflag [#allocation3], %s400
        %s402 = sand.u32 %s49, 1
        %s403 = smul.addr %s402, 8
        %s404 = scalar_lea.vmem [#allocation2], %s403
        %p405 = pneg %p62
        %p406 = pneg %p59
        %p407 = pneg %p88
        %p408 = pneg %p85
        %p409 = pneg %p114
        %p410 = pneg %p111
        %p411 = pneg %p135
        %p412 = pneg %p132
        %p413 = pneg %p156
        %p414 = pneg %p153
        %p415 = pneg %p177
        %p416 = pneg %p174
        %p417 = pneg %p198
        %p418 = pneg %p195
        %p419 = pneg %p226
        %p420 = pneg %p223
        %s421 = sand.u32 %s213, 1
        %s422 = scalar_lea.sflag [#allocation4], %s421
        %s423 = sand.u32 %s213, 1
        %s424 = smul.addr %s423, 8
        %s425 = scalar_lea.vmem [#allocation14], %s424
        %v426 = vld [vmem:[%s364] sm:$0xff]
        %v427 = vld [vmem:[#allocation8] sm:$0xff]
        %v428 = vld [vmem:[#allocation8 + $0x8] sm:$0xff]
        %v429 = vld [vmem:[#allocation8 + $0x10] sm:$0xff]
        %v430 = vld [vmem:[#allocation8 + $0x18] sm:$0xff]
        %v431 = vld [vmem:[#allocation8 + $0x20] sm:$0xff]
        %v432 = vld [vmem:[#allocation8 + $0x28] sm:$0xff]
        %v433 = vld [vmem:[#allocation8 + $0x30] sm:$0xff]
        %v434 = vld [vmem:[#allocation8 + $0x38] sm:$0xff]
        %v435 = vld [vmem:[#allocation8 + $0x40] sm:$0xff]
        %v436 = vld [vmem:[#allocation8 + $0x48] sm:$0xff]
        %v437 = vld [vmem:[#allocation8 + $0x50] sm:$0xff]
        %v438 = vld [vmem:[#allocation8 + $0x58] sm:$0xff]
        %v439 = vld [vmem:[#allocation8 + $0x60] sm:$0xff]
        %v440 = vld [vmem:[#allocation8 + $0x68] sm:$0xff]
        %v441 = vld [vmem:[#allocation8 + $0x70] sm:$0xff]
        %v442 = vld [vmem:[#allocation8 + $0x78] sm:$0xff]
        %v443 = vld [vmem:[#allocation8 + $0x80] sm:$0xff]
        %v444 = vld [vmem:[#allocation8 + $0x88] sm:$0xff]
        %v445 = vld [vmem:[#allocation8 + $0x90] sm:$0xff]
        %v446 = vld [vmem:[#allocation8 + $0x98] sm:$0xff]
        %v447 = vld [vmem:[#allocation8 + $0xa0] sm:$0xff]
        %v448 = vld [vmem:[#allocation8 + $0xa8] sm:$0xff]
        %v449 = vld [vmem:[#allocation8 + $0xb0] sm:$0xff]
        %v450 = vld [vmem:[#allocation8 + $0xb8] sm:$0xff]
        %v451 = vld [vmem:[#allocation8 + $0xc0] sm:$0xff]
        %v452 = vld [vmem:[#allocation8 + $0xc8] sm:$0xff]
        %v453 = vld [vmem:[#allocation8 + $0xd0] sm:$0xff]
        %v454 = vld [vmem:[#allocation8 + $0xd8] sm:$0xff]
        %v455 = vld [vmem:[#allocation8 + $0xe0] sm:$0xff]
        %v456 = vld [vmem:[#allocation8 + $0xe8] sm:$0xff]
        %v457 = vld [vmem:[#allocation8 + $0xf0] sm:$0xff]
        %v458 = vld [vmem:[#allocation8 + $0xf8] sm:$0xff]
        %v459 = vld [vmem:[#allocation8 + $0x100] sm:$0xff]
        %v460 = vld [vmem:[#allocation8 + $0x108] sm:$0xff]
        %v461 = vld [vmem:[#allocation8 + $0x110] sm:$0xff]
        %v462 = vld [vmem:[#allocation8 + $0x118] sm:$0xff]
        %v463 = vld [vmem:[#allocation8 + $0x120] sm:$0xff]
        %v464 = vld [vmem:[#allocation8 + $0x128] sm:$0xff]
        %v465 = vld [vmem:[#allocation8 + $0x130] sm:$0xff]
        %v466 = vld [vmem:[#allocation8 + $0x138] sm:$0xff]
        %v467 = vld [vmem:[#allocation8 + $0x140] sm:$0xff]
        %v468 = vld [vmem:[#allocation8 + $0x148] sm:$0xff]
        %v469 = vld [vmem:[#allocation8 + $0x150] sm:$0xff]
        %v470 = vld [vmem:[#allocation8 + $0x158] sm:$0xff]
        %v471 = vld [vmem:[#allocation8 + $0x160] sm:$0xff]
        %v472 = vld [vmem:[#allocation8 + $0x168] sm:$0xff]
        %v473 = vld [vmem:[#allocation8 + $0x170] sm:$0xff]
        %v474 = vld [vmem:[#allocation8 + $0x178] sm:$0xff]
        %v475 = vld [vmem:[#allocation8 + $0x180] sm:$0xff]
        %v476 = vld [vmem:[#allocation8 + $0x188] sm:$0xff]
        %v477 = vld [vmem:[#allocation8 + $0x190] sm:$0xff]
        %v478 = vld [vmem:[#allocation8 + $0x198] sm:$0xff]
        %v479 = vld [vmem:[#allocation8 + $0x1a0] sm:$0xff]
        %v480 = vld [vmem:[#allocation8 + $0x1a8] sm:$0xff]
        %v481 = vld [vmem:[#allocation8 + $0x1b0] sm:$0xff]
        %v482 = vld [vmem:[#allocation8 + $0x1b8] sm:$0xff]
        %v483 = vld [vmem:[#allocation8 + $0x1c0] sm:$0xff]
        %v484 = vld [vmem:[#allocation8 + $0x1c8] sm:$0xff]
        %v485 = vld [vmem:[#allocation8 + $0x1d0] sm:$0xff]
        %v486 = vld [vmem:[#allocation8 + $0x1d8] sm:$0xff]
        %v487 = vld [vmem:[#allocation8 + $0x1e0] sm:$0xff]
        %v488 = vld [vmem:[#allocation8 + $0x1e8] sm:$0xff]
        %v489 = vld [vmem:[#allocation8 + $0x1f0] sm:$0xff]
        %v490 = vld [vmem:[#allocation8 + $0x1f8] sm:$0xff]
        %492 = vst [vmem:[#allocation1] ss:$2 sm:$0xff] %v426
        %v493 = vld.sshfl [vmem:[#allocation1] sm:$0xff pattern:$0x75316420]
        %v494 = vld.sshfl [vmem:[#allocation1 + $0x8] sm:$0xff pattern:$0x75316420]
        %v497 = vand.u32 %v457, 4294901760
        %498 = vmatpush.msra.mxu0 %v497
        %v499 = vand.u32 %v455, 4294901760
        %500 = vmatpush.msra.mxu0 %v499
        %v501 = vand.u32 %v453, 4294901760
        %502 = vmatpush.msra.mxu0 %v501
        %v503 = vand.u32 %v451, 4294901760
        %504 = vmatpush.msra.mxu0 %v503
        %v505 = vand.u32 %v449, 4294901760
        %506 = vmatpush.msra.mxu0 %v505
        %v507 = vand.u32 %v447, 4294901760
        %508 = vmatpush.msra.mxu0 %v507
        %v509 = vand.u32 %v445, 4294901760
        %510 = vmatpush.msra.mxu0 %v509
        %v511 = vand.u32 %v443, 4294901760
        %512 = vmatpush.msra.mxu0 %v511
        %v513 = vand.u32 %v441, 4294901760
        %514 = vmatpush.msra.mxu0 %v513
        %v515 = vand.u32 %v439, 4294901760
        %516 = vmatpush.msra.mxu0 %v515
        %v517 = vand.u32 %v437, 4294901760
        %518 = vmatpush.msra.mxu0 %v517
        %v519 = vand.u32 %v435, 4294901760
        %520 = vmatpush.msra.mxu0 %v519
        %v521 = vand.u32 %v433, 4294901760
        %522 = vmatpush.msra.mxu0 %v521
        %v523 = vand.u32 %v431, 4294901760
        %524 = vmatpush.msra.mxu0 %v523
        %v525 = vand.u32 %v429, 4294901760
        %526 = vmatpush.msra.mxu0 %v525
        %v527 = vand.u32 %v427, 4294901760
        %528 = vmatpush.msra.mxu0 %v527
        %v529 = vand.u32 %v493, 4294901760
        %v530 = vsub.f32 %v493, %v529
        %v531 = vand.u32 %v530, 4294901760
        %v532 = vsub.f32 %v530, %v531
        %v533 = vand.u32 %v532, 4294901760
        %534 = vmatmul.f32.gmra.mxu0 %v533
        %v535 = vpop.f32.mrf.mxu0
        %v536 = vadd.f32 0.0, %v535
        %537 = vdwg.mxu0
        %v538 = vand.u32 %v457, 4294901760
        %v539 = vsub.f32 %v457, %v538
        %v540 = vand.u32 %v539, 4294901760
        %v541 = vsub.f32 %v539, %v540
        %v542 = vand.u32 %v541, 4294901760
        %543 = vmatpush.msra.mxu0 %v542
        %v544 = vand.u32 %v455, 4294901760
        %v545 = vsub.f32 %v455, %v544
        %v546 = vand.u32 %v545, 4294901760
        %v547 = vsub.f32 %v545, %v546
        %v548 = vand.u32 %v547, 4294901760
        %549 = vmatpush.msra.mxu0 %v548
        %v550 = vand.u32 %v453, 4294901760
        %v551 = vsub.f32 %v453, %v550
        %v552 = vand.u32 %v551, 4294901760
        %v553 = vsub.f32 %v551, %v552
        %v554 = vand.u32 %v553, 4294901760
        %555 = vmatpush.msra.mxu0 %v554
        %v556 = vand.u32 %v451, 4294901760
        %v557 = vsub.f32 %v451, %v556
        %v558 = vand.u32 %v557, 4294901760
        %v559 = vsub.f32 %v557, %v558
        %v560 = vand.u32 %v559, 4294901760
        %561 = vmatpush.msra.mxu0 %v560
        %v562 = vand.u32 %v449, 4294901760
        %v563 = vsub.f32 %v449, %v562
        %v564 = vand.u32 %v563, 4294901760
        %v565 = vsub.f32 %v563, %v564
        %v566 = vand.u32 %v565, 4294901760
        %567 = vmatpush.msra.mxu0 %v566
        %v568 = vand.u32 %v447, 4294901760
        %v569 = vsub.f32 %v447, %v568
        %v570 = vand.u32 %v569, 4294901760
        %v571 = vsub.f32 %v569, %v570
        %v572 = vand.u32 %v571, 4294901760
        %573 = vmatpush.msra.mxu0 %v572
        %v574 = vand.u32 %v445, 4294901760
        %v575 = vsub.f32 %v445, %v574
        %v576 = vand.u32 %v575, 4294901760
        %v577 = vsub.f32 %v575, %v576
        %v578 = vand.u32 %v577, 4294901760
        %579 = vmatpush.msra.mxu0 %v578
        %v580 = vand.u32 %v443, 4294901760
        %v581 = vsub.f32 %v443, %v580
        %v582 = vand.u32 %v581, 4294901760
        %v583 = vsub.f32 %v581, %v582
        %v584 = vand.u32 %v583, 4294901760
        %585 = vmatpush.msra.mxu0 %v584
        %v586 = vand.u32 %v441, 4294901760
        %v587 = vsub.f32 %v441, %v586
        %v588 = vand.u32 %v587, 4294901760
        %v589 = vsub.f32 %v587, %v588
        %v590 = vand.u32 %v589, 4294901760
        %591 = vmatpush.msra.mxu0 %v590
        %v592 = vand.u32 %v439, 4294901760
        %v593 = vsub.f32 %v439, %v592
        %v594 = vand.u32 %v593, 4294901760
        %v595 = vsub.f32 %v593, %v594
        %v596 = vand.u32 %v595, 4294901760
        %597 = vmatpush.msra.mxu0 %v596
        %v598 = vand.u32 %v437, 4294901760
        %v599 = vsub.f32 %v437, %v598
        %v600 = vand.u32 %v599, 4294901760
        %v601 = vsub.f32 %v599, %v600
        %v602 = vand.u32 %v601, 4294901760
        %603 = vmatpush.msra.mxu0 %v602
        %v604 = vand.u32 %v435, 4294901760
        %v605 = vsub.f32 %v435, %v604
        %v606 = vand.u32 %v605, 4294901760
        %v607 = vsub.f32 %v605, %v606
        %v608 = vand.u32 %v607, 4294901760
        %609 = vmatpush.msra.mxu0 %v608
        %v610 = vand.u32 %v433, 4294901760
        %v611 = vsub.f32 %v433, %v610
        %v612 = vand.u32 %v611, 4294901760
        %v613 = vsub.f32 %v611, %v612
        %v614 = vand.u32 %v613, 4294901760
        %615 = vmatpush.msra.mxu0 %v614
        %v616 = vand.u32 %v431, 4294901760
        %v617 = vsub.f32 %v431, %v616
        %v618 = vand.u32 %v617, 4294901760
        %v619 = vsub.f32 %v617, %v618
        %v620 = vand.u32 %v619, 4294901760
        %621 = vmatpush.msra.mxu0 %v620
        %v622 = vand.u32 %v429, 4294901760
        %v623 = vsub.f32 %v429, %v622
        %v624 = vand.u32 %v623, 4294901760
        %v625 = vsub.f32 %v623, %v624
        %v626 = vand.u32 %v625, 4294901760
        %627 = vmatpush.msra.mxu0 %v626
        %v628 = vand.u32 %v427, 4294901760
        %v629 = vsub.f32 %v427, %v628
        %v630 = vand.u32 %v629, 4294901760
        %v631 = vsub.f32 %v629, %v630
        %v632 = vand.u32 %v631, 4294901760
        %633 = vmatpush.msra.mxu0 %v632
        %v634 = vand.u32 %v493, 4294901760
        %635 = vmatmul.f32.gmra.mxu0 %v634
        %v636 = vpop.f32.mrf.mxu0
        %v637 = vadd.f32 %v536, %v636
        %638 = vdwg.mxu0
        %v639 = vand.u32 %v457, 4294901760
        %v640 = vsub.f32 %v457, %v639
        %641 = vmatpush.msra.mxu0 %v640
        %v642 = vand.u32 %v455, 4294901760
        %v643 = vsub.f32 %v455, %v642
        %644 = vmatpush.msra.mxu0 %v643
        %v645 = vand.u32 %v453, 4294901760
        %v646 = vsub.f32 %v453, %v645
        %647 = vmatpush.msra.mxu0 %v646
        %v648 = vand.u32 %v451, 4294901760
        %v649 = vsub.f32 %v451, %v648
        %650 = vmatpush.msra.mxu0 %v649
        %v651 = vand.u32 %v449, 4294901760
        %v652 = vsub.f32 %v449, %v651
        %653 = vmatpush.msra.mxu0 %v652
        %v654 = vand.u32 %v447, 4294901760
        %v655 = vsub.f32 %v447, %v654
        %656 = vmatpush.msra.mxu0 %v655
        %v657 = vand.u32 %v445, 4294901760
        %v658 = vsub.f32 %v445, %v657
        %659 = vmatpush.msra.mxu0 %v658
        %v660 = vand.u32 %v443, 4294901760
        %v661 = vsub.f32 %v443, %v660
        %662 = vmatpush.msra.mxu0 %v661
        %v663 = vand.u32 %v441, 4294901760
        %v664 = vsub.f32 %v441, %v663
        %665 = vmatpush.msra.mxu0 %v664
        %v666 = vand.u32 %v439, 4294901760
        %v667 = vsub.f32 %v439, %v666
        %668 = vmatpush.msra.mxu0 %v667
        %v669 = vand.u32 %v437, 4294901760
        %v670 = vsub.f32 %v437, %v669
        %671 = vmatpush.msra.mxu0 %v670
        %v672 = vand.u32 %v435, 4294901760
        %v673 = vsub.f32 %v435, %v672
        %674 = vmatpush.msra.mxu0 %v673
        %v675 = vand.u32 %v433, 4294901760
        %v676 = vsub.f32 %v433, %v675
        %677 = vmatpush.msra.mxu0 %v676
        %v678 = vand.u32 %v431, 4294901760
        %v679 = vsub.f32 %v431, %v678
        %680 = vmatpush.msra.mxu0 %v679
        %v681 = vand.u32 %v429, 4294901760
        %v682 = vsub.f32 %v429, %v681
        %683 = vmatpush.msra.mxu0 %v682
        %v684 = vand.u32 %v427, 4294901760
        %v685 = vsub.f32 %v427, %v684
        %686 = vmatpush.msra.mxu0 %v685
        %v687 = vand.u32 %v493, 4294901760
        %v688 = vsub.f32 %v493, %v687
        %689 = vmatmul.f32.gmra.mxu0 %v688
        %v690 = vpop.f32.mrf.mxu0
        %v691 = vadd.f32 %v637, %v690
        %692 = vdwg.mxu0
        %v693 = vand.u32 %v457, 4294901760
        %694 = vmatpush.msra.mxu0 %v693
        %v695 = vand.u32 %v455, 4294901760
        %696 = vmatpush.msra.mxu0 %v695
        %v697 = vand.u32 %v453, 4294901760
        %698 = vmatpush.msra.mxu0 %v697
        %v699 = vand.u32 %v451, 4294901760
        %700 = vmatpush.msra.mxu0 %v699
        %v701 = vand.u32 %v449, 4294901760
        %702 = vmatpush.msra.mxu0 %v701
        %v703 = vand.u32 %v447, 4294901760
        %704 = vmatpush.msra.mxu0 %v703
        %v705 = vand.u32 %v445, 4294901760
        %706 = vmatpush.msra.mxu0 %v705
        %v707 = vand.u32 %v443, 4294901760
        %708 = vmatpush.msra.mxu0 %v707
        %v709 = vand.u32 %v441, 4294901760
        %710 = vmatpush.msra.mxu0 %v709
        %v711 = vand.u32 %v439, 4294901760
        %712 = vmatpush.msra.mxu0 %v711
        %v713 = vand.u32 %v437, 4294901760
        %714 = vmatpush.msra.mxu0 %v713
        %v715 = vand.u32 %v435, 4294901760
        %716 = vmatpush.msra.mxu0 %v715
        %v717 = vand.u32 %v433, 4294901760
        %718 = vmatpush.msra.mxu0 %v717
        %v719 = vand.u32 %v431, 4294901760
        %720 = vmatpush.msra.mxu0 %v719
        %v721 = vand.u32 %v429, 4294901760
        %722 = vmatpush.msra.mxu0 %v721
        %v723 = vand.u32 %v427, 4294901760
        %724 = vmatpush.msra.mxu0 %v723
        %v725 = vand.u32 %v493, 4294901760
        %v726 = vsub.f32 %v493, %v725
        %v727 = vand.u32 %v726, 4294901760
        %728 = vmatmul.f32.gmra.mxu0 %v727
        %v729 = vpop.f32.mrf.mxu0
        %v730 = vadd.f32 %v691, %v729
        %731 = vdwg.mxu0
        %v732 = vand.u32 %v457, 4294901760
        %v733 = vsub.f32 %v457, %v732
        %v734 = vand.u32 %v733, 4294901760
        %735 = vmatpush.msra.mxu0 %v734
        %v736 = vand.u32 %v455, 4294901760
        %v737 = vsub.f32 %v455, %v736
        %v738 = vand.u32 %v737, 4294901760
        %739 = vmatpush.msra.mxu0 %v738
        %v740 = vand.u32 %v453, 4294901760
        %v741 = vsub.f32 %v453, %v740
        %v742 = vand.u32 %v741, 4294901760
        %743 = vmatpush.msra.mxu0 %v742
        %v744 = vand.u32 %v451, 4294901760
        %v745 = vsub.f32 %v451, %v744
        %v746 = vand.u32 %v745, 4294901760
        %747 = vmatpush.msra.mxu0 %v746
        %v748 = vand.u32 %v449, 4294901760
        %v749 = vsub.f32 %v449, %v748
        %v750 = vand.u32 %v749, 4294901760
        %751 = vmatpush.msra.mxu0 %v750
        %v752 = vand.u32 %v447, 4294901760
        %v753 = vsub.f32 %v447, %v752
        %v754 = vand.u32 %v753, 4294901760
        %755 = vmatpush.msra.mxu0 %v754
        %v756 = vand.u32 %v445, 4294901760
        %v757 = vsub.f32 %v445, %v756
        %v758 = vand.u32 %v757, 4294901760
        %759 = vmatpush.msra.mxu0 %v758
        %v760 = vand.u32 %v443, 4294901760
        %v761 = vsub.f32 %v443, %v760
        %v762 = vand.u32 %v761, 4294901760
        %763 = vmatpush.msra.mxu0 %v762
        %v764 = vand.u32 %v441, 4294901760
        %v765 = vsub.f32 %v441, %v764
        %v766 = vand.u32 %v765, 4294901760
        %767 = vmatpush.msra.mxu0 %v766
        %v768 = vand.u32 %v439, 4294901760
        %v769 = vsub.f32 %v439, %v768
        %v770 = vand.u32 %v769, 4294901760
        %771 = vmatpush.msra.mxu0 %v770
        %v772 = vand.u32 %v437, 4294901760
        %v773 = vsub.f32 %v437, %v772
        %v774 = vand.u32 %v773, 4294901760
        %775 = vmatpush.msra.mxu0 %v774
        %v776 = vand.u32 %v435, 4294901760
        %v777 = vsub.f32 %v435, %v776
        %v778 = vand.u32 %v777, 4294901760
        %779 = vmatpush.msra.mxu0 %v778
        %v780 = vand.u32 %v433, 4294901760
        %v781 = vsub.f32 %v433, %v780
        %v782 = vand.u32 %v781, 4294901760
        %783 = vmatpush.msra.mxu0 %v782
        %v784 = vand.u32 %v431, 4294901760
        %v785 = vsub.f32 %v431, %v784
        %v786 = vand.u32 %v785, 4294901760
        %787 = vmatpush.msra.mxu0 %v786
        %v788 = vand.u32 %v429, 4294901760
        %v789 = vsub.f32 %v429, %v788
        %v790 = vand.u32 %v789, 4294901760
        %791 = vmatpush.msra.mxu0 %v790
        %v792 = vand.u32 %v427, 4294901760
        %v793 = vsub.f32 %v427, %v792
        %v794 = vand.u32 %v793, 4294901760
        %795 = vmatpush.msra.mxu0 %v794
        %v796 = vand.u32 %v493, 4294901760
        %797 = vmatmul.f32.gmra.mxu0 %v796
        %v798 = vpop.f32.mrf.mxu0
        %v799 = vadd.f32 %v730, %v798
        %800 = vdwg.mxu0
        %v801 = vand.u32 %v457, 4294901760
        %802 = vmatpush.msra.mxu0 %v801
        %v803 = vand.u32 %v455, 4294901760
        %804 = vmatpush.msra.mxu0 %v803
        %v805 = vand.u32 %v453, 4294901760
        %806 = vmatpush.msra.mxu0 %v805
        %v807 = vand.u32 %v451, 4294901760
        %808 = vmatpush.msra.mxu0 %v807
        %v809 = vand.u32 %v449, 4294901760
        %810 = vmatpush.msra.mxu0 %v809
        %v811 = vand.u32 %v447, 4294901760
        %812 = vmatpush.msra.mxu0 %v811
        %v813 = vand.u32 %v445, 4294901760
        %814 = vmatpush.msra.mxu0 %v813
        %v815 = vand.u32 %v443, 4294901760
        %816 = vmatpush.msra.mxu0 %v815
        %v817 = vand.u32 %v441, 4294901760
        %818 = vmatpush.msra.mxu0 %v817
        %v819 = vand.u32 %v439, 4294901760
        %820 = vmatpush.msra.mxu0 %v819
        %v821 = vand.u32 %v437, 4294901760
        %822 = vmatpush.msra.mxu0 %v821
        %v823 = vand.u32 %v435, 4294901760
        %824 = vmatpush.msra.mxu0 %v823
        %v825 = vand.u32 %v433, 4294901760
        %826 = vmatpush.msra.mxu0 %v825
        %v827 = vand.u32 %v431, 4294901760
        %828 = vmatpush.msra.mxu0 %v827
        %v829 = vand.u32 %v429, 4294901760
        %830 = vmatpush.msra.mxu0 %v829
        %v831 = vand.u32 %v427, 4294901760
        %832 = vmatpush.msra.mxu0 %v831
        %v833 = vand.u32 %v493, 4294901760
        %834 = vmatmul.f32.gmra.mxu0 %v833
        %v835 = vpop.f32.mrf.mxu0
        %v836 = vadd.f32 %v799, %v835
        %837 = vdwg.mxu0
        %v838 = vand.u32 %v489, 4294901760
        %839 = vmatpush.msra.mxu0 %v838
        %v840 = vand.u32 %v487, 4294901760
        %841 = vmatpush.msra.mxu0 %v840
        %v842 = vand.u32 %v485, 4294901760
        %843 = vmatpush.msra.mxu0 %v842
        %v844 = vand.u32 %v483, 4294901760
        %845 = vmatpush.msra.mxu0 %v844
        %v846 = vand.u32 %v481, 4294901760
        %847 = vmatpush.msra.mxu0 %v846
        %v848 = vand.u32 %v479, 4294901760
        %849 = vmatpush.msra.mxu0 %v848
        %v850 = vand.u32 %v477, 4294901760
        %851 = vmatpush.msra.mxu0 %v850
        %v852 = vand.u32 %v475, 4294901760
        %853 = vmatpush.msra.mxu0 %v852
        %v854 = vand.u32 %v473, 4294901760
        %855 = vmatpush.msra.mxu0 %v854
        %v856 = vand.u32 %v471, 4294901760
        %857 = vmatpush.msra.mxu0 %v856
        %v858 = vand.u32 %v469, 4294901760
        %859 = vmatpush.msra.mxu0 %v858
        %v860 = vand.u32 %v467, 4294901760
        %861 = vmatpush.msra.mxu0 %v860
        %v862 = vand.u32 %v465, 4294901760
        %863 = vmatpush.msra.mxu0 %v862
        %v864 = vand.u32 %v463, 4294901760
        %865 = vmatpush.msra.mxu0 %v864
        %v866 = vand.u32 %v461, 4294901760
        %867 = vmatpush.msra.mxu0 %v866
        %v868 = vand.u32 %v459, 4294901760
        %869 = vmatpush.msra.mxu0 %v868
        %v870 = vand.u32 %v494, 4294901760
        %v871 = vsub.f32 %v494, %v870
        %v872 = vand.u32 %v871, 4294901760
        %v873 = vsub.f32 %v871, %v872
        %v874 = vand.u32 %v873, 4294901760
        %875 = vmatmul.f32.gmra.mxu0 %v874
        %v876 = vpop.f32.mrf.mxu0
        %v877 = vadd.f32 %v836, %v876
        %878 = vdwg.mxu0
        %v879 = vand.u32 %v489, 4294901760
        %v880 = vsub.f32 %v489, %v879
        %v881 = vand.u32 %v880, 4294901760
        %v882 = vsub.f32 %v880, %v881
        %v883 = vand.u32 %v882, 4294901760
        %884 = vmatpush.msra.mxu0 %v883
        %v885 = vand.u32 %v487, 4294901760
        %v886 = vsub.f32 %v487, %v885
        %v887 = vand.u32 %v886, 4294901760
        %v888 = vsub.f32 %v886, %v887
        %v889 = vand.u32 %v888, 4294901760
        %890 = vmatpush.msra.mxu0 %v889
        %v891 = vand.u32 %v485, 4294901760
        %v892 = vsub.f32 %v485, %v891
        %v893 = vand.u32 %v892, 4294901760
        %v894 = vsub.f32 %v892, %v893
        %v895 = vand.u32 %v894, 4294901760
        %896 = vmatpush.msra.mxu0 %v895
        %v897 = vand.u32 %v483, 4294901760
        %v898 = vsub.f32 %v483, %v897
        %v899 = vand.u32 %v898, 4294901760
        %v900 = vsub.f32 %v898, %v899
        %v901 = vand.u32 %v900, 4294901760
        %902 = vmatpush.msra.mxu0 %v901
        %v903 = vand.u32 %v481, 4294901760
        %v904 = vsub.f32 %v481, %v903
        %v905 = vand.u32 %v904, 4294901760
        %v906 = vsub.f32 %v904, %v905
        %v907 = vand.u32 %v906, 4294901760
        %908 = vmatpush.msra.mxu0 %v907
        %v909 = vand.u32 %v479, 4294901760
        %v910 = vsub.f32 %v479, %v909
        %v911 = vand.u32 %v910, 4294901760
        %v912 = vsub.f32 %v910, %v911
        %v913 = vand.u32 %v912, 4294901760
        %914 = vmatpush.msra.mxu0 %v913
        %v915 = vand.u32 %v477, 4294901760
        %v916 = vsub.f32 %v477, %v915
        %v917 = vand.u32 %v916, 4294901760
        %v918 = vsub.f32 %v916, %v917
        %v919 = vand.u32 %v918, 4294901760
        %920 = vmatpush.msra.mxu0 %v919
        %v921 = vand.u32 %v475, 4294901760
        %v922 = vsub.f32 %v475, %v921
        %v923 = vand.u32 %v922, 4294901760
        %v924 = vsub.f32 %v922, %v923
        %v925 = vand.u32 %v924, 4294901760
        %926 = vmatpush.msra.mxu0 %v925
        %v927 = vand.u32 %v473, 4294901760
        %v928 = vsub.f32 %v473, %v927
        %v929 = vand.u32 %v928, 4294901760
        %v930 = vsub.f32 %v928, %v929
        %v931 = vand.u32 %v930, 4294901760
        %932 = vmatpush.msra.mxu0 %v931
        %v933 = vand.u32 %v471, 4294901760
        %v934 = vsub.f32 %v471, %v933
        %v935 = vand.u32 %v934, 4294901760
        %v936 = vsub.f32 %v934, %v935
        %v937 = vand.u32 %v936, 4294901760
        %938 = vmatpush.msra.mxu0 %v937
        %v939 = vand.u32 %v469, 4294901760
        %v940 = vsub.f32 %v469, %v939
        %v941 = vand.u32 %v940, 4294901760
        %v942 = vsub.f32 %v940, %v941
        %v943 = vand.u32 %v942, 4294901760
        %944 = vmatpush.msra.mxu0 %v943
        %v945 = vand.u32 %v467, 4294901760
        %v946 = vsub.f32 %v467, %v945
        %v947 = vand.u32 %v946, 4294901760
        %v948 = vsub.f32 %v946, %v947
        %v949 = vand.u32 %v948, 4294901760
        %950 = vmatpush.msra.mxu0 %v949
        %v951 = vand.u32 %v465, 4294901760
        %v952 = vsub.f32 %v465, %v951
        %v953 = vand.u32 %v952, 4294901760
        %v954 = vsub.f32 %v952, %v953
        %v955 = vand.u32 %v954, 4294901760
        %956 = vmatpush.msra.mxu0 %v955
        %v957 = vand.u32 %v463, 4294901760
        %v958 = vsub.f32 %v463, %v957
        %v959 = vand.u32 %v958, 4294901760
        %v960 = vsub.f32 %v958, %v959
        %v961 = vand.u32 %v960, 4294901760
        %962 = vmatpush.msra.mxu0 %v961
        %v963 = vand.u32 %v461, 4294901760
        %v964 = vsub.f32 %v461, %v963
        %v965 = vand.u32 %v964, 4294901760
        %v966 = vsub.f32 %v964, %v965
        %v967 = vand.u32 %v966, 4294901760
        %968 = vmatpush.msra.mxu0 %v967
        %v969 = vand.u32 %v459, 4294901760
        %v970 = vsub.f32 %v459, %v969
        %v971 = vand.u32 %v970, 4294901760
        %v972 = vsub.f32 %v970, %v971
        %v973 = vand.u32 %v972, 4294901760
        %974 = vmatpush.msra.mxu0 %v973
        %v975 = vand.u32 %v494, 4294901760
        %976 = vmatmul.f32.gmra.mxu0 %v975
        %v977 = vpop.f32.mrf.mxu0
        %v978 = vadd.f32 %v877, %v977
        %979 = vdwg.mxu0
        %v980 = vand.u32 %v489, 4294901760
        %v981 = vsub.f32 %v489, %v980
        %982 = vmatpush.msra.mxu0 %v981
        %v983 = vand.u32 %v487, 4294901760
        %v984 = vsub.f32 %v487, %v983
        %985 = vmatpush.msra.mxu0 %v984
        %v986 = vand.u32 %v485, 4294901760
        %v987 = vsub.f32 %v485, %v986
        %988 = vmatpush.msra.mxu0 %v987
        %v989 = vand.u32 %v483, 4294901760
        %v990 = vsub.f32 %v483, %v989
        %991 = vmatpush.msra.mxu0 %v990
        %v992 = vand.u32 %v481, 4294901760
        %v993 = vsub.f32 %v481, %v992
        %994 = vmatpush.msra.mxu0 %v993
        %v995 = vand.u32 %v479, 4294901760
        %v996 = vsub.f32 %v479, %v995
        %997 = vmatpush.msra.mxu0 %v996
        %v998 = vand.u32 %v477, 4294901760
        %v999 = vsub.f32 %v477, %v998
        %1000 = vmatpush.msra.mxu0 %v999
        %v1001 = vand.u32 %v475, 4294901760
        %v1002 = vsub.f32 %v475, %v1001
        %1003 = vmatpush.msra.mxu0 %v1002
        %v1004 = vand.u32 %v473, 4294901760
        %v1005 = vsub.f32 %v473, %v1004
        %1006 = vmatpush.msra.mxu0 %v1005
        %v1007 = vand.u32 %v471, 4294901760
        %v1008 = vsub.f32 %v471, %v1007
        %1009 = vmatpush.msra.mxu0 %v1008
        %v1010 = vand.u32 %v469, 4294901760
        %v1011 = vsub.f32 %v469, %v1010
        %1012 = vmatpush.msra.mxu0 %v1011
        %v1013 = vand.u32 %v467, 4294901760
        %v1014 = vsub.f32 %v467, %v1013
        %1015 = vmatpush.msra.mxu0 %v1014
        %v1016 = vand.u32 %v465, 4294901760
        %v1017 = vsub.f32 %v465, %v1016
        %1018 = vmatpush.msra.mxu0 %v1017
        %v1019 = vand.u32 %v463, 4294901760
        %v1020 = vsub.f32 %v463, %v1019
        %1021 = vmatpush.msra.mxu0 %v1020
        %v1022 = vand.u32 %v461, 4294901760
        %v1023 = vsub.f32 %v461, %v1022
        %1024 = vmatpush.msra.mxu0 %v1023
        %v1025 = vand.u32 %v459, 4294901760
        %v1026 = vsub.f32 %v459, %v1025
        %1027 = vmatpush.msra.mxu0 %v1026
        %v1028 = vand.u32 %v494, 4294901760
        %v1029 = vsub.f32 %v494, %v1028
        %1030 = vmatmul.f32.gmra.mxu0 %v1029
        %v1031 = vpop.f32.mrf.mxu0
        %v1032 = vadd.f32 %v978, %v1031
        %1033 = vdwg.mxu0
        %v1034 = vand.u32 %v489, 4294901760
        %1035 = vmatpush.msra.mxu0 %v1034
        %v1036 = vand.u32 %v487, 4294901760
        %1037 = vmatpush.msra.mxu0 %v1036
        %v1038 = vand.u32 %v485, 4294901760
        %1039 = vmatpush.msra.mxu0 %v1038
        %v1040 = vand.u32 %v483, 4294901760
        %1041 = vmatpush.msra.mxu0 %v1040
        %v1042 = vand.u32 %v481, 4294901760
        %1043 = vmatpush.msra.mxu0 %v1042
        %v1044 = vand.u32 %v479, 4294901760
        %1045 = vmatpush.msra.mxu0 %v1044
        %v1046 = vand.u32 %v477, 4294901760
        %1047 = vmatpush.msra.mxu0 %v1046
        %v1048 = vand.u32 %v475, 4294901760
        %1049 = vmatpush.msra.mxu0 %v1048
        %v1050 = vand.u32 %v473, 4294901760
        %1051 = vmatpush.msra.mxu0 %v1050
        %v1052 = vand.u32 %v471, 4294901760
        %1053 = vmatpush.msra.mxu0 %v1052
        %v1054 = vand.u32 %v469, 4294901760
        %1055 = vmatpush.msra.mxu0 %v1054
        %v1056 = vand.u32 %v467, 4294901760
        %1057 = vmatpush.msra.mxu0 %v1056
        %v1058 = vand.u32 %v465, 4294901760
        %1059 = vmatpush.msra.mxu0 %v1058
        %v1060 = vand.u32 %v463, 4294901760
        %1061 = vmatpush.msra.mxu0 %v1060
        %v1062 = vand.u32 %v461, 4294901760
        %1063 = vmatpush.msra.mxu0 %v1062
        %v1064 = vand.u32 %v459, 4294901760
        %1065 = vmatpush.msra.mxu0 %v1064
        %v1066 = vand.u32 %v494, 4294901760
        %v1067 = vsub.f32 %v494, %v1066
        %v1068 = vand.u32 %v1067, 4294901760
        %1069 = vmatmul.f32.gmra.mxu0 %v1068
        %v1070 = vpop.f32.mrf.mxu0
        %v1071 = vadd.f32 %v1032, %v1070
        %1072 = vdwg.mxu0
        %v1073 = vand.u32 %v489, 4294901760
        %v1074 = vsub.f32 %v489, %v1073
        %v1075 = vand.u32 %v1074, 4294901760
        %1076 = vmatpush.msra.mxu0 %v1075
        %v1077 = vand.u32 %v487, 4294901760
        %v1078 = vsub.f32 %v487, %v1077
        %v1079 = vand.u32 %v1078, 4294901760
        %1080 = vmatpush.msra.mxu0 %v1079
        %v1081 = vand.u32 %v485, 4294901760
        %v1082 = vsub.f32 %v485, %v1081
        %v1083 = vand.u32 %v1082, 4294901760
        %1084 = vmatpush.msra.mxu0 %v1083
        %v1085 = vand.u32 %v483, 4294901760
        %v1086 = vsub.f32 %v483, %v1085
        %v1087 = vand.u32 %v1086, 4294901760
        %1088 = vmatpush.msra.mxu0 %v1087
        %v1089 = vand.u32 %v481, 4294901760
        %v1090 = vsub.f32 %v481, %v1089
        %v1091 = vand.u32 %v1090, 4294901760
        %1092 = vmatpush.msra.mxu0 %v1091
        %v1093 = vand.u32 %v479, 4294901760
        %v1094 = vsub.f32 %v479, %v1093
        %v1095 = vand.u32 %v1094, 4294901760
        %1096 = vmatpush.msra.mxu0 %v1095
        %v1097 = vand.u32 %v477, 4294901760
        %v1098 = vsub.f32 %v477, %v1097
        %v1099 = vand.u32 %v1098, 4294901760
        %1100 = vmatpush.msra.mxu0 %v1099
        %v1101 = vand.u32 %v475, 4294901760
        %v1102 = vsub.f32 %v475, %v1101
        %v1103 = vand.u32 %v1102, 4294901760
        %1104 = vmatpush.msra.mxu0 %v1103
        %v1105 = vand.u32 %v473, 4294901760
        %v1106 = vsub.f32 %v473, %v1105
        %v1107 = vand.u32 %v1106, 4294901760
        %1108 = vmatpush.msra.mxu0 %v1107
        %v1109 = vand.u32 %v471, 4294901760
        %v1110 = vsub.f32 %v471, %v1109
        %v1111 = vand.u32 %v1110, 4294901760
        %1112 = vmatpush.msra.mxu0 %v1111
        %v1113 = vand.u32 %v469, 4294901760
        %v1114 = vsub.f32 %v469, %v1113
        %v1115 = vand.u32 %v1114, 4294901760
        %1116 = vmatpush.msra.mxu0 %v1115
        %v1117 = vand.u32 %v467, 4294901760
        %v1118 = vsub.f32 %v467, %v1117
        %v1119 = vand.u32 %v1118, 4294901760
        %1120 = vmatpush.msra.mxu0 %v1119
        %v1121 = vand.u32 %v465, 4294901760
        %v1122 = vsub.f32 %v465, %v1121
        %v1123 = vand.u32 %v1122, 4294901760
        %1124 = vmatpush.msra.mxu0 %v1123
        %v1125 = vand.u32 %v463, 4294901760
        %v1126 = vsub.f32 %v463, %v1125
        %v1127 = vand.u32 %v1126, 4294901760
        %1128 = vmatpush.msra.mxu0 %v1127
        %v1129 = vand.u32 %v461, 4294901760
        %v1130 = vsub.f32 %v461, %v1129
        %v1131 = vand.u32 %v1130, 4294901760
        %1132 = vmatpush.msra.mxu0 %v1131
        %v1133 = vand.u32 %v459, 4294901760
        %v1134 = vsub.f32 %v459, %v1133
        %v1135 = vand.u32 %v1134, 4294901760
        %1136 = vmatpush.msra.mxu0 %v1135
        %v1137 = vand.u32 %v494, 4294901760
        %1138 = vmatmul.f32.gmra.mxu0 %v1137
        %v1139 = vpop.f32.mrf.mxu0
        %v1140 = vadd.f32 %v1071, %v1139
        %1141 = vdwg.mxu0
        %v1142 = vand.u32 %v489, 4294901760
        %1143 = vmatpush.msra.mxu0 %v1142
        %v1144 = vand.u32 %v487, 4294901760
        %1145 = vmatpush.msra.mxu0 %v1144
        %v1146 = vand.u32 %v485, 4294901760
        %1147 = vmatpush.msra.mxu0 %v1146
        %v1148 = vand.u32 %v483, 4294901760
        %1149 = vmatpush.msra.mxu0 %v1148
        %v1150 = vand.u32 %v481, 4294901760
        %1151 = vmatpush.msra.mxu0 %v1150
        %v1152 = vand.u32 %v479, 4294901760
        %1153 = vmatpush.msra.mxu0 %v1152
        %v1154 = vand.u32 %v477, 4294901760
        %1155 = vmatpush.msra.mxu0 %v1154
        %v1156 = vand.u32 %v475, 4294901760
        %1157 = vmatpush.msra.mxu0 %v1156
        %v1158 = vand.u32 %v473, 4294901760
        %1159 = vmatpush.msra.mxu0 %v1158
        %v1160 = vand.u32 %v471, 4294901760
        %1161 = vmatpush.msra.mxu0 %v1160
        %v1162 = vand.u32 %v469, 4294901760
        %1163 = vmatpush.msra.mxu0 %v1162
        %v1164 = vand.u32 %v467, 4294901760
        %1165 = vmatpush.msra.mxu0 %v1164
        %v1166 = vand.u32 %v465, 4294901760
        %1167 = vmatpush.msra.mxu0 %v1166
        %v1168 = vand.u32 %v463, 4294901760
        %1169 = vmatpush.msra.mxu0 %v1168
        %v1170 = vand.u32 %v461, 4294901760
        %1171 = vmatpush.msra.mxu0 %v1170
        %v1172 = vand.u32 %v459, 4294901760
        %1173 = vmatpush.msra.mxu0 %v1172
        %v1174 = vand.u32 %v494, 4294901760
        %1175 = vmatmul.f32.gmra.mxu0 %v1174
        %v1176 = vpop.f32.mrf.mxu0
        %v1177 = vadd.f32 %v1140, %v1176
        %1178 = vdwg.mxu0
        %v1179 = vand.u32 %v458, 4294901760
        %1180 = vmatpush.msra.mxu0 %v1179
        %v1181 = vand.u32 %v456, 4294901760
        %1182 = vmatpush.msra.mxu0 %v1181
        %v1183 = vand.u32 %v454, 4294901760
        %1184 = vmatpush.msra.mxu0 %v1183
        %v1185 = vand.u32 %v452, 4294901760
        %1186 = vmatpush.msra.mxu0 %v1185
        %v1187 = vand.u32 %v450, 4294901760
        %1188 = vmatpush.msra.mxu0 %v1187
        %v1189 = vand.u32 %v448, 4294901760
        %1190 = vmatpush.msra.mxu0 %v1189
        %v1191 = vand.u32 %v446, 4294901760
        %1192 = vmatpush.msra.mxu0 %v1191
        %v1193 = vand.u32 %v444, 4294901760
        %1194 = vmatpush.msra.mxu0 %v1193
        %v1195 = vand.u32 %v442, 4294901760
        %1196 = vmatpush.msra.mxu0 %v1195
        %v1197 = vand.u32 %v440, 4294901760
        %1198 = vmatpush.msra.mxu0 %v1197
        %v1199 = vand.u32 %v438, 4294901760
        %1200 = vmatpush.msra.mxu0 %v1199
        %v1201 = vand.u32 %v436, 4294901760
        %1202 = vmatpush.msra.mxu0 %v1201
        %v1203 = vand.u32 %v434, 4294901760
        %1204 = vmatpush.msra.mxu0 %v1203
        %v1205 = vand.u32 %v432, 4294901760
        %1206 = vmatpush.msra.mxu0 %v1205
        %v1207 = vand.u32 %v430, 4294901760
        %1208 = vmatpush.msra.mxu0 %v1207
        %v1209 = vand.u32 %v428, 4294901760
        %1210 = vmatpush.msra.mxu0 %v1209
        %v1211 = vand.u32 %v493, 4294901760
        %v1212 = vsub.f32 %v493, %v1211
        %v1213 = vand.u32 %v1212, 4294901760
        %v1214 = vsub.f32 %v1212, %v1213
        %v1215 = vand.u32 %v1214, 4294901760
        %1216 = vmatmul.f32.gmra.mxu0 %v1215
        %v1217 = vpop.f32.mrf.mxu0
        %v1218 = vadd.f32 0.0, %v1217
        %1219 = vdwg.mxu0
        %v1220 = vand.u32 %v458, 4294901760
        %v1221 = vsub.f32 %v458, %v1220
        %v1222 = vand.u32 %v1221, 4294901760
        %v1223 = vsub.f32 %v1221, %v1222
        %v1224 = vand.u32 %v1223, 4294901760
        %1225 = vmatpush.msra.mxu0 %v1224
        %v1226 = vand.u32 %v456, 4294901760
        %v1227 = vsub.f32 %v456, %v1226
        %v1228 = vand.u32 %v1227, 4294901760
        %v1229 = vsub.f32 %v1227, %v1228
        %v1230 = vand.u32 %v1229, 4294901760
        %1231 = vmatpush.msra.mxu0 %v1230
        %v1232 = vand.u32 %v454, 4294901760
        %v1233 = vsub.f32 %v454, %v1232
        %v1234 = vand.u32 %v1233, 4294901760
        %v1235 = vsub.f32 %v1233, %v1234
        %v1236 = vand.u32 %v1235, 4294901760
        %1237 = vmatpush.msra.mxu0 %v1236
        %v1238 = vand.u32 %v452, 4294901760
        %v1239 = vsub.f32 %v452, %v1238
        %v1240 = vand.u32 %v1239, 4294901760
        %v1241 = vsub.f32 %v1239, %v1240
        %v1242 = vand.u32 %v1241, 4294901760
        %1243 = vmatpush.msra.mxu0 %v1242
        %v1244 = vand.u32 %v450, 4294901760
        %v1245 = vsub.f32 %v450, %v1244
        %v1246 = vand.u32 %v1245, 4294901760
        %v1247 = vsub.f32 %v1245, %v1246
        %v1248 = vand.u32 %v1247, 4294901760
        %1249 = vmatpush.msra.mxu0 %v1248
        %v1250 = vand.u32 %v448, 4294901760
        %v1251 = vsub.f32 %v448, %v1250
        %v1252 = vand.u32 %v1251, 4294901760
        %v1253 = vsub.f32 %v1251, %v1252
        %v1254 = vand.u32 %v1253, 4294901760
        %1255 = vmatpush.msra.mxu0 %v1254
        %v1256 = vand.u32 %v446, 4294901760
        %v1257 = vsub.f32 %v446, %v1256
        %v1258 = vand.u32 %v1257, 4294901760
        %v1259 = vsub.f32 %v1257, %v1258
        %v1260 = vand.u32 %v1259, 4294901760
        %1261 = vmatpush.msra.mxu0 %v1260
        %v1262 = vand.u32 %v444, 4294901760
        %v1263 = vsub.f32 %v444, %v1262
        %v1264 = vand.u32 %v1263, 4294901760
        %v1265 = vsub.f32 %v1263, %v1264
        %v1266 = vand.u32 %v1265, 4294901760
        %1267 = vmatpush.msra.mxu0 %v1266
        %v1268 = vand.u32 %v442, 4294901760
        %v1269 = vsub.f32 %v442, %v1268
        %v1270 = vand.u32 %v1269, 4294901760
        %v1271 = vsub.f32 %v1269, %v1270
        %v1272 = vand.u32 %v1271, 4294901760
        %1273 = vmatpush.msra.mxu0 %v1272
        %v1274 = vand.u32 %v440, 4294901760
        %v1275 = vsub.f32 %v440, %v1274
        %v1276 = vand.u32 %v1275, 4294901760
        %v1277 = vsub.f32 %v1275, %v1276
        %v1278 = vand.u32 %v1277, 4294901760
        %1279 = vmatpush.msra.mxu0 %v1278
        %v1280 = vand.u32 %v438, 4294901760
        %v1281 = vsub.f32 %v438, %v1280
        %v1282 = vand.u32 %v1281, 4294901760
        %v1283 = vsub.f32 %v1281, %v1282
        %v1284 = vand.u32 %v1283, 4294901760
        %1285 = vmatpush.msra.mxu0 %v1284
        %v1286 = vand.u32 %v436, 4294901760
        %v1287 = vsub.f32 %v436, %v1286
        %v1288 = vand.u32 %v1287, 4294901760
        %v1289 = vsub.f32 %v1287, %v1288
        %v1290 = vand.u32 %v1289, 4294901760
        %1291 = vmatpush.msra.mxu0 %v1290
        %v1292 = vand.u32 %v434, 4294901760
        %v1293 = vsub.f32 %v434, %v1292
        %v1294 = vand.u32 %v1293, 4294901760
        %v1295 = vsub.f32 %v1293, %v1294
        %v1296 = vand.u32 %v1295, 4294901760
        %1297 = vmatpush.msra.mxu0 %v1296
        %v1298 = vand.u32 %v432, 4294901760
        %v1299 = vsub.f32 %v432, %v1298
        %v1300 = vand.u32 %v1299, 4294901760
        %v1301 = vsub.f32 %v1299, %v1300
        %v1302 = vand.u32 %v1301, 4294901760
        %1303 = vmatpush.msra.mxu0 %v1302
        %v1304 = vand.u32 %v430, 4294901760
        %v1305 = vsub.f32 %v430, %v1304
        %v1306 = vand.u32 %v1305, 4294901760
        %v1307 = vsub.f32 %v1305, %v1306
        %v1308 = vand.u32 %v1307, 4294901760
        %1309 = vmatpush.msra.mxu0 %v1308
        %v1310 = vand.u32 %v428, 4294901760
        %v1311 = vsub.f32 %v428, %v1310
        %v1312 = vand.u32 %v1311, 4294901760
        %v1313 = vsub.f32 %v1311, %v1312
        %v1314 = vand.u32 %v1313, 4294901760
        %1315 = vmatpush.msra.mxu0 %v1314
        %v1316 = vand.u32 %v493, 4294901760
        %1317 = vmatmul.f32.gmra.mxu0 %v1316
        %v1318 = vpop.f32.mrf.mxu0
        %v1319 = vadd.f32 %v1218, %v1318
        %1320 = vdwg.mxu0
        %v1321 = vand.u32 %v458, 4294901760
        %v1322 = vsub.f32 %v458, %v1321
        %1323 = vmatpush.msra.mxu0 %v1322
        %v1324 = vand.u32 %v456, 4294901760
        %v1325 = vsub.f32 %v456, %v1324
        %1326 = vmatpush.msra.mxu0 %v1325
        %v1327 = vand.u32 %v454, 4294901760
        %v1328 = vsub.f32 %v454, %v1327
        %1329 = vmatpush.msra.mxu0 %v1328
        %v1330 = vand.u32 %v452, 4294901760
        %v1331 = vsub.f32 %v452, %v1330
        %1332 = vmatpush.msra.mxu0 %v1331
        %v1333 = vand.u32 %v450, 4294901760
        %v1334 = vsub.f32 %v450, %v1333
        %1335 = vmatpush.msra.mxu0 %v1334
        %v1336 = vand.u32 %v448, 4294901760
        %v1337 = vsub.f32 %v448, %v1336
        %1338 = vmatpush.msra.mxu0 %v1337
        %v1339 = vand.u32 %v446, 4294901760
        %v1340 = vsub.f32 %v446, %v1339
        %1341 = vmatpush.msra.mxu0 %v1340
        %v1342 = vand.u32 %v444, 4294901760
        %v1343 = vsub.f32 %v444, %v1342
        %1344 = vmatpush.msra.mxu0 %v1343
        %v1345 = vand.u32 %v442, 4294901760
        %v1346 = vsub.f32 %v442, %v1345
        %1347 = vmatpush.msra.mxu0 %v1346
        %v1348 = vand.u32 %v440, 4294901760
        %v1349 = vsub.f32 %v440, %v1348
        %1350 = vmatpush.msra.mxu0 %v1349
        %v1351 = vand.u32 %v438, 4294901760
        %v1352 = vsub.f32 %v438, %v1351
        %1353 = vmatpush.msra.mxu0 %v1352
        %v1354 = vand.u32 %v436, 4294901760
        %v1355 = vsub.f32 %v436, %v1354
        %1356 = vmatpush.msra.mxu0 %v1355
        %v1357 = vand.u32 %v434, 4294901760
        %v1358 = vsub.f32 %v434, %v1357
        %1359 = vmatpush.msra.mxu0 %v1358
        %v1360 = vand.u32 %v432, 4294901760
        %v1361 = vsub.f32 %v432, %v1360
        %1362 = vmatpush.msra.mxu0 %v1361
        %v1363 = vand.u32 %v430, 4294901760
        %v1364 = vsub.f32 %v430, %v1363
        %1365 = vmatpush.msra.mxu0 %v1364
        %v1366 = vand.u32 %v428, 4294901760
        %v1367 = vsub.f32 %v428, %v1366
        %1368 = vmatpush.msra.mxu0 %v1367
        %v1369 = vand.u32 %v493, 4294901760
        %v1370 = vsub.f32 %v493, %v1369
        %1371 = vmatmul.f32.gmra.mxu0 %v1370
        %v1372 = vpop.f32.mrf.mxu0
        %v1373 = vadd.f32 %v1319, %v1372
        %1374 = vdwg.mxu0
        %v1375 = vand.u32 %v458, 4294901760
        %1376 = vmatpush.msra.mxu0 %v1375
        %v1377 = vand.u32 %v456, 4294901760
        %1378 = vmatpush.msra.mxu0 %v1377
        %v1379 = vand.u32 %v454, 4294901760
        %1380 = vmatpush.msra.mxu0 %v1379
        %v1381 = vand.u32 %v452, 4294901760
        %1382 = vmatpush.msra.mxu0 %v1381
        %v1383 = vand.u32 %v450, 4294901760
        %1384 = vmatpush.msra.mxu0 %v1383
        %v1385 = vand.u32 %v448, 4294901760
        %1386 = vmatpush.msra.mxu0 %v1385
        %v1387 = vand.u32 %v446, 4294901760
        %1388 = vmatpush.msra.mxu0 %v1387
        %v1389 = vand.u32 %v444, 4294901760
        %1390 = vmatpush.msra.mxu0 %v1389
        %v1391 = vand.u32 %v442, 4294901760
        %1392 = vmatpush.msra.mxu0 %v1391
        %v1393 = vand.u32 %v440, 4294901760
        %1394 = vmatpush.msra.mxu0 %v1393
        %v1395 = vand.u32 %v438, 4294901760
        %1396 = vmatpush.msra.mxu0 %v1395
        %v1397 = vand.u32 %v436, 4294901760
        %1398 = vmatpush.msra.mxu0 %v1397
        %v1399 = vand.u32 %v434, 4294901760
        %1400 = vmatpush.msra.mxu0 %v1399
        %v1401 = vand.u32 %v432, 4294901760
        %1402 = vmatpush.msra.mxu0 %v1401
        %v1403 = vand.u32 %v430, 4294901760
        %1404 = vmatpush.msra.mxu0 %v1403
        %v1405 = vand.u32 %v428, 4294901760
        %1406 = vmatpush.msra.mxu0 %v1405
        %v1407 = vand.u32 %v493, 4294901760
        %v1408 = vsub.f32 %v493, %v1407
        %v1409 = vand.u32 %v1408, 4294901760
        %1410 = vmatmul.f32.gmra.mxu0 %v1409
        %v1411 = vpop.f32.mrf.mxu0
        %v1412 = vadd.f32 %v1373, %v1411
        %1413 = vdwg.mxu0
        %v1414 = vand.u32 %v458, 4294901760
        %v1415 = vsub.f32 %v458, %v1414
        %v1416 = vand.u32 %v1415, 4294901760
        %1417 = vmatpush.msra.mxu0 %v1416
        %v1418 = vand.u32 %v456, 4294901760
        %v1419 = vsub.f32 %v456, %v1418
        %v1420 = vand.u32 %v1419, 4294901760
        %1421 = vmatpush.msra.mxu0 %v1420
        %v1422 = vand.u32 %v454, 4294901760
        %v1423 = vsub.f32 %v454, %v1422
        %v1424 = vand.u32 %v1423, 4294901760
        %1425 = vmatpush.msra.mxu0 %v1424
        %v1426 = vand.u32 %v452, 4294901760
        %v1427 = vsub.f32 %v452, %v1426
        %v1428 = vand.u32 %v1427, 4294901760
        %1429 = vmatpush.msra.mxu0 %v1428
        %v1430 = vand.u32 %v450, 4294901760
        %v1431 = vsub.f32 %v450, %v1430
        %v1432 = vand.u32 %v1431, 4294901760
        %1433 = vmatpush.msra.mxu0 %v1432
        %v1434 = vand.u32 %v448, 4294901760
        %v1435 = vsub.f32 %v448, %v1434
        %v1436 = vand.u32 %v1435, 4294901760
        %1437 = vmatpush.msra.mxu0 %v1436
        %v1438 = vand.u32 %v446, 4294901760
        %v1439 = vsub.f32 %v446, %v1438
        %v1440 = vand.u32 %v1439, 4294901760
        %1441 = vmatpush.msra.mxu0 %v1440
        %v1442 = vand.u32 %v444, 4294901760
        %v1443 = vsub.f32 %v444, %v1442
        %v1444 = vand.u32 %v1443, 4294901760
        %1445 = vmatpush.msra.mxu0 %v1444
        %v1446 = vand.u32 %v442, 4294901760
        %v1447 = vsub.f32 %v442, %v1446
        %v1448 = vand.u32 %v1447, 4294901760
        %1449 = vmatpush.msra.mxu0 %v1448
        %v1450 = vand.u32 %v440, 4294901760
        %v1451 = vsub.f32 %v440, %v1450
        %v1452 = vand.u32 %v1451, 4294901760
        %1453 = vmatpush.msra.mxu0 %v1452
        %v1454 = vand.u32 %v438, 4294901760
        %v1455 = vsub.f32 %v438, %v1454
        %v1456 = vand.u32 %v1455, 4294901760
        %1457 = vmatpush.msra.mxu0 %v1456
        %v1458 = vand.u32 %v436, 4294901760
        %v1459 = vsub.f32 %v436, %v1458
        %v1460 = vand.u32 %v1459, 4294901760
        %1461 = vmatpush.msra.mxu0 %v1460
        %v1462 = vand.u32 %v434, 4294901760
        %v1463 = vsub.f32 %v434, %v1462
        %v1464 = vand.u32 %v1463, 4294901760
        %1465 = vmatpush.msra.mxu0 %v1464
        %v1466 = vand.u32 %v432, 4294901760
        %v1467 = vsub.f32 %v432, %v1466
        %v1468 = vand.u32 %v1467, 4294901760
        %1469 = vmatpush.msra.mxu0 %v1468
        %v1470 = vand.u32 %v430, 4294901760
        %v1471 = vsub.f32 %v430, %v1470
        %v1472 = vand.u32 %v1471, 4294901760
        %1473 = vmatpush.msra.mxu0 %v1472
        %v1474 = vand.u32 %v428, 4294901760
        %v1475 = vsub.f32 %v428, %v1474
        %v1476 = vand.u32 %v1475, 4294901760
        %1477 = vmatpush.msra.mxu0 %v1476
        %v1478 = vand.u32 %v493, 4294901760
        %1479 = vmatmul.f32.gmra.mxu0 %v1478
        %v1480 = vpop.f32.mrf.mxu0
        %v1481 = vadd.f32 %v1412, %v1480
        %1482 = vdwg.mxu0
        %v1483 = vand.u32 %v458, 4294901760
        %1484 = vmatpush.msra.mxu0 %v1483
        %v1485 = vand.u32 %v456, 4294901760
        %1486 = vmatpush.msra.mxu0 %v1485
        %v1487 = vand.u32 %v454, 4294901760
        %1488 = vmatpush.msra.mxu0 %v1487
        %v1489 = vand.u32 %v452, 4294901760
        %1490 = vmatpush.msra.mxu0 %v1489
        %v1491 = vand.u32 %v450, 4294901760
        %1492 = vmatpush.msra.mxu0 %v1491
        %v1493 = vand.u32 %v448, 4294901760
        %1494 = vmatpush.msra.mxu0 %v1493
        %v1495 = vand.u32 %v446, 4294901760
        %1496 = vmatpush.msra.mxu0 %v1495
        %v1497 = vand.u32 %v444, 4294901760
        %1498 = vmatpush.msra.mxu0 %v1497
        %v1499 = vand.u32 %v442, 4294901760
        %1500 = vmatpush.msra.mxu0 %v1499
        %v1501 = vand.u32 %v440, 4294901760
        %1502 = vmatpush.msra.mxu0 %v1501
        %v1503 = vand.u32 %v438, 4294901760
        %1504 = vmatpush.msra.mxu0 %v1503
        %v1505 = vand.u32 %v436, 4294901760
        %1506 = vmatpush.msra.mxu0 %v1505
        %v1507 = vand.u32 %v434, 4294901760
        %1508 = vmatpush.msra.mxu0 %v1507
        %v1509 = vand.u32 %v432, 4294901760
        %1510 = vmatpush.msra.mxu0 %v1509
        %v1511 = vand.u32 %v430, 4294901760
        %1512 = vmatpush.msra.mxu0 %v1511
        %v1513 = vand.u32 %v428, 4294901760
        %1514 = vmatpush.msra.mxu0 %v1513
        %v1515 = vand.u32 %v493, 4294901760
        %1516 = vmatmul.f32.gmra.mxu0 %v1515
        %v1517 = vpop.f32.mrf.mxu0
        %v1518 = vadd.f32 %v1481, %v1517
        %1519 = vdwg.mxu0
        %v1520 = vand.u32 %v490, 4294901760
        %1521 = vmatpush.msra.mxu0 %v1520
        %v1522 = vand.u32 %v488, 4294901760
        %1523 = vmatpush.msra.mxu0 %v1522
        %v1524 = vand.u32 %v486, 4294901760
        %1525 = vmatpush.msra.mxu0 %v1524
        %v1526 = vand.u32 %v484, 4294901760
        %1527 = vmatpush.msra.mxu0 %v1526
        %v1528 = vand.u32 %v482, 4294901760
        %1529 = vmatpush.msra.mxu0 %v1528
        %v1530 = vand.u32 %v480, 4294901760
        %1531 = vmatpush.msra.mxu0 %v1530
        %v1532 = vand.u32 %v478, 4294901760
        %1533 = vmatpush.msra.mxu0 %v1532
        %v1534 = vand.u32 %v476, 4294901760
        %1535 = vmatpush.msra.mxu0 %v1534
        %v1536 = vand.u32 %v474, 4294901760
        %1537 = vmatpush.msra.mxu0 %v1536
        %v1538 = vand.u32 %v472, 4294901760
        %1539 = vmatpush.msra.mxu0 %v1538
        %v1540 = vand.u32 %v470, 4294901760
        %1541 = vmatpush.msra.mxu0 %v1540
        %v1542 = vand.u32 %v468, 4294901760
        %1543 = vmatpush.msra.mxu0 %v1542
        %v1544 = vand.u32 %v466, 4294901760
        %1545 = vmatpush.msra.mxu0 %v1544
        %v1546 = vand.u32 %v464, 4294901760
        %1547 = vmatpush.msra.mxu0 %v1546
        %v1548 = vand.u32 %v462, 4294901760
        %1549 = vmatpush.msra.mxu0 %v1548
        %v1550 = vand.u32 %v460, 4294901760
        %1551 = vmatpush.msra.mxu0 %v1550
        %v1552 = vand.u32 %v494, 4294901760
        %v1553 = vsub.f32 %v494, %v1552
        %v1554 = vand.u32 %v1553, 4294901760
        %v1555 = vsub.f32 %v1553, %v1554
        %v1556 = vand.u32 %v1555, 4294901760
        %1557 = vmatmul.f32.gmra.mxu0 %v1556
        %v1558 = vpop.f32.mrf.mxu0
        %v1559 = vadd.f32 %v1518, %v1558
        %1560 = vdwg.mxu0
        %v1561 = vand.u32 %v490, 4294901760
        %v1562 = vsub.f32 %v490, %v1561
        %v1563 = vand.u32 %v1562, 4294901760
        %v1564 = vsub.f32 %v1562, %v1563
        %v1565 = vand.u32 %v1564, 4294901760
        %1566 = vmatpush.msra.mxu0 %v1565
        %v1567 = vand.u32 %v488, 4294901760
        %v1568 = vsub.f32 %v488, %v1567
        %v1569 = vand.u32 %v1568, 4294901760
        %v1570 = vsub.f32 %v1568, %v1569
        %v1571 = vand.u32 %v1570, 4294901760
        %1572 = vmatpush.msra.mxu0 %v1571
        %v1573 = vand.u32 %v486, 4294901760
        %v1574 = vsub.f32 %v486, %v1573
        %v1575 = vand.u32 %v1574, 4294901760
        %v1576 = vsub.f32 %v1574, %v1575
        %v1577 = vand.u32 %v1576, 4294901760
        %1578 = vmatpush.msra.mxu0 %v1577
        %v1579 = vand.u32 %v484, 4294901760
        %v1580 = vsub.f32 %v484, %v1579
        %v1581 = vand.u32 %v1580, 4294901760
        %v1582 = vsub.f32 %v1580, %v1581
        %v1583 = vand.u32 %v1582, 4294901760
        %1584 = vmatpush.msra.mxu0 %v1583
        %v1585 = vand.u32 %v482, 4294901760
        %v1586 = vsub.f32 %v482, %v1585
        %v1587 = vand.u32 %v1586, 4294901760
        %v1588 = vsub.f32 %v1586, %v1587
        %v1589 = vand.u32 %v1588, 4294901760
        %1590 = vmatpush.msra.mxu0 %v1589
        %v1591 = vand.u32 %v480, 4294901760
        %v1592 = vsub.f32 %v480, %v1591
        %v1593 = vand.u32 %v1592, 4294901760
        %v1594 = vsub.f32 %v1592, %v1593
        %v1595 = vand.u32 %v1594, 4294901760
        %1596 = vmatpush.msra.mxu0 %v1595
        %v1597 = vand.u32 %v478, 4294901760
        %v1598 = vsub.f32 %v478, %v1597
        %v1599 = vand.u32 %v1598, 4294901760
        %v1600 = vsub.f32 %v1598, %v1599
        %v1601 = vand.u32 %v1600, 4294901760
        %1602 = vmatpush.msra.mxu0 %v1601
        %v1603 = vand.u32 %v476, 4294901760
        %v1604 = vsub.f32 %v476, %v1603
        %v1605 = vand.u32 %v1604, 4294901760
        %v1606 = vsub.f32 %v1604, %v1605
        %v1607 = vand.u32 %v1606, 4294901760
        %1608 = vmatpush.msra.mxu0 %v1607
        %v1609 = vand.u32 %v474, 4294901760
        %v1610 = vsub.f32 %v474, %v1609
        %v1611 = vand.u32 %v1610, 4294901760
        %v1612 = vsub.f32 %v1610, %v1611
        %v1613 = vand.u32 %v1612, 4294901760
        %1614 = vmatpush.msra.mxu0 %v1613
        %v1615 = vand.u32 %v472, 4294901760
        %v1616 = vsub.f32 %v472, %v1615
        %v1617 = vand.u32 %v1616, 4294901760
        %v1618 = vsub.f32 %v1616, %v1617
        %v1619 = vand.u32 %v1618, 4294901760
        %1620 = vmatpush.msra.mxu0 %v1619
        %v1621 = vand.u32 %v470, 4294901760
        %v1622 = vsub.f32 %v470, %v1621
        %v1623 = vand.u32 %v1622, 4294901760
        %v1624 = vsub.f32 %v1622, %v1623
        %v1625 = vand.u32 %v1624, 4294901760
        %1626 = vmatpush.msra.mxu0 %v1625
        %v1627 = vand.u32 %v468, 4294901760
        %v1628 = vsub.f32 %v468, %v1627
        %v1629 = vand.u32 %v1628, 4294901760
        %v1630 = vsub.f32 %v1628, %v1629
        %v1631 = vand.u32 %v1630, 4294901760
        %1632 = vmatpush.msra.mxu0 %v1631
        %v1633 = vand.u32 %v466, 4294901760
        %v1634 = vsub.f32 %v466, %v1633
        %v1635 = vand.u32 %v1634, 4294901760
        %v1636 = vsub.f32 %v1634, %v1635
        %v1637 = vand.u32 %v1636, 4294901760
        %1638 = vmatpush.msra.mxu0 %v1637
        %v1639 = vand.u32 %v464, 4294901760
        %v1640 = vsub.f32 %v464, %v1639
        %v1641 = vand.u32 %v1640, 4294901760
        %v1642 = vsub.f32 %v1640, %v1641
        %v1643 = vand.u32 %v1642, 4294901760
        %1644 = vmatpush.msra.mxu0 %v1643
        %v1645 = vand.u32 %v462, 4294901760
        %v1646 = vsub.f32 %v462, %v1645
        %v1647 = vand.u32 %v1646, 4294901760
        %v1648 = vsub.f32 %v1646, %v1647
        %v1649 = vand.u32 %v1648, 4294901760
        %1650 = vmatpush.msra.mxu0 %v1649
        %v1651 = vand.u32 %v460, 4294901760
        %v1652 = vsub.f32 %v460, %v1651
        %v1653 = vand.u32 %v1652, 4294901760
        %v1654 = vsub.f32 %v1652, %v1653
        %v1655 = vand.u32 %v1654, 4294901760
        %1656 = vmatpush.msra.mxu0 %v1655
        %v1657 = vand.u32 %v494, 4294901760
        %1658 = vmatmul.f32.gmra.mxu0 %v1657
        %v1659 = vpop.f32.mrf.mxu0
        %v1660 = vadd.f32 %v1559, %v1659
        %1661 = vdwg.mxu0
        %v1662 = vand.u32 %v490, 4294901760
        %v1663 = vsub.f32 %v490, %v1662
        %1664 = vmatpush.msra.mxu0 %v1663
        %v1665 = vand.u32 %v488, 4294901760
        %v1666 = vsub.f32 %v488, %v1665
        %1667 = vmatpush.msra.mxu0 %v1666
        %v1668 = vand.u32 %v486, 4294901760
        %v1669 = vsub.f32 %v486, %v1668
        %1670 = vmatpush.msra.mxu0 %v1669
        %v1671 = vand.u32 %v484, 4294901760
        %v1672 = vsub.f32 %v484, %v1671
        %1673 = vmatpush.msra.mxu0 %v1672
        %v1674 = vand.u32 %v482, 4294901760
        %v1675 = vsub.f32 %v482, %v1674
        %1676 = vmatpush.msra.mxu0 %v1675
        %v1677 = vand.u32 %v480, 4294901760
        %v1678 = vsub.f32 %v480, %v1677
        %1679 = vmatpush.msra.mxu0 %v1678
        %v1680 = vand.u32 %v478, 4294901760
        %v1681 = vsub.f32 %v478, %v1680
        %1682 = vmatpush.msra.mxu0 %v1681
        %v1683 = vand.u32 %v476, 4294901760
        %v1684 = vsub.f32 %v476, %v1683
        %1685 = vmatpush.msra.mxu0 %v1684
        %v1686 = vand.u32 %v474, 4294901760
        %v1687 = vsub.f32 %v474, %v1686
        %1688 = vmatpush.msra.mxu0 %v1687
        %v1689 = vand.u32 %v472, 4294901760
        %v1690 = vsub.f32 %v472, %v1689
        %1691 = vmatpush.msra.mxu0 %v1690
        %v1692 = vand.u32 %v470, 4294901760
        %v1693 = vsub.f32 %v470, %v1692
        %1694 = vmatpush.msra.mxu0 %v1693
        %v1695 = vand.u32 %v468, 4294901760
        %v1696 = vsub.f32 %v468, %v1695
        %1697 = vmatpush.msra.mxu0 %v1696
        %v1698 = vand.u32 %v466, 4294901760
        %v1699 = vsub.f32 %v466, %v1698
        %1700 = vmatpush.msra.mxu0 %v1699
        %v1701 = vand.u32 %v464, 4294901760
        %v1702 = vsub.f32 %v464, %v1701
        %1703 = vmatpush.msra.mxu0 %v1702
        %v1704 = vand.u32 %v462, 4294901760
        %v1705 = vsub.f32 %v462, %v1704
        %1706 = vmatpush.msra.mxu0 %v1705
        %v1707 = vand.u32 %v460, 4294901760
        %v1708 = vsub.f32 %v460, %v1707
        %1709 = vmatpush.msra.mxu0 %v1708
        %v1710 = vand.u32 %v494, 4294901760
        %v1711 = vsub.f32 %v494, %v1710
        %1712 = vmatmul.f32.gmra.mxu0 %v1711
        %v1713 = vpop.f32.mrf.mxu0
        %v1714 = vadd.f32 %v1660, %v1713
        %1715 = vdwg.mxu0
        %v1716 = vand.u32 %v490, 4294901760
        %1717 = vmatpush.msra.mxu0 %v1716
        %v1718 = vand.u32 %v488, 4294901760
        %1719 = vmatpush.msra.mxu0 %v1718
        %v1720 = vand.u32 %v486, 4294901760
        %1721 = vmatpush.msra.mxu0 %v1720
        %v1722 = vand.u32 %v484, 4294901760
        %1723 = vmatpush.msra.mxu0 %v1722
        %v1724 = vand.u32 %v482, 4294901760
        %1725 = vmatpush.msra.mxu0 %v1724
        %v1726 = vand.u32 %v480, 4294901760
        %1727 = vmatpush.msra.mxu0 %v1726
        %v1728 = vand.u32 %v478, 4294901760
        %1729 = vmatpush.msra.mxu0 %v1728
        %v1730 = vand.u32 %v476, 4294901760
        %1731 = vmatpush.msra.mxu0 %v1730
        %v1732 = vand.u32 %v474, 4294901760
        %1733 = vmatpush.msra.mxu0 %v1732
        %v1734 = vand.u32 %v472, 4294901760
        %1735 = vmatpush.msra.mxu0 %v1734
        %v1736 = vand.u32 %v470, 4294901760
        %1737 = vmatpush.msra.mxu0 %v1736
        %v1738 = vand.u32 %v468, 4294901760
        %1739 = vmatpush.msra.mxu0 %v1738
        %v1740 = vand.u32 %v466, 4294901760
        %1741 = vmatpush.msra.mxu0 %v1740
        %v1742 = vand.u32 %v464, 4294901760
        %1743 = vmatpush.msra.mxu0 %v1742
        %v1744 = vand.u32 %v462, 4294901760
        %1745 = vmatpush.msra.mxu0 %v1744
        %v1746 = vand.u32 %v460, 4294901760
        %1747 = vmatpush.msra.mxu0 %v1746
        %v1748 = vand.u32 %v494, 4294901760
        %v1749 = vsub.f32 %v494, %v1748
        %v1750 = vand.u32 %v1749, 4294901760
        %1751 = vmatmul.f32.gmra.mxu0 %v1750
        %v1752 = vpop.f32.mrf.mxu0
        %v1753 = vadd.f32 %v1714, %v1752
        %1754 = vdwg.mxu0
        %v1755 = vand.u32 %v490, 4294901760
        %v1756 = vsub.f32 %v490, %v1755
        %v1757 = vand.u32 %v1756, 4294901760
        %1758 = vmatpush.msra.mxu0 %v1757
        %v1759 = vand.u32 %v488, 4294901760
        %v1760 = vsub.f32 %v488, %v1759
        %v1761 = vand.u32 %v1760, 4294901760
        %1762 = vmatpush.msra.mxu0 %v1761
        %v1763 = vand.u32 %v486, 4294901760
        %v1764 = vsub.f32 %v486, %v1763
        %v1765 = vand.u32 %v1764, 4294901760
        %1766 = vmatpush.msra.mxu0 %v1765
        %v1767 = vand.u32 %v484, 4294901760
        %v1768 = vsub.f32 %v484, %v1767
        %v1769 = vand.u32 %v1768, 4294901760
        %1770 = vmatpush.msra.mxu0 %v1769
        %v1771 = vand.u32 %v482, 4294901760
        %v1772 = vsub.f32 %v482, %v1771
        %v1773 = vand.u32 %v1772, 4294901760
        %1774 = vmatpush.msra.mxu0 %v1773
        %v1775 = vand.u32 %v480, 4294901760
        %v1776 = vsub.f32 %v480, %v1775
        %v1777 = vand.u32 %v1776, 4294901760
        %1778 = vmatpush.msra.mxu0 %v1777
        %v1779 = vand.u32 %v478, 4294901760
        %v1780 = vsub.f32 %v478, %v1779
        %v1781 = vand.u32 %v1780, 4294901760
        %1782 = vmatpush.msra.mxu0 %v1781
        %v1783 = vand.u32 %v476, 4294901760
        %v1784 = vsub.f32 %v476, %v1783
        %v1785 = vand.u32 %v1784, 4294901760
        %1786 = vmatpush.msra.mxu0 %v1785
        %v1787 = vand.u32 %v474, 4294901760
        %v1788 = vsub.f32 %v474, %v1787
        %v1789 = vand.u32 %v1788, 4294901760
        %1790 = vmatpush.msra.mxu0 %v1789
        %v1791 = vand.u32 %v472, 4294901760
        %v1792 = vsub.f32 %v472, %v1791
        %v1793 = vand.u32 %v1792, 4294901760
        %1794 = vmatpush.msra.mxu0 %v1793
        %v1795 = vand.u32 %v470, 4294901760
        %v1796 = vsub.f32 %v470, %v1795
        %v1797 = vand.u32 %v1796, 4294901760
        %1798 = vmatpush.msra.mxu0 %v1797
        %v1799 = vand.u32 %v468, 4294901760
        %v1800 = vsub.f32 %v468, %v1799
        %v1801 = vand.u32 %v1800, 4294901760
        %1802 = vmatpush.msra.mxu0 %v1801
        %v1803 = vand.u32 %v466, 4294901760
        %v1804 = vsub.f32 %v466, %v1803
        %v1805 = vand.u32 %v1804, 4294901760
        %1806 = vmatpush.msra.mxu0 %v1805
        %v1807 = vand.u32 %v464, 4294901760
        %v1808 = vsub.f32 %v464, %v1807
        %v1809 = vand.u32 %v1808, 4294901760
        %1810 = vmatpush.msra.mxu0 %v1809
        %v1811 = vand.u32 %v462, 4294901760
        %v1812 = vsub.f32 %v462, %v1811
        %v1813 = vand.u32 %v1812, 4294901760
        %1814 = vmatpush.msra.mxu0 %v1813
        %v1815 = vand.u32 %v460, 4294901760
        %v1816 = vsub.f32 %v460, %v1815
        %v1817 = vand.u32 %v1816, 4294901760
        %1818 = vmatpush.msra.mxu0 %v1817
        %v1819 = vand.u32 %v494, 4294901760
        %1820 = vmatmul.f32.gmra.mxu0 %v1819
        %v1821 = vpop.f32.mrf.mxu0
        %v1822 = vadd.f32 %v1753, %v1821
        %1823 = vdwg.mxu0
        %v1824 = vand.u32 %v490, 4294901760
        %1825 = vmatpush.msra.mxu0 %v1824
        %v1826 = vand.u32 %v488, 4294901760
        %1827 = vmatpush.msra.mxu0 %v1826
        %v1828 = vand.u32 %v486, 4294901760
        %1829 = vmatpush.msra.mxu0 %v1828
        %v1830 = vand.u32 %v484, 4294901760
        %1831 = vmatpush.msra.mxu0 %v1830
        %v1832 = vand.u32 %v482, 4294901760
        %1833 = vmatpush.msra.mxu0 %v1832
        %v1834 = vand.u32 %v480, 4294901760
        %1835 = vmatpush.msra.mxu0 %v1834
        %v1836 = vand.u32 %v478, 4294901760
        %1837 = vmatpush.msra.mxu0 %v1836
        %v1838 = vand.u32 %v476, 4294901760
        %1839 = vmatpush.msra.mxu0 %v1838
        %v1840 = vand.u32 %v474, 4294901760
        %1841 = vmatpush.msra.mxu0 %v1840
        %v1842 = vand.u32 %v472, 4294901760
        %1843 = vmatpush.msra.mxu0 %v1842
        %v1844 = vand.u32 %v470, 4294901760
        %1845 = vmatpush.msra.mxu0 %v1844
        %v1846 = vand.u32 %v468, 4294901760
        %1847 = vmatpush.msra.mxu0 %v1846
        %v1848 = vand.u32 %v466, 4294901760
        %1849 = vmatpush.msra.mxu0 %v1848
        %v1850 = vand.u32 %v464, 4294901760
        %1851 = vmatpush.msra.mxu0 %v1850
        %v1852 = vand.u32 %v462, 4294901760
        %1853 = vmatpush.msra.mxu0 %v1852
        %v1854 = vand.u32 %v460, 4294901760
        %1855 = vmatpush.msra.mxu0 %v1854
        %v1856 = vand.u32 %v494, 4294901760
        %1857 = vmatmul.f32.gmra.mxu0 %v1856
        %v1858 = vpop.f32.mrf.mxu0
        %v1859 = vadd.f32 %v1822, %v1858
        %1860 = vdwg.mxu0
        %v1861 = vld [vmem:[#allocation10] sm:$0xff]
        %v1862 = vld [vmem:[#allocation10 + $0x8] sm:$0xff]
        %v1863 = vld [vmem:[#allocation10 + $0x10] sm:$0xff]
        %v1864 = vld [vmem:[#allocation10 + $0x18] sm:$0xff]
        %v1865 = vld [vmem:[#allocation10 + $0x20] sm:$0xff]
        %v1866 = vld [vmem:[#allocation10 + $0x28] sm:$0xff]
        %v1867 = vld [vmem:[#allocation10 + $0x30] sm:$0xff]
        %v1868 = vld [vmem:[#allocation10 + $0x38] sm:$0xff]
        %v1869 = vld [vmem:[#allocation10 + $0x40] sm:$0xff]
        %v1870 = vld [vmem:[#allocation10 + $0x48] sm:$0xff]
        %v1871 = vld [vmem:[#allocation10 + $0x50] sm:$0xff]
        %v1872 = vld [vmem:[#allocation10 + $0x58] sm:$0xff]
        %v1873 = vld [vmem:[#allocation10 + $0x60] sm:$0xff]
        %v1874 = vld [vmem:[#allocation10 + $0x68] sm:$0xff]
        %v1875 = vld [vmem:[#allocation10 + $0x70] sm:$0xff]
        %v1876 = vld [vmem:[#allocation10 + $0x78] sm:$0xff]
        %v1877 = vld [vmem:[#allocation10 + $0x80] sm:$0xff]
        %v1878 = vld [vmem:[#allocation10 + $0x88] sm:$0xff]
        %v1879 = vld [vmem:[#allocation10 + $0x90] sm:$0xff]
        %v1880 = vld [vmem:[#allocation10 + $0x98] sm:$0xff]
        %v1881 = vld [vmem:[#allocation10 + $0xa0] sm:$0xff]
        %v1882 = vld [vmem:[#allocation10 + $0xa8] sm:$0xff]
        %v1883 = vld [vmem:[#allocation10 + $0xb0] sm:$0xff]
        %v1884 = vld [vmem:[#allocation10 + $0xb8] sm:$0xff]
        %v1885 = vld [vmem:[#allocation10 + $0xc0] sm:$0xff]
        %v1886 = vld [vmem:[#allocation10 + $0xc8] sm:$0xff]
        %v1887 = vld [vmem:[#allocation10 + $0xd0] sm:$0xff]
        %v1888 = vld [vmem:[#allocation10 + $0xd8] sm:$0xff]
        %v1889 = vld [vmem:[#allocation10 + $0xe0] sm:$0xff]
        %v1890 = vld [vmem:[#allocation10 + $0xe8] sm:$0xff]
        %v1891 = vld [vmem:[#allocation10 + $0xf0] sm:$0xff]
        %v1892 = vld [vmem:[#allocation10 + $0xf8] sm:$0xff]
        %v1893 = vld [vmem:[#allocation10 + $0x100] sm:$0xff]
        %v1894 = vld [vmem:[#allocation10 + $0x108] sm:$0xff]
        %v1895 = vld [vmem:[#allocation10 + $0x110] sm:$0xff]
        %v1896 = vld [vmem:[#allocation10 + $0x118] sm:$0xff]
        %v1897 = vld [vmem:[#allocation10 + $0x120] sm:$0xff]
        %v1898 = vld [vmem:[#allocation10 + $0x128] sm:$0xff]
        %v1899 = vld [vmem:[#allocation10 + $0x130] sm:$0xff]
        %v1900 = vld [vmem:[#allocation10 + $0x138] sm:$0xff]
        %v1901 = vld [vmem:[#allocation10 + $0x140] sm:$0xff]
        %v1902 = vld [vmem:[#allocation10 + $0x148] sm:$0xff]
        %v1903 = vld [vmem:[#allocation10 + $0x150] sm:$0xff]
        %v1904 = vld [vmem:[#allocation10 + $0x158] sm:$0xff]
        %v1905 = vld [vmem:[#allocation10 + $0x160] sm:$0xff]
        %v1906 = vld [vmem:[#allocation10 + $0x168] sm:$0xff]
        %v1907 = vld [vmem:[#allocation10 + $0x170] sm:$0xff]
        %v1908 = vld [vmem:[#allocation10 + $0x178] sm:$0xff]
        %v1909 = vld [vmem:[#allocation10 + $0x180] sm:$0xff]
        %v1910 = vld [vmem:[#allocation10 + $0x188] sm:$0xff]
        %v1911 = vld [vmem:[#allocation10 + $0x190] sm:$0xff]
        %v1912 = vld [vmem:[#allocation10 + $0x198] sm:$0xff]
        %v1913 = vld [vmem:[#allocation10 + $0x1a0] sm:$0xff]
        %v1914 = vld [vmem:[#allocation10 + $0x1a8] sm:$0xff]
        %v1915 = vld [vmem:[#allocation10 + $0x1b0] sm:$0xff]
        %v1916 = vld [vmem:[#allocation10 + $0x1b8] sm:$0xff]
        %v1917 = vld [vmem:[#allocation10 + $0x1c0] sm:$0xff]
        %v1918 = vld [vmem:[#allocation10 + $0x1c8] sm:$0xff]
        %v1919 = vld [vmem:[#allocation10 + $0x1d0] sm:$0xff]
        %v1920 = vld [vmem:[#allocation10 + $0x1d8] sm:$0xff]
        %v1921 = vld [vmem:[#allocation10 + $0x1e0] sm:$0xff]
        %v1922 = vld [vmem:[#allocation10 + $0x1e8] sm:$0xff]
        %v1923 = vld [vmem:[#allocation10 + $0x1f0] sm:$0xff]
        %v1924 = vld [vmem:[#allocation10 + $0x1f8] sm:$0xff]
        %1925 = vst [vmem:[#allocation1] ss:$2 sm:$0xff] %v426
        %v1926 = vld.sshfl [vmem:[#allocation1] sm:$0xff pattern:$0x75316420]
        %v1927 = vld.sshfl [vmem:[#allocation1 + $0x8] sm:$0xff pattern:$0x75316420]
        %v1930 = vand.u32 %v1891, 4294901760
        %1931 = vmatpush.msra.mxu0 %v1930
        %v1932 = vand.u32 %v1889, 4294901760
        %1933 = vmatpush.msra.mxu0 %v1932
        %v1934 = vand.u32 %v1887, 4294901760
        %1935 = vmatpush.msra.mxu0 %v1934
        %v1936 = vand.u32 %v1885, 4294901760
        %1937 = vmatpush.msra.mxu0 %v1936
        %v1938 = vand.u32 %v1883, 4294901760
        %1939 = vmatpush.msra.mxu0 %v1938
        %v1940 = vand.u32 %v1881, 4294901760
        %1941 = vmatpush.msra.mxu0 %v1940
        %v1942 = vand.u32 %v1879, 4294901760
        %1943 = vmatpush.msra.mxu0 %v1942
        %v1944 = vand.u32 %v1877, 4294901760
        %1945 = vmatpush.msra.mxu0 %v1944
        %v1946 = vand.u32 %v1875, 4294901760
        %1947 = vmatpush.msra.mxu0 %v1946
        %v1948 = vand.u32 %v1873, 4294901760
        %1949 = vmatpush.msra.mxu0 %v1948
        %v1950 = vand.u32 %v1871, 4294901760
        %1951 = vmatpush.msra.mxu0 %v1950
        %v1952 = vand.u32 %v1869, 4294901760
        %1953 = vmatpush.msra.mxu0 %v1952
        %v1954 = vand.u32 %v1867, 4294901760
        %1955 = vmatpush.msra.mxu0 %v1954
        %v1956 = vand.u32 %v1865, 4294901760
        %1957 = vmatpush.msra.mxu0 %v1956
        %v1958 = vand.u32 %v1863, 4294901760
        %1959 = vmatpush.msra.mxu0 %v1958
        %v1960 = vand.u32 %v1861, 4294901760
        %1961 = vmatpush.msra.mxu0 %v1960
        %v1962 = vand.u32 %v1926, 4294901760
        %v1963 = vsub.f32 %v1926, %v1962
        %v1964 = vand.u32 %v1963, 4294901760
        %v1965 = vsub.f32 %v1963, %v1964
        %v1966 = vand.u32 %v1965, 4294901760
        %1967 = vmatmul.f32.gmra.mxu0 %v1966
        %v1968 = vpop.f32.mrf.mxu0
        %v1969 = vadd.f32 0.0, %v1968
        %1970 = vdwg.mxu0
        %v1971 = vand.u32 %v1891, 4294901760
        %v1972 = vsub.f32 %v1891, %v1971
        %v1973 = vand.u32 %v1972, 4294901760
        %v1974 = vsub.f32 %v1972, %v1973
        %v1975 = vand.u32 %v1974, 4294901760
        %1976 = vmatpush.msra.mxu0 %v1975
        %v1977 = vand.u32 %v1889, 4294901760
        %v1978 = vsub.f32 %v1889, %v1977
        %v1979 = vand.u32 %v1978, 4294901760
        %v1980 = vsub.f32 %v1978, %v1979
        %v1981 = vand.u32 %v1980, 4294901760
        %1982 = vmatpush.msra.mxu0 %v1981
        %v1983 = vand.u32 %v1887, 4294901760
        %v1984 = vsub.f32 %v1887, %v1983
        %v1985 = vand.u32 %v1984, 4294901760
        %v1986 = vsub.f32 %v1984, %v1985
        %v1987 = vand.u32 %v1986, 4294901760
        %1988 = vmatpush.msra.mxu0 %v1987
        %v1989 = vand.u32 %v1885, 4294901760
        %v1990 = vsub.f32 %v1885, %v1989
        %v1991 = vand.u32 %v1990, 4294901760
        %v1992 = vsub.f32 %v1990, %v1991
        %v1993 = vand.u32 %v1992, 4294901760
        %1994 = vmatpush.msra.mxu0 %v1993
        %v1995 = vand.u32 %v1883, 4294901760
        %v1996 = vsub.f32 %v1883, %v1995
        %v1997 = vand.u32 %v1996, 4294901760
        %v1998 = vsub.f32 %v1996, %v1997
        %v1999 = vand.u32 %v1998, 4294901760
        %2000 = vmatpush.msra.mxu0 %v1999
        %v2001 = vand.u32 %v1881, 4294901760
        %v2002 = vsub.f32 %v1881, %v2001
        %v2003 = vand.u32 %v2002, 4294901760
        %v2004 = vsub.f32 %v2002, %v2003
        %v2005 = vand.u32 %v2004, 4294901760
        %2006 = vmatpush.msra.mxu0 %v2005
        %v2007 = vand.u32 %v1879, 4294901760
        %v2008 = vsub.f32 %v1879, %v2007
        %v2009 = vand.u32 %v2008, 4294901760
        %v2010 = vsub.f32 %v2008, %v2009
        %v2011 = vand.u32 %v2010, 4294901760
        %2012 = vmatpush.msra.mxu0 %v2011
        %v2013 = vand.u32 %v1877, 4294901760
        %v2014 = vsub.f32 %v1877, %v2013
        %v2015 = vand.u32 %v2014, 4294901760
        %v2016 = vsub.f32 %v2014, %v2015
        %v2017 = vand.u32 %v2016, 4294901760
        %2018 = vmatpush.msra.mxu0 %v2017
        %v2019 = vand.u32 %v1875, 4294901760
        %v2020 = vsub.f32 %v1875, %v2019
        %v2021 = vand.u32 %v2020, 4294901760
        %v2022 = vsub.f32 %v2020, %v2021
        %v2023 = vand.u32 %v2022, 4294901760
        %2024 = vmatpush.msra.mxu0 %v2023
        %v2025 = vand.u32 %v1873, 4294901760
        %v2026 = vsub.f32 %v1873, %v2025
        %v2027 = vand.u32 %v2026, 4294901760
        %v2028 = vsub.f32 %v2026, %v2027
        %v2029 = vand.u32 %v2028, 4294901760
        %2030 = vmatpush.msra.mxu0 %v2029
        %v2031 = vand.u32 %v1871, 4294901760
        %v2032 = vsub.f32 %v1871, %v2031
        %v2033 = vand.u32 %v2032, 4294901760
        %v2034 = vsub.f32 %v2032, %v2033
        %v2035 = vand.u32 %v2034, 4294901760
        %2036 = vmatpush.msra.mxu0 %v2035
        %v2037 = vand.u32 %v1869, 4294901760
        %v2038 = vsub.f32 %v1869, %v2037
        %v2039 = vand.u32 %v2038, 4294901760
        %v2040 = vsub.f32 %v2038, %v2039
        %v2041 = vand.u32 %v2040, 4294901760
        %2042 = vmatpush.msra.mxu0 %v2041
        %v2043 = vand.u32 %v1867, 4294901760
        %v2044 = vsub.f32 %v1867, %v2043
        %v2045 = vand.u32 %v2044, 4294901760
        %v2046 = vsub.f32 %v2044, %v2045
        %v2047 = vand.u32 %v2046, 4294901760
        %2048 = vmatpush.msra.mxu0 %v2047
        %v2049 = vand.u32 %v1865, 4294901760
        %v2050 = vsub.f32 %v1865, %v2049
        %v2051 = vand.u32 %v2050, 4294901760
        %v2052 = vsub.f32 %v2050, %v2051
        %v2053 = vand.u32 %v2052, 4294901760
        %2054 = vmatpush.msra.mxu0 %v2053
        %v2055 = vand.u32 %v1863, 4294901760
        %v2056 = vsub.f32 %v1863, %v2055
        %v2057 = vand.u32 %v2056, 4294901760
        %v2058 = vsub.f32 %v2056, %v2057
        %v2059 = vand.u32 %v2058, 4294901760
        %2060 = vmatpush.msra.mxu0 %v2059
        %v2061 = vand.u32 %v1861, 4294901760
        %v2062 = vsub.f32 %v1861, %v2061
        %v2063 = vand.u32 %v2062, 4294901760
        %v2064 = vsub.f32 %v2062, %v2063
        %v2065 = vand.u32 %v2064, 4294901760
        %2066 = vmatpush.msra.mxu0 %v2065
        %v2067 = vand.u32 %v1926, 4294901760
        %2068 = vmatmul.f32.gmra.mxu0 %v2067
        %v2069 = vpop.f32.mrf.mxu0
        %v2070 = vadd.f32 %v1969, %v2069
        %2071 = vdwg.mxu0
        %v2072 = vand.u32 %v1891, 4294901760
        %v2073 = vsub.f32 %v1891, %v2072
        %2074 = vmatpush.msra.mxu0 %v2073
        %v2075 = vand.u32 %v1889, 4294901760
        %v2076 = vsub.f32 %v1889, %v2075
        %2077 = vmatpush.msra.mxu0 %v2076
        %v2078 = vand.u32 %v1887, 4294901760
        %v2079 = vsub.f32 %v1887, %v2078
        %2080 = vmatpush.msra.mxu0 %v2079
        %v2081 = vand.u32 %v1885, 4294901760
        %v2082 = vsub.f32 %v1885, %v2081
        %2083 = vmatpush.msra.mxu0 %v2082
        %v2084 = vand.u32 %v1883, 4294901760
        %v2085 = vsub.f32 %v1883, %v2084
        %2086 = vmatpush.msra.mxu0 %v2085
        %v2087 = vand.u32 %v1881, 4294901760
        %v2088 = vsub.f32 %v1881, %v2087
        %2089 = vmatpush.msra.mxu0 %v2088
        %v2090 = vand.u32 %v1879, 4294901760
        %v2091 = vsub.f32 %v1879, %v2090
        %2092 = vmatpush.msra.mxu0 %v2091
        %v2093 = vand.u32 %v1877, 4294901760
        %v2094 = vsub.f32 %v1877, %v2093
        %2095 = vmatpush.msra.mxu0 %v2094
        %v2096 = vand.u32 %v1875, 4294901760
        %v2097 = vsub.f32 %v1875, %v2096
        %2098 = vmatpush.msra.mxu0 %v2097
        %v2099 = vand.u32 %v1873, 4294901760
        %v2100 = vsub.f32 %v1873, %v2099
        %2101 = vmatpush.msra.mxu0 %v2100
        %v2102 = vand.u32 %v1871, 4294901760
        %v2103 = vsub.f32 %v1871, %v2102
        %2104 = vmatpush.msra.mxu0 %v2103
        %v2105 = vand.u32 %v1869, 4294901760
        %v2106 = vsub.f32 %v1869, %v2105
        %2107 = vmatpush.msra.mxu0 %v2106
        %v2108 = vand.u32 %v1867, 4294901760
        %v2109 = vsub.f32 %v1867, %v2108
        %2110 = vmatpush.msra.mxu0 %v2109
        %v2111 = vand.u32 %v1865, 4294901760
        %v2112 = vsub.f32 %v1865, %v2111
        %2113 = vmatpush.msra.mxu0 %v2112
        %v2114 = vand.u32 %v1863, 4294901760
        %v2115 = vsub.f32 %v1863, %v2114
        %2116 = vmatpush.msra.mxu0 %v2115
        %v2117 = vand.u32 %v1861, 4294901760
        %v2118 = vsub.f32 %v1861, %v2117
        %2119 = vmatpush.msra.mxu0 %v2118
        %v2120 = vand.u32 %v1926, 4294901760
        %v2121 = vsub.f32 %v1926, %v2120
        %2122 = vmatmul.f32.gmra.mxu0 %v2121
        %v2123 = vpop.f32.mrf.mxu0
        %v2124 = vadd.f32 %v2070, %v2123
        %2125 = vdwg.mxu0
        %v2126 = vand.u32 %v1891, 4294901760
        %2127 = vmatpush.msra.mxu0 %v2126
        %v2128 = vand.u32 %v1889, 4294901760
        %2129 = vmatpush.msra.mxu0 %v2128
        %v2130 = vand.u32 %v1887, 4294901760
        %2131 = vmatpush.msra.mxu0 %v2130
        %v2132 = vand.u32 %v1885, 4294901760
        %2133 = vmatpush.msra.mxu0 %v2132
        %v2134 = vand.u32 %v1883, 4294901760
        %2135 = vmatpush.msra.mxu0 %v2134
        %v2136 = vand.u32 %v1881, 4294901760
        %2137 = vmatpush.msra.mxu0 %v2136
        %v2138 = vand.u32 %v1879, 4294901760
        %2139 = vmatpush.msra.mxu0 %v2138
        %v2140 = vand.u32 %v1877, 4294901760
        %2141 = vmatpush.msra.mxu0 %v2140
        %v2142 = vand.u32 %v1875, 4294901760
        %2143 = vmatpush.msra.mxu0 %v2142
        %v2144 = vand.u32 %v1873, 4294901760
        %2145 = vmatpush.msra.mxu0 %v2144
        %v2146 = vand.u32 %v1871, 4294901760
        %2147 = vmatpush.msra.mxu0 %v2146
        %v2148 = vand.u32 %v1869, 4294901760
        %2149 = vmatpush.msra.mxu0 %v2148
        %v2150 = vand.u32 %v1867, 4294901760
        %2151 = vmatpush.msra.mxu0 %v2150
        %v2152 = vand.u32 %v1865, 4294901760
        %2153 = vmatpush.msra.mxu0 %v2152
        %v2154 = vand.u32 %v1863, 4294901760
        %2155 = vmatpush.msra.mxu0 %v2154
        %v2156 = vand.u32 %v1861, 4294901760
        %2157 = vmatpush.msra.mxu0 %v2156
        %v2158 = vand.u32 %v1926, 4294901760
        %v2159 = vsub.f32 %v1926, %v2158
        %v2160 = vand.u32 %v2159, 4294901760
        %2161 = vmatmul.f32.gmra.mxu0 %v2160
        %v2162 = vpop.f32.mrf.mxu0
        %v2163 = vadd.f32 %v2124, %v2162
        %2164 = vdwg.mxu0
        %v2165 = vand.u32 %v1891, 4294901760
        %v2166 = vsub.f32 %v1891, %v2165
        %v2167 = vand.u32 %v2166, 4294901760
        %2168 = vmatpush.msra.mxu0 %v2167
        %v2169 = vand.u32 %v1889, 4294901760
        %v2170 = vsub.f32 %v1889, %v2169
        %v2171 = vand.u32 %v2170, 4294901760
        %2172 = vmatpush.msra.mxu0 %v2171
        %v2173 = vand.u32 %v1887, 4294901760
        %v2174 = vsub.f32 %v1887, %v2173
        %v2175 = vand.u32 %v2174, 4294901760
        %2176 = vmatpush.msra.mxu0 %v2175
        %v2177 = vand.u32 %v1885, 4294901760
        %v2178 = vsub.f32 %v1885, %v2177
        %v2179 = vand.u32 %v2178, 4294901760
        %2180 = vmatpush.msra.mxu0 %v2179
        %v2181 = vand.u32 %v1883, 4294901760
        %v2182 = vsub.f32 %v1883, %v2181
        %v2183 = vand.u32 %v2182, 4294901760
        %2184 = vmatpush.msra.mxu0 %v2183
        %v2185 = vand.u32 %v1881, 4294901760
        %v2186 = vsub.f32 %v1881, %v2185
        %v2187 = vand.u32 %v2186, 4294901760
        %2188 = vmatpush.msra.mxu0 %v2187
        %v2189 = vand.u32 %v1879, 4294901760
        %v2190 = vsub.f32 %v1879, %v2189
        %v2191 = vand.u32 %v2190, 4294901760
        %2192 = vmatpush.msra.mxu0 %v2191
        %v2193 = vand.u32 %v1877, 4294901760
        %v2194 = vsub.f32 %v1877, %v2193
        %v2195 = vand.u32 %v2194, 4294901760
        %2196 = vmatpush.msra.mxu0 %v2195
        %v2197 = vand.u32 %v1875, 4294901760
        %v2198 = vsub.f32 %v1875, %v2197
        %v2199 = vand.u32 %v2198, 4294901760
        %2200 = vmatpush.msra.mxu0 %v2199
        %v2201 = vand.u32 %v1873, 4294901760
        %v2202 = vsub.f32 %v1873, %v2201
        %v2203 = vand.u32 %v2202, 4294901760
        %2204 = vmatpush.msra.mxu0 %v2203
        %v2205 = vand.u32 %v1871, 4294901760
        %v2206 = vsub.f32 %v1871, %v2205
        %v2207 = vand.u32 %v2206, 4294901760
        %2208 = vmatpush.msra.mxu0 %v2207
        %v2209 = vand.u32 %v1869, 4294901760
        %v2210 = vsub.f32 %v1869, %v2209
        %v2211 = vand.u32 %v2210, 4294901760
        %2212 = vmatpush.msra.mxu0 %v2211
        %v2213 = vand.u32 %v1867, 4294901760
        %v2214 = vsub.f32 %v1867, %v2213
        %v2215 = vand.u32 %v2214, 4294901760
        %2216 = vmatpush.msra.mxu0 %v2215
        %v2217 = vand.u32 %v1865, 4294901760
        %v2218 = vsub.f32 %v1865, %v2217
        %v2219 = vand.u32 %v2218, 4294901760
        %2220 = vmatpush.msra.mxu0 %v2219
        %v2221 = vand.u32 %v1863, 4294901760
        %v2222 = vsub.f32 %v1863, %v2221
        %v2223 = vand.u32 %v2222, 4294901760
        %2224 = vmatpush.msra.mxu0 %v2223
        %v2225 = vand.u32 %v1861, 4294901760
        %v2226 = vsub.f32 %v1861, %v2225
        %v2227 = vand.u32 %v2226, 4294901760
        %2228 = vmatpush.msra.mxu0 %v2227
        %v2229 = vand.u32 %v1926, 4294901760
        %2230 = vmatmul.f32.gmra.mxu0 %v2229
        %v2231 = vpop.f32.mrf.mxu0
        %v2232 = vadd.f32 %v2163, %v2231
        %2233 = vdwg.mxu0
        %v2234 = vand.u32 %v1891, 4294901760
        %2235 = vmatpush.msra.mxu0 %v2234
        %v2236 = vand.u32 %v1889, 4294901760
        %2237 = vmatpush.msra.mxu0 %v2236
        %v2238 = vand.u32 %v1887, 4294901760
        %2239 = vmatpush.msra.mxu0 %v2238
        %v2240 = vand.u32 %v1885, 4294901760
        %2241 = vmatpush.msra.mxu0 %v2240
        %v2242 = vand.u32 %v1883, 4294901760
        %2243 = vmatpush.msra.mxu0 %v2242
        %v2244 = vand.u32 %v1881, 4294901760
        %2245 = vmatpush.msra.mxu0 %v2244
        %v2246 = vand.u32 %v1879, 4294901760
        %2247 = vmatpush.msra.mxu0 %v2246
        %v2248 = vand.u32 %v1877, 4294901760
        %2249 = vmatpush.msra.mxu0 %v2248
        %v2250 = vand.u32 %v1875, 4294901760
        %2251 = vmatpush.msra.mxu0 %v2250
        %v2252 = vand.u32 %v1873, 4294901760
        %2253 = vmatpush.msra.mxu0 %v2252
        %v2254 = vand.u32 %v1871, 4294901760
        %2255 = vmatpush.msra.mxu0 %v2254
        %v2256 = vand.u32 %v1869, 4294901760
        %2257 = vmatpush.msra.mxu0 %v2256
        %v2258 = vand.u32 %v1867, 4294901760
        %2259 = vmatpush.msra.mxu0 %v2258
        %v2260 = vand.u32 %v1865, 4294901760
        %2261 = vmatpush.msra.mxu0 %v2260
        %v2262 = vand.u32 %v1863, 4294901760
        %2263 = vmatpush.msra.mxu0 %v2262
        %v2264 = vand.u32 %v1861, 4294901760
        %2265 = vmatpush.msra.mxu0 %v2264
        %v2266 = vand.u32 %v1926, 4294901760
        %2267 = vmatmul.f32.gmra.mxu0 %v2266
        %v2268 = vpop.f32.mrf.mxu0
        %v2269 = vadd.f32 %v2232, %v2268
        %2270 = vdwg.mxu0
        %v2271 = vand.u32 %v1923, 4294901760
        %2272 = vmatpush.msra.mxu0 %v2271
        %v2273 = vand.u32 %v1921, 4294901760
        %2274 = vmatpush.msra.mxu0 %v2273
        %v2275 = vand.u32 %v1919, 4294901760
        %2276 = vmatpush.msra.mxu0 %v2275
        %v2277 = vand.u32 %v1917, 4294901760
        %2278 = vmatpush.msra.mxu0 %v2277
        %v2279 = vand.u32 %v1915, 4294901760
        %2280 = vmatpush.msra.mxu0 %v2279
        %v2281 = vand.u32 %v1913, 4294901760
        %2282 = vmatpush.msra.mxu0 %v2281
        %v2283 = vand.u32 %v1911, 4294901760
        %2284 = vmatpush.msra.mxu0 %v2283
        %v2285 = vand.u32 %v1909, 4294901760
        %2286 = vmatpush.msra.mxu0 %v2285
        %v2287 = vand.u32 %v1907, 4294901760
        %2288 = vmatpush.msra.mxu0 %v2287
        %v2289 = vand.u32 %v1905, 4294901760
        %2290 = vmatpush.msra.mxu0 %v2289
        %v2291 = vand.u32 %v1903, 4294901760
        %2292 = vmatpush.msra.mxu0 %v2291
        %v2293 = vand.u32 %v1901, 4294901760
        %2294 = vmatpush.msra.mxu0 %v2293
        %v2295 = vand.u32 %v1899, 4294901760
        %2296 = vmatpush.msra.mxu0 %v2295
        %v2297 = vand.u32 %v1897, 4294901760
        %2298 = vmatpush.msra.mxu0 %v2297
        %v2299 = vand.u32 %v1895, 4294901760
        %2300 = vmatpush.msra.mxu0 %v2299
        %v2301 = vand.u32 %v1893, 4294901760
        %2302 = vmatpush.msra.mxu0 %v2301
        %v2303 = vand.u32 %v1927, 4294901760
        %v2304 = vsub.f32 %v1927, %v2303
        %v2305 = vand.u32 %v2304, 4294901760
        %v2306 = vsub.f32 %v2304, %v2305
        %v2307 = vand.u32 %v2306, 4294901760
        %2308 = vmatmul.f32.gmra.mxu0 %v2307
        %v2309 = vpop.f32.mrf.mxu0
        %v2310 = vadd.f32 %v2269, %v2309
        %2311 = vdwg.mxu0
        %v2312 = vand.u32 %v1923, 4294901760
        %v2313 = vsub.f32 %v1923, %v2312
        %v2314 = vand.u32 %v2313, 4294901760
        %v2315 = vsub.f32 %v2313, %v2314
        %v2316 = vand.u32 %v2315, 4294901760
        %2317 = vmatpush.msra.mxu0 %v2316
        %v2318 = vand.u32 %v1921, 4294901760
        %v2319 = vsub.f32 %v1921, %v2318
        %v2320 = vand.u32 %v2319, 4294901760
        %v2321 = vsub.f32 %v2319, %v2320
        %v2322 = vand.u32 %v2321, 4294901760
        %2323 = vmatpush.msra.mxu0 %v2322
        %v2324 = vand.u32 %v1919, 4294901760
        %v2325 = vsub.f32 %v1919, %v2324
        %v2326 = vand.u32 %v2325, 4294901760
        %v2327 = vsub.f32 %v2325, %v2326
        %v2328 = vand.u32 %v2327, 4294901760
        %2329 = vmatpush.msra.mxu0 %v2328
        %v2330 = vand.u32 %v1917, 4294901760
        %v2331 = vsub.f32 %v1917, %v2330
        %v2332 = vand.u32 %v2331, 4294901760
        %v2333 = vsub.f32 %v2331, %v2332
        %v2334 = vand.u32 %v2333, 4294901760
        %2335 = vmatpush.msra.mxu0 %v2334
        %v2336 = vand.u32 %v1915, 4294901760
        %v2337 = vsub.f32 %v1915, %v2336
        %v2338 = vand.u32 %v2337, 4294901760
        %v2339 = vsub.f32 %v2337, %v2338
        %v2340 = vand.u32 %v2339, 4294901760
        %2341 = vmatpush.msra.mxu0 %v2340
        %v2342 = vand.u32 %v1913, 4294901760
        %v2343 = vsub.f32 %v1913, %v2342
        %v2344 = vand.u32 %v2343, 4294901760
        %v2345 = vsub.f32 %v2343, %v2344
        %v2346 = vand.u32 %v2345, 4294901760
        %2347 = vmatpush.msra.mxu0 %v2346
        %v2348 = vand.u32 %v1911, 4294901760
        %v2349 = vsub.f32 %v1911, %v2348
        %v2350 = vand.u32 %v2349, 4294901760
        %v2351 = vsub.f32 %v2349, %v2350
        %v2352 = vand.u32 %v2351, 4294901760
        %2353 = vmatpush.msra.mxu0 %v2352
        %v2354 = vand.u32 %v1909, 4294901760
        %v2355 = vsub.f32 %v1909, %v2354
        %v2356 = vand.u32 %v2355, 4294901760
        %v2357 = vsub.f32 %v2355, %v2356
        %v2358 = vand.u32 %v2357, 4294901760
        %2359 = vmatpush.msra.mxu0 %v2358
        %v2360 = vand.u32 %v1907, 4294901760
        %v2361 = vsub.f32 %v1907, %v2360
        %v2362 = vand.u32 %v2361, 4294901760
        %v2363 = vsub.f32 %v2361, %v2362
        %v2364 = vand.u32 %v2363, 4294901760
        %2365 = vmatpush.msra.mxu0 %v2364
        %v2366 = vand.u32 %v1905, 4294901760
        %v2367 = vsub.f32 %v1905, %v2366
        %v2368 = vand.u32 %v2367, 4294901760
        %v2369 = vsub.f32 %v2367, %v2368
        %v2370 = vand.u32 %v2369, 4294901760
        %2371 = vmatpush.msra.mxu0 %v2370
        %v2372 = vand.u32 %v1903, 4294901760
        %v2373 = vsub.f32 %v1903, %v2372
        %v2374 = vand.u32 %v2373, 4294901760
        %v2375 = vsub.f32 %v2373, %v2374
        %v2376 = vand.u32 %v2375, 4294901760
        %2377 = vmatpush.msra.mxu0 %v2376
        %v2378 = vand.u32 %v1901, 4294901760
        %v2379 = vsub.f32 %v1901, %v2378
        %v2380 = vand.u32 %v2379, 4294901760
        %v2381 = vsub.f32 %v2379, %v2380
        %v2382 = vand.u32 %v2381, 4294901760
        %2383 = vmatpush.msra.mxu0 %v2382
        %v2384 = vand.u32 %v1899, 4294901760
        %v2385 = vsub.f32 %v1899, %v2384
        %v2386 = vand.u32 %v2385, 4294901760
        %v2387 = vsub.f32 %v2385, %v2386
        %v2388 = vand.u32 %v2387, 4294901760
        %2389 = vmatpush.msra.mxu0 %v2388
        %v2390 = vand.u32 %v1897, 4294901760
        %v2391 = vsub.f32 %v1897, %v2390
        %v2392 = vand.u32 %v2391, 4294901760
        %v2393 = vsub.f32 %v2391, %v2392
        %v2394 = vand.u32 %v2393, 4294901760
        %2395 = vmatpush.msra.mxu0 %v2394
        %v2396 = vand.u32 %v1895, 4294901760
        %v2397 = vsub.f32 %v1895, %v2396
        %v2398 = vand.u32 %v2397, 4294901760
        %v2399 = vsub.f32 %v2397, %v2398
        %v2400 = vand.u32 %v2399, 4294901760
        %2401 = vmatpush.msra.mxu0 %v2400
        %v2402 = vand.u32 %v1893, 4294901760
        %v2403 = vsub.f32 %v1893, %v2402
        %v2404 = vand.u32 %v2403, 4294901760
        %v2405 = vsub.f32 %v2403, %v2404
        %v2406 = vand.u32 %v2405, 4294901760
        %2407 = vmatpush.msra.mxu0 %v2406
        %v2408 = vand.u32 %v1927, 4294901760
        %2409 = vmatmul.f32.gmra.mxu0 %v2408
        %v2410 = vpop.f32.mrf.mxu0
        %v2411 = vadd.f32 %v2310, %v2410
        %2412 = vdwg.mxu0
        %v2413 = vand.u32 %v1923, 4294901760
        %v2414 = vsub.f32 %v1923, %v2413
        %2415 = vmatpush.msra.mxu0 %v2414
        %v2416 = vand.u32 %v1921, 4294901760
        %v2417 = vsub.f32 %v1921, %v2416
        %2418 = vmatpush.msra.mxu0 %v2417
        %v2419 = vand.u32 %v1919, 4294901760
        %v2420 = vsub.f32 %v1919, %v2419
        %2421 = vmatpush.msra.mxu0 %v2420
        %v2422 = vand.u32 %v1917, 4294901760
        %v2423 = vsub.f32 %v1917, %v2422
        %2424 = vmatpush.msra.mxu0 %v2423
        %v2425 = vand.u32 %v1915, 4294901760
        %v2426 = vsub.f32 %v1915, %v2425
        %2427 = vmatpush.msra.mxu0 %v2426
        %v2428 = vand.u32 %v1913, 4294901760
        %v2429 = vsub.f32 %v1913, %v2428
        %2430 = vmatpush.msra.mxu0 %v2429
        %v2431 = vand.u32 %v1911, 4294901760
        %v2432 = vsub.f32 %v1911, %v2431
        %2433 = vmatpush.msra.mxu0 %v2432
        %v2434 = vand.u32 %v1909, 4294901760
        %v2435 = vsub.f32 %v1909, %v2434
        %2436 = vmatpush.msra.mxu0 %v2435
        %v2437 = vand.u32 %v1907, 4294901760
        %v2438 = vsub.f32 %v1907, %v2437
        %2439 = vmatpush.msra.mxu0 %v2438
        %v2440 = vand.u32 %v1905, 4294901760
        %v2441 = vsub.f32 %v1905, %v2440
        %2442 = vmatpush.msra.mxu0 %v2441
        %v2443 = vand.u32 %v1903, 4294901760
        %v2444 = vsub.f32 %v1903, %v2443
        %2445 = vmatpush.msra.mxu0 %v2444
        %v2446 = vand.u32 %v1901, 4294901760
        %v2447 = vsub.f32 %v1901, %v2446
        %2448 = vmatpush.msra.mxu0 %v2447
        %v2449 = vand.u32 %v1899, 4294901760
        %v2450 = vsub.f32 %v1899, %v2449
        %2451 = vmatpush.msra.mxu0 %v2450
        %v2452 = vand.u32 %v1897, 4294901760
        %v2453 = vsub.f32 %v1897, %v2452
        %2454 = vmatpush.msra.mxu0 %v2453
        %v2455 = vand.u32 %v1895, 4294901760
        %v2456 = vsub.f32 %v1895, %v2455
        %2457 = vmatpush.msra.mxu0 %v2456
        %v2458 = vand.u32 %v1893, 4294901760
        %v2459 = vsub.f32 %v1893, %v2458
        %2460 = vmatpush.msra.mxu0 %v2459
        %v2461 = vand.u32 %v1927, 4294901760
        %v2462 = vsub.f32 %v1927, %v2461
        %2463 = vmatmul.f32.gmra.mxu0 %v2462
        %v2464 = vpop.f32.mrf.mxu0
        %v2465 = vadd.f32 %v2411, %v2464
        %2466 = vdwg.mxu0
        %v2467 = vand.u32 %v1923, 4294901760
        %2468 = vmatpush.msra.mxu0 %v2467
        %v2469 = vand.u32 %v1921, 4294901760
        %2470 = vmatpush.msra.mxu0 %v2469
        %v2471 = vand.u32 %v1919, 4294901760
        %2472 = vmatpush.msra.mxu0 %v2471
        %v2473 = vand.u32 %v1917, 4294901760
        %2474 = vmatpush.msra.mxu0 %v2473
        %v2475 = vand.u32 %v1915, 4294901760
        %2476 = vmatpush.msra.mxu0 %v2475
        %v2477 = vand.u32 %v1913, 4294901760
        %2478 = vmatpush.msra.mxu0 %v2477
        %v2479 = vand.u32 %v1911, 4294901760
        %2480 = vmatpush.msra.mxu0 %v2479
        %v2481 = vand.u32 %v1909, 4294901760
        %2482 = vmatpush.msra.mxu0 %v2481
        %v2483 = vand.u32 %v1907, 4294901760
        %2484 = vmatpush.msra.mxu0 %v2483
        %v2485 = vand.u32 %v1905, 4294901760
        %2486 = vmatpush.msra.mxu0 %v2485
        %v2487 = vand.u32 %v1903, 4294901760
        %2488 = vmatpush.msra.mxu0 %v2487
        %v2489 = vand.u32 %v1901, 4294901760
        %2490 = vmatpush.msra.mxu0 %v2489
        %v2491 = vand.u32 %v1899, 4294901760
        %2492 = vmatpush.msra.mxu0 %v2491
        %v2493 = vand.u32 %v1897, 4294901760
        %2494 = vmatpush.msra.mxu0 %v2493
        %v2495 = vand.u32 %v1895, 4294901760
        %2496 = vmatpush.msra.mxu0 %v2495
        %v2497 = vand.u32 %v1893, 4294901760
        %2498 = vmatpush.msra.mxu0 %v2497
        %v2499 = vand.u32 %v1927, 4294901760
        %v2500 = vsub.f32 %v1927, %v2499
        %v2501 = vand.u32 %v2500, 4294901760
        %2502 = vmatmul.f32.gmra.mxu0 %v2501
        %v2503 = vpop.f32.mrf.mxu0
        %v2504 = vadd.f32 %v2465, %v2503
        %2505 = vdwg.mxu0
        %v2506 = vand.u32 %v1923, 4294901760
        %v2507 = vsub.f32 %v1923, %v2506
        %v2508 = vand.u32 %v2507, 4294901760
        %2509 = vmatpush.msra.mxu0 %v2508
        %v2510 = vand.u32 %v1921, 4294901760
        %v2511 = vsub.f32 %v1921, %v2510
        %v2512 = vand.u32 %v2511, 4294901760
        %2513 = vmatpush.msra.mxu0 %v2512
        %v2514 = vand.u32 %v1919, 4294901760
        %v2515 = vsub.f32 %v1919, %v2514
        %v2516 = vand.u32 %v2515, 4294901760
        %2517 = vmatpush.msra.mxu0 %v2516
        %v2518 = vand.u32 %v1917, 4294901760
        %v2519 = vsub.f32 %v1917, %v2518
        %v2520 = vand.u32 %v2519, 4294901760
        %2521 = vmatpush.msra.mxu0 %v2520
        %v2522 = vand.u32 %v1915, 4294901760
        %v2523 = vsub.f32 %v1915, %v2522
        %v2524 = vand.u32 %v2523, 4294901760
        %2525 = vmatpush.msra.mxu0 %v2524
        %v2526 = vand.u32 %v1913, 4294901760
        %v2527 = vsub.f32 %v1913, %v2526
        %v2528 = vand.u32 %v2527, 4294901760
        %2529 = vmatpush.msra.mxu0 %v2528
        %v2530 = vand.u32 %v1911, 4294901760
        %v2531 = vsub.f32 %v1911, %v2530
        %v2532 = vand.u32 %v2531, 4294901760
        %2533 = vmatpush.msra.mxu0 %v2532
        %v2534 = vand.u32 %v1909, 4294901760
        %v2535 = vsub.f32 %v1909, %v2534
        %v2536 = vand.u32 %v2535, 4294901760
        %2537 = vmatpush.msra.mxu0 %v2536
        %v2538 = vand.u32 %v1907, 4294901760
        %v2539 = vsub.f32 %v1907, %v2538
        %v2540 = vand.u32 %v2539, 4294901760
        %2541 = vmatpush.msra.mxu0 %v2540
        %v2542 = vand.u32 %v1905, 4294901760
        %v2543 = vsub.f32 %v1905, %v2542
        %v2544 = vand.u32 %v2543, 4294901760
        %2545 = vmatpush.msra.mxu0 %v2544
        %v2546 = vand.u32 %v1903, 4294901760
        %v2547 = vsub.f32 %v1903, %v2546
        %v2548 = vand.u32 %v2547, 4294901760
        %2549 = vmatpush.msra.mxu0 %v2548
        %v2550 = vand.u32 %v1901, 4294901760
        %v2551 = vsub.f32 %v1901, %v2550
        %v2552 = vand.u32 %v2551, 4294901760
        %2553 = vmatpush.msra.mxu0 %v2552
        %v2554 = vand.u32 %v1899, 4294901760
        %v2555 = vsub.f32 %v1899, %v2554
        %v2556 = vand.u32 %v2555, 4294901760
        %2557 = vmatpush.msra.mxu0 %v2556
        %v2558 = vand.u32 %v1897, 4294901760
        %v2559 = vsub.f32 %v1897, %v2558
        %v2560 = vand.u32 %v2559, 4294901760
        %2561 = vmatpush.msra.mxu0 %v2560
        %v2562 = vand.u32 %v1895, 4294901760
        %v2563 = vsub.f32 %v1895, %v2562
        %v2564 = vand.u32 %v2563, 4294901760
        %2565 = vmatpush.msra.mxu0 %v2564
        %v2566 = vand.u32 %v1893, 4294901760
        %v2567 = vsub.f32 %v1893, %v2566
        %v2568 = vand.u32 %v2567, 4294901760
        %2569 = vmatpush.msra.mxu0 %v2568
        %v2570 = vand.u32 %v1927, 4294901760
        %2571 = vmatmul.f32.gmra.mxu0 %v2570
        %v2572 = vpop.f32.mrf.mxu0
        %v2573 = vadd.f32 %v2504, %v2572
        %2574 = vdwg.mxu0
        %v2575 = vand.u32 %v1923, 4294901760
        %2576 = vmatpush.msra.mxu0 %v2575
        %v2577 = vand.u32 %v1921, 4294901760
        %2578 = vmatpush.msra.mxu0 %v2577
        %v2579 = vand.u32 %v1919, 4294901760
        %2580 = vmatpush.msra.mxu0 %v2579
        %v2581 = vand.u32 %v1917, 4294901760
        %2582 = vmatpush.msra.mxu0 %v2581
        %v2583 = vand.u32 %v1915, 4294901760
        %2584 = vmatpush.msra.mxu0 %v2583
        %v2585 = vand.u32 %v1913, 4294901760
        %2586 = vmatpush.msra.mxu0 %v2585
        %v2587 = vand.u32 %v1911, 4294901760
        %2588 = vmatpush.msra.mxu0 %v2587
        %v2589 = vand.u32 %v1909, 4294901760
        %2590 = vmatpush.msra.mxu0 %v2589
        %v2591 = vand.u32 %v1907, 4294901760
        %2592 = vmatpush.msra.mxu0 %v2591
        %v2593 = vand.u32 %v1905, 4294901760
        %2594 = vmatpush.msra.mxu0 %v2593
        %v2595 = vand.u32 %v1903, 4294901760
        %2596 = vmatpush.msra.mxu0 %v2595
        %v2597 = vand.u32 %v1901, 4294901760
        %2598 = vmatpush.msra.mxu0 %v2597
        %v2599 = vand.u32 %v1899, 4294901760
        %2600 = vmatpush.msra.mxu0 %v2599
        %v2601 = vand.u32 %v1897, 4294901760
        %2602 = vmatpush.msra.mxu0 %v2601
        %v2603 = vand.u32 %v1895, 4294901760
        %2604 = vmatpush.msra.mxu0 %v2603
        %v2605 = vand.u32 %v1893, 4294901760
        %2606 = vmatpush.msra.mxu0 %v2605
        %v2607 = vand.u32 %v1927, 4294901760
        %2608 = vmatmul.f32.gmra.mxu0 %v2607
        %v2609 = vpop.f32.mrf.mxu0
        %v2610 = vadd.f32 %v2573, %v2609
        %2611 = vdwg.mxu0
        %v2612 = vand.u32 %v1892, 4294901760
        %2613 = vmatpush.msra.mxu0 %v2612
        %v2614 = vand.u32 %v1890, 4294901760
        %2615 = vmatpush.msra.mxu0 %v2614
        %v2616 = vand.u32 %v1888, 4294901760
        %2617 = vmatpush.msra.mxu0 %v2616
        %v2618 = vand.u32 %v1886, 4294901760
        %2619 = vmatpush.msra.mxu0 %v2618
        %v2620 = vand.u32 %v1884, 4294901760
        %2621 = vmatpush.msra.mxu0 %v2620
        %v2622 = vand.u32 %v1882, 4294901760
        %2623 = vmatpush.msra.mxu0 %v2622
        %v2624 = vand.u32 %v1880, 4294901760
        %2625 = vmatpush.msra.mxu0 %v2624
        %v2626 = vand.u32 %v1878, 4294901760
        %2627 = vmatpush.msra.mxu0 %v2626
        %v2628 = vand.u32 %v1876, 4294901760
        %2629 = vmatpush.msra.mxu0 %v2628
        %v2630 = vand.u32 %v1874, 4294901760
        %2631 = vmatpush.msra.mxu0 %v2630
        %v2632 = vand.u32 %v1872, 4294901760
        %2633 = vmatpush.msra.mxu0 %v2632
        %v2634 = vand.u32 %v1870, 4294901760
        %2635 = vmatpush.msra.mxu0 %v2634
        %v2636 = vand.u32 %v1868, 4294901760
        %2637 = vmatpush.msra.mxu0 %v2636
        %v2638 = vand.u32 %v1866, 4294901760
        %2639 = vmatpush.msra.mxu0 %v2638
        %v2640 = vand.u32 %v1864, 4294901760
        %2641 = vmatpush.msra.mxu0 %v2640
        %v2642 = vand.u32 %v1862, 4294901760
        %2643 = vmatpush.msra.mxu0 %v2642
        %v2644 = vand.u32 %v1926, 4294901760
        %v2645 = vsub.f32 %v1926, %v2644
        %v2646 = vand.u32 %v2645, 4294901760
        %v2647 = vsub.f32 %v2645, %v2646
        %v2648 = vand.u32 %v2647, 4294901760
        %2649 = vmatmul.f32.gmra.mxu0 %v2648
        %v2650 = vpop.f32.mrf.mxu0
        %v2651 = vadd.f32 0.0, %v2650
        %2652 = vdwg.mxu0
        %v2653 = vand.u32 %v1892, 4294901760
        %v2654 = vsub.f32 %v1892, %v2653
        %v2655 = vand.u32 %v2654, 4294901760
        %v2656 = vsub.f32 %v2654, %v2655
        %v2657 = vand.u32 %v2656, 4294901760
        %2658 = vmatpush.msra.mxu0 %v2657
        %v2659 = vand.u32 %v1890, 4294901760
        %v2660 = vsub.f32 %v1890, %v2659
        %v2661 = vand.u32 %v2660, 4294901760
        %v2662 = vsub.f32 %v2660, %v2661
        %v2663 = vand.u32 %v2662, 4294901760
        %2664 = vmatpush.msra.mxu0 %v2663
        %v2665 = vand.u32 %v1888, 4294901760
        %v2666 = vsub.f32 %v1888, %v2665
        %v2667 = vand.u32 %v2666, 4294901760
        %v2668 = vsub.f32 %v2666, %v2667
        %v2669 = vand.u32 %v2668, 4294901760
        %2670 = vmatpush.msra.mxu0 %v2669
        %v2671 = vand.u32 %v1886, 4294901760
        %v2672 = vsub.f32 %v1886, %v2671
        %v2673 = vand.u32 %v2672, 4294901760
        %v2674 = vsub.f32 %v2672, %v2673
        %v2675 = vand.u32 %v2674, 4294901760
        %2676 = vmatpush.msra.mxu0 %v2675
        %v2677 = vand.u32 %v1884, 4294901760
        %v2678 = vsub.f32 %v1884, %v2677
        %v2679 = vand.u32 %v2678, 4294901760
        %v2680 = vsub.f32 %v2678, %v2679
        %v2681 = vand.u32 %v2680, 4294901760
        %2682 = vmatpush.msra.mxu0 %v2681
        %v2683 = vand.u32 %v1882, 4294901760
        %v2684 = vsub.f32 %v1882, %v2683
        %v2685 = vand.u32 %v2684, 4294901760
        %v2686 = vsub.f32 %v2684, %v2685
        %v2687 = vand.u32 %v2686, 4294901760
        %2688 = vmatpush.msra.mxu0 %v2687
        %v2689 = vand.u32 %v1880, 4294901760
        %v2690 = vsub.f32 %v1880, %v2689
        %v2691 = vand.u32 %v2690, 4294901760
        %v2692 = vsub.f32 %v2690, %v2691
        %v2693 = vand.u32 %v2692, 4294901760
        %2694 = vmatpush.msra.mxu0 %v2693
        %v2695 = vand.u32 %v1878, 4294901760
        %v2696 = vsub.f32 %v1878, %v2695
        %v2697 = vand.u32 %v2696, 4294901760
        %v2698 = vsub.f32 %v2696, %v2697
        %v2699 = vand.u32 %v2698, 4294901760
        %2700 = vmatpush.msra.mxu0 %v2699
        %v2701 = vand.u32 %v1876, 4294901760
        %v2702 = vsub.f32 %v1876, %v2701
        %v2703 = vand.u32 %v2702, 4294901760
        %v2704 = vsub.f32 %v2702, %v2703
        %v2705 = vand.u32 %v2704, 4294901760
        %2706 = vmatpush.msra.mxu0 %v2705
        %v2707 = vand.u32 %v1874, 4294901760
        %v2708 = vsub.f32 %v1874, %v2707
        %v2709 = vand.u32 %v2708, 4294901760
        %v2710 = vsub.f32 %v2708, %v2709
        %v2711 = vand.u32 %v2710, 4294901760
        %2712 = vmatpush.msra.mxu0 %v2711
        %v2713 = vand.u32 %v1872, 4294901760
        %v2714 = vsub.f32 %v1872, %v2713
        %v2715 = vand.u32 %v2714, 4294901760
        %v2716 = vsub.f32 %v2714, %v2715
        %v2717 = vand.u32 %v2716, 4294901760
        %2718 = vmatpush.msra.mxu0 %v2717
        %v2719 = vand.u32 %v1870, 4294901760
        %v2720 = vsub.f32 %v1870, %v2719
        %v2721 = vand.u32 %v2720, 4294901760
        %v2722 = vsub.f32 %v2720, %v2721
        %v2723 = vand.u32 %v2722, 4294901760
        %2724 = vmatpush.msra.mxu0 %v2723
        %v2725 = vand.u32 %v1868, 4294901760
        %v2726 = vsub.f32 %v1868, %v2725
        %v2727 = vand.u32 %v2726, 4294901760
        %v2728 = vsub.f32 %v2726, %v2727
        %v2729 = vand.u32 %v2728, 4294901760
        %2730 = vmatpush.msra.mxu0 %v2729
        %v2731 = vand.u32 %v1866, 4294901760
        %v2732 = vsub.f32 %v1866, %v2731
        %v2733 = vand.u32 %v2732, 4294901760
        %v2734 = vsub.f32 %v2732, %v2733
        %v2735 = vand.u32 %v2734, 4294901760
        %2736 = vmatpush.msra.mxu0 %v2735
        %v2737 = vand.u32 %v1864, 4294901760
        %v2738 = vsub.f32 %v1864, %v2737
        %v2739 = vand.u32 %v2738, 4294901760
        %v2740 = vsub.f32 %v2738, %v2739
        %v2741 = vand.u32 %v2740, 4294901760
        %2742 = vmatpush.msra.mxu0 %v2741
        %v2743 = vand.u32 %v1862, 4294901760
        %v2744 = vsub.f32 %v1862, %v2743
        %v2745 = vand.u32 %v2744, 4294901760
        %v2746 = vsub.f32 %v2744, %v2745
        %v2747 = vand.u32 %v2746, 4294901760
        %2748 = vmatpush.msra.mxu0 %v2747
        %v2749 = vand.u32 %v1926, 4294901760
        %2750 = vmatmul.f32.gmra.mxu0 %v2749
        %v2751 = vpop.f32.mrf.mxu0
        %v2752 = vadd.f32 %v2651, %v2751
        %2753 = vdwg.mxu0
        %v2754 = vand.u32 %v1892, 4294901760
        %v2755 = vsub.f32 %v1892, %v2754
        %2756 = vmatpush.msra.mxu0 %v2755
        %v2757 = vand.u32 %v1890, 4294901760
        %v2758 = vsub.f32 %v1890, %v2757
        %2759 = vmatpush.msra.mxu0 %v2758
        %v2760 = vand.u32 %v1888, 4294901760
        %v2761 = vsub.f32 %v1888, %v2760
        %2762 = vmatpush.msra.mxu0 %v2761
        %v2763 = vand.u32 %v1886, 4294901760
        %v2764 = vsub.f32 %v1886, %v2763
        %2765 = vmatpush.msra.mxu0 %v2764
        %v2766 = vand.u32 %v1884, 4294901760
        %v2767 = vsub.f32 %v1884, %v2766
        %2768 = vmatpush.msra.mxu0 %v2767
        %v2769 = vand.u32 %v1882, 4294901760
        %v2770 = vsub.f32 %v1882, %v2769
        %2771 = vmatpush.msra.mxu0 %v2770
        %v2772 = vand.u32 %v1880, 4294901760
        %v2773 = vsub.f32 %v1880, %v2772
        %2774 = vmatpush.msra.mxu0 %v2773
        %v2775 = vand.u32 %v1878, 4294901760
        %v2776 = vsub.f32 %v1878, %v2775
        %2777 = vmatpush.msra.mxu0 %v2776
        %v2778 = vand.u32 %v1876, 4294901760
        %v2779 = vsub.f32 %v1876, %v2778
        %2780 = vmatpush.msra.mxu0 %v2779
        %v2781 = vand.u32 %v1874, 4294901760
        %v2782 = vsub.f32 %v1874, %v2781
        %2783 = vmatpush.msra.mxu0 %v2782
        %v2784 = vand.u32 %v1872, 4294901760
        %v2785 = vsub.f32 %v1872, %v2784
        %2786 = vmatpush.msra.mxu0 %v2785
        %v2787 = vand.u32 %v1870, 4294901760
        %v2788 = vsub.f32 %v1870, %v2787
        %2789 = vmatpush.msra.mxu0 %v2788
        %v2790 = vand.u32 %v1868, 4294901760
        %v2791 = vsub.f32 %v1868, %v2790
        %2792 = vmatpush.msra.mxu0 %v2791
        %v2793 = vand.u32 %v1866, 4294901760
        %v2794 = vsub.f32 %v1866, %v2793
        %2795 = vmatpush.msra.mxu0 %v2794
        %v2796 = vand.u32 %v1864, 4294901760
        %v2797 = vsub.f32 %v1864, %v2796
        %2798 = vmatpush.msra.mxu0 %v2797
        %v2799 = vand.u32 %v1862, 4294901760
        %v2800 = vsub.f32 %v1862, %v2799
        %2801 = vmatpush.msra.mxu0 %v2800
        %v2802 = vand.u32 %v1926, 4294901760
        %v2803 = vsub.f32 %v1926, %v2802
        %2804 = vmatmul.f32.gmra.mxu0 %v2803
        %v2805 = vpop.f32.mrf.mxu0
        %v2806 = vadd.f32 %v2752, %v2805
        %2807 = vdwg.mxu0
        %v2808 = vand.u32 %v1892, 4294901760
        %2809 = vmatpush.msra.mxu0 %v2808
        %v2810 = vand.u32 %v1890, 4294901760
        %2811 = vmatpush.msra.mxu0 %v2810
        %v2812 = vand.u32 %v1888, 4294901760
        %2813 = vmatpush.msra.mxu0 %v2812
        %v2814 = vand.u32 %v1886, 4294901760
        %2815 = vmatpush.msra.mxu0 %v2814
        %v2816 = vand.u32 %v1884, 4294901760
        %2817 = vmatpush.msra.mxu0 %v2816
        %v2818 = vand.u32 %v1882, 4294901760
        %2819 = vmatpush.msra.mxu0 %v2818
        %v2820 = vand.u32 %v1880, 4294901760
        %2821 = vmatpush.msra.mxu0 %v2820
        %v2822 = vand.u32 %v1878, 4294901760
        %2823 = vmatpush.msra.mxu0 %v2822
        %v2824 = vand.u32 %v1876, 4294901760
        %2825 = vmatpush.msra.mxu0 %v2824
        %v2826 = vand.u32 %v1874, 4294901760
        %2827 = vmatpush.msra.mxu0 %v2826
        %v2828 = vand.u32 %v1872, 4294901760
        %2829 = vmatpush.msra.mxu0 %v2828
        %v2830 = vand.u32 %v1870, 4294901760
        %2831 = vmatpush.msra.mxu0 %v2830
        %v2832 = vand.u32 %v1868, 4294901760
        %2833 = vmatpush.msra.mxu0 %v2832
        %v2834 = vand.u32 %v1866, 4294901760
        %2835 = vmatpush.msra.mxu0 %v2834
        %v2836 = vand.u32 %v1864, 4294901760
        %2837 = vmatpush.msra.mxu0 %v2836
        %v2838 = vand.u32 %v1862, 4294901760
        %2839 = vmatpush.msra.mxu0 %v2838
        %v2840 = vand.u32 %v1926, 4294901760
        %v2841 = vsub.f32 %v1926, %v2840
        %v2842 = vand.u32 %v2841, 4294901760
        %2843 = vmatmul.f32.gmra.mxu0 %v2842
        %v2844 = vpop.f32.mrf.mxu0
        %v2845 = vadd.f32 %v2806, %v2844
        %2846 = vdwg.mxu0
        %v2847 = vand.u32 %v1892, 4294901760
        %v2848 = vsub.f32 %v1892, %v2847
        %v2849 = vand.u32 %v2848, 4294901760
        %2850 = vmatpush.msra.mxu0 %v2849
        %v2851 = vand.u32 %v1890, 4294901760
        %v2852 = vsub.f32 %v1890, %v2851
        %v2853 = vand.u32 %v2852, 4294901760
        %2854 = vmatpush.msra.mxu0 %v2853
        %v2855 = vand.u32 %v1888, 4294901760
        %v2856 = vsub.f32 %v1888, %v2855
        %v2857 = vand.u32 %v2856, 4294901760
        %2858 = vmatpush.msra.mxu0 %v2857
        %v2859 = vand.u32 %v1886, 4294901760
        %v2860 = vsub.f32 %v1886, %v2859
        %v2861 = vand.u32 %v2860, 4294901760
        %2862 = vmatpush.msra.mxu0 %v2861
        %v2863 = vand.u32 %v1884, 4294901760
        %v2864 = vsub.f32 %v1884, %v2863
        %v2865 = vand.u32 %v2864, 4294901760
        %2866 = vmatpush.msra.mxu0 %v2865
        %v2867 = vand.u32 %v1882, 4294901760
        %v2868 = vsub.f32 %v1882, %v2867
        %v2869 = vand.u32 %v2868, 4294901760
        %2870 = vmatpush.msra.mxu0 %v2869
        %v2871 = vand.u32 %v1880, 4294901760
        %v2872 = vsub.f32 %v1880, %v2871
        %v2873 = vand.u32 %v2872, 4294901760
        %2874 = vmatpush.msra.mxu0 %v2873
        %v2875 = vand.u32 %v1878, 4294901760
        %v2876 = vsub.f32 %v1878, %v2875
        %v2877 = vand.u32 %v2876, 4294901760
        %2878 = vmatpush.msra.mxu0 %v2877
        %v2879 = vand.u32 %v1876, 4294901760
        %v2880 = vsub.f32 %v1876, %v2879
        %v2881 = vand.u32 %v2880, 4294901760
        %2882 = vmatpush.msra.mxu0 %v2881
        %v2883 = vand.u32 %v1874, 4294901760
        %v2884 = vsub.f32 %v1874, %v2883
        %v2885 = vand.u32 %v2884, 4294901760
        %2886 = vmatpush.msra.mxu0 %v2885
        %v2887 = vand.u32 %v1872, 4294901760
        %v2888 = vsub.f32 %v1872, %v2887
        %v2889 = vand.u32 %v2888, 4294901760
        %2890 = vmatpush.msra.mxu0 %v2889
        %v2891 = vand.u32 %v1870, 4294901760
        %v2892 = vsub.f32 %v1870, %v2891
        %v2893 = vand.u32 %v2892, 4294901760
        %2894 = vmatpush.msra.mxu0 %v2893
        %v2895 = vand.u32 %v1868, 4294901760
        %v2896 = vsub.f32 %v1868, %v2895
        %v2897 = vand.u32 %v2896, 4294901760
        %2898 = vmatpush.msra.mxu0 %v2897
        %v2899 = vand.u32 %v1866, 4294901760
        %v2900 = vsub.f32 %v1866, %v2899
        %v2901 = vand.u32 %v2900, 4294901760
        %2902 = vmatpush.msra.mxu0 %v2901
        %v2903 = vand.u32 %v1864, 4294901760
        %v2904 = vsub.f32 %v1864, %v2903
        %v2905 = vand.u32 %v2904, 4294901760
        %2906 = vmatpush.msra.mxu0 %v2905
        %v2907 = vand.u32 %v1862, 4294901760
        %v2908 = vsub.f32 %v1862, %v2907
        %v2909 = vand.u32 %v2908, 4294901760
        %2910 = vmatpush.msra.mxu0 %v2909
        %v2911 = vand.u32 %v1926, 4294901760
        %2912 = vmatmul.f32.gmra.mxu0 %v2911
        %v2913 = vpop.f32.mrf.mxu0
        %v2914 = vadd.f32 %v2845, %v2913
        %2915 = vdwg.mxu0
        %v2916 = vand.u32 %v1892, 4294901760
        %2917 = vmatpush.msra.mxu0 %v2916
        %v2918 = vand.u32 %v1890, 4294901760
        %2919 = vmatpush.msra.mxu0 %v2918
        %v2920 = vand.u32 %v1888, 4294901760
        %2921 = vmatpush.msra.mxu0 %v2920
        %v2922 = vand.u32 %v1886, 4294901760
        %2923 = vmatpush.msra.mxu0 %v2922
        %v2924 = vand.u32 %v1884, 4294901760
        %2925 = vmatpush.msra.mxu0 %v2924
        %v2926 = vand.u32 %v1882, 4294901760
        %2927 = vmatpush.msra.mxu0 %v2926
        %v2928 = vand.u32 %v1880, 4294901760
        %2929 = vmatpush.msra.mxu0 %v2928
        %v2930 = vand.u32 %v1878, 4294901760
        %2931 = vmatpush.msra.mxu0 %v2930
        %v2932 = vand.u32 %v1876, 4294901760
        %2933 = vmatpush.msra.mxu0 %v2932
        %v2934 = vand.u32 %v1874, 4294901760
        %2935 = vmatpush.msra.mxu0 %v2934
        %v2936 = vand.u32 %v1872, 4294901760
        %2937 = vmatpush.msra.mxu0 %v2936
        %v2938 = vand.u32 %v1870, 4294901760
        %2939 = vmatpush.msra.mxu0 %v2938
        %v2940 = vand.u32 %v1868, 4294901760
        %2941 = vmatpush.msra.mxu0 %v2940
        %v2942 = vand.u32 %v1866, 4294901760
        %2943 = vmatpush.msra.mxu0 %v2942
        %v2944 = vand.u32 %v1864, 4294901760
        %2945 = vmatpush.msra.mxu0 %v2944
        %v2946 = vand.u32 %v1862, 4294901760
        %2947 = vmatpush.msra.mxu0 %v2946
        %v2948 = vand.u32 %v1926, 4294901760
        %2949 = vmatmul.f32.gmra.mxu0 %v2948
        %v2950 = vpop.f32.mrf.mxu0
        %v2951 = vadd.f32 %v2914, %v2950
        %2952 = vdwg.mxu0
        %v2953 = vand.u32 %v1924, 4294901760
        %2954 = vmatpush.msra.mxu0 %v2953
        %v2955 = vand.u32 %v1922, 4294901760
        %2956 = vmatpush.msra.mxu0 %v2955
        %v2957 = vand.u32 %v1920, 4294901760
        %2958 = vmatpush.msra.mxu0 %v2957
        %v2959 = vand.u32 %v1918, 4294901760
        %2960 = vmatpush.msra.mxu0 %v2959
        %v2961 = vand.u32 %v1916, 4294901760
        %2962 = vmatpush.msra.mxu0 %v2961
        %v2963 = vand.u32 %v1914, 4294901760
        %2964 = vmatpush.msra.mxu0 %v2963
        %v2965 = vand.u32 %v1912, 4294901760
        %2966 = vmatpush.msra.mxu0 %v2965
        %v2967 = vand.u32 %v1910, 4294901760
        %2968 = vmatpush.msra.mxu0 %v2967
        %v2969 = vand.u32 %v1908, 4294901760
        %2970 = vmatpush.msra.mxu0 %v2969
        %v2971 = vand.u32 %v1906, 4294901760
        %2972 = vmatpush.msra.mxu0 %v2971
        %v2973 = vand.u32 %v1904, 4294901760
        %2974 = vmatpush.msra.mxu0 %v2973
        %v2975 = vand.u32 %v1902, 4294901760
        %2976 = vmatpush.msra.mxu0 %v2975
        %v2977 = vand.u32 %v1900, 4294901760
        %2978 = vmatpush.msra.mxu0 %v2977
        %v2979 = vand.u32 %v1898, 4294901760
        %2980 = vmatpush.msra.mxu0 %v2979
        %v2981 = vand.u32 %v1896, 4294901760
        %2982 = vmatpush.msra.mxu0 %v2981
        %v2983 = vand.u32 %v1894, 4294901760
        %2984 = vmatpush.msra.mxu0 %v2983
        %v2985 = vand.u32 %v1927, 4294901760
        %v2986 = vsub.f32 %v1927, %v2985
        %v2987 = vand.u32 %v2986, 4294901760
        %v2988 = vsub.f32 %v2986, %v2987
        %v2989 = vand.u32 %v2988, 4294901760
        %2990 = vmatmul.f32.gmra.mxu0 %v2989
        %v2991 = vpop.f32.mrf.mxu0
        %v2992 = vadd.f32 %v2951, %v2991
        %2993 = vdwg.mxu0
        %v2994 = vand.u32 %v1924, 4294901760
        %v2995 = vsub.f32 %v1924, %v2994
        %v2996 = vand.u32 %v2995, 4294901760
        %v2997 = vsub.f32 %v2995, %v2996
        %v2998 = vand.u32 %v2997, 4294901760
        %2999 = vmatpush.msra.mxu0 %v2998
        %v3000 = vand.u32 %v1922, 4294901760
        %v3001 = vsub.f32 %v1922, %v3000
        %v3002 = vand.u32 %v3001, 4294901760
        %v3003 = vsub.f32 %v3001, %v3002
        %v3004 = vand.u32 %v3003, 4294901760
        %3005 = vmatpush.msra.mxu0 %v3004
        %v3006 = vand.u32 %v1920, 4294901760
        %v3007 = vsub.f32 %v1920, %v3006
        %v3008 = vand.u32 %v3007, 4294901760
        %v3009 = vsub.f32 %v3007, %v3008
        %v3010 = vand.u32 %v3009, 4294901760
        %3011 = vmatpush.msra.mxu0 %v3010
        %v3012 = vand.u32 %v1918, 4294901760
        %v3013 = vsub.f32 %v1918, %v3012
        %v3014 = vand.u32 %v3013, 4294901760
        %v3015 = vsub.f32 %v3013, %v3014
        %v3016 = vand.u32 %v3015, 4294901760
        %3017 = vmatpush.msra.mxu0 %v3016
        %v3018 = vand.u32 %v1916, 4294901760
        %v3019 = vsub.f32 %v1916, %v3018
        %v3020 = vand.u32 %v3019, 4294901760
        %v3021 = vsub.f32 %v3019, %v3020
        %v3022 = vand.u32 %v3021, 4294901760
        %3023 = vmatpush.msra.mxu0 %v3022
        %v3024 = vand.u32 %v1914, 4294901760
        %v3025 = vsub.f32 %v1914, %v3024
        %v3026 = vand.u32 %v3025, 4294901760
        %v3027 = vsub.f32 %v3025, %v3026
        %v3028 = vand.u32 %v3027, 4294901760
        %3029 = vmatpush.msra.mxu0 %v3028
        %v3030 = vand.u32 %v1912, 4294901760
        %v3031 = vsub.f32 %v1912, %v3030
        %v3032 = vand.u32 %v3031, 4294901760
        %v3033 = vsub.f32 %v3031, %v3032
        %v3034 = vand.u32 %v3033, 4294901760
        %3035 = vmatpush.msra.mxu0 %v3034
        %v3036 = vand.u32 %v1910, 4294901760
        %v3037 = vsub.f32 %v1910, %v3036
        %v3038 = vand.u32 %v3037, 4294901760
        %v3039 = vsub.f32 %v3037, %v3038
        %v3040 = vand.u32 %v3039, 4294901760
        %3041 = vmatpush.msra.mxu0 %v3040
        %v3042 = vand.u32 %v1908, 4294901760
        %v3043 = vsub.f32 %v1908, %v3042
        %v3044 = vand.u32 %v3043, 4294901760
        %v3045 = vsub.f32 %v3043, %v3044
        %v3046 = vand.u32 %v3045, 4294901760
        %3047 = vmatpush.msra.mxu0 %v3046
        %v3048 = vand.u32 %v1906, 4294901760
        %v3049 = vsub.f32 %v1906, %v3048
        %v3050 = vand.u32 %v3049, 4294901760
        %v3051 = vsub.f32 %v3049, %v3050
        %v3052 = vand.u32 %v3051, 4294901760
        %3053 = vmatpush.msra.mxu0 %v3052
        %v3054 = vand.u32 %v1904, 4294901760
        %v3055 = vsub.f32 %v1904, %v3054
        %v3056 = vand.u32 %v3055, 4294901760
        %v3057 = vsub.f32 %v3055, %v3056
        %v3058 = vand.u32 %v3057, 4294901760
        %3059 = vmatpush.msra.mxu0 %v3058
        %v3060 = vand.u32 %v1902, 4294901760
        %v3061 = vsub.f32 %v1902, %v3060
        %v3062 = vand.u32 %v3061, 4294901760
        %v3063 = vsub.f32 %v3061, %v3062
        %v3064 = vand.u32 %v3063, 4294901760
        %3065 = vmatpush.msra.mxu0 %v3064
        %v3066 = vand.u32 %v1900, 4294901760
        %v3067 = vsub.f32 %v1900, %v3066
        %v3068 = vand.u32 %v3067, 4294901760
        %v3069 = vsub.f32 %v3067, %v3068
        %v3070 = vand.u32 %v3069, 4294901760
        %3071 = vmatpush.msra.mxu0 %v3070
        %v3072 = vand.u32 %v1898, 4294901760
        %v3073 = vsub.f32 %v1898, %v3072
        %v3074 = vand.u32 %v3073, 4294901760
        %v3075 = vsub.f32 %v3073, %v3074
        %v3076 = vand.u32 %v3075, 4294901760
        %3077 = vmatpush.msra.mxu0 %v3076
        %v3078 = vand.u32 %v1896, 4294901760
        %v3079 = vsub.f32 %v1896, %v3078
        %v3080 = vand.u32 %v3079, 4294901760
        %v3081 = vsub.f32 %v3079, %v3080
        %v3082 = vand.u32 %v3081, 4294901760
        %3083 = vmatpush.msra.mxu0 %v3082
        %v3084 = vand.u32 %v1894, 4294901760
        %v3085 = vsub.f32 %v1894, %v3084
        %v3086 = vand.u32 %v3085, 4294901760
        %v3087 = vsub.f32 %v3085, %v3086
        %v3088 = vand.u32 %v3087, 4294901760
        %3089 = vmatpush.msra.mxu0 %v3088
        %v3090 = vand.u32 %v1927, 4294901760
        %3091 = vmatmul.f32.gmra.mxu0 %v3090
        %v3092 = vpop.f32.mrf.mxu0
        %v3093 = vadd.f32 %v2992, %v3092
        %3094 = vdwg.mxu0
        %v3095 = vand.u32 %v1924, 4294901760
        %v3096 = vsub.f32 %v1924, %v3095
        %3097 = vmatpush.msra.mxu0 %v3096
        %v3098 = vand.u32 %v1922, 4294901760
        %v3099 = vsub.f32 %v1922, %v3098
        %3100 = vmatpush.msra.mxu0 %v3099
        %v3101 = vand.u32 %v1920, 4294901760
        %v3102 = vsub.f32 %v1920, %v3101
        %3103 = vmatpush.msra.mxu0 %v3102
        %v3104 = vand.u32 %v1918, 4294901760
        %v3105 = vsub.f32 %v1918, %v3104
        %3106 = vmatpush.msra.mxu0 %v3105
        %v3107 = vand.u32 %v1916, 4294901760
        %v3108 = vsub.f32 %v1916, %v3107
        %3109 = vmatpush.msra.mxu0 %v3108
        %v3110 = vand.u32 %v1914, 4294901760
        %v3111 = vsub.f32 %v1914, %v3110
        %3112 = vmatpush.msra.mxu0 %v3111
        %v3113 = vand.u32 %v1912, 4294901760
        %v3114 = vsub.f32 %v1912, %v3113
        %3115 = vmatpush.msra.mxu0 %v3114
        %v3116 = vand.u32 %v1910, 4294901760
        %v3117 = vsub.f32 %v1910, %v3116
        %3118 = vmatpush.msra.mxu0 %v3117
        %v3119 = vand.u32 %v1908, 4294901760
        %v3120 = vsub.f32 %v1908, %v3119
        %3121 = vmatpush.msra.mxu0 %v3120
        %v3122 = vand.u32 %v1906, 4294901760
        %v3123 = vsub.f32 %v1906, %v3122
        %3124 = vmatpush.msra.mxu0 %v3123
        %v3125 = vand.u32 %v1904, 4294901760
        %v3126 = vsub.f32 %v1904, %v3125
        %3127 = vmatpush.msra.mxu0 %v3126
        %v3128 = vand.u32 %v1902, 4294901760
        %v3129 = vsub.f32 %v1902, %v3128
        %3130 = vmatpush.msra.mxu0 %v3129
        %v3131 = vand.u32 %v1900, 4294901760
        %v3132 = vsub.f32 %v1900, %v3131
        %3133 = vmatpush.msra.mxu0 %v3132
        %v3134 = vand.u32 %v1898, 4294901760
        %v3135 = vsub.f32 %v1898, %v3134
        %3136 = vmatpush.msra.mxu0 %v3135
        %v3137 = vand.u32 %v1896, 4294901760
        %v3138 = vsub.f32 %v1896, %v3137
        %3139 = vmatpush.msra.mxu0 %v3138
        %v3140 = vand.u32 %v1894, 4294901760
        %v3141 = vsub.f32 %v1894, %v3140
        %3142 = vmatpush.msra.mxu0 %v3141
        %v3143 = vand.u32 %v1927, 4294901760
        %v3144 = vsub.f32 %v1927, %v3143
        %3145 = vmatmul.f32.gmra.mxu0 %v3144
        %v3146 = vpop.f32.mrf.mxu0
        %v3147 = vadd.f32 %v3093, %v3146
        %3148 = vdwg.mxu0
        %v3149 = vand.u32 %v1924, 4294901760
        %3150 = vmatpush.msra.mxu0 %v3149
        %v3151 = vand.u32 %v1922, 4294901760
        %3152 = vmatpush.msra.mxu0 %v3151
        %v3153 = vand.u32 %v1920, 4294901760
        %3154 = vmatpush.msra.mxu0 %v3153
        %v3155 = vand.u32 %v1918, 4294901760
        %3156 = vmatpush.msra.mxu0 %v3155
        %v3157 = vand.u32 %v1916, 4294901760
        %3158 = vmatpush.msra.mxu0 %v3157
        %v3159 = vand.u32 %v1914, 4294901760
        %3160 = vmatpush.msra.mxu0 %v3159
        %v3161 = vand.u32 %v1912, 4294901760
        %3162 = vmatpush.msra.mxu0 %v3161
        %v3163 = vand.u32 %v1910, 4294901760
        %3164 = vmatpush.msra.mxu0 %v3163
        %v3165 = vand.u32 %v1908, 4294901760
        %3166 = vmatpush.msra.mxu0 %v3165
        %v3167 = vand.u32 %v1906, 4294901760
        %3168 = vmatpush.msra.mxu0 %v3167
        %v3169 = vand.u32 %v1904, 4294901760
        %3170 = vmatpush.msra.mxu0 %v3169
        %v3171 = vand.u32 %v1902, 4294901760
        %3172 = vmatpush.msra.mxu0 %v3171
        %v3173 = vand.u32 %v1900, 4294901760
        %3174 = vmatpush.msra.mxu0 %v3173
        %v3175 = vand.u32 %v1898, 4294901760
        %3176 = vmatpush.msra.mxu0 %v3175
        %v3177 = vand.u32 %v1896, 4294901760
        %3178 = vmatpush.msra.mxu0 %v3177
        %v3179 = vand.u32 %v1894, 4294901760
        %3180 = vmatpush.msra.mxu0 %v3179
        %v3181 = vand.u32 %v1927, 4294901760
        %v3182 = vsub.f32 %v1927, %v3181
        %v3183 = vand.u32 %v3182, 4294901760
        %3184 = vmatmul.f32.gmra.mxu0 %v3183
        %v3185 = vpop.f32.mrf.mxu0
        %v3186 = vadd.f32 %v3147, %v3185
        %3187 = vdwg.mxu0
        %v3188 = vand.u32 %v1924, 4294901760
        %v3189 = vsub.f32 %v1924, %v3188
        %v3190 = vand.u32 %v3189, 4294901760
        %3191 = vmatpush.msra.mxu0 %v3190
        %v3192 = vand.u32 %v1922, 4294901760
        %v3193 = vsub.f32 %v1922, %v3192
        %v3194 = vand.u32 %v3193, 4294901760
        %3195 = vmatpush.msra.mxu0 %v3194
        %v3196 = vand.u32 %v1920, 4294901760
        %v3197 = vsub.f32 %v1920, %v3196
        %v3198 = vand.u32 %v3197, 4294901760
        %3199 = vmatpush.msra.mxu0 %v3198
        %v3200 = vand.u32 %v1918, 4294901760
        %v3201 = vsub.f32 %v1918, %v3200
        %v3202 = vand.u32 %v3201, 4294901760
        %3203 = vmatpush.msra.mxu0 %v3202
        %v3204 = vand.u32 %v1916, 4294901760
        %v3205 = vsub.f32 %v1916, %v3204
        %v3206 = vand.u32 %v3205, 4294901760
        %3207 = vmatpush.msra.mxu0 %v3206
        %v3208 = vand.u32 %v1914, 4294901760
        %v3209 = vsub.f32 %v1914, %v3208
        %v3210 = vand.u32 %v3209, 4294901760
        %3211 = vmatpush.msra.mxu0 %v3210
        %v3212 = vand.u32 %v1912, 4294901760
        %v3213 = vsub.f32 %v1912, %v3212
        %v3214 = vand.u32 %v3213, 4294901760
        %3215 = vmatpush.msra.mxu0 %v3214
        %v3216 = vand.u32 %v1910, 4294901760
        %v3217 = vsub.f32 %v1910, %v3216
        %v3218 = vand.u32 %v3217, 4294901760
        %3219 = vmatpush.msra.mxu0 %v3218
        %v3220 = vand.u32 %v1908, 4294901760
        %v3221 = vsub.f32 %v1908, %v3220
        %v3222 = vand.u32 %v3221, 4294901760
        %3223 = vmatpush.msra.mxu0 %v3222
        %v3224 = vand.u32 %v1906, 4294901760
        %v3225 = vsub.f32 %v1906, %v3224
        %v3226 = vand.u32 %v3225, 4294901760
        %3227 = vmatpush.msra.mxu0 %v3226
        %v3228 = vand.u32 %v1904, 4294901760
        %v3229 = vsub.f32 %v1904, %v3228
        %v3230 = vand.u32 %v3229, 4294901760
        %3231 = vmatpush.msra.mxu0 %v3230
        %v3232 = vand.u32 %v1902, 4294901760
        %v3233 = vsub.f32 %v1902, %v3232
        %v3234 = vand.u32 %v3233, 4294901760
        %3235 = vmatpush.msra.mxu0 %v3234
        %v3236 = vand.u32 %v1900, 4294901760
        %v3237 = vsub.f32 %v1900, %v3236
        %v3238 = vand.u32 %v3237, 4294901760
        %3239 = vmatpush.msra.mxu0 %v3238
        %v3240 = vand.u32 %v1898, 4294901760
        %v3241 = vsub.f32 %v1898, %v3240
        %v3242 = vand.u32 %v3241, 4294901760
        %3243 = vmatpush.msra.mxu0 %v3242
        %v3244 = vand.u32 %v1896, 4294901760
        %v3245 = vsub.f32 %v1896, %v3244
        %v3246 = vand.u32 %v3245, 4294901760
        %3247 = vmatpush.msra.mxu0 %v3246
        %v3248 = vand.u32 %v1894, 4294901760
        %v3249 = vsub.f32 %v1894, %v3248
        %v3250 = vand.u32 %v3249, 4294901760
        %3251 = vmatpush.msra.mxu0 %v3250
        %v3252 = vand.u32 %v1927, 4294901760
        %3253 = vmatmul.f32.gmra.mxu0 %v3252
        %v3254 = vpop.f32.mrf.mxu0
        %v3255 = vadd.f32 %v3186, %v3254
        %3256 = vdwg.mxu0
        %v3257 = vand.u32 %v1924, 4294901760
        %3258 = vmatpush.msra.mxu0 %v3257
        %v3259 = vand.u32 %v1922, 4294901760
        %3260 = vmatpush.msra.mxu0 %v3259
        %v3261 = vand.u32 %v1920, 4294901760
        %3262 = vmatpush.msra.mxu0 %v3261
        %v3263 = vand.u32 %v1918, 4294901760
        %3264 = vmatpush.msra.mxu0 %v3263
        %v3265 = vand.u32 %v1916, 4294901760
        %3266 = vmatpush.msra.mxu0 %v3265
        %v3267 = vand.u32 %v1914, 4294901760
        %3268 = vmatpush.msra.mxu0 %v3267
        %v3269 = vand.u32 %v1912, 4294901760
        %3270 = vmatpush.msra.mxu0 %v3269
        %v3271 = vand.u32 %v1910, 4294901760
        %3272 = vmatpush.msra.mxu0 %v3271
        %v3273 = vand.u32 %v1908, 4294901760
        %3274 = vmatpush.msra.mxu0 %v3273
        %v3275 = vand.u32 %v1906, 4294901760
        %3276 = vmatpush.msra.mxu0 %v3275
        %v3277 = vand.u32 %v1904, 4294901760
        %3278 = vmatpush.msra.mxu0 %v3277
        %v3279 = vand.u32 %v1902, 4294901760
        %3280 = vmatpush.msra.mxu0 %v3279
        %v3281 = vand.u32 %v1900, 4294901760
        %3282 = vmatpush.msra.mxu0 %v3281
        %v3283 = vand.u32 %v1898, 4294901760
        %3284 = vmatpush.msra.mxu0 %v3283
        %v3285 = vand.u32 %v1896, 4294901760
        %3286 = vmatpush.msra.mxu0 %v3285
        %v3287 = vand.u32 %v1894, 4294901760
        %3288 = vmatpush.msra.mxu0 %v3287
        %v3289 = vand.u32 %v1927, 4294901760
        %3290 = vmatmul.f32.gmra.mxu0 %v3289
        %v3291 = vpop.f32.mrf.mxu0
        %v3292 = vadd.f32 %v3255, %v3291
        %3293 = vdwg.mxu0
        %v3294 = vld [vmem:[#allocation5] sm:$0xff]
        %v3295 = vld [vmem:[#allocation7] sm:$0xff]
        %3297 = vst [vmem:[#allocation1] ss:$2 sm:$0xff] %v3294
        %v3298 = vld.sshfl [vmem:[#allocation1] sm:$0xff pattern:$0x75316420]
        %v3299 = vld.sshfl [vmem:[#allocation1 + $0x8] sm:$0xff pattern:$0x75316420]
        %v3302 = vmul.f32 %v1177, %v3298
        %v3303 = vmul.f32 %v1859, %v3299
        %3305 = vst [vmem:[#allocation1] ss:$2 sm:$0xff] %v3295
        %v3306 = vld.sshfl [vmem:[#allocation1] sm:$0xff pattern:$0x75316420]
        %v3307 = vld.sshfl [vmem:[#allocation1 + $0x8] sm:$0xff pattern:$0x75316420]
        %v3310 = vmul.f32 %v2610, %v3306
        %v3311 = vmul.f32 %v3292, %v3307
        %v3312 = vsub.f32 %v3302, %v3310
        %v3313 = vsub.f32 %v3303, %v3311
        %3314 = vst [vmem:[#allocation1] ss:$2 sm:$0xff] %v3295
        %v3315 = vld.sshfl [vmem:[#allocation1] sm:$0xff pattern:$0x75316420]
        %v3316 = vld.sshfl [vmem:[#allocation1 + $0x8] sm:$0xff pattern:$0x75316420]
        %v3319 = vmul.f32 %v1177, %v3315
        %v3320 = vmul.f32 %v1859, %v3316
        %3321 = vst [vmem:[#allocation1] ss:$2 sm:$0xff] %v3294
        %v3322 = vld.sshfl [vmem:[#allocation1] sm:$0xff pattern:$0x75316420]
        %v3323 = vld.sshfl [vmem:[#allocation1 + $0x8] sm:$0xff pattern:$0x75316420]
        %v3326 = vmul.f32 %v2610, %v3322
        %v3327 = vmul.f32 %v3292, %v3323
        %v3328 = vadd.f32 %v3319, %v3326
        %v3329 = vadd.f32 %v3320, %v3327
        %v3330 = vld [vmem:[#allocation11] sm:$0xff]
        %v3331 = vld [vmem:[#allocation11 + $0x8] sm:$0xff]
        %v3332 = vld [vmem:[#allocation11 + $0x10] sm:$0xff]
        %v3333 = vld [vmem:[#allocation11 + $0x18] sm:$0xff]
        %v3334 = vld [vmem:[#allocation11 + $0x20] sm:$0xff]
        %v3335 = vld [vmem:[#allocation11 + $0x28] sm:$0xff]
        %v3336 = vld [vmem:[#allocation11 + $0x30] sm:$0xff]
        %v3337 = vld [vmem:[#allocation11 + $0x38] sm:$0xff]
        %v3338 = vld [vmem:[#allocation11 + $0x40] sm:$0xff]
        %v3339 = vld [vmem:[#allocation11 + $0x48] sm:$0xff]
        %v3340 = vld [vmem:[#allocation11 + $0x50] sm:$0xff]
        %v3341 = vld [vmem:[#allocation11 + $0x58] sm:$0xff]
        %v3342 = vld [vmem:[#allocation11 + $0x60] sm:$0xff]
        %v3343 = vld [vmem:[#allocation11 + $0x68] sm:$0xff]
        %v3344 = vld [vmem:[#allocation11 + $0x70] sm:$0xff]
        %v3345 = vld [vmem:[#allocation11 + $0x78] sm:$0xff]
        %v3346 = vld [vmem:[#allocation11 + $0x80] sm:$0xff]
        %v3347 = vld [vmem:[#allocation11 + $0x88] sm:$0xff]
        %v3348 = vld [vmem:[#allocation11 + $0x90] sm:$0xff]
        %v3349 = vld [vmem:[#allocation11 + $0x98] sm:$0xff]
        %v3350 = vld [vmem:[#allocation11 + $0xa0] sm:$0xff]
        %v3351 = vld [vmem:[#allocation11 + $0xa8] sm:$0xff]
        %v3352 = vld [vmem:[#allocation11 + $0xb0] sm:$0xff]
        %v3353 = vld [vmem:[#allocation11 + $0xb8] sm:$0xff]
        %v3354 = vld [vmem:[#allocation11 + $0xc0] sm:$0xff]
        %v3355 = vld [vmem:[#allocation11 + $0xc8] sm:$0xff]
        %v3356 = vld [vmem:[#allocation11 + $0xd0] sm:$0xff]
        %v3357 = vld [vmem:[#allocation11 + $0xd8] sm:$0xff]
        %v3358 = vld [vmem:[#allocation11 + $0xe0] sm:$0xff]
        %v3359 = vld [vmem:[#allocation11 + $0xe8] sm:$0xff]
        %v3360 = vld [vmem:[#allocation11 + $0xf0] sm:$0xff]
        %v3361 = vld [vmem:[#allocation11 + $0xf8] sm:$0xff]
        %v3362 = vld [vmem:[#allocation11 + $0x100] sm:$0xff]
        %v3363 = vld [vmem:[#allocation11 + $0x108] sm:$0xff]
        %v3364 = vld [vmem:[#allocation11 + $0x110] sm:$0xff]
        %v3365 = vld [vmem:[#allocation11 + $0x118] sm:$0xff]
        %v3366 = vld [vmem:[#allocation11 + $0x120] sm:$0xff]
        %v3367 = vld [vmem:[#allocation11 + $0x128] sm:$0xff]
        %v3368 = vld [vmem:[#allocation11 + $0x130] sm:$0xff]
        %v3369 = vld [vmem:[#allocation11 + $0x138] sm:$0xff]
        %v3370 = vld [vmem:[#allocation11 + $0x140] sm:$0xff]
        %v3371 = vld [vmem:[#allocation11 + $0x148] sm:$0xff]
        %v3372 = vld [vmem:[#allocation11 + $0x150] sm:$0xff]
        %v3373 = vld [vmem:[#allocation11 + $0x158] sm:$0xff]
        %v3374 = vld [vmem:[#allocation11 + $0x160] sm:$0xff]
        %v3375 = vld [vmem:[#allocation11 + $0x168] sm:$0xff]
        %v3376 = vld [vmem:[#allocation11 + $0x170] sm:$0xff]
        %v3377 = vld [vmem:[#allocation11 + $0x178] sm:$0xff]
        %v3378 = vld [vmem:[#allocation11 + $0x180] sm:$0xff]
        %v3379 = vld [vmem:[#allocation11 + $0x188] sm:$0xff]
        %v3380 = vld [vmem:[#allocation11 + $0x190] sm:$0xff]
        %v3381 = vld [vmem:[#allocation11 + $0x198] sm:$0xff]
        %v3382 = vld [vmem:[#allocation11 + $0x1a0] sm:$0xff]
        %v3383 = vld [vmem:[#allocation11 + $0x1a8] sm:$0xff]
        %v3384 = vld [vmem:[#allocation11 + $0x1b0] sm:$0xff]
        %v3385 = vld [vmem:[#allocation11 + $0x1b8] sm:$0xff]
        %v3386 = vld [vmem:[#allocation11 + $0x1c0] sm:$0xff]
        %v3387 = vld [vmem:[#allocation11 + $0x1c8] sm:$0xff]
        %v3388 = vld [vmem:[#allocation11 + $0x1d0] sm:$0xff]
        %v3389 = vld [vmem:[#allocation11 + $0x1d8] sm:$0xff]
        %v3390 = vld [vmem:[#allocation11 + $0x1e0] sm:$0xff]
        %v3391 = vld [vmem:[#allocation11 + $0x1e8] sm:$0xff]
        %v3392 = vld [vmem:[#allocation11 + $0x1f0] sm:$0xff]
        %v3393 = vld [vmem:[#allocation11 + $0x1f8] sm:$0xff]
        %v3394 = vld [vmem:[#allocation13] sm:$0xff]
        %v3395 = vld [vmem:[#allocation13 + $0x8] sm:$0xff]
        %v3396 = vld [vmem:[#allocation13 + $0x10] sm:$0xff]
        %v3397 = vld [vmem:[#allocation13 + $0x18] sm:$0xff]
        %v3398 = vld [vmem:[#allocation13 + $0x20] sm:$0xff]
        %v3399 = vld [vmem:[#allocation13 + $0x28] sm:$0xff]
        %v3400 = vld [vmem:[#allocation13 + $0x30] sm:$0xff]
        %v3401 = vld [vmem:[#allocation13 + $0x38] sm:$0xff]
        %v3402 = vld [vmem:[#allocation13 + $0x40] sm:$0xff]
        %v3403 = vld [vmem:[#allocation13 + $0x48] sm:$0xff]
        %v3404 = vld [vmem:[#allocation13 + $0x50] sm:$0xff]
        %v3405 = vld [vmem:[#allocation13 + $0x58] sm:$0xff]
        %v3406 = vld [vmem:[#allocation13 + $0x60] sm:$0xff]
        %v3407 = vld [vmem:[#allocation13 + $0x68] sm:$0xff]
        %v3408 = vld [vmem:[#allocation13 + $0x70] sm:$0xff]
        %v3409 = vld [vmem:[#allocation13 + $0x78] sm:$0xff]
        %v3410 = vld [vmem:[#allocation13 + $0x80] sm:$0xff]
        %v3411 = vld [vmem:[#allocation13 + $0x88] sm:$0xff]
        %v3412 = vld [vmem:[#allocation13 + $0x90] sm:$0xff]
        %v3413 = vld [vmem:[#allocation13 + $0x98] sm:$0xff]
        %v3414 = vld [vmem:[#allocation13 + $0xa0] sm:$0xff]
        %v3415 = vld [vmem:[#allocation13 + $0xa8] sm:$0xff]
        %v3416 = vld [vmem:[#allocation13 + $0xb0] sm:$0xff]
        %v3417 = vld [vmem:[#allocation13 + $0xb8] sm:$0xff]
        %v3418 = vld [vmem:[#allocation13 + $0xc0] sm:$0xff]
        %v3419 = vld [vmem:[#allocation13 + $0xc8] sm:$0xff]
        %v3420 = vld [vmem:[#allocation13 + $0xd0] sm:$0xff]
        %v3421 = vld [vmem:[#allocation13 + $0xd8] sm:$0xff]
        %v3422 = vld [vmem:[#allocation13 + $0xe0] sm:$0xff]
        %v3423 = vld [vmem:[#allocation13 + $0xe8] sm:$0xff]
        %v3424 = vld [vmem:[#allocation13 + $0xf0] sm:$0xff]
        %v3425 = vld [vmem:[#allocation13 + $0xf8] sm:$0xff]
        %v3426 = vld [vmem:[#allocation13 + $0x100] sm:$0xff]
        %v3427 = vld [vmem:[#allocation13 + $0x108] sm:$0xff]
        %v3428 = vld [vmem:[#allocation13 + $0x110] sm:$0xff]
        %v3429 = vld [vmem:[#allocation13 + $0x118] sm:$0xff]
        %v3430 = vld [vmem:[#allocation13 + $0x120] sm:$0xff]
        %v3431 = vld [vmem:[#allocation13 + $0x128] sm:$0xff]
        %v3432 = vld [vmem:[#allocation13 + $0x130] sm:$0xff]
        %v3433 = vld [vmem:[#allocation13 + $0x138] sm:$0xff]
        %v3434 = vld [vmem:[#allocation13 + $0x140] sm:$0xff]
        %v3435 = vld [vmem:[#allocation13 + $0x148] sm:$0xff]
        %v3436 = vld [vmem:[#allocation13 + $0x150] sm:$0xff]
        %v3437 = vld [vmem:[#allocation13 + $0x158] sm:$0xff]
        %v3438 = vld [vmem:[#allocation13 + $0x160] sm:$0xff]
        %v3439 = vld [vmem:[#allocation13 + $0x168] sm:$0xff]
        %v3440 = vld [vmem:[#allocation13 + $0x170] sm:$0xff]
        %v3441 = vld [vmem:[#allocation13 + $0x178] sm:$0xff]
        %v3442 = vld [vmem:[#allocation13 + $0x180] sm:$0xff]
        %v3443 = vld [vmem:[#allocation13 + $0x188] sm:$0xff]
        %v3444 = vld [vmem:[#allocation13 + $0x190] sm:$0xff]
        %v3445 = vld [vmem:[#allocation13 + $0x198] sm:$0xff]
        %v3446 = vld [vmem:[#allocation13 + $0x1a0] sm:$0xff]
        %v3447 = vld [vmem:[#allocation13 + $0x1a8] sm:$0xff]
        %v3448 = vld [vmem:[#allocation13 + $0x1b0] sm:$0xff]
        %v3449 = vld [vmem:[#allocation13 + $0x1b8] sm:$0xff]
        %v3450 = vld [vmem:[#allocation13 + $0x1c0] sm:$0xff]
        %v3451 = vld [vmem:[#allocation13 + $0x1c8] sm:$0xff]
        %v3452 = vld [vmem:[#allocation13 + $0x1d0] sm:$0xff]
        %v3453 = vld [vmem:[#allocation13 + $0x1d8] sm:$0xff]
        %v3454 = vld [vmem:[#allocation13 + $0x1e0] sm:$0xff]
        %v3455 = vld [vmem:[#allocation13 + $0x1e8] sm:$0xff]
        %v3456 = vld [vmem:[#allocation13 + $0x1f0] sm:$0xff]
        %v3457 = vld [vmem:[#allocation13 + $0x1f8] sm:$0xff]
        %v3458 = vand.u32 %v3424, 4294901760
        %3459 = vmatpush.msra.mxu0 %v3458
        %v3460 = vand.u32 %v3422, 4294901760
        %3461 = vmatpush.msra.mxu0 %v3460
        %v3462 = vand.u32 %v3420, 4294901760
        %3463 = vmatpush.msra.mxu0 %v3462
        %v3464 = vand.u32 %v3418, 4294901760
        %3465 = vmatpush.msra.mxu0 %v3464
        %v3466 = vand.u32 %v3416, 4294901760
        %3467 = vmatpush.msra.mxu0 %v3466
        %v3468 = vand.u32 %v3414, 4294901760
        %3469 = vmatpush.msra.mxu0 %v3468
        %v3470 = vand.u32 %v3412, 4294901760
        %3471 = vmatpush.msra.mxu0 %v3470
        %v3472 = vand.u32 %v3410, 4294901760
        %3473 = vmatpush.msra.mxu0 %v3472
        %v3474 = vand.u32 %v3408, 4294901760
        %3475 = vmatpush.msra.mxu0 %v3474
        %v3476 = vand.u32 %v3406, 4294901760
        %3477 = vmatpush.msra.mxu0 %v3476
        %v3478 = vand.u32 %v3404, 4294901760
        %3479 = vmatpush.msra.mxu0 %v3478
        %v3480 = vand.u32 %v3402, 4294901760
        %3481 = vmatpush.msra.mxu0 %v3480
        %v3482 = vand.u32 %v3400, 4294901760
        %3483 = vmatpush.msra.mxu0 %v3482
        %v3484 = vand.u32 %v3398, 4294901760
        %3485 = vmatpush.msra.mxu0 %v3484
        %v3486 = vand.u32 %v3396, 4294901760
        %3487 = vmatpush.msra.mxu0 %v3486
        %v3488 = vand.u32 %v3394, 4294901760
        %3489 = vmatpush.msra.mxu0 %v3488
        %v3490 = vand.u32 %v3328, 4294901760
        %v3491 = vsub.f32 %v3328, %v3490
        %v3492 = vand.u32 %v3491, 4294901760
        %v3493 = vsub.f32 %v3491, %v3492
        %v3494 = vand.u32 %v3493, 4294901760
        %3495 = vmatmul.f32.gmra.mxu0 %v3494
        %v3496 = vpop.f32.mrf.mxu0
        %v3497 = vadd.f32 0.0, %v3496
        %3498 = vdwg.mxu0
        %v3499 = vand.u32 %v3424, 4294901760
        %v3500 = vsub.f32 %v3424, %v3499
        %v3501 = vand.u32 %v3500, 4294901760
        %v3502 = vsub.f32 %v3500, %v3501
        %v3503 = vand.u32 %v3502, 4294901760
        %3504 = vmatpush.msra.mxu0 %v3503
        %v3505 = vand.u32 %v3422, 4294901760
        %v3506 = vsub.f32 %v3422, %v3505
        %v3507 = vand.u32 %v3506, 4294901760
        %v3508 = vsub.f32 %v3506, %v3507
        %v3509 = vand.u32 %v3508, 4294901760
        %3510 = vmatpush.msra.mxu0 %v3509
        %v3511 = vand.u32 %v3420, 4294901760
        %v3512 = vsub.f32 %v3420, %v3511
        %v3513 = vand.u32 %v3512, 4294901760
        %v3514 = vsub.f32 %v3512, %v3513
        %v3515 = vand.u32 %v3514, 4294901760
        %3516 = vmatpush.msra.mxu0 %v3515
        %v3517 = vand.u32 %v3418, 4294901760
        %v3518 = vsub.f32 %v3418, %v3517
        %v3519 = vand.u32 %v3518, 4294901760
        %v3520 = vsub.f32 %v3518, %v3519
        %v3521 = vand.u32 %v3520, 4294901760
        %3522 = vmatpush.msra.mxu0 %v3521
        %v3523 = vand.u32 %v3416, 4294901760
        %v3524 = vsub.f32 %v3416, %v3523
        %v3525 = vand.u32 %v3524, 4294901760
        %v3526 = vsub.f32 %v3524, %v3525
        %v3527 = vand.u32 %v3526, 4294901760
        %3528 = vmatpush.msra.mxu0 %v3527
        %v3529 = vand.u32 %v3414, 4294901760
        %v3530 = vsub.f32 %v3414, %v3529
        %v3531 = vand.u32 %v3530, 4294901760
        %v3532 = vsub.f32 %v3530, %v3531
        %v3533 = vand.u32 %v3532, 4294901760
        %3534 = vmatpush.msra.mxu0 %v3533
        %v3535 = vand.u32 %v3412, 4294901760
        %v3536 = vsub.f32 %v3412, %v3535
        %v3537 = vand.u32 %v3536, 4294901760
        %v3538 = vsub.f32 %v3536, %v3537
        %v3539 = vand.u32 %v3538, 4294901760
        %3540 = vmatpush.msra.mxu0 %v3539
        %v3541 = vand.u32 %v3410, 4294901760
        %v3542 = vsub.f32 %v3410, %v3541
        %v3543 = vand.u32 %v3542, 4294901760
        %v3544 = vsub.f32 %v3542, %v3543
        %v3545 = vand.u32 %v3544, 4294901760
        %3546 = vmatpush.msra.mxu0 %v3545
        %v3547 = vand.u32 %v3408, 4294901760
        %v3548 = vsub.f32 %v3408, %v3547
        %v3549 = vand.u32 %v3548, 4294901760
        %v3550 = vsub.f32 %v3548, %v3549
        %v3551 = vand.u32 %v3550, 4294901760
        %3552 = vmatpush.msra.mxu0 %v3551
        %v3553 = vand.u32 %v3406, 4294901760
        %v3554 = vsub.f32 %v3406, %v3553
        %v3555 = vand.u32 %v3554, 4294901760
        %v3556 = vsub.f32 %v3554, %v3555
        %v3557 = vand.u32 %v3556, 4294901760
        %3558 = vmatpush.msra.mxu0 %v3557
        %v3559 = vand.u32 %v3404, 4294901760
        %v3560 = vsub.f32 %v3404, %v3559
        %v3561 = vand.u32 %v3560, 4294901760
        %v3562 = vsub.f32 %v3560, %v3561
        %v3563 = vand.u32 %v3562, 4294901760
        %3564 = vmatpush.msra.mxu0 %v3563
        %v3565 = vand.u32 %v3402, 4294901760
        %v3566 = vsub.f32 %v3402, %v3565
        %v3567 = vand.u32 %v3566, 4294901760
        %v3568 = vsub.f32 %v3566, %v3567
        %v3569 = vand.u32 %v3568, 4294901760
        %3570 = vmatpush.msra.mxu0 %v3569
        %v3571 = vand.u32 %v3400, 4294901760
        %v3572 = vsub.f32 %v3400, %v3571
        %v3573 = vand.u32 %v3572, 4294901760
        %v3574 = vsub.f32 %v3572, %v3573
        %v3575 = vand.u32 %v3574, 4294901760
        %3576 = vmatpush.msra.mxu0 %v3575
        %v3577 = vand.u32 %v3398, 4294901760
        %v3578 = vsub.f32 %v3398, %v3577
        %v3579 = vand.u32 %v3578, 4294901760
        %v3580 = vsub.f32 %v3578, %v3579
        %v3581 = vand.u32 %v3580, 4294901760
        %3582 = vmatpush.msra.mxu0 %v3581
        %v3583 = vand.u32 %v3396, 4294901760
        %v3584 = vsub.f32 %v3396, %v3583
        %v3585 = vand.u32 %v3584, 4294901760
        %v3586 = vsub.f32 %v3584, %v3585
        %v3587 = vand.u32 %v3586, 4294901760
        %3588 = vmatpush.msra.mxu0 %v3587
        %v3589 = vand.u32 %v3394, 4294901760
        %v3590 = vsub.f32 %v3394, %v3589
        %v3591 = vand.u32 %v3590, 4294901760
        %v3592 = vsub.f32 %v3590, %v3591
        %v3593 = vand.u32 %v3592, 4294901760
        %3594 = vmatpush.msra.mxu0 %v3593
        %v3595 = vand.u32 %v3328, 4294901760
        %3596 = vmatmul.f32.gmra.mxu0 %v3595
        %v3597 = vpop.f32.mrf.mxu0
        %v3598 = vadd.f32 %v3497, %v3597
        %3599 = vdwg.mxu0
        %v3600 = vand.u32 %v3424, 4294901760
        %v3601 = vsub.f32 %v3424, %v3600
        %3602 = vmatpush.msra.mxu0 %v3601
        %v3603 = vand.u32 %v3422, 4294901760
        %v3604 = vsub.f32 %v3422, %v3603
        %3605 = vmatpush.msra.mxu0 %v3604
        %v3606 = vand.u32 %v3420, 4294901760
        %v3607 = vsub.f32 %v3420, %v3606
        %3608 = vmatpush.msra.mxu0 %v3607
        %v3609 = vand.u32 %v3418, 4294901760
        %v3610 = vsub.f32 %v3418, %v3609
        %3611 = vmatpush.msra.mxu0 %v3610
        %v3612 = vand.u32 %v3416, 4294901760
        %v3613 = vsub.f32 %v3416, %v3612
        %3614 = vmatpush.msra.mxu0 %v3613
        %v3615 = vand.u32 %v3414, 4294901760
        %v3616 = vsub.f32 %v3414, %v3615
        %3617 = vmatpush.msra.mxu0 %v3616
        %v3618 = vand.u32 %v3412, 4294901760
        %v3619 = vsub.f32 %v3412, %v3618
        %3620 = vmatpush.msra.mxu0 %v3619
        %v3621 = vand.u32 %v3410, 4294901760
        %v3622 = vsub.f32 %v3410, %v3621
        %3623 = vmatpush.msra.mxu0 %v3622
        %v3624 = vand.u32 %v3408, 4294901760
        %v3625 = vsub.f32 %v3408, %v3624
        %3626 = vmatpush.msra.mxu0 %v3625
        %v3627 = vand.u32 %v3406, 4294901760
        %v3628 = vsub.f32 %v3406, %v3627
        %3629 = vmatpush.msra.mxu0 %v3628
        %v3630 = vand.u32 %v3404, 4294901760
        %v3631 = vsub.f32 %v3404, %v3630
        %3632 = vmatpush.msra.mxu0 %v3631
        %v3633 = vand.u32 %v3402, 4294901760
        %v3634 = vsub.f32 %v3402, %v3633
        %3635 = vmatpush.msra.mxu0 %v3634
        %v3636 = vand.u32 %v3400, 4294901760
        %v3637 = vsub.f32 %v3400, %v3636
        %3638 = vmatpush.msra.mxu0 %v3637
        %v3639 = vand.u32 %v3398, 4294901760
        %v3640 = vsub.f32 %v3398, %v3639
        %3641 = vmatpush.msra.mxu0 %v3640
        %v3642 = vand.u32 %v3396, 4294901760
        %v3643 = vsub.f32 %v3396, %v3642
        %3644 = vmatpush.msra.mxu0 %v3643
        %v3645 = vand.u32 %v3394, 4294901760
        %v3646 = vsub.f32 %v3394, %v3645
        %3647 = vmatpush.msra.mxu0 %v3646
        %v3648 = vand.u32 %v3328, 4294901760
        %v3649 = vsub.f32 %v3328, %v3648
        %3650 = vmatmul.f32.gmra.mxu0 %v3649
        %v3651 = vpop.f32.mrf.mxu0
        %v3652 = vadd.f32 %v3598, %v3651
        %3653 = vdwg.mxu0
        %v3654 = vand.u32 %v3424, 4294901760
        %3655 = vmatpush.msra.mxu0 %v3654
        %v3656 = vand.u32 %v3422, 4294901760
        %3657 = vmatpush.msra.mxu0 %v3656
        %v3658 = vand.u32 %v3420, 4294901760
        %3659 = vmatpush.msra.mxu0 %v3658
        %v3660 = vand.u32 %v3418, 4294901760
        %3661 = vmatpush.msra.mxu0 %v3660
        %v3662 = vand.u32 %v3416, 4294901760
        %3663 = vmatpush.msra.mxu0 %v3662
        %v3664 = vand.u32 %v3414, 4294901760
        %3665 = vmatpush.msra.mxu0 %v3664
        %v3666 = vand.u32 %v3412, 4294901760
        %3667 = vmatpush.msra.mxu0 %v3666
        %v3668 = vand.u32 %v3410, 4294901760
        %3669 = vmatpush.msra.mxu0 %v3668
        %v3670 = vand.u32 %v3408, 4294901760
        %3671 = vmatpush.msra.mxu0 %v3670
        %v3672 = vand.u32 %v3406, 4294901760
        %3673 = vmatpush.msra.mxu0 %v3672
        %v3674 = vand.u32 %v3404, 4294901760
        %3675 = vmatpush.msra.mxu0 %v3674
        %v3676 = vand.u32 %v3402, 4294901760
        %3677 = vmatpush.msra.mxu0 %v3676
        %v3678 = vand.u32 %v3400, 4294901760
        %3679 = vmatpush.msra.mxu0 %v3678
        %v3680 = vand.u32 %v3398, 4294901760
        %3681 = vmatpush.msra.mxu0 %v3680
        %v3682 = vand.u32 %v3396, 4294901760
        %3683 = vmatpush.msra.mxu0 %v3682
        %v3684 = vand.u32 %v3394, 4294901760
        %3685 = vmatpush.msra.mxu0 %v3684
        %v3686 = vand.u32 %v3328, 4294901760
        %v3687 = vsub.f32 %v3328, %v3686
        %v3688 = vand.u32 %v3687, 4294901760
        %3689 = vmatmul.f32.gmra.mxu0 %v3688
        %v3690 = vpop.f32.mrf.mxu0
        %v3691 = vadd.f32 %v3652, %v3690
        %3692 = vdwg.mxu0
        %v3693 = vand.u32 %v3424, 4294901760
        %v3694 = vsub.f32 %v3424, %v3693
        %v3695 = vand.u32 %v3694, 4294901760
        %3696 = vmatpush.msra.mxu0 %v3695
        %v3697 = vand.u32 %v3422, 4294901760
        %v3698 = vsub.f32 %v3422, %v3697
        %v3699 = vand.u32 %v3698, 4294901760
        %3700 = vmatpush.msra.mxu0 %v3699
        %v3701 = vand.u32 %v3420, 4294901760
        %v3702 = vsub.f32 %v3420, %v3701
        %v3703 = vand.u32 %v3702, 4294901760
        %3704 = vmatpush.msra.mxu0 %v3703
        %v3705 = vand.u32 %v3418, 4294901760
        %v3706 = vsub.f32 %v3418, %v3705
        %v3707 = vand.u32 %v3706, 4294901760
        %3708 = vmatpush.msra.mxu0 %v3707
        %v3709 = vand.u32 %v3416, 4294901760
        %v3710 = vsub.f32 %v3416, %v3709
        %v3711 = vand.u32 %v3710, 4294901760
        %3712 = vmatpush.msra.mxu0 %v3711
        %v3713 = vand.u32 %v3414, 4294901760
        %v3714 = vsub.f32 %v3414, %v3713
        %v3715 = vand.u32 %v3714, 4294901760
        %3716 = vmatpush.msra.mxu0 %v3715
        %v3717 = vand.u32 %v3412, 4294901760
        %v3718 = vsub.f32 %v3412, %v3717
        %v3719 = vand.u32 %v3718, 4294901760
        %3720 = vmatpush.msra.mxu0 %v3719
        %v3721 = vand.u32 %v3410, 4294901760
        %v3722 = vsub.f32 %v3410, %v3721
        %v3723 = vand.u32 %v3722, 4294901760
        %3724 = vmatpush.msra.mxu0 %v3723
        %v3725 = vand.u32 %v3408, 4294901760
        %v3726 = vsub.f32 %v3408, %v3725
        %v3727 = vand.u32 %v3726, 4294901760
        %3728 = vmatpush.msra.mxu0 %v3727
        %v3729 = vand.u32 %v3406, 4294901760
        %v3730 = vsub.f32 %v3406, %v3729
        %v3731 = vand.u32 %v3730, 4294901760
        %3732 = vmatpush.msra.mxu0 %v3731
        %v3733 = vand.u32 %v3404, 4294901760
        %v3734 = vsub.f32 %v3404, %v3733
        %v3735 = vand.u32 %v3734, 4294901760
        %3736 = vmatpush.msra.mxu0 %v3735
        %v3737 = vand.u32 %v3402, 4294901760
        %v3738 = vsub.f32 %v3402, %v3737
        %v3739 = vand.u32 %v3738, 4294901760
        %3740 = vmatpush.msra.mxu0 %v3739
        %v3741 = vand.u32 %v3400, 4294901760
        %v3742 = vsub.f32 %v3400, %v3741
        %v3743 = vand.u32 %v3742, 4294901760
        %3744 = vmatpush.msra.mxu0 %v3743
        %v3745 = vand.u32 %v3398, 4294901760
        %v3746 = vsub.f32 %v3398, %v3745
        %v3747 = vand.u32 %v3746, 4294901760
        %3748 = vmatpush.msra.mxu0 %v3747
        %v3749 = vand.u32 %v3396, 4294901760
        %v3750 = vsub.f32 %v3396, %v3749
        %v3751 = vand.u32 %v3750, 4294901760
        %3752 = vmatpush.msra.mxu0 %v3751
        %v3753 = vand.u32 %v3394, 4294901760
        %v3754 = vsub.f32 %v3394, %v3753
        %v3755 = vand.u32 %v3754, 4294901760
        %3756 = vmatpush.msra.mxu0 %v3755
        %v3757 = vand.u32 %v3328, 4294901760
        %3758 = vmatmul.f32.gmra.mxu0 %v3757
        %v3759 = vpop.f32.mrf.mxu0
        %v3760 = vadd.f32 %v3691, %v3759
        %3761 = vdwg.mxu0
        %v3762 = vand.u32 %v3424, 4294901760
        %3763 = vmatpush.msra.mxu0 %v3762
        %v3764 = vand.u32 %v3422, 4294901760
        %3765 = vmatpush.msra.mxu0 %v3764
        %v3766 = vand.u32 %v3420, 4294901760
        %3767 = vmatpush.msra.mxu0 %v3766
        %v3768 = vand.u32 %v3418, 4294901760
        %3769 = vmatpush.msra.mxu0 %v3768
        %v3770 = vand.u32 %v3416, 4294901760
        %3771 = vmatpush.msra.mxu0 %v3770
        %v3772 = vand.u32 %v3414, 4294901760
        %3773 = vmatpush.msra.mxu0 %v3772
        %v3774 = vand.u32 %v3412, 4294901760
        %3775 = vmatpush.msra.mxu0 %v3774
        %v3776 = vand.u32 %v3410, 4294901760
        %3777 = vmatpush.msra.mxu0 %v3776
        %v3778 = vand.u32 %v3408, 4294901760
        %3779 = vmatpush.msra.mxu0 %v3778
        %v3780 = vand.u32 %v3406, 4294901760
        %3781 = vmatpush.msra.mxu0 %v3780
        %v3782 = vand.u32 %v3404, 4294901760
        %3783 = vmatpush.msra.mxu0 %v3782
        %v3784 = vand.u32 %v3402, 4294901760
        %3785 = vmatpush.msra.mxu0 %v3784
        %v3786 = vand.u32 %v3400, 4294901760
        %3787 = vmatpush.msra.mxu0 %v3786
        %v3788 = vand.u32 %v3398, 4294901760
        %3789 = vmatpush.msra.mxu0 %v3788
        %v3790 = vand.u32 %v3396, 4294901760
        %3791 = vmatpush.msra.mxu0 %v3790
        %v3792 = vand.u32 %v3394, 4294901760
        %3793 = vmatpush.msra.mxu0 %v3792
        %v3794 = vand.u32 %v3328, 4294901760
        %3795 = vmatmul.f32.gmra.mxu0 %v3794
        %v3796 = vpop.f32.mrf.mxu0
        %v3797 = vadd.f32 %v3760, %v3796
        %3798 = vdwg.mxu0
        %v3799 = vand.u32 %v3456, 4294901760
        %3800 = vmatpush.msra.mxu0 %v3799
        %v3801 = vand.u32 %v3454, 4294901760
        %3802 = vmatpush.msra.mxu0 %v3801
        %v3803 = vand.u32 %v3452, 4294901760
        %3804 = vmatpush.msra.mxu0 %v3803
        %v3805 = vand.u32 %v3450, 4294901760
        %3806 = vmatpush.msra.mxu0 %v3805
        %v3807 = vand.u32 %v3448, 4294901760
        %3808 = vmatpush.msra.mxu0 %v3807
        %v3809 = vand.u32 %v3446, 4294901760
        %3810 = vmatpush.msra.mxu0 %v3809
        %v3811 = vand.u32 %v3444, 4294901760
        %3812 = vmatpush.msra.mxu0 %v3811
        %v3813 = vand.u32 %v3442, 4294901760
        %3814 = vmatpush.msra.mxu0 %v3813
        %v3815 = vand.u32 %v3440, 4294901760
        %3816 = vmatpush.msra.mxu0 %v3815
        %v3817 = vand.u32 %v3438, 4294901760
        %3818 = vmatpush.msra.mxu0 %v3817
        %v3819 = vand.u32 %v3436, 4294901760
        %3820 = vmatpush.msra.mxu0 %v3819
        %v3821 = vand.u32 %v3434, 4294901760
        %3822 = vmatpush.msra.mxu0 %v3821
        %v3823 = vand.u32 %v3432, 4294901760
        %3824 = vmatpush.msra.mxu0 %v3823
        %v3825 = vand.u32 %v3430, 4294901760
        %3826 = vmatpush.msra.mxu0 %v3825
        %v3827 = vand.u32 %v3428, 4294901760
        %3828 = vmatpush.msra.mxu0 %v3827
        %v3829 = vand.u32 %v3426, 4294901760
        %3830 = vmatpush.msra.mxu0 %v3829
        %v3831 = vand.u32 %v3329, 4294901760
        %v3832 = vsub.f32 %v3329, %v3831
        %v3833 = vand.u32 %v3832, 4294901760
        %v3834 = vsub.f32 %v3832, %v3833
        %v3835 = vand.u32 %v3834, 4294901760
        %3836 = vmatmul.f32.gmra.mxu0 %v3835
        %v3837 = vpop.f32.mrf.mxu0
        %v3838 = vadd.f32 %v3797, %v3837
        %3839 = vdwg.mxu0
        %v3840 = vand.u32 %v3456, 4294901760
        %v3841 = vsub.f32 %v3456, %v3840
        %v3842 = vand.u32 %v3841, 4294901760
        %v3843 = vsub.f32 %v3841, %v3842
        %v3844 = vand.u32 %v3843, 4294901760
        %3845 = vmatpush.msra.mxu0 %v3844
        %v3846 = vand.u32 %v3454, 4294901760
        %v3847 = vsub.f32 %v3454, %v3846
        %v3848 = vand.u32 %v3847, 4294901760
        %v3849 = vsub.f32 %v3847, %v3848
        %v3850 = vand.u32 %v3849, 4294901760
        %3851 = vmatpush.msra.mxu0 %v3850
        %v3852 = vand.u32 %v3452, 4294901760
        %v3853 = vsub.f32 %v3452, %v3852
        %v3854 = vand.u32 %v3853, 4294901760
        %v3855 = vsub.f32 %v3853, %v3854
        %v3856 = vand.u32 %v3855, 4294901760
        %3857 = vmatpush.msra.mxu0 %v3856
        %v3858 = vand.u32 %v3450, 4294901760
        %v3859 = vsub.f32 %v3450, %v3858
        %v3860 = vand.u32 %v3859, 4294901760
        %v3861 = vsub.f32 %v3859, %v3860
        %v3862 = vand.u32 %v3861, 4294901760
        %3863 = vmatpush.msra.mxu0 %v3862
        %v3864 = vand.u32 %v3448, 4294901760
        %v3865 = vsub.f32 %v3448, %v3864
        %v3866 = vand.u32 %v3865, 4294901760
        %v3867 = vsub.f32 %v3865, %v3866
        %v3868 = vand.u32 %v3867, 4294901760
        %3869 = vmatpush.msra.mxu0 %v3868
        %v3870 = vand.u32 %v3446, 4294901760
        %v3871 = vsub.f32 %v3446, %v3870
        %v3872 = vand.u32 %v3871, 4294901760
        %v3873 = vsub.f32 %v3871, %v3872
        %v3874 = vand.u32 %v3873, 4294901760
        %3875 = vmatpush.msra.mxu0 %v3874
        %v3876 = vand.u32 %v3444, 4294901760
        %v3877 = vsub.f32 %v3444, %v3876
        %v3878 = vand.u32 %v3877, 4294901760
        %v3879 = vsub.f32 %v3877, %v3878
        %v3880 = vand.u32 %v3879, 4294901760
        %3881 = vmatpush.msra.mxu0 %v3880
        %v3882 = vand.u32 %v3442, 4294901760
        %v3883 = vsub.f32 %v3442, %v3882
        %v3884 = vand.u32 %v3883, 4294901760
        %v3885 = vsub.f32 %v3883, %v3884
        %v3886 = vand.u32 %v3885, 4294901760
        %3887 = vmatpush.msra.mxu0 %v3886
        %v3888 = vand.u32 %v3440, 4294901760
        %v3889 = vsub.f32 %v3440, %v3888
        %v3890 = vand.u32 %v3889, 4294901760
        %v3891 = vsub.f32 %v3889, %v3890
        %v3892 = vand.u32 %v3891, 4294901760
        %3893 = vmatpush.msra.mxu0 %v3892
        %v3894 = vand.u32 %v3438, 4294901760
        %v3895 = vsub.f32 %v3438, %v3894
        %v3896 = vand.u32 %v3895, 4294901760
        %v3897 = vsub.f32 %v3895, %v3896
        %v3898 = vand.u32 %v3897, 4294901760
        %3899 = vmatpush.msra.mxu0 %v3898
        %v3900 = vand.u32 %v3436, 4294901760
        %v3901 = vsub.f32 %v3436, %v3900
        %v3902 = vand.u32 %v3901, 4294901760
        %v3903 = vsub.f32 %v3901, %v3902
        %v3904 = vand.u32 %v3903, 4294901760
        %3905 = vmatpush.msra.mxu0 %v3904
        %v3906 = vand.u32 %v3434, 4294901760
        %v3907 = vsub.f32 %v3434, %v3906
        %v3908 = vand.u32 %v3907, 4294901760
        %v3909 = vsub.f32 %v3907, %v3908
        %v3910 = vand.u32 %v3909, 4294901760
        %3911 = vmatpush.msra.mxu0 %v3910
        %v3912 = vand.u32 %v3432, 4294901760
        %v3913 = vsub.f32 %v3432, %v3912
        %v3914 = vand.u32 %v3913, 4294901760
        %v3915 = vsub.f32 %v3913, %v3914
        %v3916 = vand.u32 %v3915, 4294901760
        %3917 = vmatpush.msra.mxu0 %v3916
        %v3918 = vand.u32 %v3430, 4294901760
        %v3919 = vsub.f32 %v3430, %v3918
        %v3920 = vand.u32 %v3919, 4294901760
        %v3921 = vsub.f32 %v3919, %v3920
        %v3922 = vand.u32 %v3921, 4294901760
        %3923 = vmatpush.msra.mxu0 %v3922
        %v3924 = vand.u32 %v3428, 4294901760
        %v3925 = vsub.f32 %v3428, %v3924
        %v3926 = vand.u32 %v3925, 4294901760
        %v3927 = vsub.f32 %v3925, %v3926
        %v3928 = vand.u32 %v3927, 4294901760
        %3929 = vmatpush.msra.mxu0 %v3928
        %v3930 = vand.u32 %v3426, 4294901760
        %v3931 = vsub.f32 %v3426, %v3930
        %v3932 = vand.u32 %v3931, 4294901760
        %v3933 = vsub.f32 %v3931, %v3932
        %v3934 = vand.u32 %v3933, 4294901760
        %3935 = vmatpush.msra.mxu0 %v3934
        %v3936 = vand.u32 %v3329, 4294901760
        %3937 = vmatmul.f32.gmra.mxu0 %v3936
        %v3938 = vpop.f32.mrf.mxu0
        %v3939 = vadd.f32 %v3838, %v3938
        %3940 = vdwg.mxu0
        %v3941 = vand.u32 %v3456, 4294901760
        %v3942 = vsub.f32 %v3456, %v3941
        %3943 = vmatpush.msra.mxu0 %v3942
        %v3944 = vand.u32 %v3454, 4294901760
        %v3945 = vsub.f32 %v3454, %v3944
        %3946 = vmatpush.msra.mxu0 %v3945
        %v3947 = vand.u32 %v3452, 4294901760
        %v3948 = vsub.f32 %v3452, %v3947
        %3949 = vmatpush.msra.mxu0 %v3948
        %v3950 = vand.u32 %v3450, 4294901760
        %v3951 = vsub.f32 %v3450, %v3950
        %3952 = vmatpush.msra.mxu0 %v3951
        %v3953 = vand.u32 %v3448, 4294901760
        %v3954 = vsub.f32 %v3448, %v3953
        %3955 = vmatpush.msra.mxu0 %v3954
        %v3956 = vand.u32 %v3446, 4294901760
        %v3957 = vsub.f32 %v3446, %v3956
        %3958 = vmatpush.msra.mxu0 %v3957
        %v3959 = vand.u32 %v3444, 4294901760
        %v3960 = vsub.f32 %v3444, %v3959
        %3961 = vmatpush.msra.mxu0 %v3960
        %v3962 = vand.u32 %v3442, 4294901760
        %v3963 = vsub.f32 %v3442, %v3962
        %3964 = vmatpush.msra.mxu0 %v3963
        %v3965 = vand.u32 %v3440, 4294901760
        %v3966 = vsub.f32 %v3440, %v3965
        %3967 = vmatpush.msra.mxu0 %v3966
        %v3968 = vand.u32 %v3438, 4294901760
        %v3969 = vsub.f32 %v3438, %v3968
        %3970 = vmatpush.msra.mxu0 %v3969
        %v3971 = vand.u32 %v3436, 4294901760
        %v3972 = vsub.f32 %v3436, %v3971
        %3973 = vmatpush.msra.mxu0 %v3972
        %v3974 = vand.u32 %v3434, 4294901760
        %v3975 = vsub.f32 %v3434, %v3974
        %3976 = vmatpush.msra.mxu0 %v3975
        %v3977 = vand.u32 %v3432, 4294901760
        %v3978 = vsub.f32 %v3432, %v3977
        %3979 = vmatpush.msra.mxu0 %v3978
        %v3980 = vand.u32 %v3430, 4294901760
        %v3981 = vsub.f32 %v3430, %v3980
        %3982 = vmatpush.msra.mxu0 %v3981
        %v3983 = vand.u32 %v3428, 4294901760
        %v3984 = vsub.f32 %v3428, %v3983
        %3985 = vmatpush.msra.mxu0 %v3984
        %v3986 = vand.u32 %v3426, 4294901760
        %v3987 = vsub.f32 %v3426, %v3986
        %3988 = vmatpush.msra.mxu0 %v3987
        %v3989 = vand.u32 %v3329, 4294901760
        %v3990 = vsub.f32 %v3329, %v3989
        %3991 = vmatmul.f32.gmra.mxu0 %v3990
        %v3992 = vpop.f32.mrf.mxu0
        %v3993 = vadd.f32 %v3939, %v3992
        %3994 = vdwg.mxu0
        %v3995 = vand.u32 %v3456, 4294901760
        %3996 = vmatpush.msra.mxu0 %v3995
        %v3997 = vand.u32 %v3454, 4294901760
        %3998 = vmatpush.msra.mxu0 %v3997
        %v3999 = vand.u32 %v3452, 4294901760
        %4000 = vmatpush.msra.mxu0 %v3999
        %v4001 = vand.u32 %v3450, 4294901760
        %4002 = vmatpush.msra.mxu0 %v4001
        %v4003 = vand.u32 %v3448, 4294901760
        %4004 = vmatpush.msra.mxu0 %v4003
        %v4005 = vand.u32 %v3446, 4294901760
        %4006 = vmatpush.msra.mxu0 %v4005
        %v4007 = vand.u32 %v3444, 4294901760
        %4008 = vmatpush.msra.mxu0 %v4007
        %v4009 = vand.u32 %v3442, 4294901760
        %4010 = vmatpush.msra.mxu0 %v4009
        %v4011 = vand.u32 %v3440, 4294901760
        %4012 = vmatpush.msra.mxu0 %v4011
        %v4013 = vand.u32 %v3438, 4294901760
        %4014 = vmatpush.msra.mxu0 %v4013
        %v4015 = vand.u32 %v3436, 4294901760
        %4016 = vmatpush.msra.mxu0 %v4015
        %v4017 = vand.u32 %v3434, 4294901760
        %4018 = vmatpush.msra.mxu0 %v4017
        %v4019 = vand.u32 %v3432, 4294901760
        %4020 = vmatpush.msra.mxu0 %v4019
        %v4021 = vand.u32 %v3430, 4294901760
        %4022 = vmatpush.msra.mxu0 %v4021
        %v4023 = vand.u32 %v3428, 4294901760
        %4024 = vmatpush.msra.mxu0 %v4023
        %v4025 = vand.u32 %v3426, 4294901760
        %4026 = vmatpush.msra.mxu0 %v4025
        %v4027 = vand.u32 %v3329, 4294901760
        %v4028 = vsub.f32 %v3329, %v4027
        %v4029 = vand.u32 %v4028, 4294901760
        %4030 = vmatmul.f32.gmra.mxu0 %v4029
        %v4031 = vpop.f32.mrf.mxu0
        %v4032 = vadd.f32 %v3993, %v4031
        %4033 = vdwg.mxu0
        %v4034 = vand.u32 %v3456, 4294901760
        %v4035 = vsub.f32 %v3456, %v4034
        %v4036 = vand.u32 %v4035, 4294901760
        %4037 = vmatpush.msra.mxu0 %v4036
        %v4038 = vand.u32 %v3454, 4294901760
        %v4039 = vsub.f32 %v3454, %v4038
        %v4040 = vand.u32 %v4039, 4294901760
        %4041 = vmatpush.msra.mxu0 %v4040
        %v4042 = vand.u32 %v3452, 4294901760
        %v4043 = vsub.f32 %v3452, %v4042
        %v4044 = vand.u32 %v4043, 4294901760
        %4045 = vmatpush.msra.mxu0 %v4044
        %v4046 = vand.u32 %v3450, 4294901760
        %v4047 = vsub.f32 %v3450, %v4046
        %v4048 = vand.u32 %v4047, 4294901760
        %4049 = vmatpush.msra.mxu0 %v4048
        %v4050 = vand.u32 %v3448, 4294901760
        %v4051 = vsub.f32 %v3448, %v4050
        %v4052 = vand.u32 %v4051, 4294901760
        %4053 = vmatpush.msra.mxu0 %v4052
        %v4054 = vand.u32 %v3446, 4294901760
        %v4055 = vsub.f32 %v3446, %v4054
        %v4056 = vand.u32 %v4055, 4294901760
        %4057 = vmatpush.msra.mxu0 %v4056
        %v4058 = vand.u32 %v3444, 4294901760
        %v4059 = vsub.f32 %v3444, %v4058
        %v4060 = vand.u32 %v4059, 4294901760
        %4061 = vmatpush.msra.mxu0 %v4060
        %v4062 = vand.u32 %v3442, 4294901760
        %v4063 = vsub.f32 %v3442, %v4062
        %v4064 = vand.u32 %v4063, 4294901760
        %4065 = vmatpush.msra.mxu0 %v4064
        %v4066 = vand.u32 %v3440, 4294901760
        %v4067 = vsub.f32 %v3440, %v4066
        %v4068 = vand.u32 %v4067, 4294901760
        %4069 = vmatpush.msra.mxu0 %v4068
        %v4070 = vand.u32 %v3438, 4294901760
        %v4071 = vsub.f32 %v3438, %v4070
        %v4072 = vand.u32 %v4071, 4294901760
        %4073 = vmatpush.msra.mxu0 %v4072
        %v4074 = vand.u32 %v3436, 4294901760
        %v4075 = vsub.f32 %v3436, %v4074
        %v4076 = vand.u32 %v4075, 4294901760
        %4077 = vmatpush.msra.mxu0 %v4076
        %v4078 = vand.u32 %v3434, 4294901760
        %v4079 = vsub.f32 %v3434, %v4078
        %v4080 = vand.u32 %v4079, 4294901760
        %4081 = vmatpush.msra.mxu0 %v4080
        %v4082 = vand.u32 %v3432, 4294901760
        %v4083 = vsub.f32 %v3432, %v4082
        %v4084 = vand.u32 %v4083, 4294901760
        %4085 = vmatpush.msra.mxu0 %v4084
        %v4086 = vand.u32 %v3430, 4294901760
        %v4087 = vsub.f32 %v3430, %v4086
        %v4088 = vand.u32 %v4087, 4294901760
        %4089 = vmatpush.msra.mxu0 %v4088
        %v4090 = vand.u32 %v3428, 4294901760
        %v4091 = vsub.f32 %v3428, %v4090
        %v4092 = vand.u32 %v4091, 4294901760
        %4093 = vmatpush.msra.mxu0 %v4092
        %v4094 = vand.u32 %v3426, 4294901760
        %v4095 = vsub.f32 %v3426, %v4094
        %v4096 = vand.u32 %v4095, 4294901760
        %4097 = vmatpush.msra.mxu0 %v4096
        %v4098 = vand.u32 %v3329, 4294901760
        %4099 = vmatmul.f32.gmra.mxu0 %v4098
        %v4100 = vpop.f32.mrf.mxu0
        %v4101 = vadd.f32 %v4032, %v4100
        %4102 = vdwg.mxu0
        %v4103 = vand.u32 %v3456, 4294901760
        %4104 = vmatpush.msra.mxu0 %v4103
        %v4105 = vand.u32 %v3454, 4294901760
        %4106 = vmatpush.msra.mxu0 %v4105
        %v4107 = vand.u32 %v3452, 4294901760
        %4108 = vmatpush.msra.mxu0 %v4107
        %v4109 = vand.u32 %v3450, 4294901760
        %4110 = vmatpush.msra.mxu0 %v4109
        %v4111 = vand.u32 %v3448, 4294901760
        %4112 = vmatpush.msra.mxu0 %v4111
        %v4113 = vand.u32 %v3446, 4294901760
        %4114 = vmatpush.msra.mxu0 %v4113
        %v4115 = vand.u32 %v3444, 4294901760
        %4116 = vmatpush.msra.mxu0 %v4115
        %v4117 = vand.u32 %v3442, 4294901760
        %4118 = vmatpush.msra.mxu0 %v4117
        %v4119 = vand.u32 %v3440, 4294901760
        %4120 = vmatpush.msra.mxu0 %v4119
        %v4121 = vand.u32 %v3438, 4294901760
        %4122 = vmatpush.msra.mxu0 %v4121
        %v4123 = vand.u32 %v3436, 4294901760
        %4124 = vmatpush.msra.mxu0 %v4123
        %v4125 = vand.u32 %v3434, 4294901760
        %4126 = vmatpush.msra.mxu0 %v4125
        %v4127 = vand.u32 %v3432, 4294901760
        %4128 = vmatpush.msra.mxu0 %v4127
        %v4129 = vand.u32 %v3430, 4294901760
        %4130 = vmatpush.msra.mxu0 %v4129
        %v4131 = vand.u32 %v3428, 4294901760
        %4132 = vmatpush.msra.mxu0 %v4131
        %v4133 = vand.u32 %v3426, 4294901760
        %4134 = vmatpush.msra.mxu0 %v4133
        %v4135 = vand.u32 %v3329, 4294901760
        %4136 = vmatmul.f32.gmra.mxu0 %v4135
        %v4137 = vpop.f32.mrf.mxu0
        %v4138 = vadd.f32 %v4101, %v4137
        %4139 = vdwg.mxu0
        %v4140 = vand.u32 %v3425, 4294901760
        %4141 = vmatpush.msra.mxu0 %v4140
        %v4142 = vand.u32 %v3423, 4294901760
        %4143 = vmatpush.msra.mxu0 %v4142
        %v4144 = vand.u32 %v3421, 4294901760
        %4145 = vmatpush.msra.mxu0 %v4144
        %v4146 = vand.u32 %v3419, 4294901760
        %4147 = vmatpush.msra.mxu0 %v4146
        %v4148 = vand.u32 %v3417, 4294901760
        %4149 = vmatpush.msra.mxu0 %v4148
        %v4150 = vand.u32 %v3415, 4294901760
        %4151 = vmatpush.msra.mxu0 %v4150
        %v4152 = vand.u32 %v3413, 4294901760
        %4153 = vmatpush.msra.mxu0 %v4152
        %v4154 = vand.u32 %v3411, 4294901760
        %4155 = vmatpush.msra.mxu0 %v4154
        %v4156 = vand.u32 %v3409, 4294901760
        %4157 = vmatpush.msra.mxu0 %v4156
        %v4158 = vand.u32 %v3407, 4294901760
        %4159 = vmatpush.msra.mxu0 %v4158
        %v4160 = vand.u32 %v3405, 4294901760
        %4161 = vmatpush.msra.mxu0 %v4160
        %v4162 = vand.u32 %v3403, 4294901760
        %4163 = vmatpush.msra.mxu0 %v4162
        %v4164 = vand.u32 %v3401, 4294901760
        %4165 = vmatpush.msra.mxu0 %v4164
        %v4166 = vand.u32 %v3399, 4294901760
        %4167 = vmatpush.msra.mxu0 %v4166
        %v4168 = vand.u32 %v3397, 4294901760
        %4169 = vmatpush.msra.mxu0 %v4168
        %v4170 = vand.u32 %v3395, 4294901760
        %4171 = vmatpush.msra.mxu0 %v4170
        %v4172 = vand.u32 %v3328, 4294901760
        %v4173 = vsub.f32 %v3328, %v4172
        %v4174 = vand.u32 %v4173, 4294901760
        %v4175 = vsub.f32 %v4173, %v4174
        %v4176 = vand.u32 %v4175, 4294901760
        %4177 = vmatmul.f32.gmra.mxu0 %v4176
        %v4178 = vpop.f32.mrf.mxu0
        %v4179 = vadd.f32 0.0, %v4178
        %4180 = vdwg.mxu0
        %v4181 = vand.u32 %v3425, 4294901760
        %v4182 = vsub.f32 %v3425, %v4181
        %v4183 = vand.u32 %v4182, 4294901760
        %v4184 = vsub.f32 %v4182, %v4183
        %v4185 = vand.u32 %v4184, 4294901760
        %4186 = vmatpush.msra.mxu0 %v4185
        %v4187 = vand.u32 %v3423, 4294901760
        %v4188 = vsub.f32 %v3423, %v4187
        %v4189 = vand.u32 %v4188, 4294901760
        %v4190 = vsub.f32 %v4188, %v4189
        %v4191 = vand.u32 %v4190, 4294901760
        %4192 = vmatpush.msra.mxu0 %v4191
        %v4193 = vand.u32 %v3421, 4294901760
        %v4194 = vsub.f32 %v3421, %v4193
        %v4195 = vand.u32 %v4194, 4294901760
        %v4196 = vsub.f32 %v4194, %v4195
        %v4197 = vand.u32 %v4196, 4294901760
        %4198 = vmatpush.msra.mxu0 %v4197
        %v4199 = vand.u32 %v3419, 4294901760
        %v4200 = vsub.f32 %v3419, %v4199
        %v4201 = vand.u32 %v4200, 4294901760
        %v4202 = vsub.f32 %v4200, %v4201
        %v4203 = vand.u32 %v4202, 4294901760
        %4204 = vmatpush.msra.mxu0 %v4203
        %v4205 = vand.u32 %v3417, 4294901760
        %v4206 = vsub.f32 %v3417, %v4205
        %v4207 = vand.u32 %v4206, 4294901760
        %v4208 = vsub.f32 %v4206, %v4207
        %v4209 = vand.u32 %v4208, 4294901760
        %4210 = vmatpush.msra.mxu0 %v4209
        %v4211 = vand.u32 %v3415, 4294901760
        %v4212 = vsub.f32 %v3415, %v4211
        %v4213 = vand.u32 %v4212, 4294901760
        %v4214 = vsub.f32 %v4212, %v4213
        %v4215 = vand.u32 %v4214, 4294901760
        %4216 = vmatpush.msra.mxu0 %v4215
        %v4217 = vand.u32 %v3413, 4294901760
        %v4218 = vsub.f32 %v3413, %v4217
        %v4219 = vand.u32 %v4218, 4294901760
        %v4220 = vsub.f32 %v4218, %v4219
        %v4221 = vand.u32 %v4220, 4294901760
        %4222 = vmatpush.msra.mxu0 %v4221
        %v4223 = vand.u32 %v3411, 4294901760
        %v4224 = vsub.f32 %v3411, %v4223
        %v4225 = vand.u32 %v4224, 4294901760
        %v4226 = vsub.f32 %v4224, %v4225
        %v4227 = vand.u32 %v4226, 4294901760
        %4228 = vmatpush.msra.mxu0 %v4227
        %v4229 = vand.u32 %v3409, 4294901760
        %v4230 = vsub.f32 %v3409, %v4229
        %v4231 = vand.u32 %v4230, 4294901760
        %v4232 = vsub.f32 %v4230, %v4231
        %v4233 = vand.u32 %v4232, 4294901760
        %4234 = vmatpush.msra.mxu0 %v4233
        %v4235 = vand.u32 %v3407, 4294901760
        %v4236 = vsub.f32 %v3407, %v4235
        %v4237 = vand.u32 %v4236, 4294901760
        %v4238 = vsub.f32 %v4236, %v4237
        %v4239 = vand.u32 %v4238, 4294901760
        %4240 = vmatpush.msra.mxu0 %v4239
        %v4241 = vand.u32 %v3405, 4294901760
        %v4242 = vsub.f32 %v3405, %v4241
        %v4243 = vand.u32 %v4242, 4294901760
        %v4244 = vsub.f32 %v4242, %v4243
        %v4245 = vand.u32 %v4244, 4294901760
        %4246 = vmatpush.msra.mxu0 %v4245
        %v4247 = vand.u32 %v3403, 4294901760
        %v4248 = vsub.f32 %v3403, %v4247
        %v4249 = vand.u32 %v4248, 4294901760
        %v4250 = vsub.f32 %v4248, %v4249
        %v4251 = vand.u32 %v4250, 4294901760
        %4252 = vmatpush.msra.mxu0 %v4251
        %v4253 = vand.u32 %v3401, 4294901760
        %v4254 = vsub.f32 %v3401, %v4253
        %v4255 = vand.u32 %v4254, 4294901760
        %v4256 = vsub.f32 %v4254, %v4255
        %v4257 = vand.u32 %v4256, 4294901760
        %4258 = vmatpush.msra.mxu0 %v4257
        %v4259 = vand.u32 %v3399, 4294901760
        %v4260 = vsub.f32 %v3399, %v4259
        %v4261 = vand.u32 %v4260, 4294901760
        %v4262 = vsub.f32 %v4260, %v4261
        %v4263 = vand.u32 %v4262, 4294901760
        %4264 = vmatpush.msra.mxu0 %v4263
        %v4265 = vand.u32 %v3397, 4294901760
        %v4266 = vsub.f32 %v3397, %v4265
        %v4267 = vand.u32 %v4266, 4294901760
        %v4268 = vsub.f32 %v4266, %v4267
        %v4269 = vand.u32 %v4268, 4294901760
        %4270 = vmatpush.msra.mxu0 %v4269
        %v4271 = vand.u32 %v3395, 4294901760
        %v4272 = vsub.f32 %v3395, %v4271
        %v4273 = vand.u32 %v4272, 4294901760
        %v4274 = vsub.f32 %v4272, %v4273
        %v4275 = vand.u32 %v4274, 4294901760
        %4276 = vmatpush.msra.mxu0 %v4275
        %v4277 = vand.u32 %v3328, 4294901760
        %4278 = vmatmul.f32.gmra.mxu0 %v4277
        %v4279 = vpop.f32.mrf.mxu0
        %v4280 = vadd.f32 %v4179, %v4279
        %4281 = vdwg.mxu0
        %v4282 = vand.u32 %v3425, 4294901760
        %v4283 = vsub.f32 %v3425, %v4282
        %4284 = vmatpush.msra.mxu0 %v4283
        %v4285 = vand.u32 %v3423, 4294901760
        %v4286 = vsub.f32 %v3423, %v4285
        %4287 = vmatpush.msra.mxu0 %v4286
        %v4288 = vand.u32 %v3421, 4294901760
        %v4289 = vsub.f32 %v3421, %v4288
        %4290 = vmatpush.msra.mxu0 %v4289
        %v4291 = vand.u32 %v3419, 4294901760
        %v4292 = vsub.f32 %v3419, %v4291
        %4293 = vmatpush.msra.mxu0 %v4292
        %v4294 = vand.u32 %v3417, 4294901760
        %v4295 = vsub.f32 %v3417, %v4294
        %4296 = vmatpush.msra.mxu0 %v4295
        %v4297 = vand.u32 %v3415, 4294901760
        %v4298 = vsub.f32 %v3415, %v4297
        %4299 = vmatpush.msra.mxu0 %v4298
        %v4300 = vand.u32 %v3413, 4294901760
        %v4301 = vsub.f32 %v3413, %v4300
        %4302 = vmatpush.msra.mxu0 %v4301
        %v4303 = vand.u32 %v3411, 4294901760
        %v4304 = vsub.f32 %v3411, %v4303
        %4305 = vmatpush.msra.mxu0 %v4304
        %v4306 = vand.u32 %v3409, 4294901760
        %v4307 = vsub.f32 %v3409, %v4306
        %4308 = vmatpush.msra.mxu0 %v4307
        %v4309 = vand.u32 %v3407, 4294901760
        %v4310 = vsub.f32 %v3407, %v4309
        %4311 = vmatpush.msra.mxu0 %v4310
        %v4312 = vand.u32 %v3405, 4294901760
        %v4313 = vsub.f32 %v3405, %v4312
        %4314 = vmatpush.msra.mxu0 %v4313
        %v4315 = vand.u32 %v3403, 4294901760
        %v4316 = vsub.f32 %v3403, %v4315
        %4317 = vmatpush.msra.mxu0 %v4316
        %v4318 = vand.u32 %v3401, 4294901760
        %v4319 = vsub.f32 %v3401, %v4318
        %4320 = vmatpush.msra.mxu0 %v4319
        %v4321 = vand.u32 %v3399, 4294901760
        %v4322 = vsub.f32 %v3399, %v4321
        %4323 = vmatpush.msra.mxu0 %v4322
        %v4324 = vand.u32 %v3397, 4294901760
        %v4325 = vsub.f32 %v3397, %v4324
        %4326 = vmatpush.msra.mxu0 %v4325
        %v4327 = vand.u32 %v3395, 4294901760
        %v4328 = vsub.f32 %v3395, %v4327
        %4329 = vmatpush.msra.mxu0 %v4328
        %v4330 = vand.u32 %v3328, 4294901760
        %v4331 = vsub.f32 %v3328, %v4330
        %4332 = vmatmul.f32.gmra.mxu0 %v4331
        %v4333 = vpop.f32.mrf.mxu0
        %v4334 = vadd.f32 %v4280, %v4333
        %4335 = vdwg.mxu0
        %v4336 = vand.u32 %v3425, 4294901760
        %4337 = vmatpush.msra.mxu0 %v4336
        %v4338 = vand.u32 %v3423, 4294901760
        %4339 = vmatpush.msra.mxu0 %v4338
        %v4340 = vand.u32 %v3421, 4294901760
        %4341 = vmatpush.msra.mxu0 %v4340
        %v4342 = vand.u32 %v3419, 4294901760
        %4343 = vmatpush.msra.mxu0 %v4342
        %v4344 = vand.u32 %v3417, 4294901760
        %4345 = vmatpush.msra.mxu0 %v4344
        %v4346 = vand.u32 %v3415, 4294901760
        %4347 = vmatpush.msra.mxu0 %v4346
        %v4348 = vand.u32 %v3413, 4294901760
        %4349 = vmatpush.msra.mxu0 %v4348
        %v4350 = vand.u32 %v3411, 4294901760
        %4351 = vmatpush.msra.mxu0 %v4350
        %v4352 = vand.u32 %v3409, 4294901760
        %4353 = vmatpush.msra.mxu0 %v4352
        %v4354 = vand.u32 %v3407, 4294901760
        %4355 = vmatpush.msra.mxu0 %v4354
        %v4356 = vand.u32 %v3405, 4294901760
        %4357 = vmatpush.msra.mxu0 %v4356
        %v4358 = vand.u32 %v3403, 4294901760
        %4359 = vmatpush.msra.mxu0 %v4358
        %v4360 = vand.u32 %v3401, 4294901760
        %4361 = vmatpush.msra.mxu0 %v4360
        %v4362 = vand.u32 %v3399, 4294901760
        %4363 = vmatpush.msra.mxu0 %v4362
        %v4364 = vand.u32 %v3397, 4294901760
        %4365 = vmatpush.msra.mxu0 %v4364
        %v4366 = vand.u32 %v3395, 4294901760
        %4367 = vmatpush.msra.mxu0 %v4366
        %v4368 = vand.u32 %v3328, 4294901760
        %v4369 = vsub.f32 %v3328, %v4368
        %v4370 = vand.u32 %v4369, 4294901760
        %4371 = vmatmul.f32.gmra.mxu0 %v4370
        %v4372 = vpop.f32.mrf.mxu0
        %v4373 = vadd.f32 %v4334, %v4372
        %4374 = vdwg.mxu0
        %v4375 = vand.u32 %v3425, 4294901760
        %v4376 = vsub.f32 %v3425, %v4375
        %v4377 = vand.u32 %v4376, 4294901760
        %4378 = vmatpush.msra.mxu0 %v4377
        %v4379 = vand.u32 %v3423, 4294901760
        %v4380 = vsub.f32 %v3423, %v4379
        %v4381 = vand.u32 %v4380, 4294901760
        %4382 = vmatpush.msra.mxu0 %v4381
        %v4383 = vand.u32 %v3421, 4294901760
        %v4384 = vsub.f32 %v3421, %v4383
        %v4385 = vand.u32 %v4384, 4294901760
        %4386 = vmatpush.msra.mxu0 %v4385
        %v4387 = vand.u32 %v3419, 4294901760
        %v4388 = vsub.f32 %v3419, %v4387
        %v4389 = vand.u32 %v4388, 4294901760
        %4390 = vmatpush.msra.mxu0 %v4389
        %v4391 = vand.u32 %v3417, 4294901760
        %v4392 = vsub.f32 %v3417, %v4391
        %v4393 = vand.u32 %v4392, 4294901760
        %4394 = vmatpush.msra.mxu0 %v4393
        %v4395 = vand.u32 %v3415, 4294901760
        %v4396 = vsub.f32 %v3415, %v4395
        %v4397 = vand.u32 %v4396, 4294901760
        %4398 = vmatpush.msra.mxu0 %v4397
        %v4399 = vand.u32 %v3413, 4294901760
        %v4400 = vsub.f32 %v3413, %v4399
        %v4401 = vand.u32 %v4400, 4294901760
        %4402 = vmatpush.msra.mxu0 %v4401
        %v4403 = vand.u32 %v3411, 4294901760
        %v4404 = vsub.f32 %v3411, %v4403
        %v4405 = vand.u32 %v4404, 4294901760
        %4406 = vmatpush.msra.mxu0 %v4405
        %v4407 = vand.u32 %v3409, 4294901760
        %v4408 = vsub.f32 %v3409, %v4407
        %v4409 = vand.u32 %v4408, 4294901760
        %4410 = vmatpush.msra.mxu0 %v4409
        %v4411 = vand.u32 %v3407, 4294901760
        %v4412 = vsub.f32 %v3407, %v4411
        %v4413 = vand.u32 %v4412, 4294901760
        %4414 = vmatpush.msra.mxu0 %v4413
        %v4415 = vand.u32 %v3405, 4294901760
        %v4416 = vsub.f32 %v3405, %v4415
        %v4417 = vand.u32 %v4416, 4294901760
        %4418 = vmatpush.msra.mxu0 %v4417
        %v4419 = vand.u32 %v3403, 4294901760
        %v4420 = vsub.f32 %v3403, %v4419
        %v4421 = vand.u32 %v4420, 4294901760
        %4422 = vmatpush.msra.mxu0 %v4421
        %v4423 = vand.u32 %v3401, 4294901760
        %v4424 = vsub.f32 %v3401, %v4423
        %v4425 = vand.u32 %v4424, 4294901760
        %4426 = vmatpush.msra.mxu0 %v4425
        %v4427 = vand.u32 %v3399, 4294901760
        %v4428 = vsub.f32 %v3399, %v4427
        %v4429 = vand.u32 %v4428, 4294901760
        %4430 = vmatpush.msra.mxu0 %v4429
        %v4431 = vand.u32 %v3397, 4294901760
        %v4432 = vsub.f32 %v3397, %v4431
        %v4433 = vand.u32 %v4432, 4294901760
        %4434 = vmatpush.msra.mxu0 %v4433
        %v4435 = vand.u32 %v3395, 4294901760
        %v4436 = vsub.f32 %v3395, %v4435
        %v4437 = vand.u32 %v4436, 4294901760
        %4438 = vmatpush.msra.mxu0 %v4437
        %v4439 = vand.u32 %v3328, 4294901760
        %4440 = vmatmul.f32.gmra.mxu0 %v4439
        %v4441 = vpop.f32.mrf.mxu0
        %v4442 = vadd.f32 %v4373, %v4441
        %4443 = vdwg.mxu0
        %v4444 = vand.u32 %v3425, 4294901760
        %4445 = vmatpush.msra.mxu0 %v4444
        %v4446 = vand.u32 %v3423, 4294901760
        %4447 = vmatpush.msra.mxu0 %v4446
        %v4448 = vand.u32 %v3421, 4294901760
        %4449 = vmatpush.msra.mxu0 %v4448
        %v4450 = vand.u32 %v3419, 4294901760
        %4451 = vmatpush.msra.mxu0 %v4450
        %v4452 = vand.u32 %v3417, 4294901760
        %4453 = vmatpush.msra.mxu0 %v4452
        %v4454 = vand.u32 %v3415, 4294901760
        %4455 = vmatpush.msra.mxu0 %v4454
        %v4456 = vand.u32 %v3413, 4294901760
        %4457 = vmatpush.msra.mxu0 %v4456
        %v4458 = vand.u32 %v3411, 4294901760
        %4459 = vmatpush.msra.mxu0 %v4458
        %v4460 = vand.u32 %v3409, 4294901760
        %4461 = vmatpush.msra.mxu0 %v4460
        %v4462 = vand.u32 %v3407, 4294901760
        %4463 = vmatpush.msra.mxu0 %v4462
        %v4464 = vand.u32 %v3405, 4294901760
        %4465 = vmatpush.msra.mxu0 %v4464
        %v4466 = vand.u32 %v3403, 4294901760
        %4467 = vmatpush.msra.mxu0 %v4466
        %v4468 = vand.u32 %v3401, 4294901760
        %4469 = vmatpush.msra.mxu0 %v4468
        %v4470 = vand.u32 %v3399, 4294901760
        %4471 = vmatpush.msra.mxu0 %v4470
        %v4472 = vand.u32 %v3397, 4294901760
        %4473 = vmatpush.msra.mxu0 %v4472
        %v4474 = vand.u32 %v3395, 4294901760
        %4475 = vmatpush.msra.mxu0 %v4474
        %v4476 = vand.u32 %v3328, 4294901760
        %4477 = vmatmul.f32.gmra.mxu0 %v4476
        %v4478 = vpop.f32.mrf.mxu0
        %v4479 = vadd.f32 %v4442, %v4478
        %4480 = vdwg.mxu0
        %v4481 = vand.u32 %v3457, 4294901760
        %4482 = vmatpush.msra.mxu0 %v4481
        %v4483 = vand.u32 %v3455, 4294901760
        %4484 = vmatpush.msra.mxu0 %v4483
        %v4485 = vand.u32 %v3453, 4294901760
        %4486 = vmatpush.msra.mxu0 %v4485
        %v4487 = vand.u32 %v3451, 4294901760
        %4488 = vmatpush.msra.mxu0 %v4487
        %v4489 = vand.u32 %v3449, 4294901760
        %4490 = vmatpush.msra.mxu0 %v4489
        %v4491 = vand.u32 %v3447, 4294901760
        %4492 = vmatpush.msra.mxu0 %v4491
        %v4493 = vand.u32 %v3445, 4294901760
        %4494 = vmatpush.msra.mxu0 %v4493
        %v4495 = vand.u32 %v3443, 4294901760
        %4496 = vmatpush.msra.mxu0 %v4495
        %v4497 = vand.u32 %v3441, 4294901760
        %4498 = vmatpush.msra.mxu0 %v4497
        %v4499 = vand.u32 %v3439, 4294901760
        %4500 = vmatpush.msra.mxu0 %v4499
        %v4501 = vand.u32 %v3437, 4294901760
        %4502 = vmatpush.msra.mxu0 %v4501
        %v4503 = vand.u32 %v3435, 4294901760
        %4504 = vmatpush.msra.mxu0 %v4503
        %v4505 = vand.u32 %v3433, 4294901760
        %4506 = vmatpush.msra.mxu0 %v4505
        %v4507 = vand.u32 %v3431, 4294901760
        %4508 = vmatpush.msra.mxu0 %v4507
        %v4509 = vand.u32 %v3429, 4294901760
        %4510 = vmatpush.msra.mxu0 %v4509
        %v4511 = vand.u32 %v3427, 4294901760
        %4512 = vmatpush.msra.mxu0 %v4511
        %v4513 = vand.u32 %v3329, 4294901760
        %v4514 = vsub.f32 %v3329, %v4513
        %v4515 = vand.u32 %v4514, 4294901760
        %v4516 = vsub.f32 %v4514, %v4515
        %v4517 = vand.u32 %v4516, 4294901760
        %4518 = vmatmul.f32.gmra.mxu0 %v4517
        %v4519 = vpop.f32.mrf.mxu0
        %v4520 = vadd.f32 %v4479, %v4519
        %4521 = vdwg.mxu0
        %v4522 = vand.u32 %v3457, 4294901760
        %v4523 = vsub.f32 %v3457, %v4522
        %v4524 = vand.u32 %v4523, 4294901760
        %v4525 = vsub.f32 %v4523, %v4524
        %v4526 = vand.u32 %v4525, 4294901760
        %4527 = vmatpush.msra.mxu0 %v4526
        %v4528 = vand.u32 %v3455, 4294901760
        %v4529 = vsub.f32 %v3455, %v4528
        %v4530 = vand.u32 %v4529, 4294901760
        %v4531 = vsub.f32 %v4529, %v4530
        %v4532 = vand.u32 %v4531, 4294901760
        %4533 = vmatpush.msra.mxu0 %v4532
        %v4534 = vand.u32 %v3453, 4294901760
        %v4535 = vsub.f32 %v3453, %v4534
        %v4536 = vand.u32 %v4535, 4294901760
        %v4537 = vsub.f32 %v4535, %v4536
        %v4538 = vand.u32 %v4537, 4294901760
        %4539 = vmatpush.msra.mxu0 %v4538
        %v4540 = vand.u32 %v3451, 4294901760
        %v4541 = vsub.f32 %v3451, %v4540
        %v4542 = vand.u32 %v4541, 4294901760
        %v4543 = vsub.f32 %v4541, %v4542
        %v4544 = vand.u32 %v4543, 4294901760
        %4545 = vmatpush.msra.mxu0 %v4544
        %v4546 = vand.u32 %v3449, 4294901760
        %v4547 = vsub.f32 %v3449, %v4546
        %v4548 = vand.u32 %v4547, 4294901760
        %v4549 = vsub.f32 %v4547, %v4548
        %v4550 = vand.u32 %v4549, 4294901760
        %4551 = vmatpush.msra.mxu0 %v4550
        %v4552 = vand.u32 %v3447, 4294901760
        %v4553 = vsub.f32 %v3447, %v4552
        %v4554 = vand.u32 %v4553, 4294901760
        %v4555 = vsub.f32 %v4553, %v4554
        %v4556 = vand.u32 %v4555, 4294901760
        %4557 = vmatpush.msra.mxu0 %v4556
        %v4558 = vand.u32 %v3445, 4294901760
        %v4559 = vsub.f32 %v3445, %v4558
        %v4560 = vand.u32 %v4559, 4294901760
        %v4561 = vsub.f32 %v4559, %v4560
        %v4562 = vand.u32 %v4561, 4294901760
        %4563 = vmatpush.msra.mxu0 %v4562
        %v4564 = vand.u32 %v3443, 4294901760
        %v4565 = vsub.f32 %v3443, %v4564
        %v4566 = vand.u32 %v4565, 4294901760
        %v4567 = vsub.f32 %v4565, %v4566
        %v4568 = vand.u32 %v4567, 4294901760
        %4569 = vmatpush.msra.mxu0 %v4568
        %v4570 = vand.u32 %v3441, 4294901760
        %v4571 = vsub.f32 %v3441, %v4570
        %v4572 = vand.u32 %v4571, 4294901760
        %v4573 = vsub.f32 %v4571, %v4572
        %v4574 = vand.u32 %v4573, 4294901760
        %4575 = vmatpush.msra.mxu0 %v4574
        %v4576 = vand.u32 %v3439, 4294901760
        %v4577 = vsub.f32 %v3439, %v4576
        %v4578 = vand.u32 %v4577, 4294901760
        %v4579 = vsub.f32 %v4577, %v4578
        %v4580 = vand.u32 %v4579, 4294901760
        %4581 = vmatpush.msra.mxu0 %v4580
        %v4582 = vand.u32 %v3437, 4294901760
        %v4583 = vsub.f32 %v3437, %v4582
        %v4584 = vand.u32 %v4583, 4294901760
        %v4585 = vsub.f32 %v4583, %v4584
        %v4586 = vand.u32 %v4585, 4294901760
        %4587 = vmatpush.msra.mxu0 %v4586
        %v4588 = vand.u32 %v3435, 4294901760
        %v4589 = vsub.f32 %v3435, %v4588
        %v4590 = vand.u32 %v4589, 4294901760
        %v4591 = vsub.f32 %v4589, %v4590
        %v4592 = vand.u32 %v4591, 4294901760
        %4593 = vmatpush.msra.mxu0 %v4592
        %v4594 = vand.u32 %v3433, 4294901760
        %v4595 = vsub.f32 %v3433, %v4594
        %v4596 = vand.u32 %v4595, 4294901760
        %v4597 = vsub.f32 %v4595, %v4596
        %v4598 = vand.u32 %v4597, 4294901760
        %4599 = vmatpush.msra.mxu0 %v4598
        %v4600 = vand.u32 %v3431, 4294901760
        %v4601 = vsub.f32 %v3431, %v4600
        %v4602 = vand.u32 %v4601, 4294901760
        %v4603 = vsub.f32 %v4601, %v4602
        %v4604 = vand.u32 %v4603, 4294901760
        %4605 = vmatpush.msra.mxu0 %v4604
        %v4606 = vand.u32 %v3429, 4294901760
        %v4607 = vsub.f32 %v3429, %v4606
        %v4608 = vand.u32 %v4607, 4294901760
        %v4609 = vsub.f32 %v4607, %v4608
        %v4610 = vand.u32 %v4609, 4294901760
        %4611 = vmatpush.msra.mxu0 %v4610
        %v4612 = vand.u32 %v3427, 4294901760
        %v4613 = vsub.f32 %v3427, %v4612
        %v4614 = vand.u32 %v4613, 4294901760
        %v4615 = vsub.f32 %v4613, %v4614
        %v4616 = vand.u32 %v4615, 4294901760
        %4617 = vmatpush.msra.mxu0 %v4616
        %v4618 = vand.u32 %v3329, 4294901760
        %4619 = vmatmul.f32.gmra.mxu0 %v4618
        %v4620 = vpop.f32.mrf.mxu0
        %v4621 = vadd.f32 %v4520, %v4620
        %4622 = vdwg.mxu0
        %v4623 = vand.u32 %v3457, 4294901760
        %v4624 = vsub.f32 %v3457, %v4623
        %4625 = vmatpush.msra.mxu0 %v4624
        %v4626 = vand.u32 %v3455, 4294901760
        %v4627 = vsub.f32 %v3455, %v4626
        %4628 = vmatpush.msra.mxu0 %v4627
        %v4629 = vand.u32 %v3453, 4294901760
        %v4630 = vsub.f32 %v3453, %v4629
        %4631 = vmatpush.msra.mxu0 %v4630
        %v4632 = vand.u32 %v3451, 4294901760
        %v4633 = vsub.f32 %v3451, %v4632
        %4634 = vmatpush.msra.mxu0 %v4633
        %v4635 = vand.u32 %v3449, 4294901760
        %v4636 = vsub.f32 %v3449, %v4635
        %4637 = vmatpush.msra.mxu0 %v4636
        %v4638 = vand.u32 %v3447, 4294901760
        %v4639 = vsub.f32 %v3447, %v4638
        %4640 = vmatpush.msra.mxu0 %v4639
        %v4641 = vand.u32 %v3445, 4294901760
        %v4642 = vsub.f32 %v3445, %v4641
        %4643 = vmatpush.msra.mxu0 %v4642
        %v4644 = vand.u32 %v3443, 4294901760
        %v4645 = vsub.f32 %v3443, %v4644
        %4646 = vmatpush.msra.mxu0 %v4645
        %v4647 = vand.u32 %v3441, 4294901760
        %v4648 = vsub.f32 %v3441, %v4647
        %4649 = vmatpush.msra.mxu0 %v4648
        %v4650 = vand.u32 %v3439, 4294901760
        %v4651 = vsub.f32 %v3439, %v4650
        %4652 = vmatpush.msra.mxu0 %v4651
        %v4653 = vand.u32 %v3437, 4294901760
        %v4654 = vsub.f32 %v3437, %v4653
        %4655 = vmatpush.msra.mxu0 %v4654
        %v4656 = vand.u32 %v3435, 4294901760
        %v4657 = vsub.f32 %v3435, %v4656
        %4658 = vmatpush.msra.mxu0 %v4657
        %v4659 = vand.u32 %v3433, 4294901760
        %v4660 = vsub.f32 %v3433, %v4659
        %4661 = vmatpush.msra.mxu0 %v4660
        %v4662 = vand.u32 %v3431, 4294901760
        %v4663 = vsub.f32 %v3431, %v4662
        %4664 = vmatpush.msra.mxu0 %v4663
        %v4665 = vand.u32 %v3429, 4294901760
        %v4666 = vsub.f32 %v3429, %v4665
        %4667 = vmatpush.msra.mxu0 %v4666
        %v4668 = vand.u32 %v3427, 4294901760
        %v4669 = vsub.f32 %v3427, %v4668
        %4670 = vmatpush.msra.mxu0 %v4669
        %v4671 = vand.u32 %v3329, 4294901760
        %v4672 = vsub.f32 %v3329, %v4671
        %4673 = vmatmul.f32.gmra.mxu0 %v4672
        %v4674 = vpop.f32.mrf.mxu0
        %v4675 = vadd.f32 %v4621, %v4674
        %4676 = vdwg.mxu0
        %v4677 = vand.u32 %v3457, 4294901760
        %4678 = vmatpush.msra.mxu0 %v4677
        %v4679 = vand.u32 %v3455, 4294901760
        %4680 = vmatpush.msra.mxu0 %v4679
        %v4681 = vand.u32 %v3453, 4294901760
        %4682 = vmatpush.msra.mxu0 %v4681
        %v4683 = vand.u32 %v3451, 4294901760
        %4684 = vmatpush.msra.mxu0 %v4683
        %v4685 = vand.u32 %v3449, 4294901760
        %4686 = vmatpush.msra.mxu0 %v4685
        %v4687 = vand.u32 %v3447, 4294901760
        %4688 = vmatpush.msra.mxu0 %v4687
        %v4689 = vand.u32 %v3445, 4294901760
        %4690 = vmatpush.msra.mxu0 %v4689
        %v4691 = vand.u32 %v3443, 4294901760
        %4692 = vmatpush.msra.mxu0 %v4691
        %v4693 = vand.u32 %v3441, 4294901760
        %4694 = vmatpush.msra.mxu0 %v4693
        %v4695 = vand.u32 %v3439, 4294901760
        %4696 = vmatpush.msra.mxu0 %v4695
        %v4697 = vand.u32 %v3437, 4294901760
        %4698 = vmatpush.msra.mxu0 %v4697
        %v4699 = vand.u32 %v3435, 4294901760
        %4700 = vmatpush.msra.mxu0 %v4699
        %v4701 = vand.u32 %v3433, 4294901760
        %4702 = vmatpush.msra.mxu0 %v4701
        %v4703 = vand.u32 %v3431, 4294901760
        %4704 = vmatpush.msra.mxu0 %v4703
        %v4705 = vand.u32 %v3429, 4294901760
        %4706 = vmatpush.msra.mxu0 %v4705
        %v4707 = vand.u32 %v3427, 4294901760
        %4708 = vmatpush.msra.mxu0 %v4707
        %v4709 = vand.u32 %v3329, 4294901760
        %v4710 = vsub.f32 %v3329, %v4709
        %v4711 = vand.u32 %v4710, 4294901760
        %4712 = vmatmul.f32.gmra.mxu0 %v4711
        %v4713 = vpop.f32.mrf.mxu0
        %v4714 = vadd.f32 %v4675, %v4713
        %4715 = vdwg.mxu0
        %v4716 = vand.u32 %v3457, 4294901760
        %v4717 = vsub.f32 %v3457, %v4716
        %v4718 = vand.u32 %v4717, 4294901760
        %4719 = vmatpush.msra.mxu0 %v4718
        %v4720 = vand.u32 %v3455, 4294901760
        %v4721 = vsub.f32 %v3455, %v4720
        %v4722 = vand.u32 %v4721, 4294901760
        %4723 = vmatpush.msra.mxu0 %v4722
        %v4724 = vand.u32 %v3453, 4294901760
        %v4725 = vsub.f32 %v3453, %v4724
        %v4726 = vand.u32 %v4725, 4294901760
        %4727 = vmatpush.msra.mxu0 %v4726
        %v4728 = vand.u32 %v3451, 4294901760
        %v4729 = vsub.f32 %v3451, %v4728
        %v4730 = vand.u32 %v4729, 4294901760
        %4731 = vmatpush.msra.mxu0 %v4730
        %v4732 = vand.u32 %v3449, 4294901760
        %v4733 = vsub.f32 %v3449, %v4732
        %v4734 = vand.u32 %v4733, 4294901760
        %4735 = vmatpush.msra.mxu0 %v4734
        %v4736 = vand.u32 %v3447, 4294901760
        %v4737 = vsub.f32 %v3447, %v4736
        %v4738 = vand.u32 %v4737, 4294901760
        %4739 = vmatpush.msra.mxu0 %v4738
        %v4740 = vand.u32 %v3445, 4294901760
        %v4741 = vsub.f32 %v3445, %v4740
        %v4742 = vand.u32 %v4741, 4294901760
        %4743 = vmatpush.msra.mxu0 %v4742
        %v4744 = vand.u32 %v3443, 4294901760
        %v4745 = vsub.f32 %v3443, %v4744
        %v4746 = vand.u32 %v4745, 4294901760
        %4747 = vmatpush.msra.mxu0 %v4746
        %v4748 = vand.u32 %v3441, 4294901760
        %v4749 = vsub.f32 %v3441, %v4748
        %v4750 = vand.u32 %v4749, 4294901760
        %4751 = vmatpush.msra.mxu0 %v4750
        %v4752 = vand.u32 %v3439, 4294901760
        %v4753 = vsub.f32 %v3439, %v4752
        %v4754 = vand.u32 %v4753, 4294901760
        %4755 = vmatpush.msra.mxu0 %v4754
        %v4756 = vand.u32 %v3437, 4294901760
        %v4757 = vsub.f32 %v3437, %v4756
        %v4758 = vand.u32 %v4757, 4294901760
        %4759 = vmatpush.msra.mxu0 %v4758
        %v4760 = vand.u32 %v3435, 4294901760
        %v4761 = vsub.f32 %v3435, %v4760
        %v4762 = vand.u32 %v4761, 4294901760
        %4763 = vmatpush.msra.mxu0 %v4762
        %v4764 = vand.u32 %v3433, 4294901760
        %v4765 = vsub.f32 %v3433, %v4764
        %v4766 = vand.u32 %v4765, 4294901760
        %4767 = vmatpush.msra.mxu0 %v4766
        %v4768 = vand.u32 %v3431, 4294901760
        %v4769 = vsub.f32 %v3431, %v4768
        %v4770 = vand.u32 %v4769, 4294901760
        %4771 = vmatpush.msra.mxu0 %v4770
        %v4772 = vand.u32 %v3429, 4294901760
        %v4773 = vsub.f32 %v3429, %v4772
        %v4774 = vand.u32 %v4773, 4294901760
        %4775 = vmatpush.msra.mxu0 %v4774
        %v4776 = vand.u32 %v3427, 4294901760
        %v4777 = vsub.f32 %v3427, %v4776
        %v4778 = vand.u32 %v4777, 4294901760
        %4779 = vmatpush.msra.mxu0 %v4778
        %v4780 = vand.u32 %v3329, 4294901760
        %4781 = vmatmul.f32.gmra.mxu0 %v4780
        %v4782 = vpop.f32.mrf.mxu0
        %v4783 = vadd.f32 %v4714, %v4782
        %4784 = vdwg.mxu0
        %v4785 = vand.u32 %v3457, 4294901760
        %4786 = vmatpush.msra.mxu0 %v4785
        %v4787 = vand.u32 %v3455, 4294901760
        %4788 = vmatpush.msra.mxu0 %v4787
        %v4789 = vand.u32 %v3453, 4294901760
        %4790 = vmatpush.msra.mxu0 %v4789
        %v4791 = vand.u32 %v3451, 4294901760
        %4792 = vmatpush.msra.mxu0 %v4791
        %v4793 = vand.u32 %v3449, 4294901760
        %4794 = vmatpush.msra.mxu0 %v4793
        %v4795 = vand.u32 %v3447, 4294901760
        %4796 = vmatpush.msra.mxu0 %v4795
        %v4797 = vand.u32 %v3445, 4294901760
        %4798 = vmatpush.msra.mxu0 %v4797
        %v4799 = vand.u32 %v3443, 4294901760
        %4800 = vmatpush.msra.mxu0 %v4799
        %v4801 = vand.u32 %v3441, 4294901760
        %4802 = vmatpush.msra.mxu0 %v4801
        %v4803 = vand.u32 %v3439, 4294901760
        %4804 = vmatpush.msra.mxu0 %v4803
        %v4805 = vand.u32 %v3437, 4294901760
        %4806 = vmatpush.msra.mxu0 %v4805
        %v4807 = vand.u32 %v3435, 4294901760
        %4808 = vmatpush.msra.mxu0 %v4807
        %v4809 = vand.u32 %v3433, 4294901760
        %4810 = vmatpush.msra.mxu0 %v4809
        %v4811 = vand.u32 %v3431, 4294901760
        %4812 = vmatpush.msra.mxu0 %v4811
        %v4813 = vand.u32 %v3429, 4294901760
        %4814 = vmatpush.msra.mxu0 %v4813
        %v4815 = vand.u32 %v3427, 4294901760
        %4816 = vmatpush.msra.mxu0 %v4815
        %v4817 = vand.u32 %v3329, 4294901760
        %4818 = vmatmul.f32.gmra.mxu0 %v4817
        %v4819 = vpop.f32.mrf.mxu0
        %v4820 = vadd.f32 %v4783, %v4819
        %4821 = vdwg.mxu0
        %v4822 = vand.u32 %v3360, 4294901760
        %4823 = vmatpush.msra.mxu0 %v4822
        %v4824 = vand.u32 %v3358, 4294901760
        %4825 = vmatpush.msra.mxu0 %v4824
        %v4826 = vand.u32 %v3356, 4294901760
        %4827 = vmatpush.msra.mxu0 %v4826
        %v4828 = vand.u32 %v3354, 4294901760
        %4829 = vmatpush.msra.mxu0 %v4828
        %v4830 = vand.u32 %v3352, 4294901760
        %4831 = vmatpush.msra.mxu0 %v4830
        %v4832 = vand.u32 %v3350, 4294901760
        %4833 = vmatpush.msra.mxu0 %v4832
        %v4834 = vand.u32 %v3348, 4294901760
        %4835 = vmatpush.msra.mxu0 %v4834
        %v4836 = vand.u32 %v3346, 4294901760
        %4837 = vmatpush.msra.mxu0 %v4836
        %v4838 = vand.u32 %v3344, 4294901760
        %4839 = vmatpush.msra.mxu0 %v4838
        %v4840 = vand.u32 %v3342, 4294901760
        %4841 = vmatpush.msra.mxu0 %v4840
        %v4842 = vand.u32 %v3340, 4294901760
        %4843 = vmatpush.msra.mxu0 %v4842
        %v4844 = vand.u32 %v3338, 4294901760
        %4845 = vmatpush.msra.mxu0 %v4844
        %v4846 = vand.u32 %v3336, 4294901760
        %4847 = vmatpush.msra.mxu0 %v4846
        %v4848 = vand.u32 %v3334, 4294901760
        %4849 = vmatpush.msra.mxu0 %v4848
        %v4850 = vand.u32 %v3332, 4294901760
        %4851 = vmatpush.msra.mxu0 %v4850
        %v4852 = vand.u32 %v3330, 4294901760
        %4853 = vmatpush.msra.mxu0 %v4852
        %v4854 = vand.u32 %v3312, 4294901760
        %v4855 = vsub.f32 %v3312, %v4854
        %v4856 = vand.u32 %v4855, 4294901760
        %v4857 = vsub.f32 %v4855, %v4856
        %v4858 = vand.u32 %v4857, 4294901760
        %4859 = vmatmul.f32.gmra.mxu0 %v4858
        %v4860 = vpop.f32.mrf.mxu0
        %v4861 = vadd.f32 %v4138, %v4860
        %4862 = vdwg.mxu0
        %v4863 = vand.u32 %v3360, 4294901760
        %v4864 = vsub.f32 %v3360, %v4863
        %v4865 = vand.u32 %v4864, 4294901760
        %v4866 = vsub.f32 %v4864, %v4865
        %v4867 = vand.u32 %v4866, 4294901760
        %4868 = vmatpush.msra.mxu0 %v4867
        %v4869 = vand.u32 %v3358, 4294901760
        %v4870 = vsub.f32 %v3358, %v4869
        %v4871 = vand.u32 %v4870, 4294901760
        %v4872 = vsub.f32 %v4870, %v4871
        %v4873 = vand.u32 %v4872, 4294901760
        %4874 = vmatpush.msra.mxu0 %v4873
        %v4875 = vand.u32 %v3356, 4294901760
        %v4876 = vsub.f32 %v3356, %v4875
        %v4877 = vand.u32 %v4876, 4294901760
        %v4878 = vsub.f32 %v4876, %v4877
        %v4879 = vand.u32 %v4878, 4294901760
        %4880 = vmatpush.msra.mxu0 %v4879
        %v4881 = vand.u32 %v3354, 4294901760
        %v4882 = vsub.f32 %v3354, %v4881
        %v4883 = vand.u32 %v4882, 4294901760
        %v4884 = vsub.f32 %v4882, %v4883
        %v4885 = vand.u32 %v4884, 4294901760
        %4886 = vmatpush.msra.mxu0 %v4885
        %v4887 = vand.u32 %v3352, 4294901760
        %v4888 = vsub.f32 %v3352, %v4887
        %v4889 = vand.u32 %v4888, 4294901760
        %v4890 = vsub.f32 %v4888, %v4889
        %v4891 = vand.u32 %v4890, 4294901760
        %4892 = vmatpush.msra.mxu0 %v4891
        %v4893 = vand.u32 %v3350, 4294901760
        %v4894 = vsub.f32 %v3350, %v4893
        %v4895 = vand.u32 %v4894, 4294901760
        %v4896 = vsub.f32 %v4894, %v4895
        %v4897 = vand.u32 %v4896, 4294901760
        %4898 = vmatpush.msra.mxu0 %v4897
        %v4899 = vand.u32 %v3348, 4294901760
        %v4900 = vsub.f32 %v3348, %v4899
        %v4901 = vand.u32 %v4900, 4294901760
        %v4902 = vsub.f32 %v4900, %v4901
        %v4903 = vand.u32 %v4902, 4294901760
        %4904 = vmatpush.msra.mxu0 %v4903
        %v4905 = vand.u32 %v3346, 4294901760
        %v4906 = vsub.f32 %v3346, %v4905
        %v4907 = vand.u32 %v4906, 4294901760
        %v4908 = vsub.f32 %v4906, %v4907
        %v4909 = vand.u32 %v4908, 4294901760
        %4910 = vmatpush.msra.mxu0 %v4909
        %v4911 = vand.u32 %v3344, 4294901760
        %v4912 = vsub.f32 %v3344, %v4911
        %v4913 = vand.u32 %v4912, 4294901760
        %v4914 = vsub.f32 %v4912, %v4913
        %v4915 = vand.u32 %v4914, 4294901760
        %4916 = vmatpush.msra.mxu0 %v4915
        %v4917 = vand.u32 %v3342, 4294901760
        %v4918 = vsub.f32 %v3342, %v4917
        %v4919 = vand.u32 %v4918, 4294901760
        %v4920 = vsub.f32 %v4918, %v4919
        %v4921 = vand.u32 %v4920, 4294901760
        %4922 = vmatpush.msra.mxu0 %v4921
        %v4923 = vand.u32 %v3340, 4294901760
        %v4924 = vsub.f32 %v3340, %v4923
        %v4925 = vand.u32 %v4924, 4294901760
        %v4926 = vsub.f32 %v4924, %v4925
        %v4927 = vand.u32 %v4926, 4294901760
        %4928 = vmatpush.msra.mxu0 %v4927
        %v4929 = vand.u32 %v3338, 4294901760
        %v4930 = vsub.f32 %v3338, %v4929
        %v4931 = vand.u32 %v4930, 4294901760
        %v4932 = vsub.f32 %v4930, %v4931
        %v4933 = vand.u32 %v4932, 4294901760
        %4934 = vmatpush.msra.mxu0 %v4933
        %v4935 = vand.u32 %v3336, 4294901760
        %v4936 = vsub.f32 %v3336, %v4935
        %v4937 = vand.u32 %v4936, 4294901760
        %v4938 = vsub.f32 %v4936, %v4937
        %v4939 = vand.u32 %v4938, 4294901760
        %4940 = vmatpush.msra.mxu0 %v4939
        %v4941 = vand.u32 %v3334, 4294901760
        %v4942 = vsub.f32 %v3334, %v4941
        %v4943 = vand.u32 %v4942, 4294901760
        %v4944 = vsub.f32 %v4942, %v4943
        %v4945 = vand.u32 %v4944, 4294901760
        %4946 = vmatpush.msra.mxu0 %v4945
        %v4947 = vand.u32 %v3332, 4294901760
        %v4948 = vsub.f32 %v3332, %v4947
        %v4949 = vand.u32 %v4948, 4294901760
        %v4950 = vsub.f32 %v4948, %v4949
        %v4951 = vand.u32 %v4950, 4294901760
        %4952 = vmatpush.msra.mxu0 %v4951
        %v4953 = vand.u32 %v3330, 4294901760
        %v4954 = vsub.f32 %v3330, %v4953
        %v4955 = vand.u32 %v4954, 4294901760
        %v4956 = vsub.f32 %v4954, %v4955
        %v4957 = vand.u32 %v4956, 4294901760
        %4958 = vmatpush.msra.mxu0 %v4957
        %v4959 = vand.u32 %v3312, 4294901760
        %4960 = vmatmul.f32.gmra.mxu0 %v4959
        %v4961 = vpop.f32.mrf.mxu0
        %v4962 = vadd.f32 %v4861, %v4961
        %4963 = vdwg.mxu0
        %v4964 = vand.u32 %v3360, 4294901760
        %v4965 = vsub.f32 %v3360, %v4964
        %4966 = vmatpush.msra.mxu0 %v4965
        %v4967 = vand.u32 %v3358, 4294901760
        %v4968 = vsub.f32 %v3358, %v4967
        %4969 = vmatpush.msra.mxu0 %v4968
        %v4970 = vand.u32 %v3356, 4294901760
        %v4971 = vsub.f32 %v3356, %v4970
        %4972 = vmatpush.msra.mxu0 %v4971
        %v4973 = vand.u32 %v3354, 4294901760
        %v4974 = vsub.f32 %v3354, %v4973
        %4975 = vmatpush.msra.mxu0 %v4974
        %v4976 = vand.u32 %v3352, 4294901760
        %v4977 = vsub.f32 %v3352, %v4976
        %4978 = vmatpush.msra.mxu0 %v4977
        %v4979 = vand.u32 %v3350, 4294901760
        %v4980 = vsub.f32 %v3350, %v4979
        %4981 = vmatpush.msra.mxu0 %v4980
        %v4982 = vand.u32 %v3348, 4294901760
        %v4983 = vsub.f32 %v3348, %v4982
        %4984 = vmatpush.msra.mxu0 %v4983
        %v4985 = vand.u32 %v3346, 4294901760
        %v4986 = vsub.f32 %v3346, %v4985
        %4987 = vmatpush.msra.mxu0 %v4986
        %v4988 = vand.u32 %v3344, 4294901760
        %v4989 = vsub.f32 %v3344, %v4988
        %4990 = vmatpush.msra.mxu0 %v4989
        %v4991 = vand.u32 %v3342, 4294901760
        %v4992 = vsub.f32 %v3342, %v4991
        %4993 = vmatpush.msra.mxu0 %v4992
        %v4994 = vand.u32 %v3340, 4294901760
        %v4995 = vsub.f32 %v3340, %v4994
        %4996 = vmatpush.msra.mxu0 %v4995
        %v4997 = vand.u32 %v3338, 4294901760
        %v4998 = vsub.f32 %v3338, %v4997
        %4999 = vmatpush.msra.mxu0 %v4998
        %v5000 = vand.u32 %v3336, 4294901760
        %v5001 = vsub.f32 %v3336, %v5000
        %5002 = vmatpush.msra.mxu0 %v5001
        %v5003 = vand.u32 %v3334, 4294901760
        %v5004 = vsub.f32 %v3334, %v5003
        %5005 = vmatpush.msra.mxu0 %v5004
        %v5006 = vand.u32 %v3332, 4294901760
        %v5007 = vsub.f32 %v3332, %v5006
        %5008 = vmatpush.msra.mxu0 %v5007
        %v5009 = vand.u32 %v3330, 4294901760
        %v5010 = vsub.f32 %v3330, %v5009
        %5011 = vmatpush.msra.mxu0 %v5010
        %v5012 = vand.u32 %v3312, 4294901760
        %v5013 = vsub.f32 %v3312, %v5012
        %5014 = vmatmul.f32.gmra.mxu0 %v5013
        %v5015 = vpop.f32.mrf.mxu0
        %v5016 = vadd.f32 %v4962, %v5015
        %5017 = vdwg.mxu0
        %v5018 = vand.u32 %v3360, 4294901760
        %5019 = vmatpush.msra.mxu0 %v5018
        %v5020 = vand.u32 %v3358, 4294901760
        %5021 = vmatpush.msra.mxu0 %v5020
        %v5022 = vand.u32 %v3356, 4294901760
        %5023 = vmatpush.msra.mxu0 %v5022
        %v5024 = vand.u32 %v3354, 4294901760
        %5025 = vmatpush.msra.mxu0 %v5024
        %v5026 = vand.u32 %v3352, 4294901760
        %5027 = vmatpush.msra.mxu0 %v5026
        %v5028 = vand.u32 %v3350, 4294901760
        %5029 = vmatpush.msra.mxu0 %v5028
        %v5030 = vand.u32 %v3348, 4294901760
        %5031 = vmatpush.msra.mxu0 %v5030
        %v5032 = vand.u32 %v3346, 4294901760
        %5033 = vmatpush.msra.mxu0 %v5032
        %v5034 = vand.u32 %v3344, 4294901760
        %5035 = vmatpush.msra.mxu0 %v5034
        %v5036 = vand.u32 %v3342, 4294901760
        %5037 = vmatpush.msra.mxu0 %v5036
        %v5038 = vand.u32 %v3340, 4294901760
        %5039 = vmatpush.msra.mxu0 %v5038
        %v5040 = vand.u32 %v3338, 4294901760
        %5041 = vmatpush.msra.mxu0 %v5040
        %v5042 = vand.u32 %v3336, 4294901760
        %5043 = vmatpush.msra.mxu0 %v5042
        %v5044 = vand.u32 %v3334, 4294901760
        %5045 = vmatpush.msra.mxu0 %v5044
        %v5046 = vand.u32 %v3332, 4294901760
        %5047 = vmatpush.msra.mxu0 %v5046
        %v5048 = vand.u32 %v3330, 4294901760
        %5049 = vmatpush.msra.mxu0 %v5048
        %v5050 = vand.u32 %v3312, 4294901760
        %v5051 = vsub.f32 %v3312, %v5050
        %v5052 = vand.u32 %v5051, 4294901760
        %5053 = vmatmul.f32.gmra.mxu0 %v5052
        %v5054 = vpop.f32.mrf.mxu0
        %v5055 = vadd.f32 %v5016, %v5054
        %5056 = vdwg.mxu0
        %v5057 = vand.u32 %v3360, 4294901760
        %v5058 = vsub.f32 %v3360, %v5057
        %v5059 = vand.u32 %v5058, 4294901760
        %5060 = vmatpush.msra.mxu0 %v5059
        %v5061 = vand.u32 %v3358, 4294901760
        %v5062 = vsub.f32 %v3358, %v5061
        %v5063 = vand.u32 %v5062, 4294901760
        %5064 = vmatpush.msra.mxu0 %v5063
        %v5065 = vand.u32 %v3356, 4294901760
        %v5066 = vsub.f32 %v3356, %v5065
        %v5067 = vand.u32 %v5066, 4294901760
        %5068 = vmatpush.msra.mxu0 %v5067
        %v5069 = vand.u32 %v3354, 4294901760
        %v5070 = vsub.f32 %v3354, %v5069
        %v5071 = vand.u32 %v5070, 4294901760
        %5072 = vmatpush.msra.mxu0 %v5071
        %v5073 = vand.u32 %v3352, 4294901760
        %v5074 = vsub.f32 %v3352, %v5073
        %v5075 = vand.u32 %v5074, 4294901760
        %5076 = vmatpush.msra.mxu0 %v5075
        %v5077 = vand.u32 %v3350, 4294901760
        %v5078 = vsub.f32 %v3350, %v5077
        %v5079 = vand.u32 %v5078, 4294901760
        %5080 = vmatpush.msra.mxu0 %v5079
        %v5081 = vand.u32 %v3348, 4294901760
        %v5082 = vsub.f32 %v3348, %v5081
        %v5083 = vand.u32 %v5082, 4294901760
        %5084 = vmatpush.msra.mxu0 %v5083
        %v5085 = vand.u32 %v3346, 4294901760
        %v5086 = vsub.f32 %v3346, %v5085
        %v5087 = vand.u32 %v5086, 4294901760
        %5088 = vmatpush.msra.mxu0 %v5087
        %v5089 = vand.u32 %v3344, 4294901760
        %v5090 = vsub.f32 %v3344, %v5089
        %v5091 = vand.u32 %v5090, 4294901760
        %5092 = vmatpush.msra.mxu0 %v5091
        %v5093 = vand.u32 %v3342, 4294901760
        %v5094 = vsub.f32 %v3342, %v5093
        %v5095 = vand.u32 %v5094, 4294901760
        %5096 = vmatpush.msra.mxu0 %v5095
        %v5097 = vand.u32 %v3340, 4294901760
        %v5098 = vsub.f32 %v3340, %v5097
        %v5099 = vand.u32 %v5098, 4294901760
        %5100 = vmatpush.msra.mxu0 %v5099
        %v5101 = vand.u32 %v3338, 4294901760
        %v5102 = vsub.f32 %v3338, %v5101
        %v5103 = vand.u32 %v5102, 4294901760
        %5104 = vmatpush.msra.mxu0 %v5103
        %v5105 = vand.u32 %v3336, 4294901760
        %v5106 = vsub.f32 %v3336, %v5105
        %v5107 = vand.u32 %v5106, 4294901760
        %5108 = vmatpush.msra.mxu0 %v5107
        %v5109 = vand.u32 %v3334, 4294901760
        %v5110 = vsub.f32 %v3334, %v5109
        %v5111 = vand.u32 %v5110, 4294901760
        %5112 = vmatpush.msra.mxu0 %v5111
        %v5113 = vand.u32 %v3332, 4294901760
        %v5114 = vsub.f32 %v3332, %v5113
        %v5115 = vand.u32 %v5114, 4294901760
        %5116 = vmatpush.msra.mxu0 %v5115
        %v5117 = vand.u32 %v3330, 4294901760
        %v5118 = vsub.f32 %v3330, %v5117
        %v5119 = vand.u32 %v5118, 4294901760
        %5120 = vmatpush.msra.mxu0 %v5119
        %v5121 = vand.u32 %v3312, 4294901760
        %5122 = vmatmul.f32.gmra.mxu0 %v5121
        %v5123 = vpop.f32.mrf.mxu0
        %v5124 = vadd.f32 %v5055, %v5123
        %5125 = vdwg.mxu0
        %v5126 = vand.u32 %v3360, 4294901760
        %5127 = vmatpush.msra.mxu0 %v5126
        %v5128 = vand.u32 %v3358, 4294901760
        %5129 = vmatpush.msra.mxu0 %v5128
        %v5130 = vand.u32 %v3356, 4294901760
        %5131 = vmatpush.msra.mxu0 %v5130
        %v5132 = vand.u32 %v3354, 4294901760
        %5133 = vmatpush.msra.mxu0 %v5132
        %v5134 = vand.u32 %v3352, 4294901760
        %5135 = vmatpush.msra.mxu0 %v5134
        %v5136 = vand.u32 %v3350, 4294901760
        %5137 = vmatpush.msra.mxu0 %v5136
        %v5138 = vand.u32 %v3348, 4294901760
        %5139 = vmatpush.msra.mxu0 %v5138
        %v5140 = vand.u32 %v3346, 4294901760
        %5141 = vmatpush.msra.mxu0 %v5140
        %v5142 = vand.u32 %v3344, 4294901760
        %5143 = vmatpush.msra.mxu0 %v5142
        %v5144 = vand.u32 %v3342, 4294901760
        %5145 = vmatpush.msra.mxu0 %v5144
        %v5146 = vand.u32 %v3340, 4294901760
        %5147 = vmatpush.msra.mxu0 %v5146
        %v5148 = vand.u32 %v3338, 4294901760
        %5149 = vmatpush.msra.mxu0 %v5148
        %v5150 = vand.u32 %v3336, 4294901760
        %5151 = vmatpush.msra.mxu0 %v5150
        %v5152 = vand.u32 %v3334, 4294901760
        %5153 = vmatpush.msra.mxu0 %v5152
        %v5154 = vand.u32 %v3332, 4294901760
        %5155 = vmatpush.msra.mxu0 %v5154
        %v5156 = vand.u32 %v3330, 4294901760
        %5157 = vmatpush.msra.mxu0 %v5156
        %v5158 = vand.u32 %v3312, 4294901760
        %5159 = vmatmul.f32.gmra.mxu0 %v5158
        %v5160 = vpop.f32.mrf.mxu0
        %v5161 = vadd.f32 %v5124, %v5160
        %5162 = vdwg.mxu0
        %v5163 = vand.u32 %v3392, 4294901760
        %5164 = vmatpush.msra.mxu0 %v5163
        %v5165 = vand.u32 %v3390, 4294901760
        %5166 = vmatpush.msra.mxu0 %v5165
        %v5167 = vand.u32 %v3388, 4294901760
        %5168 = vmatpush.msra.mxu0 %v5167
        %v5169 = vand.u32 %v3386, 4294901760
        %5170 = vmatpush.msra.mxu0 %v5169
        %v5171 = vand.u32 %v3384, 4294901760
        %5172 = vmatpush.msra.mxu0 %v5171
        %v5173 = vand.u32 %v3382, 4294901760
        %5174 = vmatpush.msra.mxu0 %v5173
        %v5175 = vand.u32 %v3380, 4294901760
        %5176 = vmatpush.msra.mxu0 %v5175
        %v5177 = vand.u32 %v3378, 4294901760
        %5178 = vmatpush.msra.mxu0 %v5177
        %v5179 = vand.u32 %v3376, 4294901760
        %5180 = vmatpush.msra.mxu0 %v5179
        %v5181 = vand.u32 %v3374, 4294901760
        %5182 = vmatpush.msra.mxu0 %v5181
        %v5183 = vand.u32 %v3372, 4294901760
        %5184 = vmatpush.msra.mxu0 %v5183
        %v5185 = vand.u32 %v3370, 4294901760
        %5186 = vmatpush.msra.mxu0 %v5185
        %v5187 = vand.u32 %v3368, 4294901760
        %5188 = vmatpush.msra.mxu0 %v5187
        %v5189 = vand.u32 %v3366, 4294901760
        %5190 = vmatpush.msra.mxu0 %v5189
        %v5191 = vand.u32 %v3364, 4294901760
        %5192 = vmatpush.msra.mxu0 %v5191
        %v5193 = vand.u32 %v3362, 4294901760
        %5194 = vmatpush.msra.mxu0 %v5193
        %v5195 = vand.u32 %v3313, 4294901760
        %v5196 = vsub.f32 %v3313, %v5195
        %v5197 = vand.u32 %v5196, 4294901760
        %v5198 = vsub.f32 %v5196, %v5197
        %v5199 = vand.u32 %v5198, 4294901760
        %5200 = vmatmul.f32.gmra.mxu0 %v5199
        %v5201 = vpop.f32.mrf.mxu0
        %v5202 = vadd.f32 %v5161, %v5201
        %5203 = vdwg.mxu0
        %v5204 = vand.u32 %v3392, 4294901760
        %v5205 = vsub.f32 %v3392, %v5204
        %v5206 = vand.u32 %v5205, 4294901760
        %v5207 = vsub.f32 %v5205, %v5206
        %v5208 = vand.u32 %v5207, 4294901760
        %5209 = vmatpush.msra.mxu0 %v5208
        %v5210 = vand.u32 %v3390, 4294901760
        %v5211 = vsub.f32 %v3390, %v5210
        %v5212 = vand.u32 %v5211, 4294901760
        %v5213 = vsub.f32 %v5211, %v5212
        %v5214 = vand.u32 %v5213, 4294901760
        %5215 = vmatpush.msra.mxu0 %v5214
        %v5216 = vand.u32 %v3388, 4294901760
        %v5217 = vsub.f32 %v3388, %v5216
        %v5218 = vand.u32 %v5217, 4294901760
        %v5219 = vsub.f32 %v5217, %v5218
        %v5220 = vand.u32 %v5219, 4294901760
        %5221 = vmatpush.msra.mxu0 %v5220
        %v5222 = vand.u32 %v3386, 4294901760
        %v5223 = vsub.f32 %v3386, %v5222
        %v5224 = vand.u32 %v5223, 4294901760
        %v5225 = vsub.f32 %v5223, %v5224
        %v5226 = vand.u32 %v5225, 4294901760
        %5227 = vmatpush.msra.mxu0 %v5226
        %v5228 = vand.u32 %v3384, 4294901760
        %v5229 = vsub.f32 %v3384, %v5228
        %v5230 = vand.u32 %v5229, 4294901760
        %v5231 = vsub.f32 %v5229, %v5230
        %v5232 = vand.u32 %v5231, 4294901760
        %5233 = vmatpush.msra.mxu0 %v5232
        %v5234 = vand.u32 %v3382, 4294901760
        %v5235 = vsub.f32 %v3382, %v5234
        %v5236 = vand.u32 %v5235, 4294901760
        %v5237 = vsub.f32 %v5235, %v5236
        %v5238 = vand.u32 %v5237, 4294901760
        %5239 = vmatpush.msra.mxu0 %v5238
        %v5240 = vand.u32 %v3380, 4294901760
        %v5241 = vsub.f32 %v3380, %v5240
        %v5242 = vand.u32 %v5241, 4294901760
        %v5243 = vsub.f32 %v5241, %v5242
        %v5244 = vand.u32 %v5243, 4294901760
        %5245 = vmatpush.msra.mxu0 %v5244
        %v5246 = vand.u32 %v3378, 4294901760
        %v5247 = vsub.f32 %v3378, %v5246
        %v5248 = vand.u32 %v5247, 4294901760
        %v5249 = vsub.f32 %v5247, %v5248
        %v5250 = vand.u32 %v5249, 4294901760
        %5251 = vmatpush.msra.mxu0 %v5250
        %v5252 = vand.u32 %v3376, 4294901760
        %v5253 = vsub.f32 %v3376, %v5252
        %v5254 = vand.u32 %v5253, 4294901760
        %v5255 = vsub.f32 %v5253, %v5254
        %v5256 = vand.u32 %v5255, 4294901760
        %5257 = vmatpush.msra.mxu0 %v5256
        %v5258 = vand.u32 %v3374, 4294901760
        %v5259 = vsub.f32 %v3374, %v5258
        %v5260 = vand.u32 %v5259, 4294901760
        %v5261 = vsub.f32 %v5259, %v5260
        %v5262 = vand.u32 %v5261, 4294901760
        %5263 = vmatpush.msra.mxu0 %v5262
        %v5264 = vand.u32 %v3372, 4294901760
        %v5265 = vsub.f32 %v3372, %v5264
        %v5266 = vand.u32 %v5265, 4294901760
        %v5267 = vsub.f32 %v5265, %v5266
        %v5268 = vand.u32 %v5267, 4294901760
        %5269 = vmatpush.msra.mxu0 %v5268
        %v5270 = vand.u32 %v3370, 4294901760
        %v5271 = vsub.f32 %v3370, %v5270
        %v5272 = vand.u32 %v5271, 4294901760
        %v5273 = vsub.f32 %v5271, %v5272
        %v5274 = vand.u32 %v5273, 4294901760
        %5275 = vmatpush.msra.mxu0 %v5274
        %v5276 = vand.u32 %v3368, 4294901760
        %v5277 = vsub.f32 %v3368, %v5276
        %v5278 = vand.u32 %v5277, 4294901760
        %v5279 = vsub.f32 %v5277, %v5278
        %v5280 = vand.u32 %v5279, 4294901760
        %5281 = vmatpush.msra.mxu0 %v5280
        %v5282 = vand.u32 %v3366, 4294901760
        %v5283 = vsub.f32 %v3366, %v5282
        %v5284 = vand.u32 %v5283, 4294901760
        %v5285 = vsub.f32 %v5283, %v5284
        %v5286 = vand.u32 %v5285, 4294901760
        %5287 = vmatpush.msra.mxu0 %v5286
        %v5288 = vand.u32 %v3364, 4294901760
        %v5289 = vsub.f32 %v3364, %v5288
        %v5290 = vand.u32 %v5289, 4294901760
        %v5291 = vsub.f32 %v5289, %v5290
        %v5292 = vand.u32 %v5291, 4294901760
        %5293 = vmatpush.msra.mxu0 %v5292
        %v5294 = vand.u32 %v3362, 4294901760
        %v5295 = vsub.f32 %v3362, %v5294
        %v5296 = vand.u32 %v5295, 4294901760
        %v5297 = vsub.f32 %v5295, %v5296
        %v5298 = vand.u32 %v5297, 4294901760
        %5299 = vmatpush.msra.mxu0 %v5298
        %v5300 = vand.u32 %v3313, 4294901760
        %5301 = vmatmul.f32.gmra.mxu0 %v5300
        %v5302 = vpop.f32.mrf.mxu0
        %v5303 = vadd.f32 %v5202, %v5302
        %5304 = vdwg.mxu0
        %v5305 = vand.u32 %v3392, 4294901760
        %v5306 = vsub.f32 %v3392, %v5305
        %5307 = vmatpush.msra.mxu0 %v5306
        %v5308 = vand.u32 %v3390, 4294901760
        %v5309 = vsub.f32 %v3390, %v5308
        %5310 = vmatpush.msra.mxu0 %v5309
        %v5311 = vand.u32 %v3388, 4294901760
        %v5312 = vsub.f32 %v3388, %v5311
        %5313 = vmatpush.msra.mxu0 %v5312
        %v5314 = vand.u32 %v3386, 4294901760
        %v5315 = vsub.f32 %v3386, %v5314
        %5316 = vmatpush.msra.mxu0 %v5315
        %v5317 = vand.u32 %v3384, 4294901760
        %v5318 = vsub.f32 %v3384, %v5317
        %5319 = vmatpush.msra.mxu0 %v5318
        %v5320 = vand.u32 %v3382, 4294901760
        %v5321 = vsub.f32 %v3382, %v5320
        %5322 = vmatpush.msra.mxu0 %v5321
        %v5323 = vand.u32 %v3380, 4294901760
        %v5324 = vsub.f32 %v3380, %v5323
        %5325 = vmatpush.msra.mxu0 %v5324
        %v5326 = vand.u32 %v3378, 4294901760
        %v5327 = vsub.f32 %v3378, %v5326
        %5328 = vmatpush.msra.mxu0 %v5327
        %v5329 = vand.u32 %v3376, 4294901760
        %v5330 = vsub.f32 %v3376, %v5329
        %5331 = vmatpush.msra.mxu0 %v5330
        %v5332 = vand.u32 %v3374, 4294901760
        %v5333 = vsub.f32 %v3374, %v5332
        %5334 = vmatpush.msra.mxu0 %v5333
        %v5335 = vand.u32 %v3372, 4294901760
        %v5336 = vsub.f32 %v3372, %v5335
        %5337 = vmatpush.msra.mxu0 %v5336
        %v5338 = vand.u32 %v3370, 4294901760
        %v5339 = vsub.f32 %v3370, %v5338
        %5340 = vmatpush.msra.mxu0 %v5339
        %v5341 = vand.u32 %v3368, 4294901760
        %v5342 = vsub.f32 %v3368, %v5341
        %5343 = vmatpush.msra.mxu0 %v5342
        %v5344 = vand.u32 %v3366, 4294901760
        %v5345 = vsub.f32 %v3366, %v5344
        %5346 = vmatpush.msra.mxu0 %v5345
        %v5347 = vand.u32 %v3364, 4294901760
        %v5348 = vsub.f32 %v3364, %v5347
        %5349 = vmatpush.msra.mxu0 %v5348
        %v5350 = vand.u32 %v3362, 4294901760
        %v5351 = vsub.f32 %v3362, %v5350
        %5352 = vmatpush.msra.mxu0 %v5351
        %v5353 = vand.u32 %v3313, 4294901760
        %v5354 = vsub.f32 %v3313, %v5353
        %5355 = vmatmul.f32.gmra.mxu0 %v5354
        %v5356 = vpop.f32.mrf.mxu0
        %v5357 = vadd.f32 %v5303, %v5356
        %5358 = vdwg.mxu0
        %v5359 = vand.u32 %v3392, 4294901760
        %5360 = vmatpush.msra.mxu0 %v5359
        %v5361 = vand.u32 %v3390, 4294901760
        %5362 = vmatpush.msra.mxu0 %v5361
        %v5363 = vand.u32 %v3388, 4294901760
        %5364 = vmatpush.msra.mxu0 %v5363
        %v5365 = vand.u32 %v3386, 4294901760
        %5366 = vmatpush.msra.mxu0 %v5365
        %v5367 = vand.u32 %v3384, 4294901760
        %5368 = vmatpush.msra.mxu0 %v5367
        %v5369 = vand.u32 %v3382, 4294901760
        %5370 = vmatpush.msra.mxu0 %v5369
        %v5371 = vand.u32 %v3380, 4294901760
        %5372 = vmatpush.msra.mxu0 %v5371
        %v5373 = vand.u32 %v3378, 4294901760
        %5374 = vmatpush.msra.mxu0 %v5373
        %v5375 = vand.u32 %v3376, 4294901760
        %5376 = vmatpush.msra.mxu0 %v5375
        %v5377 = vand.u32 %v3374, 4294901760
        %5378 = vmatpush.msra.mxu0 %v5377
        %v5379 = vand.u32 %v3372, 4294901760
        %5380 = vmatpush.msra.mxu0 %v5379
        %v5381 = vand.u32 %v3370, 4294901760
        %5382 = vmatpush.msra.mxu0 %v5381
        %v5383 = vand.u32 %v3368, 4294901760
        %5384 = vmatpush.msra.mxu0 %v5383
        %v5385 = vand.u32 %v3366, 4294901760
        %5386 = vmatpush.msra.mxu0 %v5385
        %v5387 = vand.u32 %v3364, 4294901760
        %5388 = vmatpush.msra.mxu0 %v5387
        %v5389 = vand.u32 %v3362, 4294901760
        %5390 = vmatpush.msra.mxu0 %v5389
        %v5391 = vand.u32 %v3313, 4294901760
        %v5392 = vsub.f32 %v3313, %v5391
        %v5393 = vand.u32 %v5392, 4294901760
        %5394 = vmatmul.f32.gmra.mxu0 %v5393
        %v5395 = vpop.f32.mrf.mxu0
        %v5396 = vadd.f32 %v5357, %v5395
        %5397 = vdwg.mxu0
        %v5398 = vand.u32 %v3392, 4294901760
        %v5399 = vsub.f32 %v3392, %v5398
        %v5400 = vand.u32 %v5399, 4294901760
        %5401 = vmatpush.msra.mxu0 %v5400
        %v5402 = vand.u32 %v3390, 4294901760
        %v5403 = vsub.f32 %v3390, %v5402
        %v5404 = vand.u32 %v5403, 4294901760
        %5405 = vmatpush.msra.mxu0 %v5404
        %v5406 = vand.u32 %v3388, 4294901760
        %v5407 = vsub.f32 %v3388, %v5406
        %v5408 = vand.u32 %v5407, 4294901760
        %5409 = vmatpush.msra.mxu0 %v5408
        %v5410 = vand.u32 %v3386, 4294901760
        %v5411 = vsub.f32 %v3386, %v5410
        %v5412 = vand.u32 %v5411, 4294901760
        %5413 = vmatpush.msra.mxu0 %v5412
        %v5414 = vand.u32 %v3384, 4294901760
        %v5415 = vsub.f32 %v3384, %v5414
        %v5416 = vand.u32 %v5415, 4294901760
        %5417 = vmatpush.msra.mxu0 %v5416
        %v5418 = vand.u32 %v3382, 4294901760
        %v5419 = vsub.f32 %v3382, %v5418
        %v5420 = vand.u32 %v5419, 4294901760
        %5421 = vmatpush.msra.mxu0 %v5420
        %v5422 = vand.u32 %v3380, 4294901760
        %v5423 = vsub.f32 %v3380, %v5422
        %v5424 = vand.u32 %v5423, 4294901760
        %5425 = vmatpush.msra.mxu0 %v5424
        %v5426 = vand.u32 %v3378, 4294901760
        %v5427 = vsub.f32 %v3378, %v5426
        %v5428 = vand.u32 %v5427, 4294901760
        %5429 = vmatpush.msra.mxu0 %v5428
        %v5430 = vand.u32 %v3376, 4294901760
        %v5431 = vsub.f32 %v3376, %v5430
        %v5432 = vand.u32 %v5431, 4294901760
        %5433 = vmatpush.msra.mxu0 %v5432
        %v5434 = vand.u32 %v3374, 4294901760
        %v5435 = vsub.f32 %v3374, %v5434
        %v5436 = vand.u32 %v5435, 4294901760
        %5437 = vmatpush.msra.mxu0 %v5436
        %v5438 = vand.u32 %v3372, 4294901760
        %v5439 = vsub.f32 %v3372, %v5438
        %v5440 = vand.u32 %v5439, 4294901760
        %5441 = vmatpush.msra.mxu0 %v5440
        %v5442 = vand.u32 %v3370, 4294901760
        %v5443 = vsub.f32 %v3370, %v5442
        %v5444 = vand.u32 %v5443, 4294901760
        %5445 = vmatpush.msra.mxu0 %v5444
        %v5446 = vand.u32 %v3368, 4294901760
        %v5447 = vsub.f32 %v3368, %v5446
        %v5448 = vand.u32 %v5447, 4294901760
        %5449 = vmatpush.msra.mxu0 %v5448
        %v5450 = vand.u32 %v3366, 4294901760
        %v5451 = vsub.f32 %v3366, %v5450
        %v5452 = vand.u32 %v5451, 4294901760
        %5453 = vmatpush.msra.mxu0 %v5452
        %v5454 = vand.u32 %v3364, 4294901760
        %v5455 = vsub.f32 %v3364, %v5454
        %v5456 = vand.u32 %v5455, 4294901760
        %5457 = vmatpush.msra.mxu0 %v5456
        %v5458 = vand.u32 %v3362, 4294901760
        %v5459 = vsub.f32 %v3362, %v5458
        %v5460 = vand.u32 %v5459, 4294901760
        %5461 = vmatpush.msra.mxu0 %v5460
        %v5462 = vand.u32 %v3313, 4294901760
        %5463 = vmatmul.f32.gmra.mxu0 %v5462
        %v5464 = vpop.f32.mrf.mxu0
        %v5465 = vadd.f32 %v5396, %v5464
        %5466 = vdwg.mxu0
        %v5467 = vand.u32 %v3392, 4294901760
        %5468 = vmatpush.msra.mxu0 %v5467
        %v5469 = vand.u32 %v3390, 4294901760
        %5470 = vmatpush.msra.mxu0 %v5469
        %v5471 = vand.u32 %v3388, 4294901760
        %5472 = vmatpush.msra.mxu0 %v5471
        %v5473 = vand.u32 %v3386, 4294901760
        %5474 = vmatpush.msra.mxu0 %v5473
        %v5475 = vand.u32 %v3384, 4294901760
        %5476 = vmatpush.msra.mxu0 %v5475
        %v5477 = vand.u32 %v3382, 4294901760
        %5478 = vmatpush.msra.mxu0 %v5477
        %v5479 = vand.u32 %v3380, 4294901760
        %5480 = vmatpush.msra.mxu0 %v5479
        %v5481 = vand.u32 %v3378, 4294901760
        %5482 = vmatpush.msra.mxu0 %v5481
        %v5483 = vand.u32 %v3376, 4294901760
        %5484 = vmatpush.msra.mxu0 %v5483
        %v5485 = vand.u32 %v3374, 4294901760
        %5486 = vmatpush.msra.mxu0 %v5485
        %v5487 = vand.u32 %v3372, 4294901760
        %5488 = vmatpush.msra.mxu0 %v5487
        %v5489 = vand.u32 %v3370, 4294901760
        %5490 = vmatpush.msra.mxu0 %v5489
        %v5491 = vand.u32 %v3368, 4294901760
        %5492 = vmatpush.msra.mxu0 %v5491
        %v5493 = vand.u32 %v3366, 4294901760
        %5494 = vmatpush.msra.mxu0 %v5493
        %v5495 = vand.u32 %v3364, 4294901760
        %5496 = vmatpush.msra.mxu0 %v5495
        %v5497 = vand.u32 %v3362, 4294901760
        %5498 = vmatpush.msra.mxu0 %v5497
        %v5499 = vand.u32 %v3313, 4294901760
        %5500 = vmatmul.f32.gmra.mxu0 %v5499
        %v5501 = vpop.f32.mrf.mxu0
        %v5502 = vadd.f32 %v5465, %v5501
        %5503 = vdwg.mxu0
        %v5504 = vand.u32 %v3361, 4294901760
        %5505 = vmatpush.msra.mxu0 %v5504
        %v5506 = vand.u32 %v3359, 4294901760
        %5507 = vmatpush.msra.mxu0 %v5506
        %v5508 = vand.u32 %v3357, 4294901760
        %5509 = vmatpush.msra.mxu0 %v5508
        %v5510 = vand.u32 %v3355, 4294901760
        %5511 = vmatpush.msra.mxu0 %v5510
        %v5512 = vand.u32 %v3353, 4294901760
        %5513 = vmatpush.msra.mxu0 %v5512
        %v5514 = vand.u32 %v3351, 4294901760
        %5515 = vmatpush.msra.mxu0 %v5514
        %v5516 = vand.u32 %v3349, 4294901760
        %5517 = vmatpush.msra.mxu0 %v5516
        %v5518 = vand.u32 %v3347, 4294901760
        %5519 = vmatpush.msra.mxu0 %v5518
        %v5520 = vand.u32 %v3345, 4294901760
        %5521 = vmatpush.msra.mxu0 %v5520
        %v5522 = vand.u32 %v3343, 4294901760
        %5523 = vmatpush.msra.mxu0 %v5522
        %v5524 = vand.u32 %v3341, 4294901760
        %5525 = vmatpush.msra.mxu0 %v5524
        %v5526 = vand.u32 %v3339, 4294901760
        %5527 = vmatpush.msra.mxu0 %v5526
        %v5528 = vand.u32 %v3337, 4294901760
        %5529 = vmatpush.msra.mxu0 %v5528
        %v5530 = vand.u32 %v3335, 4294901760
        %5531 = vmatpush.msra.mxu0 %v5530
        %v5532 = vand.u32 %v3333, 4294901760
        %5533 = vmatpush.msra.mxu0 %v5532
        %v5534 = vand.u32 %v3331, 4294901760
        %5535 = vmatpush.msra.mxu0 %v5534
        %v5536 = vand.u32 %v3312, 4294901760
        %v5537 = vsub.f32 %v3312, %v5536
        %v5538 = vand.u32 %v5537, 4294901760
        %v5539 = vsub.f32 %v5537, %v5538
        %v5540 = vand.u32 %v5539, 4294901760
        %5541 = vmatmul.f32.gmra.mxu0 %v5540
        %v5542 = vpop.f32.mrf.mxu0
        %v5543 = vadd.f32 %v4820, %v5542
        %5544 = vdwg.mxu0
        %v5545 = vand.u32 %v3361, 4294901760
        %v5546 = vsub.f32 %v3361, %v5545
        %v5547 = vand.u32 %v5546, 4294901760
        %v5548 = vsub.f32 %v5546, %v5547
        %v5549 = vand.u32 %v5548, 4294901760
        %5550 = vmatpush.msra.mxu0 %v5549
        %v5551 = vand.u32 %v3359, 4294901760
        %v5552 = vsub.f32 %v3359, %v5551
        %v5553 = vand.u32 %v5552, 4294901760
        %v5554 = vsub.f32 %v5552, %v5553
        %v5555 = vand.u32 %v5554, 4294901760
        %5556 = vmatpush.msra.mxu0 %v5555
        %v5557 = vand.u32 %v3357, 4294901760
        %v5558 = vsub.f32 %v3357, %v5557
        %v5559 = vand.u32 %v5558, 4294901760
        %v5560 = vsub.f32 %v5558, %v5559
        %v5561 = vand.u32 %v5560, 4294901760
        %5562 = vmatpush.msra.mxu0 %v5561
        %v5563 = vand.u32 %v3355, 4294901760
        %v5564 = vsub.f32 %v3355, %v5563
        %v5565 = vand.u32 %v5564, 4294901760
        %v5566 = vsub.f32 %v5564, %v5565
        %v5567 = vand.u32 %v5566, 4294901760
        %5568 = vmatpush.msra.mxu0 %v5567
        %v5569 = vand.u32 %v3353, 4294901760
        %v5570 = vsub.f32 %v3353, %v5569
        %v5571 = vand.u32 %v5570, 4294901760
        %v5572 = vsub.f32 %v5570, %v5571
        %v5573 = vand.u32 %v5572, 4294901760
        %5574 = vmatpush.msra.mxu0 %v5573
        %v5575 = vand.u32 %v3351, 4294901760
        %v5576 = vsub.f32 %v3351, %v5575
        %v5577 = vand.u32 %v5576, 4294901760
        %v5578 = vsub.f32 %v5576, %v5577
        %v5579 = vand.u32 %v5578, 4294901760
        %5580 = vmatpush.msra.mxu0 %v5579
        %v5581 = vand.u32 %v3349, 4294901760
        %v5582 = vsub.f32 %v3349, %v5581
        %v5583 = vand.u32 %v5582, 4294901760
        %v5584 = vsub.f32 %v5582, %v5583
        %v5585 = vand.u32 %v5584, 4294901760
        %5586 = vmatpush.msra.mxu0 %v5585
        %v5587 = vand.u32 %v3347, 4294901760
        %v5588 = vsub.f32 %v3347, %v5587
        %v5589 = vand.u32 %v5588, 4294901760
        %v5590 = vsub.f32 %v5588, %v5589
        %v5591 = vand.u32 %v5590, 4294901760
        %5592 = vmatpush.msra.mxu0 %v5591
        %v5593 = vand.u32 %v3345, 4294901760
        %v5594 = vsub.f32 %v3345, %v5593
        %v5595 = vand.u32 %v5594, 4294901760
        %v5596 = vsub.f32 %v5594, %v5595
        %v5597 = vand.u32 %v5596, 4294901760
        %5598 = vmatpush.msra.mxu0 %v5597
        %v5599 = vand.u32 %v3343, 4294901760
        %v5600 = vsub.f32 %v3343, %v5599
        %v5601 = vand.u32 %v5600, 4294901760
        %v5602 = vsub.f32 %v5600, %v5601
        %v5603 = vand.u32 %v5602, 4294901760
        %5604 = vmatpush.msra.mxu0 %v5603
        %v5605 = vand.u32 %v3341, 4294901760
        %v5606 = vsub.f32 %v3341, %v5605
        %v5607 = vand.u32 %v5606, 4294901760
        %v5608 = vsub.f32 %v5606, %v5607
        %v5609 = vand.u32 %v5608, 4294901760
        %5610 = vmatpush.msra.mxu0 %v5609
        %v5611 = vand.u32 %v3339, 4294901760
        %v5612 = vsub.f32 %v3339, %v5611
        %v5613 = vand.u32 %v5612, 4294901760
        %v5614 = vsub.f32 %v5612, %v5613
        %v5615 = vand.u32 %v5614, 4294901760
        %5616 = vmatpush.msra.mxu0 %v5615
        %v5617 = vand.u32 %v3337, 4294901760
        %v5618 = vsub.f32 %v3337, %v5617
        %v5619 = vand.u32 %v5618, 4294901760
        %v5620 = vsub.f32 %v5618, %v5619
        %v5621 = vand.u32 %v5620, 4294901760
        %5622 = vmatpush.msra.mxu0 %v5621
        %v5623 = vand.u32 %v3335, 4294901760
        %v5624 = vsub.f32 %v3335, %v5623
        %v5625 = vand.u32 %v5624, 4294901760
        %v5626 = vsub.f32 %v5624, %v5625
        %v5627 = vand.u32 %v5626, 4294901760
        %5628 = vmatpush.msra.mxu0 %v5627
        %v5629 = vand.u32 %v3333, 4294901760
        %v5630 = vsub.f32 %v3333, %v5629
        %v5631 = vand.u32 %v5630, 4294901760
        %v5632 = vsub.f32 %v5630, %v5631
        %v5633 = vand.u32 %v5632, 4294901760
        %5634 = vmatpush.msra.mxu0 %v5633
        %v5635 = vand.u32 %v3331, 4294901760
        %v5636 = vsub.f32 %v3331, %v5635
        %v5637 = vand.u32 %v5636, 4294901760
        %v5638 = vsub.f32 %v5636, %v5637
        %v5639 = vand.u32 %v5638, 4294901760
        %5640 = vmatpush.msra.mxu0 %v5639
        %v5641 = vand.u32 %v3312, 4294901760
        %5642 = vmatmul.f32.gmra.mxu0 %v5641
        %v5643 = vpop.f32.mrf.mxu0
        %v5644 = vadd.f32 %v5543, %v5643
        %5645 = vdwg.mxu0
        %v5646 = vand.u32 %v3361, 4294901760
        %v5647 = vsub.f32 %v3361, %v5646
        %5648 = vmatpush.msra.mxu0 %v5647
        %v5649 = vand.u32 %v3359, 4294901760
        %v5650 = vsub.f32 %v3359, %v5649
        %5651 = vmatpush.msra.mxu0 %v5650
        %v5652 = vand.u32 %v3357, 4294901760
        %v5653 = vsub.f32 %v3357, %v5652
        %5654 = vmatpush.msra.mxu0 %v5653
        %v5655 = vand.u32 %v3355, 4294901760
        %v5656 = vsub.f32 %v3355, %v5655
        %5657 = vmatpush.msra.mxu0 %v5656
        %v5658 = vand.u32 %v3353, 4294901760
        %v5659 = vsub.f32 %v3353, %v5658
        %5660 = vmatpush.msra.mxu0 %v5659
        %v5661 = vand.u32 %v3351, 4294901760
        %v5662 = vsub.f32 %v3351, %v5661
        %5663 = vmatpush.msra.mxu0 %v5662
        %v5664 = vand.u32 %v3349, 4294901760
        %v5665 = vsub.f32 %v3349, %v5664
        %5666 = vmatpush.msra.mxu0 %v5665
        %v5667 = vand.u32 %v3347, 4294901760
        %v5668 = vsub.f32 %v3347, %v5667
        %5669 = vmatpush.msra.mxu0 %v5668
        %v5670 = vand.u32 %v3345, 4294901760
        %v5671 = vsub.f32 %v3345, %v5670
        %5672 = vmatpush.msra.mxu0 %v5671
        %v5673 = vand.u32 %v3343, 4294901760
        %v5674 = vsub.f32 %v3343, %v5673
        %5675 = vmatpush.msra.mxu0 %v5674
        %v5676 = vand.u32 %v3341, 4294901760
        %v5677 = vsub.f32 %v3341, %v5676
        %5678 = vmatpush.msra.mxu0 %v5677
        %v5679 = vand.u32 %v3339, 4294901760
        %v5680 = vsub.f32 %v3339, %v5679
        %5681 = vmatpush.msra.mxu0 %v5680
        %v5682 = vand.u32 %v3337, 4294901760
        %v5683 = vsub.f32 %v3337, %v5682
        %5684 = vmatpush.msra.mxu0 %v5683
        %v5685 = vand.u32 %v3335, 4294901760
        %v5686 = vsub.f32 %v3335, %v5685
        %5687 = vmatpush.msra.mxu0 %v5686
        %v5688 = vand.u32 %v3333, 4294901760
        %v5689 = vsub.f32 %v3333, %v5688
        %5690 = vmatpush.msra.mxu0 %v5689
        %v5691 = vand.u32 %v3331, 4294901760
        %v5692 = vsub.f32 %v3331, %v5691
        %5693 = vmatpush.msra.mxu0 %v5692
        %v5694 = vand.u32 %v3312, 4294901760
        %v5695 = vsub.f32 %v3312, %v5694
        %5696 = vmatmul.f32.gmra.mxu0 %v5695
        %v5697 = vpop.f32.mrf.mxu0
        %v5698 = vadd.f32 %v5644, %v5697
        %5699 = vdwg.mxu0
        %v5700 = vand.u32 %v3361, 4294901760
        %5701 = vmatpush.msra.mxu0 %v5700
        %v5702 = vand.u32 %v3359, 4294901760
        %5703 = vmatpush.msra.mxu0 %v5702
        %v5704 = vand.u32 %v3357, 4294901760
        %5705 = vmatpush.msra.mxu0 %v5704
        %v5706 = vand.u32 %v3355, 4294901760
        %5707 = vmatpush.msra.mxu0 %v5706
        %v5708 = vand.u32 %v3353, 4294901760
        %5709 = vmatpush.msra.mxu0 %v5708
        %v5710 = vand.u32 %v3351, 4294901760
        %5711 = vmatpush.msra.mxu0 %v5710
        %v5712 = vand.u32 %v3349, 4294901760
        %5713 = vmatpush.msra.mxu0 %v5712
        %v5714 = vand.u32 %v3347, 4294901760
        %5715 = vmatpush.msra.mxu0 %v5714
        %v5716 = vand.u32 %v3345, 4294901760
        %5717 = vmatpush.msra.mxu0 %v5716
        %v5718 = vand.u32 %v3343, 4294901760
        %5719 = vmatpush.msra.mxu0 %v5718
        %v5720 = vand.u32 %v3341, 4294901760
        %5721 = vmatpush.msra.mxu0 %v5720
        %v5722 = vand.u32 %v3339, 4294901760
        %5723 = vmatpush.msra.mxu0 %v5722
        %v5724 = vand.u32 %v3337, 4294901760
        %5725 = vmatpush.msra.mxu0 %v5724
        %v5726 = vand.u32 %v3335, 4294901760
        %5727 = vmatpush.msra.mxu0 %v5726
        %v5728 = vand.u32 %v3333, 4294901760
        %5729 = vmatpush.msra.mxu0 %v5728
        %v5730 = vand.u32 %v3331, 4294901760
        %5731 = vmatpush.msra.mxu0 %v5730
        %v5732 = vand.u32 %v3312, 4294901760
        %v5733 = vsub.f32 %v3312, %v5732
        %v5734 = vand.u32 %v5733, 4294901760
        %5735 = vmatmul.f32.gmra.mxu0 %v5734
        %v5736 = vpop.f32.mrf.mxu0
        %v5737 = vadd.f32 %v5698, %v5736
        %5738 = vdwg.mxu0
        %v5739 = vand.u32 %v3361, 4294901760
        %v5740 = vsub.f32 %v3361, %v5739
        %v5741 = vand.u32 %v5740, 4294901760
        %5742 = vmatpush.msra.mxu0 %v5741
        %v5743 = vand.u32 %v3359, 4294901760
        %v5744 = vsub.f32 %v3359, %v5743
        %v5745 = vand.u32 %v5744, 4294901760
        %5746 = vmatpush.msra.mxu0 %v5745
        %v5747 = vand.u32 %v3357, 4294901760
        %v5748 = vsub.f32 %v3357, %v5747
        %v5749 = vand.u32 %v5748, 4294901760
        %5750 = vmatpush.msra.mxu0 %v5749
        %v5751 = vand.u32 %v3355, 4294901760
        %v5752 = vsub.f32 %v3355, %v5751
        %v5753 = vand.u32 %v5752, 4294901760
        %5754 = vmatpush.msra.mxu0 %v5753
        %v5755 = vand.u32 %v3353, 4294901760
        %v5756 = vsub.f32 %v3353, %v5755
        %v5757 = vand.u32 %v5756, 4294901760
        %5758 = vmatpush.msra.mxu0 %v5757
        %v5759 = vand.u32 %v3351, 4294901760
        %v5760 = vsub.f32 %v3351, %v5759
        %v5761 = vand.u32 %v5760, 4294901760
        %5762 = vmatpush.msra.mxu0 %v5761
        %v5763 = vand.u32 %v3349, 4294901760
        %v5764 = vsub.f32 %v3349, %v5763
        %v5765 = vand.u32 %v5764, 4294901760
        %5766 = vmatpush.msra.mxu0 %v5765
        %v5767 = vand.u32 %v3347, 4294901760
        %v5768 = vsub.f32 %v3347, %v5767
        %v5769 = vand.u32 %v5768, 4294901760
        %5770 = vmatpush.msra.mxu0 %v5769
        %v5771 = vand.u32 %v3345, 4294901760
        %v5772 = vsub.f32 %v3345, %v5771
        %v5773 = vand.u32 %v5772, 4294901760
        %5774 = vmatpush.msra.mxu0 %v5773
        %v5775 = vand.u32 %v3343, 4294901760
        %v5776 = vsub.f32 %v3343, %v5775
        %v5777 = vand.u32 %v5776, 4294901760
        %5778 = vmatpush.msra.mxu0 %v5777
        %v5779 = vand.u32 %v3341, 4294901760
        %v5780 = vsub.f32 %v3341, %v5779
        %v5781 = vand.u32 %v5780, 4294901760
        %5782 = vmatpush.msra.mxu0 %v5781
        %v5783 = vand.u32 %v3339, 4294901760
        %v5784 = vsub.f32 %v3339, %v5783
        %v5785 = vand.u32 %v5784, 4294901760
        %5786 = vmatpush.msra.mxu0 %v5785
        %v5787 = vand.u32 %v3337, 4294901760
        %v5788 = vsub.f32 %v3337, %v5787
        %v5789 = vand.u32 %v5788, 4294901760
        %5790 = vmatpush.msra.mxu0 %v5789
        %v5791 = vand.u32 %v3335, 4294901760
        %v5792 = vsub.f32 %v3335, %v5791
        %v5793 = vand.u32 %v5792, 4294901760
        %5794 = vmatpush.msra.mxu0 %v5793
        %v5795 = vand.u32 %v3333, 4294901760
        %v5796 = vsub.f32 %v3333, %v5795
        %v5797 = vand.u32 %v5796, 4294901760
        %5798 = vmatpush.msra.mxu0 %v5797
        %v5799 = vand.u32 %v3331, 4294901760
        %v5800 = vsub.f32 %v3331, %v5799
        %v5801 = vand.u32 %v5800, 4294901760
        %5802 = vmatpush.msra.mxu0 %v5801
        %v5803 = vand.u32 %v3312, 4294901760
        %5804 = vmatmul.f32.gmra.mxu0 %v5803
        %v5805 = vpop.f32.mrf.mxu0
        %v5806 = vadd.f32 %v5737, %v5805
        %5807 = vdwg.mxu0
        %v5808 = vand.u32 %v3361, 4294901760
        %5809 = vmatpush.msra.mxu0 %v5808
        %v5810 = vand.u32 %v3359, 4294901760
        %5811 = vmatpush.msra.mxu0 %v5810
        %v5812 = vand.u32 %v3357, 4294901760
        %5813 = vmatpush.msra.mxu0 %v5812
        %v5814 = vand.u32 %v3355, 4294901760
        %5815 = vmatpush.msra.mxu0 %v5814
        %v5816 = vand.u32 %v3353, 4294901760
        %5817 = vmatpush.msra.mxu0 %v5816
        %v5818 = vand.u32 %v3351, 4294901760
        %5819 = vmatpush.msra.mxu0 %v5818
        %v5820 = vand.u32 %v3349, 4294901760
        %5821 = vmatpush.msra.mxu0 %v5820
        %v5822 = vand.u32 %v3347, 4294901760
        %5823 = vmatpush.msra.mxu0 %v5822
        %v5824 = vand.u32 %v3345, 4294901760
        %5825 = vmatpush.msra.mxu0 %v5824
        %v5826 = vand.u32 %v3343, 4294901760
        %5827 = vmatpush.msra.mxu0 %v5826
        %v5828 = vand.u32 %v3341, 4294901760
        %5829 = vmatpush.msra.mxu0 %v5828
        %v5830 = vand.u32 %v3339, 4294901760
        %5831 = vmatpush.msra.mxu0 %v5830
        %v5832 = vand.u32 %v3337, 4294901760
        %5833 = vmatpush.msra.mxu0 %v5832
        %v5834 = vand.u32 %v3335, 4294901760
        %5835 = vmatpush.msra.mxu0 %v5834
        %v5836 = vand.u32 %v3333, 4294901760
        %5837 = vmatpush.msra.mxu0 %v5836
        %v5838 = vand.u32 %v3331, 4294901760
        %5839 = vmatpush.msra.mxu0 %v5838
        %v5840 = vand.u32 %v3312, 4294901760
        %5841 = vmatmul.f32.gmra.mxu0 %v5840
        %v5842 = vpop.f32.mrf.mxu0
        %v5843 = vadd.f32 %v5806, %v5842
        %5844 = vdwg.mxu0
        %v5845 = vand.u32 %v3393, 4294901760
        %5846 = vmatpush.msra.mxu0 %v5845
        %v5847 = vand.u32 %v3391, 4294901760
        %5848 = vmatpush.msra.mxu0 %v5847
        %v5849 = vand.u32 %v3389, 4294901760
        %5850 = vmatpush.msra.mxu0 %v5849
        %v5851 = vand.u32 %v3387, 4294901760
        %5852 = vmatpush.msra.mxu0 %v5851
        %v5853 = vand.u32 %v3385, 4294901760
        %5854 = vmatpush.msra.mxu0 %v5853
        %v5855 = vand.u32 %v3383, 4294901760
        %5856 = vmatpush.msra.mxu0 %v5855
        %v5857 = vand.u32 %v3381, 4294901760
        %5858 = vmatpush.msra.mxu0 %v5857
        %v5859 = vand.u32 %v3379, 4294901760
        %5860 = vmatpush.msra.mxu0 %v5859
        %v5861 = vand.u32 %v3377, 4294901760
        %5862 = vmatpush.msra.mxu0 %v5861
        %v5863 = vand.u32 %v3375, 4294901760
        %5864 = vmatpush.msra.mxu0 %v5863
        %v5865 = vand.u32 %v3373, 4294901760
        %5866 = vmatpush.msra.mxu0 %v5865
        %v5867 = vand.u32 %v3371, 4294901760
        %5868 = vmatpush.msra.mxu0 %v5867
        %v5869 = vand.u32 %v3369, 4294901760
        %5870 = vmatpush.msra.mxu0 %v5869
        %v5871 = vand.u32 %v3367, 4294901760
        %5872 = vmatpush.msra.mxu0 %v5871
        %v5873 = vand.u32 %v3365, 4294901760
        %5874 = vmatpush.msra.mxu0 %v5873
        %v5875 = vand.u32 %v3363, 4294901760
        %5876 = vmatpush.msra.mxu0 %v5875
        %v5877 = vand.u32 %v3313, 4294901760
        %v5878 = vsub.f32 %v3313, %v5877
        %v5879 = vand.u32 %v5878, 4294901760
        %v5880 = vsub.f32 %v5878, %v5879
        %v5881 = vand.u32 %v5880, 4294901760
        %5882 = vmatmul.f32.gmra.mxu0 %v5881
        %v5883 = vpop.f32.mrf.mxu0
        %v5884 = vadd.f32 %v5843, %v5883
        %5885 = vdwg.mxu0
        %v5886 = vand.u32 %v3393, 4294901760
        %v5887 = vsub.f32 %v3393, %v5886
        %v5888 = vand.u32 %v5887, 4294901760
        %v5889 = vsub.f32 %v5887, %v5888
        %v5890 = vand.u32 %v5889, 4294901760
        %5891 = vmatpush.msra.mxu0 %v5890
        %v5892 = vand.u32 %v3391, 4294901760
        %v5893 = vsub.f32 %v3391, %v5892
        %v5894 = vand.u32 %v5893, 4294901760
        %v5895 = vsub.f32 %v5893, %v5894
        %v5896 = vand.u32 %v5895, 4294901760
        %5897 = vmatpush.msra.mxu0 %v5896
        %v5898 = vand.u32 %v3389, 4294901760
        %v5899 = vsub.f32 %v3389, %v5898
        %v5900 = vand.u32 %v5899, 4294901760
        %v5901 = vsub.f32 %v5899, %v5900
        %v5902 = vand.u32 %v5901, 4294901760
        %5903 = vmatpush.msra.mxu0 %v5902
        %v5904 = vand.u32 %v3387, 4294901760
        %v5905 = vsub.f32 %v3387, %v5904
        %v5906 = vand.u32 %v5905, 4294901760
        %v5907 = vsub.f32 %v5905, %v5906
        %v5908 = vand.u32 %v5907, 4294901760
        %5909 = vmatpush.msra.mxu0 %v5908
        %v5910 = vand.u32 %v3385, 4294901760
        %v5911 = vsub.f32 %v3385, %v5910
        %v5912 = vand.u32 %v5911, 4294901760
        %v5913 = vsub.f32 %v5911, %v5912
        %v5914 = vand.u32 %v5913, 4294901760
        %5915 = vmatpush.msra.mxu0 %v5914
        %v5916 = vand.u32 %v3383, 4294901760
        %v5917 = vsub.f32 %v3383, %v5916
        %v5918 = vand.u32 %v5917, 4294901760
        %v5919 = vsub.f32 %v5917, %v5918
        %v5920 = vand.u32 %v5919, 4294901760
        %5921 = vmatpush.msra.mxu0 %v5920
        %v5922 = vand.u32 %v3381, 4294901760
        %v5923 = vsub.f32 %v3381, %v5922
        %v5924 = vand.u32 %v5923, 4294901760
        %v5925 = vsub.f32 %v5923, %v5924
        %v5926 = vand.u32 %v5925, 4294901760
        %5927 = vmatpush.msra.mxu0 %v5926
        %v5928 = vand.u32 %v3379, 4294901760
        %v5929 = vsub.f32 %v3379, %v5928
        %v5930 = vand.u32 %v5929, 4294901760
        %v5931 = vsub.f32 %v5929, %v5930
        %v5932 = vand.u32 %v5931, 4294901760
        %5933 = vmatpush.msra.mxu0 %v5932
        %v5934 = vand.u32 %v3377, 4294901760
        %v5935 = vsub.f32 %v3377, %v5934
        %v5936 = vand.u32 %v5935, 4294901760
        %v5937 = vsub.f32 %v5935, %v5936
        %v5938 = vand.u32 %v5937, 4294901760
        %5939 = vmatpush.msra.mxu0 %v5938
        %v5940 = vand.u32 %v3375, 4294901760
        %v5941 = vsub.f32 %v3375, %v5940
        %v5942 = vand.u32 %v5941, 4294901760
        %v5943 = vsub.f32 %v5941, %v5942
        %v5944 = vand.u32 %v5943, 4294901760
        %5945 = vmatpush.msra.mxu0 %v5944
        %v5946 = vand.u32 %v3373, 4294901760
        %v5947 = vsub.f32 %v3373, %v5946
        %v5948 = vand.u32 %v5947, 4294901760
        %v5949 = vsub.f32 %v5947, %v5948
        %v5950 = vand.u32 %v5949, 4294901760
        %5951 = vmatpush.msra.mxu0 %v5950
        %v5952 = vand.u32 %v3371, 4294901760
        %v5953 = vsub.f32 %v3371, %v5952
        %v5954 = vand.u32 %v5953, 4294901760
        %v5955 = vsub.f32 %v5953, %v5954
        %v5956 = vand.u32 %v5955, 4294901760
        %5957 = vmatpush.msra.mxu0 %v5956
        %v5958 = vand.u32 %v3369, 4294901760
        %v5959 = vsub.f32 %v3369, %v5958
        %v5960 = vand.u32 %v5959, 4294901760
        %v5961 = vsub.f32 %v5959, %v5960
        %v5962 = vand.u32 %v5961, 4294901760
        %5963 = vmatpush.msra.mxu0 %v5962
        %v5964 = vand.u32 %v3367, 4294901760
        %v5965 = vsub.f32 %v3367, %v5964
        %v5966 = vand.u32 %v5965, 4294901760
        %v5967 = vsub.f32 %v5965, %v5966
        %v5968 = vand.u32 %v5967, 4294901760
        %5969 = vmatpush.msra.mxu0 %v5968
        %v5970 = vand.u32 %v3365, 4294901760
        %v5971 = vsub.f32 %v3365, %v5970
        %v5972 = vand.u32 %v5971, 4294901760
        %v5973 = vsub.f32 %v5971, %v5972
        %v5974 = vand.u32 %v5973, 4294901760
        %5975 = vmatpush.msra.mxu0 %v5974
        %v5976 = vand.u32 %v3363, 4294901760
        %v5977 = vsub.f32 %v3363, %v5976
        %v5978 = vand.u32 %v5977, 4294901760
        %v5979 = vsub.f32 %v5977, %v5978
        %v5980 = vand.u32 %v5979, 4294901760
        %5981 = vmatpush.msra.mxu0 %v5980
        %v5982 = vand.u32 %v3313, 4294901760
        %5983 = vmatmul.f32.gmra.mxu0 %v5982
        %v5984 = vpop.f32.mrf.mxu0
        %v5985 = vadd.f32 %v5884, %v5984
        %5986 = vdwg.mxu0
        %v5987 = vand.u32 %v3393, 4294901760
        %v5988 = vsub.f32 %v3393, %v5987
        %5989 = vmatpush.msra.mxu0 %v5988
        %v5990 = vand.u32 %v3391, 4294901760
        %v5991 = vsub.f32 %v3391, %v5990
        %5992 = vmatpush.msra.mxu0 %v5991
        %v5993 = vand.u32 %v3389, 4294901760
        %v5994 = vsub.f32 %v3389, %v5993
        %5995 = vmatpush.msra.mxu0 %v5994
        %v5996 = vand.u32 %v3387, 4294901760
        %v5997 = vsub.f32 %v3387, %v5996
        %5998 = vmatpush.msra.mxu0 %v5997
        %v5999 = vand.u32 %v3385, 4294901760
        %v6000 = vsub.f32 %v3385, %v5999
        %6001 = vmatpush.msra.mxu0 %v6000
        %v6002 = vand.u32 %v3383, 4294901760
        %v6003 = vsub.f32 %v3383, %v6002
        %6004 = vmatpush.msra.mxu0 %v6003
        %v6005 = vand.u32 %v3381, 4294901760
        %v6006 = vsub.f32 %v3381, %v6005
        %6007 = vmatpush.msra.mxu0 %v6006
        %v6008 = vand.u32 %v3379, 4294901760
        %v6009 = vsub.f32 %v3379, %v6008
        %6010 = vmatpush.msra.mxu0 %v6009
        %v6011 = vand.u32 %v3377, 4294901760
        %v6012 = vsub.f32 %v3377, %v6011
        %6013 = vmatpush.msra.mxu0 %v6012
        %v6014 = vand.u32 %v3375, 4294901760
        %v6015 = vsub.f32 %v3375, %v6014
        %6016 = vmatpush.msra.mxu0 %v6015
        %v6017 = vand.u32 %v3373, 4294901760
        %v6018 = vsub.f32 %v3373, %v6017
        %6019 = vmatpush.msra.mxu0 %v6018
        %v6020 = vand.u32 %v3371, 4294901760
        %v6021 = vsub.f32 %v3371, %v6020
        %6022 = vmatpush.msra.mxu0 %v6021
        %v6023 = vand.u32 %v3369, 4294901760
        %v6024 = vsub.f32 %v3369, %v6023
        %6025 = vmatpush.msra.mxu0 %v6024
        %v6026 = vand.u32 %v3367, 4294901760
        %v6027 = vsub.f32 %v3367, %v6026
        %6028 = vmatpush.msra.mxu0 %v6027
        %v6029 = vand.u32 %v3365, 4294901760
        %v6030 = vsub.f32 %v3365, %v6029
        %6031 = vmatpush.msra.mxu0 %v6030
        %v6032 = vand.u32 %v3363, 4294901760
        %v6033 = vsub.f32 %v3363, %v6032
        %6034 = vmatpush.msra.mxu0 %v6033
        %v6035 = vand.u32 %v3313, 4294901760
        %v6036 = vsub.f32 %v3313, %v6035
        %6037 = vmatmul.f32.gmra.mxu0 %v6036
        %v6038 = vpop.f32.mrf.mxu0
        %v6039 = vadd.f32 %v5985, %v6038
        %6040 = vdwg.mxu0
        %v6041 = vand.u32 %v3393, 4294901760
        %6042 = vmatpush.msra.mxu0 %v6041
        %v6043 = vand.u32 %v3391, 4294901760
        %6044 = vmatpush.msra.mxu0 %v6043
        %v6045 = vand.u32 %v3389, 4294901760
        %6046 = vmatpush.msra.mxu0 %v6045
        %v6047 = vand.u32 %v3387, 4294901760
        %6048 = vmatpush.msra.mxu0 %v6047
        %v6049 = vand.u32 %v3385, 4294901760
        %6050 = vmatpush.msra.mxu0 %v6049
        %v6051 = vand.u32 %v3383, 4294901760
        %6052 = vmatpush.msra.mxu0 %v6051
        %v6053 = vand.u32 %v3381, 4294901760
        %6054 = vmatpush.msra.mxu0 %v6053
        %v6055 = vand.u32 %v3379, 4294901760
        %6056 = vmatpush.msra.mxu0 %v6055
        %v6057 = vand.u32 %v3377, 4294901760
        %6058 = vmatpush.msra.mxu0 %v6057
        %v6059 = vand.u32 %v3375, 4294901760
        %6060 = vmatpush.msra.mxu0 %v6059
        %v6061 = vand.u32 %v3373, 4294901760
        %6062 = vmatpush.msra.mxu0 %v6061
        %v6063 = vand.u32 %v3371, 4294901760
        %6064 = vmatpush.msra.mxu0 %v6063
        %v6065 = vand.u32 %v3369, 4294901760
        %6066 = vmatpush.msra.mxu0 %v6065
        %v6067 = vand.u32 %v3367, 4294901760
        %6068 = vmatpush.msra.mxu0 %v6067
        %v6069 = vand.u32 %v3365, 4294901760
        %6070 = vmatpush.msra.mxu0 %v6069
        %v6071 = vand.u32 %v3363, 4294901760
        %6072 = vmatpush.msra.mxu0 %v6071
        %v6073 = vand.u32 %v3313, 4294901760
        %v6074 = vsub.f32 %v3313, %v6073
        %v6075 = vand.u32 %v6074, 4294901760
        %6076 = vmatmul.f32.gmra.mxu0 %v6075
        %v6077 = vpop.f32.mrf.mxu0
        %v6078 = vadd.f32 %v6039, %v6077
        %6079 = vdwg.mxu0
        %v6080 = vand.u32 %v3393, 4294901760
        %v6081 = vsub.f32 %v3393, %v6080
        %v6082 = vand.u32 %v6081, 4294901760
        %6083 = vmatpush.msra.mxu0 %v6082
        %v6084 = vand.u32 %v3391, 4294901760
        %v6085 = vsub.f32 %v3391, %v6084
        %v6086 = vand.u32 %v6085, 4294901760
        %6087 = vmatpush.msra.mxu0 %v6086
        %v6088 = vand.u32 %v3389, 4294901760
        %v6089 = vsub.f32 %v3389, %v6088
        %v6090 = vand.u32 %v6089, 4294901760
        %6091 = vmatpush.msra.mxu0 %v6090
        %v6092 = vand.u32 %v3387, 4294901760
        %v6093 = vsub.f32 %v3387, %v6092
        %v6094 = vand.u32 %v6093, 4294901760
        %6095 = vmatpush.msra.mxu0 %v6094
        %v6096 = vand.u32 %v3385, 4294901760
        %v6097 = vsub.f32 %v3385, %v6096
        %v6098 = vand.u32 %v6097, 4294901760
        %6099 = vmatpush.msra.mxu0 %v6098
        %v6100 = vand.u32 %v3383, 4294901760
        %v6101 = vsub.f32 %v3383, %v6100
        %v6102 = vand.u32 %v6101, 4294901760
        %6103 = vmatpush.msra.mxu0 %v6102
        %v6104 = vand.u32 %v3381, 4294901760
        %v6105 = vsub.f32 %v3381, %v6104
        %v6106 = vand.u32 %v6105, 4294901760
        %6107 = vmatpush.msra.mxu0 %v6106
        %v6108 = vand.u32 %v3379, 4294901760
        %v6109 = vsub.f32 %v3379, %v6108
        %v6110 = vand.u32 %v6109, 4294901760
        %6111 = vmatpush.msra.mxu0 %v6110
        %v6112 = vand.u32 %v3377, 4294901760
        %v6113 = vsub.f32 %v3377, %v6112
        %v6114 = vand.u32 %v6113, 4294901760
        %6115 = vmatpush.msra.mxu0 %v6114
        %v6116 = vand.u32 %v3375, 4294901760
        %v6117 = vsub.f32 %v3375, %v6116
        %v6118 = vand.u32 %v6117, 4294901760
        %6119 = vmatpush.msra.mxu0 %v6118
        %v6120 = vand.u32 %v3373, 4294901760
        %v6121 = vsub.f32 %v3373, %v6120
        %v6122 = vand.u32 %v6121, 4294901760
        %6123 = vmatpush.msra.mxu0 %v6122
        %v6124 = vand.u32 %v3371, 4294901760
        %v6125 = vsub.f32 %v3371, %v6124
        %v6126 = vand.u32 %v6125, 4294901760
        %6127 = vmatpush.msra.mxu0 %v6126
        %v6128 = vand.u32 %v3369, 4294901760
        %v6129 = vsub.f32 %v3369, %v6128
        %v6130 = vand.u32 %v6129, 4294901760
        %6131 = vmatpush.msra.mxu0 %v6130
        %v6132 = vand.u32 %v3367, 4294901760
        %v6133 = vsub.f32 %v3367, %v6132
        %v6134 = vand.u32 %v6133, 4294901760
        %6135 = vmatpush.msra.mxu0 %v6134
        %v6136 = vand.u32 %v3365, 4294901760
        %v6137 = vsub.f32 %v3365, %v6136
        %v6138 = vand.u32 %v6137, 4294901760
        %6139 = vmatpush.msra.mxu0 %v6138
        %v6140 = vand.u32 %v3363, 4294901760
        %v6141 = vsub.f32 %v3363, %v6140
        %v6142 = vand.u32 %v6141, 4294901760
        %6143 = vmatpush.msra.mxu0 %v6142
        %v6144 = vand.u32 %v3313, 4294901760
        %6145 = vmatmul.f32.gmra.mxu0 %v6144
        %v6146 = vpop.f32.mrf.mxu0
        %v6147 = vadd.f32 %v6078, %v6146
        %6148 = vdwg.mxu0
        %v6149 = vand.u32 %v3393, 4294901760
        %6150 = vmatpush.msra.mxu0 %v6149
        %v6151 = vand.u32 %v3391, 4294901760
        %6152 = vmatpush.msra.mxu0 %v6151
        %v6153 = vand.u32 %v3389, 4294901760
        %6154 = vmatpush.msra.mxu0 %v6153
        %v6155 = vand.u32 %v3387, 4294901760
        %6156 = vmatpush.msra.mxu0 %v6155
        %v6157 = vand.u32 %v3385, 4294901760
        %6158 = vmatpush.msra.mxu0 %v6157
        %v6159 = vand.u32 %v3383, 4294901760
        %6160 = vmatpush.msra.mxu0 %v6159
        %v6161 = vand.u32 %v3381, 4294901760
        %6162 = vmatpush.msra.mxu0 %v6161
        %v6163 = vand.u32 %v3379, 4294901760
        %6164 = vmatpush.msra.mxu0 %v6163
        %v6165 = vand.u32 %v3377, 4294901760
        %6166 = vmatpush.msra.mxu0 %v6165
        %v6167 = vand.u32 %v3375, 4294901760
        %6168 = vmatpush.msra.mxu0 %v6167
        %v6169 = vand.u32 %v3373, 4294901760
        %6170 = vmatpush.msra.mxu0 %v6169
        %v6171 = vand.u32 %v3371, 4294901760
        %6172 = vmatpush.msra.mxu0 %v6171
        %v6173 = vand.u32 %v3369, 4294901760
        %6174 = vmatpush.msra.mxu0 %v6173
        %v6175 = vand.u32 %v3367, 4294901760
        %6176 = vmatpush.msra.mxu0 %v6175
        %v6177 = vand.u32 %v3365, 4294901760
        %6178 = vmatpush.msra.mxu0 %v6177
        %v6179 = vand.u32 %v3363, 4294901760
        %6180 = vmatpush.msra.mxu0 %v6179
        %v6181 = vand.u32 %v3313, 4294901760
        %6182 = vmatmul.f32.gmra.mxu0 %v6181
        %v6183 = vpop.f32.mrf.mxu0
        %v6184 = vadd.f32 %v6147, %v6183
        %6185 = vdwg.mxu0
        %v6188 = vrot.slane %v6184, 4
        %vm6189 = vcmask 1043456
        %v6190 = vsel %vm6189, %v5502, %v6188
        %6192 = vst [vmem:[%s425] sm:$0xff] %v6190
        %s6193 = sand.u32 %s213, 1
        %s6194 = scalar_lea.sflag [#allocation4], %s6193
        %s6195 = sand.u32 %s213, 1
        %s6196 = smul.addr %s6195, 8
        %s6197 = scalar_lea.vmem [#allocation14], %s6196
        // Predicated region
        $region77: #{tpu_custom_call.1} parent=47 // pred_check
          %p6198 = pneg %p223
        $region78: #{tpu_custom_call.1} parent=47 // pred_check_branch
          %6200 = sbr.rel (%p6198) target = $region80
        $region79: #{tpu_custom_call.1} parent=47 // pred_region
          %6202 = vsyncadd %s6194, 0
          %s6203 = smul.addr %s31, 2
          %s6204 = smul.addr %s32, 2
          %s6205 = sadd.s32 %s6203, %s6204
          %s6206 = smul.addr %s6205, 4
          %s6207 = scalar_lea.hbm %s7, %s6206
          %s6209 = sshll.u32 %s6197, 4
          %s6210 = int_to_ptr.vmem [resolvable:$true] %s6209
          %s6211 = sshll.u32 %s6207, 4
          %s6212 = int_to_ptr.hbm [resolvable:$true] %s6211
          %6214 = dma.vmem_to_hbm [thread:$0]  %s6210, 128, %s6212, %s6194
        $region80: #{tpu_custom_call.1} parent=47 // pred_fallthru
          _
      $region48: #{tpu_custom_call.1} parent=5 // pred_fallthru
        _
      %p6215 = scmp.le.s32.totalorder 2, %s22
      // Predicated region
      $region81: #{tpu_custom_call.1} parent=5 // pred_check
        %p6216 = pneg %p6215
      $region82: #{tpu_custom_call.1} parent=5 // pred_check_branch
        %6218 = sbr.rel (%p6216) target = $region84
      $region83: #{tpu_custom_call.1} parent=5 // pred_region
        %s6219 = ssub.s32 %s22, 2
        // Predicated region
        $region85: #{tpu_custom_call.1} parent=83 // pred_check
          %p6220 = pneg %p229
        $region86: #{tpu_custom_call.1} parent=83 // pred_check_branch
          %6222 = sbr.rel (%p6220) target = $region88
        $region87: #{tpu_custom_call.1} parent=83 // pred_region
          %s6223 = sand.u32 %s214, 1
          %s6224 = scalar_lea.sflag [#allocation4], %s6223
          %s6225 = sand.u32 %s214, 1
          %s6226 = smul.addr %s6225, 8
          %s6227 = scalar_lea.vmem [#allocation14], %s6226
          %6229 = dma.done %s6224, 128
        $region88: #{tpu_custom_call.1} parent=83 // pred_fallthru
          _
      $region84: #{tpu_custom_call.1} parent=5 // pred_fallthru
        _
    $region6: #{tpu_custom_call.1} parent=1 // loop_footer
      %s26 = sadd.s32 1, %s22
    $region7: #{tpu_custom_call.1} parent=1 // loop_footer_branch
      %21 = sbr.rel target = $region3
    $region8: #{tpu_custom_call.1} parent=1 // loop_exit
      _
    %6230 = vsyncpa [#allocation3], 1
    %s6231 = scalar_lea.sflag [#allocation3], 1
    %6232 = vsyncpa %s6231, 1
    %6233 = vsyncpa [#allocation6], 1
    %6234 = vsyncpa [#allocation9], 1
    %6235 = vsyncpa [#allocation12], 1
    %6236 = vsyncpa [#allocation4], 1
    %s6237 = scalar_lea.sflag [#allocation4], 1
    %6238 = vsyncpa %s6237, 1

// kernel: tpu_custom_call.1
$region0: #{tpu_custom_call.1}
  #allocation0 [shape = 'u32[]', space=smem, size = 0x4, offset = 0x4, fixed_abs, tag = 'smem constant byte address 0x4 - core index']
  #allocation1 [shape = 'u32[72,128]{1,0:T(1,128)}', space=vmem, size = 0x9000, scoped, tag = 'internal scratch']
  %s0 = inlined_call_operand.hbm [shape: f32[2,4,256], index: 0, kind: input, shape index: {}]
  %s1 = inlined_call_operand.hbm [shape: f32[4,256], index: 1, kind: input, shape index: {}]
  %s2 = inlined_call_operand.hbm [shape: f32[4,256], index: 2, kind: input, shape index: {}]
  %s3 = inlined_call_operand.hbm [shape: f32[256,256], index: 3, kind: input, shape index: {}]
  %s4 = inlined_call_operand.hbm [shape: f32[256,256], index: 4, kind: input, shape index: {}]
  %s5 = inlined_call_operand.hbm [shape: f32[256,256], index: 5, kind: input, shape index: {}]
  %s6 = inlined_call_operand.hbm [shape: f32[256,256], index: 6, kind: input, shape index: {}]
  %s7 = inlined_call_operand.hbm [shape: f32[2,4,256], index: 7, kind: output, shape index: {}]
  %s8 = sld [smem:[#allocation0]]
  $region89: #{tpu_custom_call.1} parent=0
    _
  %s10 = ssub.s32 1, %s8
  %s11 = scalar_select 0, %s10, %s8
  $region1: #{tpu_custom_call.1} parent=0
    #allocation2 [shape = 'u8[8192]{0}', space=vmem, size = 0x2000, scoped, tag = 'input window, operand 0']
    #allocation3 [shape = 's32[2]{0}', space=sflag, size = 0x8, scoped, tag = 'scoped memory for tpu_custom_call.1']
    #allocation4 [shape = 's32[2]{0}', space=sflag, size = 0x8, scoped, tag = 'scoped memory for tpu_custom_call.1']
    #allocation5 [shape = 'u8[4096]{0}', space=vmem, size = 0x1000, scoped, tag = 'input window, operand 1, single buffered']
    #allocation6 [shape = 's32[1]{0}', space=sflag, size = 0x4, scoped, tag = 'scoped memory for tpu_custom_call.1']
    #allocation7 [shape = 'u8[4096]{0}', space=vmem, size = 0x1000, scoped, tag = 'input window, operand 2, single buffered']
    #allocation8 [shape = 'u8[262144]{0}', space=vmem, size = 0x40000, scoped, tag = 'input window, operand 3, single buffered']
    #allocation9 [shape = 's32[1]{0}', space=sflag, size = 0x4, scoped, tag = 'scoped memory for tpu_custom_call.1']
    #allocation10 [shape = 'u8[262144]{0}', space=vmem, size = 0x40000, scoped, tag = 'input window, operand 4, single buffered']
    #allocation11 [shape = 'u8[262144]{0}', space=vmem, size = 0x40000, scoped, tag = 'input window, operand 5, single buffered']
    #allocation12 [shape = 's32[1]{0}', space=sflag, size = 0x4, scoped, tag = 'scoped memory for tpu_custom_call.1']
    #allocation13 [shape = 'u8[262144]{0}', space=vmem, size = 0x40000, scoped, tag = 'input window, operand 6, single buffered']
    #allocation14 [shape = 'u8[8192]{0}', space=vmem, size = 0x2000, scoped, tag = 'output window, operand 0']
    %12 = vsyncpa [#allocation3], 0
    %s13 = scalar_lea.sflag [#allocation3], 1
    %14 = vsyncpa %s13, 0
    %15 = vsyncpa [#allocation6], 0
    %16 = vsyncpa [#allocation9], 0
    %17 = vsyncpa [#allocation12], 0
    %18 = vsyncpa [#allocation4], 0
    %s19 = scalar_lea.sflag [#allocation4], 1
    %20 = vsyncpa %s19, 0
    loop: start=0, step=1, limit=4
    $region2: #{tpu_custom_call.1} parent=1 // loop_pre_header
      _
    $region3: #{tpu_custom_call.1} parent=1 // loop_header
      %s22 = sphi 0, %s26
      %p23 = scmp.ge.s32.totalorder %s22, 4
      %s29 = sphi 0, %s41
      %s30 = sphi 0, %s37
      %s31 = sphi 0, %s29
      %s32 = sphi 0, %s30
      %s33 = sphi 0, %s31
      %s34 = sphi 0, %s32
      %s46 = sphi 0, %s48
      %s49 = sphi 0, %s46
      %s50 = sphi 0, %s49
      %s66 = sphi 0, %s50
      %s72 = sphi 0, %s74
      %s75 = sphi 0, %s72
      %s76 = sphi 0, %s75
      %s92 = sphi 0, %s76
      %s98 = sphi 0, %s100
      %s101 = sphi 0, %s98
      %s102 = sphi 0, %s101
      %s118 = sphi 0, %s102
      %s122 = sphi 0, %s122
      %s124 = sphi 0, %s122
      %s125 = sphi 0, %s124
      %s139 = sphi 0, %s125
      %s143 = sphi 0, %s143
      %s145 = sphi 0, %s143
      %s146 = sphi 0, %s145
      %s160 = sphi 0, %s146
      %s164 = sphi 0, %s164
      %s166 = sphi 0, %s164
      %s167 = sphi 0, %s166
      %s181 = sphi 0, %s167
      %s185 = sphi 0, %s185
      %s187 = sphi 0, %s185
      %s188 = sphi 0, %s187
      %s202 = sphi 0, %s188
      %s210 = sphi 0, %s212
      %s213 = sphi 0, %s210
      %s214 = sphi 0, %s213
      %s230 = sphi 0, %s214
    $region4: #{tpu_custom_call.1} parent=1 // loop_header_branch
      %25 = sbr.rel (%p23) target = $region8
    $region5: #{tpu_custom_call.1} parent=1 // loop_body
      %s27 = ssub.s32 %s22, 1
      %s28 = ssub.s32 %s22, 2
      %s35 = sadd.s32 1, %s30
      %p36 = scmp.ge.s32.totalorder %s35, 2
      %s37 = scalar_select %p36, 0, %s35
      %s38 = sadd.s32 1, %s29
      %s39 = scalar_select %p36, %s38, %s29
      %p40 = scmp.ge.s32.totalorder %s39, 1
      %s41 = scalar_select %p40, 0, %s39
      %s42 = ssub.s32 %s30, %s37
      %s43 = ssub.s32 %s29, %s41
      %s44 = sor.u32 %s42, %s43
      %p45 = scmp.eq.s32.totalorder %s44, 0
      %s47 = sadd.s32 %s46, 1
      %s48 = scalar_select %p45, %s46, %s47
      %p51 = pneg %p45
      %p52 = scmp.eq.s32.totalorder %s22, 1
      %p53 = por %p51, %p52
      %p54 = scmp.ne.s32.totalorder %s46, %s49
      %p55 = scmp.eq.s32.totalorder %s22, 0
      %p56 = por %p54, %p55
      %p57 = scmp.ne.s32.totalorder %s46, %s49
      %p58 = scmp.eq.s32.totalorder %s27, 1
      %p59 = por %p57, %p58
      %p60 = scmp.ne.s32.totalorder %s49, %s50
      %p61 = scmp.eq.s32.totalorder %s27, 0
      %p62 = por %p60, %p61
      %p63 = scmp.ne.s32.totalorder %s49, %s50
      %p64 = scmp.eq.s32.totalorder %s28, 1
      %p65 = por %p63, %p64
      %p67 = scmp.ne.s32.totalorder %s50, %s66
      %p68 = scmp.eq.s32.totalorder %s28, 0
      %p69 = por %p67, %p68
      %s70 = ssub.s32 %s29, %s41
      %p71 = scmp.eq.s32.totalorder %s70, 0
      %s73 = sadd.s32 %s72, 1
      %s74 = scalar_select %p71, %s72, %s73
      %p77 = pneg %p71
      %p78 = scmp.eq.s32.totalorder %s22, 1
      %p79 = por %p77, %p78
      %p80 = scmp.ne.s32.totalorder %s72, %s75
      %p81 = scmp.eq.s32.totalorder %s22, 0
      %p82 = por %p80, %p81
      %p83 = scmp.ne.s32.totalorder %s72, %s75
      %p84 = scmp.eq.s32.totalorder %s27, 1
      %p85 = por %p83, %p84
      %p86 = scmp.ne.s32.totalorder %s75, %s76
      %p87 = scmp.eq.s32.totalorder %s27, 0
      %p88 = por %p86, %p87
      %p89 = scmp.ne.s32.totalorder %s75, %s76
      %p90 = scmp.eq.s32.totalorder %s28, 1
      %p91 = por %p89, %p90
      %p93 = scmp.ne.s32.totalorder %s76, %s92
      %p94 = scmp.eq.s32.totalorder %s28, 0
      %p95 = por %p93, %p94
      %s96 = ssub.s32 %s29, %s41
      %p97 = scmp.eq.s32.totalorder %s96, 0
      %s99 = sadd.s32 %s98, 1
      %s100 = scalar_select %p97, %s98, %s99
      %p103 = pneg %p97
      %p104 = scmp.eq.s32.totalorder %s22, 1
      %p105 = por %p103, %p104
      %p106 = scmp.ne.s32.totalorder %s98, %s101
      %p107 = scmp.eq.s32.totalorder %s22, 0
      %p108 = por %p106, %p107
      %p109 = scmp.ne.s32.totalorder %s98, %s101
      %p110 = scmp.eq.s32.totalorder %s27, 1
      %p111 = por %p109, %p110
      %p112 = scmp.ne.s32.totalorder %s101, %s102
      %p113 = scmp.eq.s32.totalorder %s27, 0
      %p114 = por %p112, %p113
      %p115 = scmp.ne.s32.totalorder %s101, %s102
      %p116 = scmp.eq.s32.totalorder %s28, 1
      %p117 = por %p115, %p116
      %p119 = scmp.ne.s32.totalorder %s102, %s118
      %p120 = scmp.eq.s32.totalorder %s28, 0
      %p121 = por %p119, %p120
      %s123 = sadd.s32 %s122, 1
      %p126 = scmp.eq.s32.totalorder %s22, 1
      %p127 = scmp.ne.s32.totalorder %s122, %s124
      %p128 = scmp.eq.s32.totalorder %s22, 0
      %p129 = por %p127, %p128
      %p130 = scmp.ne.s32.totalorder %s122, %s124
      %p131 = scmp.eq.s32.totalorder %s27, 1
      %p132 = por %p130, %p131
      %p133 = scmp.ne.s32.totalorder %s124, %s125
      %p134 = scmp.eq.s32.totalorder %s27, 0
      %p135 = por %p133, %p134
      %p136 = scmp.ne.s32.totalorder %s124, %s125
      %p137 = scmp.eq.s32.totalorder %s28, 1
      %p138 = por %p136, %p137
      %p140 = scmp.ne.s32.totalorder %s125, %s139
      %p141 = scmp.eq.s32.totalorder %s28, 0
      %p142 = por %p140, %p141
      %s144 = sadd.s32 %s143, 1
      %p147 = scmp.eq.s32.totalorder %s22, 1
      %p148 = scmp.ne.s32.totalorder %s143, %s145
      %p149 = scmp.eq.s32.totalorder %s22, 0
      %p150 = por %p148, %p149
      %p151 = scmp.ne.s32.totalorder %s143, %s145
      %p152 = scmp.eq.s32.totalorder %s27, 1
      %p153 = por %p151, %p152
      %p154 = scmp.ne.s32.totalorder %s145, %s146
      %p155 = scmp.eq.s32.totalorder %s27, 0
      %p156 = por %p154, %p155
      %p157 = scmp.ne.s32.totalorder %s145, %s146
      %p158 = scmp.eq.s32.totalorder %s28, 1
      %p159 = por %p157, %p158
      %p161 = scmp.ne.s32.totalorder %s146, %s160
      %p162 = scmp.eq.s32.totalorder %s28, 0
      %p163 = por %p161, %p162
      %s165 = sadd.s32 %s164, 1
      %p168 = scmp.eq.s32.totalorder %s22, 1
      %p169 = scmp.ne.s32.totalorder %s164, %s166
      %p170 = scmp.eq.s32.totalorder %s22, 0
      %p171 = por %p169, %p170
      %p172 = scmp.ne.s32.totalorder %s164, %s166
      %p173 = scmp.eq.s32.totalorder %s27, 1
      %p174 = por %p172, %p173
      %p175 = scmp.ne.s32.totalorder %s166, %s167
      %p176 = scmp.eq.s32.totalorder %s27, 0
      %p177 = por %p175, %p176
      %p178 = scmp.ne.s32.totalorder %s166, %s167
      %p179 = scmp.eq.s32.totalorder %s28, 1
      %p180 = por %p178, %p179
      %p182 = scmp.ne.s32.totalorder %s167, %s181
      %p183 = scmp.eq.s32.totalorder %s28, 0
      %p184 = por %p182, %p183
      %s186 = sadd.s32 %s185, 1
      %p189 = scmp.eq.s32.totalorder %s22, 1
      %p190 = scmp.ne.s32.totalorder %s185, %s187
      %p191 = scmp.eq.s32.totalorder %s22, 0
      %p192 = por %p190, %p191
      %p193 = scmp.ne.s32.totalorder %s185, %s187
      %p194 = scmp.eq.s32.totalorder %s27, 1
      %p195 = por %p193, %p194
      %p196 = scmp.ne.s32.totalorder %s187, %s188
      %p197 = scmp.eq.s32.totalorder %s27, 0
      %p198 = por %p196, %p197
      %p199 = scmp.ne.s32.totalorder %s187, %s188
      %p200 = scmp.eq.s32.totalorder %s28, 1
      %p201 = por %p199, %p200
      %p203 = scmp.ne.s32.totalorder %s188, %s202
      %p204 = scmp.eq.s32.totalorder %s28, 0
      %p205 = por %p203, %p204
      %s206 = ssub.s32 %s30, %s37
      %s207 = ssub.s32 %s29, %s41
      %s208 = sor.u32 %s206, %s207
      %p209 = scmp.eq.s32.totalorder %s208, 0
      %s211 = sadd.s32 %s210, 1
      %s212 = scalar_select %p209, %s210, %s211
      %p215 = pneg %p209
      %p216 = scmp.eq.s32.totalorder %s22, 1
      %p217 = por %p215, %p216
      %p218 = scmp.ne.s32.totalorder %s210, %s213
      %p219 = scmp.eq.s32.totalorder %s22, 0
      %p220 = por %p218, %p219
      %p221 = scmp.ne.s32.totalorder %s210, %s213
      %p222 = scmp.eq.s32.totalorder %s27, 1
      %p223 = por %p221, %p222
      %p224 = scmp.ne.s32.totalorder %s213, %s214
      %p225 = scmp.eq.s32.totalorder %s27, 0
      %p226 = por %p224, %p225
      %p227 = scmp.ne.s32.totalorder %s213, %s214
      %p228 = scmp.eq.s32.totalorder %s28, 1
      %p229 = por %p227, %p228
      %p231 = scmp.ne.s32.totalorder %s214, %s230
      %p232 = scmp.eq.s32.totalorder %s28, 0
      %p233 = por %p231, %p232
      %p234 = scmp.le.s32.totalorder 1, %s22
      %p235 = scmp.lt.s32.totalorder %s22, 3
      %p236 = pnand %p234, %p235
      %p237 = pneg %p236
      // Predicated region
      $region9: #{tpu_custom_call.1} parent=5 // pred_check
        _
      $region10: #{tpu_custom_call.1} parent=5 // pred_check_branch
        %239 = sbr.rel (%p236) target = $region12
      $region11: #{tpu_custom_call.1} parent=5 // pred_region
        %s240 = ssub.s32 %s22, 1
        // Predicated region
        $region13: #{tpu_custom_call.1} parent=11 // pred_check
          %p241 = pneg %p88
        $region14: #{tpu_custom_call.1} parent=11 // pred_check_branch
          %243 = sbr.rel (%p241) target = $region16
        $region15: #{tpu_custom_call.1} parent=11 // pred_region
          %245 = vsyncadd [#allocation6], 0
          %s246 = smul.addr %s31, 2
          %s247 = smul.addr %s246, 4
          %s248 = scalar_lea.hbm %s1, %s247
          %s250 = sshll.u32 %s248, 4
          %s251 = int_to_ptr.hbm [resolvable:$true] %s250
          %s252 = sshll.u32 [#allocation5], 4
          %s253 = int_to_ptr.vmem [resolvable:$true] %s252
          %255 = dma.hbm_to_vmem [thread:$0]  %s251, 128, %s253, [#allocation6]
        $region16: #{tpu_custom_call.1} parent=11 // pred_fallthru
          _
        // Predicated region
        $region17: #{tpu_custom_call.1} parent=11 // pred_check
          %p256 = pneg %p114
        $region18: #{tpu_custom_call.1} parent=11 // pred_check_branch
          %258 = sbr.rel (%p256) target = $region20
        $region19: #{tpu_custom_call.1} parent=11 // pred_region
          %260 = vsyncadd [#allocation6], 0
          %s261 = smul.addr %s31, 2
          %s262 = smul.addr %s261, 4
          %s263 = scalar_lea.hbm %s2, %s262
          %s265 = sshll.u32 %s263, 4
          %s266 = int_to_ptr.hbm [resolvable:$true] %s265
          %s267 = sshll.u32 [#allocation7], 4
          %s268 = int_to_ptr.vmem [resolvable:$true] %s267
          %270 = dma.hbm_to_vmem [thread:$0]  %s266, 128, %s268, [#allocation6]
        $region20: #{tpu_custom_call.1} parent=11 // pred_fallthru
          _
        // Predicated region
        $region21: #{tpu_custom_call.1} parent=11 // pred_check
          %p271 = pneg %p135
        $region22: #{tpu_custom_call.1} parent=11 // pred_check_branch
          %273 = sbr.rel (%p271) target = $region24
        $region23: #{tpu_custom_call.1} parent=11 // pred_region
          %275 = vsyncadd [#allocation9], 0
          %s276 = sshll.u32 %s3, 4
          %s277 = int_to_ptr.hbm [resolvable:$true] %s276
          %s278 = sshll.u32 [#allocation8], 4
          %s279 = int_to_ptr.vmem [resolvable:$true] %s278
          %284 = dma.hbm_to_vmem [thread:$0]  %s277, 8192, %s279, [#allocation9], 256, 256, 16
        $region24: #{tpu_custom_call.1} parent=11 // pred_fallthru
          _
        // Predicated region
        $region25: #{tpu_custom_call.1} parent=11 // pred_check
          %p285 = pneg %p156
        $region26: #{tpu_custom_call.1} parent=11 // pred_check_branch
          %287 = sbr.rel (%p285) target = $region28
        $region27: #{tpu_custom_call.1} parent=11 // pred_region
          %289 = vsyncadd [#allocation9], 0
          %s290 = sshll.u32 %s4, 4
          %s291 = int_to_ptr.hbm [resolvable:$true] %s290
          %s292 = sshll.u32 [#allocation10], 4
          %s293 = int_to_ptr.vmem [resolvable:$true] %s292
          %298 = dma.hbm_to_vmem [thread:$0]  %s291, 8192, %s293, [#allocation9], 256, 256, 16
        $region28: #{tpu_custom_call.1} parent=11 // pred_fallthru
          _
        // Predicated region
        $region29: #{tpu_custom_call.1} parent=11 // pred_check
          %p299 = pneg %p177
        $region30: #{tpu_custom_call.1} parent=11 // pred_check_branch
          %301 = sbr.rel (%p299) target = $region32
        $region31: #{tpu_custom_call.1} parent=11 // pred_region
          %303 = vsyncadd [#allocation12], 0
          %s304 = sshll.u32 %s5, 4
          %s305 = int_to_ptr.hbm [resolvable:$true] %s304
          %s306 = sshll.u32 [#allocation11], 4
          %s307 = int_to_ptr.vmem [resolvable:$true] %s306
          %312 = dma.hbm_to_vmem [thread:$0]  %s305, 8192, %s307, [#allocation12], 256, 256, 16
        $region32: #{tpu_custom_call.1} parent=11 // pred_fallthru
          _
        // Predicated region
        $region33: #{tpu_custom_call.1} parent=11 // pred_check
          %p313 = pneg %p198
        $region34: #{tpu_custom_call.1} parent=11 // pred_check_branch
          %315 = sbr.rel (%p313) target = $region36
        $region35: #{tpu_custom_call.1} parent=11 // pred_region
          %317 = vsyncadd [#allocation12], 0
          %s318 = sshll.u32 %s6, 4
          %s319 = int_to_ptr.hbm [resolvable:$true] %s318
          %s320 = sshll.u32 [#allocation13], 4
          %s321 = int_to_ptr.vmem [resolvable:$true] %s320
          %326 = dma.hbm_to_vmem [thread:$0]  %s319, 8192, %s321, [#allocation12], 256, 256, 16
        $region36: #{tpu_custom_call.1} parent=11 // pred_fallthru
          _
      $region12: #{tpu_custom_call.1} parent=5 // pred_fallthru
        _
      %p327 = scmp.lt.s32.totalorder %s22, 2
      // Predicated region
      $region37: #{tpu_custom_call.1} parent=5 // pred_check
        %p328 = pneg %p327
      $region38: #{tpu_custom_call.1} parent=5 // pred_check_branch
        %330 = sbr.rel (%p328) target = $region40
      $region39: #{tpu_custom_call.1} parent=5 // pred_region
        // Predicated region
        $region41: #{tpu_custom_call.1} parent=39 // pred_check
          %p331 = pneg %p56
        $region42: #{tpu_custom_call.1} parent=39 // pred_check_branch
          %333 = sbr.rel (%p331) target = $region44
        $region43: #{tpu_custom_call.1} parent=39 // pred_region
          %s334 = sand.u32 %s46, 1
          %s335 = scalar_lea.sflag [#allocation3], %s334
          %s336 = sand.u32 %s46, 1
          %s337 = smul.addr %s336, 8
          %s338 = scalar_lea.vmem [#allocation2], %s337
          %340 = vsyncadd %s335, 0
          %s341 = smul.addr %s29, 2
          %s342 = smul.addr %s30, 2
          %s343 = sadd.s32 %s341, %s342
          %s344 = smul.addr %s343, 4
          %s345 = scalar_lea.hbm %s0, %s344
          %s347 = sshll.u32 %s345, 4
          %s348 = int_to_ptr.hbm [resolvable:$true] %s347
          %s349 = sshll.u32 %s338, 4
          %s350 = int_to_ptr.vmem [resolvable:$true] %s349
          %352 = dma.hbm_to_vmem [thread:$0]  %s348, 128, %s350, %s335
        $region44: #{tpu_custom_call.1} parent=39 // pred_fallthru
          _
      $region40: #{tpu_custom_call.1} parent=5 // pred_fallthru
        _
      %p353 = scmp.le.s32.totalorder 1, %s22
      %p354 = scmp.lt.s32.totalorder %s22, 3
      %p355 = pnand %p353, %p354
      %p356 = pneg %p355
      // Predicated region
      $region45: #{tpu_custom_call.1} parent=5 // pred_check
        _
      $region46: #{tpu_custom_call.1} parent=5 // pred_check_branch
        %358 = sbr.rel (%p355) target = $region48
      $region47: #{tpu_custom_call.1} parent=5 // pred_region
        %s359 = ssub.s32 %s22, 1
        %s360 = sand.u32 %s49, 1
        %s361 = scalar_lea.sflag [#allocation3], %s360
        %s362 = sand.u32 %s49, 1
        %s363 = smul.addr %s362, 8
        %s364 = scalar_lea.vmem [#allocation2], %s363
        // Predicated region
        $region49: #{tpu_custom_call.1} parent=47 // pred_check
          %p365 = pneg %p62
        $region50: #{tpu_custom_call.1} parent=47 // pred_check_branch
          %367 = sbr.rel (%p365) target = $region52
        $region51: #{tpu_custom_call.1} parent=47 // pred_region
          %369 = dma.done %s361, 128
        $region52: #{tpu_custom_call.1} parent=47 // pred_fallthru
          _
        // Predicated region
        $region53: #{tpu_custom_call.1} parent=47 // pred_check
          %p370 = pneg %p88
        $region54: #{tpu_custom_call.1} parent=47 // pred_check_branch
          %372 = sbr.rel (%p370) target = $region56
        $region55: #{tpu_custom_call.1} parent=47 // pred_region
          %374 = dma.done [#allocation6], 128
        $region56: #{tpu_custom_call.1} parent=47 // pred_fallthru
          _
        // Predicated region
        $region57: #{tpu_custom_call.1} parent=47 // pred_check
          %p375 = pneg %p114
        $region58: #{tpu_custom_call.1} parent=47 // pred_check_branch
          %377 = sbr.rel (%p375) target = $region60
        $region59: #{tpu_custom_call.1} parent=47 // pred_region
          %379 = dma.done [#allocation6], 128
        $region60: #{tpu_custom_call.1} parent=47 // pred_fallthru
          _
        // Predicated region
        $region61: #{tpu_custom_call.1} parent=47 // pred_check
          %p380 = pneg %p135
        $region62: #{tpu_custom_call.1} parent=47 // pred_check_branch
          %382 = sbr.rel (%p380) target = $region64
        $region63: #{tpu_custom_call.1} parent=47 // pred_region
          %384 = dma.done [#allocation9], 8192
        $region64: #{tpu_custom_call.1} parent=47 // pred_fallthru
          _
        // Predicated region
        $region65: #{tpu_custom_call.1} parent=47 // pred_check
          %p385 = pneg %p156
        $region66: #{tpu_custom_call.1} parent=47 // pred_check_branch
          %387 = sbr.rel (%p385) target = $region68
        $region67: #{tpu_custom_call.1} parent=47 // pred_region
          %389 = dma.done [#allocation9], 8192
        $region68: #{tpu_custom_call.1} parent=47 // pred_fallthru
          _
        // Predicated region
        $region69: #{tpu_custom_call.1} parent=47 // pred_check
          %p390 = pneg %p177
        $region70: #{tpu_custom_call.1} parent=47 // pred_check_branch
          %392 = sbr.rel (%p390) target = $region72
        $region71: #{tpu_custom_call.1} parent=47 // pred_region
          %394 = dma.done [#allocation12], 8192
        $region72: #{tpu_custom_call.1} parent=47 // pred_fallthru
          _
        // Predicated region
        $region73: #{tpu_custom_call.1} parent=47 // pred_check
          %p395 = pneg %p198
        $region74: #{tpu_custom_call.1} parent=47 // pred_check_branch
          %397 = sbr.rel (%p395) target = $region76
        $region75: #{tpu_custom_call.1} parent=47 // pred_region
          %399 = dma.done [#allocation12], 8192
        $region76: #{tpu_custom_call.1} parent=47 // pred_fallthru
          _
        %s400 = sand.u32 %s49, 1
        %s401 = scalar_lea.sflag [#allocation3], %s400
        %s402 = sand.u32 %s49, 1
        %s403 = smul.addr %s402, 8
        %s404 = scalar_lea.vmem [#allocation2], %s403
        %p405 = pneg %p62
        %p406 = pneg %p59
        %p407 = pneg %p88
        %p408 = pneg %p85
        %p409 = pneg %p114
        %p410 = pneg %p111
        %p411 = pneg %p135
        %p412 = pneg %p132
        %p413 = pneg %p156
        %p414 = pneg %p153
        %p415 = pneg %p177
        %p416 = pneg %p174
        %p417 = pneg %p198
        %p418 = pneg %p195
        %p419 = pneg %p226
        %p420 = pneg %p223
        %s421 = sand.u32 %s213, 1
        %s422 = scalar_lea.sflag [#allocation4], %s421
        %s423 = sand.u32 %s213, 1
        %s424 = smul.addr %s423, 8
        %s425 = scalar_lea.vmem [#allocation14], %s424
        %v426 = vld [vmem:[%s364] sm:$0xff]
        %v427 = vld [vmem:[#allocation8] sm:$0xff]
        %v428 = vld [vmem:[#allocation8 + $0x8] sm:$0xff]
        %v429 = vld [vmem:[#allocation8 + $0x10] sm:$0xff]
        %v430 = vld [vmem:[#allocation8 + $0x18] sm:$0xff]
        %v431 = vld [vmem:[#allocation8 + $0x20] sm:$0xff]
        %v432 = vld [vmem:[#allocation8 + $0x28] sm:$0xff]
        %v433 = vld [vmem:[#allocation8 + $0x30] sm:$0xff]
        %v434 = vld [vmem:[#allocation8 + $0x38] sm:$0xff]
        %v435 = vld [vmem:[#allocation8 + $0x40] sm:$0xff]
        %v436 = vld [vmem:[#allocation8 + $0x48] sm:$0xff]
        %v437 = vld [vmem:[#allocation8 + $0x50] sm:$0xff]
        %v438 = vld [vmem:[#allocation8 + $0x58] sm:$0xff]
        %v439 = vld [vmem:[#allocation8 + $0x60] sm:$0xff]
        %v440 = vld [vmem:[#allocation8 + $0x68] sm:$0xff]
        %v441 = vld [vmem:[#allocation8 + $0x70] sm:$0xff]
        %v442 = vld [vmem:[#allocation8 + $0x78] sm:$0xff]
        %v443 = vld [vmem:[#allocation8 + $0x80] sm:$0xff]
        %v444 = vld [vmem:[#allocation8 + $0x88] sm:$0xff]
        %v445 = vld [vmem:[#allocation8 + $0x90] sm:$0xff]
        %v446 = vld [vmem:[#allocation8 + $0x98] sm:$0xff]
        %v447 = vld [vmem:[#allocation8 + $0xa0] sm:$0xff]
        %v448 = vld [vmem:[#allocation8 + $0xa8] sm:$0xff]
        %v449 = vld [vmem:[#allocation8 + $0xb0] sm:$0xff]
        %v450 = vld [vmem:[#allocation8 + $0xb8] sm:$0xff]
        %v451 = vld [vmem:[#allocation8 + $0xc0] sm:$0xff]
        %v452 = vld [vmem:[#allocation8 + $0xc8] sm:$0xff]
        %v453 = vld [vmem:[#allocation8 + $0xd0] sm:$0xff]
        %v454 = vld [vmem:[#allocation8 + $0xd8] sm:$0xff]
        %v455 = vld [vmem:[#allocation8 + $0xe0] sm:$0xff]
        %v456 = vld [vmem:[#allocation8 + $0xe8] sm:$0xff]
        %v457 = vld [vmem:[#allocation8 + $0xf0] sm:$0xff]
        %v458 = vld [vmem:[#allocation8 + $0xf8] sm:$0xff]
        %v459 = vld [vmem:[#allocation8 + $0x100] sm:$0xff]
        %v460 = vld [vmem:[#allocation8 + $0x108] sm:$0xff]
        %v461 = vld [vmem:[#allocation8 + $0x110] sm:$0xff]
        %v462 = vld [vmem:[#allocation8 + $0x118] sm:$0xff]
        %v463 = vld [vmem:[#allocation8 + $0x120] sm:$0xff]
        %v464 = vld [vmem:[#allocation8 + $0x128] sm:$0xff]
        %v465 = vld [vmem:[#allocation8 + $0x130] sm:$0xff]
        %v466 = vld [vmem:[#allocation8 + $0x138] sm:$0xff]
        %v467 = vld [vmem:[#allocation8 + $0x140] sm:$0xff]
        %v468 = vld [vmem:[#allocation8 + $0x148] sm:$0xff]
        %v469 = vld [vmem:[#allocation8 + $0x150] sm:$0xff]
        %v470 = vld [vmem:[#allocation8 + $0x158] sm:$0xff]
        %v471 = vld [vmem:[#allocation8 + $0x160] sm:$0xff]
        %v472 = vld [vmem:[#allocation8 + $0x168] sm:$0xff]
        %v473 = vld [vmem:[#allocation8 + $0x170] sm:$0xff]
        %v474 = vld [vmem:[#allocation8 + $0x178] sm:$0xff]
        %v475 = vld [vmem:[#allocation8 + $0x180] sm:$0xff]
        %v476 = vld [vmem:[#allocation8 + $0x188] sm:$0xff]
        %v477 = vld [vmem:[#allocation8 + $0x190] sm:$0xff]
        %v478 = vld [vmem:[#allocation8 + $0x198] sm:$0xff]
        %v479 = vld [vmem:[#allocation8 + $0x1a0] sm:$0xff]
        %v480 = vld [vmem:[#allocation8 + $0x1a8] sm:$0xff]
        %v481 = vld [vmem:[#allocation8 + $0x1b0] sm:$0xff]
        %v482 = vld [vmem:[#allocation8 + $0x1b8] sm:$0xff]
        %v483 = vld [vmem:[#allocation8 + $0x1c0] sm:$0xff]
        %v484 = vld [vmem:[#allocation8 + $0x1c8] sm:$0xff]
        %v485 = vld [vmem:[#allocation8 + $0x1d0] sm:$0xff]
        %v486 = vld [vmem:[#allocation8 + $0x1d8] sm:$0xff]
        %v487 = vld [vmem:[#allocation8 + $0x1e0] sm:$0xff]
        %v488 = vld [vmem:[#allocation8 + $0x1e8] sm:$0xff]
        %v489 = vld [vmem:[#allocation8 + $0x1f0] sm:$0xff]
        %v490 = vld [vmem:[#allocation8 + $0x1f8] sm:$0xff]
        %492 = vst [vmem:[#allocation1] ss:$2 sm:$0xff] %v426
        %v493 = vld.sshfl [vmem:[#allocation1] sm:$0xff pattern:$0x75316420]
        %v494 = vld.sshfl [vmem:[#allocation1 + $0x8] sm:$0xff pattern:$0x75316420]
        %497 = vmatpush.msra.mxu0 %v457
        %498 = vmatpush.msra.mxu0 %v455
        %499 = vmatpush.msra.mxu0 %v453
        %500 = vmatpush.msra.mxu0 %v451
        %501 = vmatpush.msra.mxu0 %v449
        %502 = vmatpush.msra.mxu0 %v447
        %503 = vmatpush.msra.mxu0 %v445
        %504 = vmatpush.msra.mxu0 %v443
        %505 = vmatpush.msra.mxu0 %v441
        %506 = vmatpush.msra.mxu0 %v439
        %507 = vmatpush.msra.mxu0 %v437
        %508 = vmatpush.msra.mxu0 %v435
        %509 = vmatpush.msra.mxu0 %v433
        %510 = vmatpush.msra.mxu0 %v431
        %511 = vmatpush.msra.mxu0 %v429
        %512 = vmatpush.msra.mxu0 %v427
        %513 = vmatmul.f32.gmra.mxu0 %v493
        %v514 = vpop.f32.mrf.mxu0
        %v515 = vadd.f32 0.0, %v514
        %516 = vdwg.mxu0
        %517 = vmatpush.msra.mxu0 %v489
        %518 = vmatpush.msra.mxu0 %v487
        %519 = vmatpush.msra.mxu0 %v485
        %520 = vmatpush.msra.mxu0 %v483
        %521 = vmatpush.msra.mxu0 %v481
        %522 = vmatpush.msra.mxu0 %v479
        %523 = vmatpush.msra.mxu0 %v477
        %524 = vmatpush.msra.mxu0 %v475
        %525 = vmatpush.msra.mxu0 %v473
        %526 = vmatpush.msra.mxu0 %v471
        %527 = vmatpush.msra.mxu0 %v469
        %528 = vmatpush.msra.mxu0 %v467
        %529 = vmatpush.msra.mxu0 %v465
        %530 = vmatpush.msra.mxu0 %v463
        %531 = vmatpush.msra.mxu0 %v461
        %532 = vmatpush.msra.mxu0 %v459
        %533 = vmatmul.f32.gmra.mxu0 %v494
        %v534 = vpop.f32.mrf.mxu0
        %v535 = vadd.f32 %v515, %v534
        %536 = vdwg.mxu0
        %537 = vmatpush.msra.mxu0 %v458
        %538 = vmatpush.msra.mxu0 %v456
        %539 = vmatpush.msra.mxu0 %v454
        %540 = vmatpush.msra.mxu0 %v452
        %541 = vmatpush.msra.mxu0 %v450
        %542 = vmatpush.msra.mxu0 %v448
        %543 = vmatpush.msra.mxu0 %v446
        %544 = vmatpush.msra.mxu0 %v444
        %545 = vmatpush.msra.mxu0 %v442
        %546 = vmatpush.msra.mxu0 %v440
        %547 = vmatpush.msra.mxu0 %v438
        %548 = vmatpush.msra.mxu0 %v436
        %549 = vmatpush.msra.mxu0 %v434
        %550 = vmatpush.msra.mxu0 %v432
        %551 = vmatpush.msra.mxu0 %v430
        %552 = vmatpush.msra.mxu0 %v428
        %553 = vmatmul.f32.gmra.mxu0 %v493
        %v554 = vpop.f32.mrf.mxu0
        %v555 = vadd.f32 0.0, %v554
        %556 = vdwg.mxu0
        %557 = vmatpush.msra.mxu0 %v490
        %558 = vmatpush.msra.mxu0 %v488
        %559 = vmatpush.msra.mxu0 %v486
        %560 = vmatpush.msra.mxu0 %v484
        %561 = vmatpush.msra.mxu0 %v482
        %562 = vmatpush.msra.mxu0 %v480
        %563 = vmatpush.msra.mxu0 %v478
        %564 = vmatpush.msra.mxu0 %v476
        %565 = vmatpush.msra.mxu0 %v474
        %566 = vmatpush.msra.mxu0 %v472
        %567 = vmatpush.msra.mxu0 %v470
        %568 = vmatpush.msra.mxu0 %v468
        %569 = vmatpush.msra.mxu0 %v466
        %570 = vmatpush.msra.mxu0 %v464
        %571 = vmatpush.msra.mxu0 %v462
        %572 = vmatpush.msra.mxu0 %v460
        %573 = vmatmul.f32.gmra.mxu0 %v494
        %v574 = vpop.f32.mrf.mxu0
        %v575 = vadd.f32 %v555, %v574
        %576 = vdwg.mxu0
        %v577 = vld [vmem:[#allocation10] sm:$0xff]
        %v578 = vld [vmem:[#allocation10 + $0x8] sm:$0xff]
        %v579 = vld [vmem:[#allocation10 + $0x10] sm:$0xff]
        %v580 = vld [vmem:[#allocation10 + $0x18] sm:$0xff]
        %v581 = vld [vmem:[#allocation10 + $0x20] sm:$0xff]
        %v582 = vld [vmem:[#allocation10 + $0x28] sm:$0xff]
        %v583 = vld [vmem:[#allocation10 + $0x30] sm:$0xff]
        %v584 = vld [vmem:[#allocation10 + $0x38] sm:$0xff]
        %v585 = vld [vmem:[#allocation10 + $0x40] sm:$0xff]
        %v586 = vld [vmem:[#allocation10 + $0x48] sm:$0xff]
        %v587 = vld [vmem:[#allocation10 + $0x50] sm:$0xff]
        %v588 = vld [vmem:[#allocation10 + $0x58] sm:$0xff]
        %v589 = vld [vmem:[#allocation10 + $0x60] sm:$0xff]
        %v590 = vld [vmem:[#allocation10 + $0x68] sm:$0xff]
        %v591 = vld [vmem:[#allocation10 + $0x70] sm:$0xff]
        %v592 = vld [vmem:[#allocation10 + $0x78] sm:$0xff]
        %v593 = vld [vmem:[#allocation10 + $0x80] sm:$0xff]
        %v594 = vld [vmem:[#allocation10 + $0x88] sm:$0xff]
        %v595 = vld [vmem:[#allocation10 + $0x90] sm:$0xff]
        %v596 = vld [vmem:[#allocation10 + $0x98] sm:$0xff]
        %v597 = vld [vmem:[#allocation10 + $0xa0] sm:$0xff]
        %v598 = vld [vmem:[#allocation10 + $0xa8] sm:$0xff]
        %v599 = vld [vmem:[#allocation10 + $0xb0] sm:$0xff]
        %v600 = vld [vmem:[#allocation10 + $0xb8] sm:$0xff]
        %v601 = vld [vmem:[#allocation10 + $0xc0] sm:$0xff]
        %v602 = vld [vmem:[#allocation10 + $0xc8] sm:$0xff]
        %v603 = vld [vmem:[#allocation10 + $0xd0] sm:$0xff]
        %v604 = vld [vmem:[#allocation10 + $0xd8] sm:$0xff]
        %v605 = vld [vmem:[#allocation10 + $0xe0] sm:$0xff]
        %v606 = vld [vmem:[#allocation10 + $0xe8] sm:$0xff]
        %v607 = vld [vmem:[#allocation10 + $0xf0] sm:$0xff]
        %v608 = vld [vmem:[#allocation10 + $0xf8] sm:$0xff]
        %v609 = vld [vmem:[#allocation10 + $0x100] sm:$0xff]
        %v610 = vld [vmem:[#allocation10 + $0x108] sm:$0xff]
        %v611 = vld [vmem:[#allocation10 + $0x110] sm:$0xff]
        %v612 = vld [vmem:[#allocation10 + $0x118] sm:$0xff]
        %v613 = vld [vmem:[#allocation10 + $0x120] sm:$0xff]
        %v614 = vld [vmem:[#allocation10 + $0x128] sm:$0xff]
        %v615 = vld [vmem:[#allocation10 + $0x130] sm:$0xff]
        %v616 = vld [vmem:[#allocation10 + $0x138] sm:$0xff]
        %v617 = vld [vmem:[#allocation10 + $0x140] sm:$0xff]
        %v618 = vld [vmem:[#allocation10 + $0x148] sm:$0xff]
        %v619 = vld [vmem:[#allocation10 + $0x150] sm:$0xff]
        %v620 = vld [vmem:[#allocation10 + $0x158] sm:$0xff]
        %v621 = vld [vmem:[#allocation10 + $0x160] sm:$0xff]
        %v622 = vld [vmem:[#allocation10 + $0x168] sm:$0xff]
        %v623 = vld [vmem:[#allocation10 + $0x170] sm:$0xff]
        %v624 = vld [vmem:[#allocation10 + $0x178] sm:$0xff]
        %v625 = vld [vmem:[#allocation10 + $0x180] sm:$0xff]
        %v626 = vld [vmem:[#allocation10 + $0x188] sm:$0xff]
        %v627 = vld [vmem:[#allocation10 + $0x190] sm:$0xff]
        %v628 = vld [vmem:[#allocation10 + $0x198] sm:$0xff]
        %v629 = vld [vmem:[#allocation10 + $0x1a0] sm:$0xff]
        %v630 = vld [vmem:[#allocation10 + $0x1a8] sm:$0xff]
        %v631 = vld [vmem:[#allocation10 + $0x1b0] sm:$0xff]
        %v632 = vld [vmem:[#allocation10 + $0x1b8] sm:$0xff]
        %v633 = vld [vmem:[#allocation10 + $0x1c0] sm:$0xff]
        %v634 = vld [vmem:[#allocation10 + $0x1c8] sm:$0xff]
        %v635 = vld [vmem:[#allocation10 + $0x1d0] sm:$0xff]
        %v636 = vld [vmem:[#allocation10 + $0x1d8] sm:$0xff]
        %v637 = vld [vmem:[#allocation10 + $0x1e0] sm:$0xff]
        %v638 = vld [vmem:[#allocation10 + $0x1e8] sm:$0xff]
        %v639 = vld [vmem:[#allocation10 + $0x1f0] sm:$0xff]
        %v640 = vld [vmem:[#allocation10 + $0x1f8] sm:$0xff]
        %641 = vst [vmem:[#allocation1] ss:$2 sm:$0xff] %v426
        %v642 = vld.sshfl [vmem:[#allocation1] sm:$0xff pattern:$0x75316420]
        %v643 = vld.sshfl [vmem:[#allocation1 + $0x8] sm:$0xff pattern:$0x75316420]
        %646 = vmatpush.msra.mxu0 %v607
        %647 = vmatpush.msra.mxu0 %v605
        %648 = vmatpush.msra.mxu0 %v603
        %649 = vmatpush.msra.mxu0 %v601
        %650 = vmatpush.msra.mxu0 %v599
        %651 = vmatpush.msra.mxu0 %v597
        %652 = vmatpush.msra.mxu0 %v595
        %653 = vmatpush.msra.mxu0 %v593
        %654 = vmatpush.msra.mxu0 %v591
        %655 = vmatpush.msra.mxu0 %v589
        %656 = vmatpush.msra.mxu0 %v587
        %657 = vmatpush.msra.mxu0 %v585
        %658 = vmatpush.msra.mxu0 %v583
        %659 = vmatpush.msra.mxu0 %v581
        %660 = vmatpush.msra.mxu0 %v579
        %661 = vmatpush.msra.mxu0 %v577
        %662 = vmatmul.f32.gmra.mxu0 %v642
        %v663 = vpop.f32.mrf.mxu0
        %v664 = vadd.f32 0.0, %v663
        %665 = vdwg.mxu0
        %666 = vmatpush.msra.mxu0 %v639
        %667 = vmatpush.msra.mxu0 %v637
        %668 = vmatpush.msra.mxu0 %v635
        %669 = vmatpush.msra.mxu0 %v633
        %670 = vmatpush.msra.mxu0 %v631
        %671 = vmatpush.msra.mxu0 %v629
        %672 = vmatpush.msra.mxu0 %v627
        %673 = vmatpush.msra.mxu0 %v625
        %674 = vmatpush.msra.mxu0 %v623
        %675 = vmatpush.msra.mxu0 %v621
        %676 = vmatpush.msra.mxu0 %v619
        %677 = vmatpush.msra.mxu0 %v617
        %678 = vmatpush.msra.mxu0 %v615
        %679 = vmatpush.msra.mxu0 %v613
        %680 = vmatpush.msra.mxu0 %v611
        %681 = vmatpush.msra.mxu0 %v609
        %682 = vmatmul.f32.gmra.mxu0 %v643
        %v683 = vpop.f32.mrf.mxu0
        %v684 = vadd.f32 %v664, %v683
        %685 = vdwg.mxu0
        %686 = vmatpush.msra.mxu0 %v608
        %687 = vmatpush.msra.mxu0 %v606
        %688 = vmatpush.msra.mxu0 %v604
        %689 = vmatpush.msra.mxu0 %v602
        %690 = vmatpush.msra.mxu0 %v600
        %691 = vmatpush.msra.mxu0 %v598
        %692 = vmatpush.msra.mxu0 %v596
        %693 = vmatpush.msra.mxu0 %v594
        %694 = vmatpush.msra.mxu0 %v592
        %695 = vmatpush.msra.mxu0 %v590
        %696 = vmatpush.msra.mxu0 %v588
        %697 = vmatpush.msra.mxu0 %v586
        %698 = vmatpush.msra.mxu0 %v584
        %699 = vmatpush.msra.mxu0 %v582
        %700 = vmatpush.msra.mxu0 %v580
        %701 = vmatpush.msra.mxu0 %v578
        %702 = vmatmul.f32.gmra.mxu0 %v642
        %v703 = vpop.f32.mrf.mxu0
        %v704 = vadd.f32 0.0, %v703
        %705 = vdwg.mxu0
        %706 = vmatpush.msra.mxu0 %v640
        %707 = vmatpush.msra.mxu0 %v638
        %708 = vmatpush.msra.mxu0 %v636
        %709 = vmatpush.msra.mxu0 %v634
        %710 = vmatpush.msra.mxu0 %v632
        %711 = vmatpush.msra.mxu0 %v630
        %712 = vmatpush.msra.mxu0 %v628
        %713 = vmatpush.msra.mxu0 %v626
        %714 = vmatpush.msra.mxu0 %v624
        %715 = vmatpush.msra.mxu0 %v622
        %716 = vmatpush.msra.mxu0 %v620
        %717 = vmatpush.msra.mxu0 %v618
        %718 = vmatpush.msra.mxu0 %v616
        %719 = vmatpush.msra.mxu0 %v614
        %720 = vmatpush.msra.mxu0 %v612
        %721 = vmatpush.msra.mxu0 %v610
        %722 = vmatmul.f32.gmra.mxu0 %v643
        %v723 = vpop.f32.mrf.mxu0
        %v724 = vadd.f32 %v704, %v723
        %725 = vdwg.mxu0
        %v726 = vld [vmem:[#allocation5] sm:$0xff]
        %v727 = vld [vmem:[#allocation7] sm:$0xff]
        %729 = vst [vmem:[#allocation1] ss:$2 sm:$0xff] %v726
        %v730 = vld.sshfl [vmem:[#allocation1] sm:$0xff pattern:$0x75316420]
        %v731 = vld.sshfl [vmem:[#allocation1 + $0x8] sm:$0xff pattern:$0x75316420]
        %v734 = vmul.f32 %v535, %v730
        %v735 = vmul.f32 %v575, %v731
        %737 = vst [vmem:[#allocation1] ss:$2 sm:$0xff] %v727
        %v738 = vld.sshfl [vmem:[#allocation1] sm:$0xff pattern:$0x75316420]
        %v739 = vld.sshfl [vmem:[#allocation1 + $0x8] sm:$0xff pattern:$0x75316420]
        %v742 = vmul.f32 %v684, %v738
        %v743 = vmul.f32 %v724, %v739
        %v744 = vsub.f32 %v734, %v742
        %v745 = vsub.f32 %v735, %v743
        %746 = vst [vmem:[#allocation1] ss:$2 sm:$0xff] %v727
        %v747 = vld.sshfl [vmem:[#allocation1] sm:$0xff pattern:$0x75316420]
        %v748 = vld.sshfl [vmem:[#allocation1 + $0x8] sm:$0xff pattern:$0x75316420]
        %v751 = vmul.f32 %v535, %v747
        %v752 = vmul.f32 %v575, %v748
        %753 = vst [vmem:[#allocation1] ss:$2 sm:$0xff] %v726
        %v754 = vld.sshfl [vmem:[#allocation1] sm:$0xff pattern:$0x75316420]
        %v755 = vld.sshfl [vmem:[#allocation1 + $0x8] sm:$0xff pattern:$0x75316420]
        %v758 = vmul.f32 %v684, %v754
        %v759 = vmul.f32 %v724, %v755
        %v760 = vadd.f32 %v751, %v758
        %v761 = vadd.f32 %v752, %v759
        %v762 = vld [vmem:[#allocation11] sm:$0xff]
        %v763 = vld [vmem:[#allocation11 + $0x8] sm:$0xff]
        %v764 = vld [vmem:[#allocation11 + $0x10] sm:$0xff]
        %v765 = vld [vmem:[#allocation11 + $0x18] sm:$0xff]
        %v766 = vld [vmem:[#allocation11 + $0x20] sm:$0xff]
        %v767 = vld [vmem:[#allocation11 + $0x28] sm:$0xff]
        %v768 = vld [vmem:[#allocation11 + $0x30] sm:$0xff]
        %v769 = vld [vmem:[#allocation11 + $0x38] sm:$0xff]
        %v770 = vld [vmem:[#allocation11 + $0x40] sm:$0xff]
        %v771 = vld [vmem:[#allocation11 + $0x48] sm:$0xff]
        %v772 = vld [vmem:[#allocation11 + $0x50] sm:$0xff]
        %v773 = vld [vmem:[#allocation11 + $0x58] sm:$0xff]
        %v774 = vld [vmem:[#allocation11 + $0x60] sm:$0xff]
        %v775 = vld [vmem:[#allocation11 + $0x68] sm:$0xff]
        %v776 = vld [vmem:[#allocation11 + $0x70] sm:$0xff]
        %v777 = vld [vmem:[#allocation11 + $0x78] sm:$0xff]
        %v778 = vld [vmem:[#allocation11 + $0x80] sm:$0xff]
        %v779 = vld [vmem:[#allocation11 + $0x88] sm:$0xff]
        %v780 = vld [vmem:[#allocation11 + $0x90] sm:$0xff]
        %v781 = vld [vmem:[#allocation11 + $0x98] sm:$0xff]
        %v782 = vld [vmem:[#allocation11 + $0xa0] sm:$0xff]
        %v783 = vld [vmem:[#allocation11 + $0xa8] sm:$0xff]
        %v784 = vld [vmem:[#allocation11 + $0xb0] sm:$0xff]
        %v785 = vld [vmem:[#allocation11 + $0xb8] sm:$0xff]
        %v786 = vld [vmem:[#allocation11 + $0xc0] sm:$0xff]
        %v787 = vld [vmem:[#allocation11 + $0xc8] sm:$0xff]
        %v788 = vld [vmem:[#allocation11 + $0xd0] sm:$0xff]
        %v789 = vld [vmem:[#allocation11 + $0xd8] sm:$0xff]
        %v790 = vld [vmem:[#allocation11 + $0xe0] sm:$0xff]
        %v791 = vld [vmem:[#allocation11 + $0xe8] sm:$0xff]
        %v792 = vld [vmem:[#allocation11 + $0xf0] sm:$0xff]
        %v793 = vld [vmem:[#allocation11 + $0xf8] sm:$0xff]
        %v794 = vld [vmem:[#allocation11 + $0x100] sm:$0xff]
        %v795 = vld [vmem:[#allocation11 + $0x108] sm:$0xff]
        %v796 = vld [vmem:[#allocation11 + $0x110] sm:$0xff]
        %v797 = vld [vmem:[#allocation11 + $0x118] sm:$0xff]
        %v798 = vld [vmem:[#allocation11 + $0x120] sm:$0xff]
        %v799 = vld [vmem:[#allocation11 + $0x128] sm:$0xff]
        %v800 = vld [vmem:[#allocation11 + $0x130] sm:$0xff]
        %v801 = vld [vmem:[#allocation11 + $0x138] sm:$0xff]
        %v802 = vld [vmem:[#allocation11 + $0x140] sm:$0xff]
        %v803 = vld [vmem:[#allocation11 + $0x148] sm:$0xff]
        %v804 = vld [vmem:[#allocation11 + $0x150] sm:$0xff]
        %v805 = vld [vmem:[#allocation11 + $0x158] sm:$0xff]
        %v806 = vld [vmem:[#allocation11 + $0x160] sm:$0xff]
        %v807 = vld [vmem:[#allocation11 + $0x168] sm:$0xff]
        %v808 = vld [vmem:[#allocation11 + $0x170] sm:$0xff]
        %v809 = vld [vmem:[#allocation11 + $0x178] sm:$0xff]
        %v810 = vld [vmem:[#allocation11 + $0x180] sm:$0xff]
        %v811 = vld [vmem:[#allocation11 + $0x188] sm:$0xff]
        %v812 = vld [vmem:[#allocation11 + $0x190] sm:$0xff]
        %v813 = vld [vmem:[#allocation11 + $0x198] sm:$0xff]
        %v814 = vld [vmem:[#allocation11 + $0x1a0] sm:$0xff]
        %v815 = vld [vmem:[#allocation11 + $0x1a8] sm:$0xff]
        %v816 = vld [vmem:[#allocation11 + $0x1b0] sm:$0xff]
        %v817 = vld [vmem:[#allocation11 + $0x1b8] sm:$0xff]
        %v818 = vld [vmem:[#allocation11 + $0x1c0] sm:$0xff]
        %v819 = vld [vmem:[#allocation11 + $0x1c8] sm:$0xff]
        %v820 = vld [vmem:[#allocation11 + $0x1d0] sm:$0xff]
        %v821 = vld [vmem:[#allocation11 + $0x1d8] sm:$0xff]
        %v822 = vld [vmem:[#allocation11 + $0x1e0] sm:$0xff]
        %v823 = vld [vmem:[#allocation11 + $0x1e8] sm:$0xff]
        %v824 = vld [vmem:[#allocation11 + $0x1f0] sm:$0xff]
        %v825 = vld [vmem:[#allocation11 + $0x1f8] sm:$0xff]
        %v826 = vld [vmem:[#allocation13] sm:$0xff]
        %v827 = vld [vmem:[#allocation13 + $0x8] sm:$0xff]
        %v828 = vld [vmem:[#allocation13 + $0x10] sm:$0xff]
        %v829 = vld [vmem:[#allocation13 + $0x18] sm:$0xff]
        %v830 = vld [vmem:[#allocation13 + $0x20] sm:$0xff]
        %v831 = vld [vmem:[#allocation13 + $0x28] sm:$0xff]
        %v832 = vld [vmem:[#allocation13 + $0x30] sm:$0xff]
        %v833 = vld [vmem:[#allocation13 + $0x38] sm:$0xff]
        %v834 = vld [vmem:[#allocation13 + $0x40] sm:$0xff]
        %v835 = vld [vmem:[#allocation13 + $0x48] sm:$0xff]
        %v836 = vld [vmem:[#allocation13 + $0x50] sm:$0xff]
        %v837 = vld [vmem:[#allocation13 + $0x58] sm:$0xff]
        %v838 = vld [vmem:[#allocation13 + $0x60] sm:$0xff]
        %v839 = vld [vmem:[#allocation13 + $0x68] sm:$0xff]
        %v840 = vld [vmem:[#allocation13 + $0x70] sm:$0xff]
        %v841 = vld [vmem:[#allocation13 + $0x78] sm:$0xff]
        %v842 = vld [vmem:[#allocation13 + $0x80] sm:$0xff]
        %v843 = vld [vmem:[#allocation13 + $0x88] sm:$0xff]
        %v844 = vld [vmem:[#allocation13 + $0x90] sm:$0xff]
        %v845 = vld [vmem:[#allocation13 + $0x98] sm:$0xff]
        %v846 = vld [vmem:[#allocation13 + $0xa0] sm:$0xff]
        %v847 = vld [vmem:[#allocation13 + $0xa8] sm:$0xff]
        %v848 = vld [vmem:[#allocation13 + $0xb0] sm:$0xff]
        %v849 = vld [vmem:[#allocation13 + $0xb8] sm:$0xff]
        %v850 = vld [vmem:[#allocation13 + $0xc0] sm:$0xff]
        %v851 = vld [vmem:[#allocation13 + $0xc8] sm:$0xff]
        %v852 = vld [vmem:[#allocation13 + $0xd0] sm:$0xff]
        %v853 = vld [vmem:[#allocation13 + $0xd8] sm:$0xff]
        %v854 = vld [vmem:[#allocation13 + $0xe0] sm:$0xff]
        %v855 = vld [vmem:[#allocation13 + $0xe8] sm:$0xff]
        %v856 = vld [vmem:[#allocation13 + $0xf0] sm:$0xff]
        %v857 = vld [vmem:[#allocation13 + $0xf8] sm:$0xff]
        %v858 = vld [vmem:[#allocation13 + $0x100] sm:$0xff]
        %v859 = vld [vmem:[#allocation13 + $0x108] sm:$0xff]
        %v860 = vld [vmem:[#allocation13 + $0x110] sm:$0xff]
        %v861 = vld [vmem:[#allocation13 + $0x118] sm:$0xff]
        %v862 = vld [vmem:[#allocation13 + $0x120] sm:$0xff]
        %v863 = vld [vmem:[#allocation13 + $0x128] sm:$0xff]
        %v864 = vld [vmem:[#allocation13 + $0x130] sm:$0xff]
        %v865 = vld [vmem:[#allocation13 + $0x138] sm:$0xff]
        %v866 = vld [vmem:[#allocation13 + $0x140] sm:$0xff]
        %v867 = vld [vmem:[#allocation13 + $0x148] sm:$0xff]
        %v868 = vld [vmem:[#allocation13 + $0x150] sm:$0xff]
        %v869 = vld [vmem:[#allocation13 + $0x158] sm:$0xff]
        %v870 = vld [vmem:[#allocation13 + $0x160] sm:$0xff]
        %v871 = vld [vmem:[#allocation13 + $0x168] sm:$0xff]
        %v872 = vld [vmem:[#allocation13 + $0x170] sm:$0xff]
        %v873 = vld [vmem:[#allocation13 + $0x178] sm:$0xff]
        %v874 = vld [vmem:[#allocation13 + $0x180] sm:$0xff]
        %v875 = vld [vmem:[#allocation13 + $0x188] sm:$0xff]
        %v876 = vld [vmem:[#allocation13 + $0x190] sm:$0xff]
        %v877 = vld [vmem:[#allocation13 + $0x198] sm:$0xff]
        %v878 = vld [vmem:[#allocation13 + $0x1a0] sm:$0xff]
        %v879 = vld [vmem:[#allocation13 + $0x1a8] sm:$0xff]
        %v880 = vld [vmem:[#allocation13 + $0x1b0] sm:$0xff]
        %v881 = vld [vmem:[#allocation13 + $0x1b8] sm:$0xff]
        %v882 = vld [vmem:[#allocation13 + $0x1c0] sm:$0xff]
        %v883 = vld [vmem:[#allocation13 + $0x1c8] sm:$0xff]
        %v884 = vld [vmem:[#allocation13 + $0x1d0] sm:$0xff]
        %v885 = vld [vmem:[#allocation13 + $0x1d8] sm:$0xff]
        %v886 = vld [vmem:[#allocation13 + $0x1e0] sm:$0xff]
        %v887 = vld [vmem:[#allocation13 + $0x1e8] sm:$0xff]
        %v888 = vld [vmem:[#allocation13 + $0x1f0] sm:$0xff]
        %v889 = vld [vmem:[#allocation13 + $0x1f8] sm:$0xff]
        %890 = vmatpush.msra.mxu0 %v856
        %891 = vmatpush.msra.mxu0 %v854
        %892 = vmatpush.msra.mxu0 %v852
        %893 = vmatpush.msra.mxu0 %v850
        %894 = vmatpush.msra.mxu0 %v848
        %895 = vmatpush.msra.mxu0 %v846
        %896 = vmatpush.msra.mxu0 %v844
        %897 = vmatpush.msra.mxu0 %v842
        %898 = vmatpush.msra.mxu0 %v840
        %899 = vmatpush.msra.mxu0 %v838
        %900 = vmatpush.msra.mxu0 %v836
        %901 = vmatpush.msra.mxu0 %v834
        %902 = vmatpush.msra.mxu0 %v832
        %903 = vmatpush.msra.mxu0 %v830
        %904 = vmatpush.msra.mxu0 %v828
        %905 = vmatpush.msra.mxu0 %v826
        %906 = vmatmul.f32.gmra.mxu0 %v760
        %v907 = vpop.f32.mrf.mxu0
        %v908 = vadd.f32 0.0, %v907
        %909 = vdwg.mxu0
        %910 = vmatpush.msra.mxu0 %v888
        %911 = vmatpush.msra.mxu0 %v886
        %912 = vmatpush.msra.mxu0 %v884
        %913 = vmatpush.msra.mxu0 %v882
        %914 = vmatpush.msra.mxu0 %v880
        %915 = vmatpush.msra.mxu0 %v878
        %916 = vmatpush.msra.mxu0 %v876
        %917 = vmatpush.msra.mxu0 %v874
        %918 = vmatpush.msra.mxu0 %v872
        %919 = vmatpush.msra.mxu0 %v870
        %920 = vmatpush.msra.mxu0 %v868
        %921 = vmatpush.msra.mxu0 %v866
        %922 = vmatpush.msra.mxu0 %v864
        %923 = vmatpush.msra.mxu0 %v862
        %924 = vmatpush.msra.mxu0 %v860
        %925 = vmatpush.msra.mxu0 %v858
        %926 = vmatmul.f32.gmra.mxu0 %v761
        %v927 = vpop.f32.mrf.mxu0
        %v928 = vadd.f32 %v908, %v927
        %929 = vdwg.mxu0
        %930 = vmatpush.msra.mxu0 %v857
        %931 = vmatpush.msra.mxu0 %v855
        %932 = vmatpush.msra.mxu0 %v853
        %933 = vmatpush.msra.mxu0 %v851
        %934 = vmatpush.msra.mxu0 %v849
        %935 = vmatpush.msra.mxu0 %v847
        %936 = vmatpush.msra.mxu0 %v845
        %937 = vmatpush.msra.mxu0 %v843
        %938 = vmatpush.msra.mxu0 %v841
        %939 = vmatpush.msra.mxu0 %v839
        %940 = vmatpush.msra.mxu0 %v837
        %941 = vmatpush.msra.mxu0 %v835
        %942 = vmatpush.msra.mxu0 %v833
        %943 = vmatpush.msra.mxu0 %v831
        %944 = vmatpush.msra.mxu0 %v829
        %945 = vmatpush.msra.mxu0 %v827
        %946 = vmatmul.f32.gmra.mxu0 %v760
        %v947 = vpop.f32.mrf.mxu0
        %v948 = vadd.f32 0.0, %v947
        %949 = vdwg.mxu0
        %950 = vmatpush.msra.mxu0 %v889
        %951 = vmatpush.msra.mxu0 %v887
        %952 = vmatpush.msra.mxu0 %v885
        %953 = vmatpush.msra.mxu0 %v883
        %954 = vmatpush.msra.mxu0 %v881
        %955 = vmatpush.msra.mxu0 %v879
        %956 = vmatpush.msra.mxu0 %v877
        %957 = vmatpush.msra.mxu0 %v875
        %958 = vmatpush.msra.mxu0 %v873
        %959 = vmatpush.msra.mxu0 %v871
        %960 = vmatpush.msra.mxu0 %v869
        %961 = vmatpush.msra.mxu0 %v867
        %962 = vmatpush.msra.mxu0 %v865
        %963 = vmatpush.msra.mxu0 %v863
        %964 = vmatpush.msra.mxu0 %v861
        %965 = vmatpush.msra.mxu0 %v859
        %966 = vmatmul.f32.gmra.mxu0 %v761
        %v967 = vpop.f32.mrf.mxu0
        %v968 = vadd.f32 %v948, %v967
        %969 = vdwg.mxu0
        %970 = vmatpush.msra.mxu0 %v792
        %971 = vmatpush.msra.mxu0 %v790
        %972 = vmatpush.msra.mxu0 %v788
        %973 = vmatpush.msra.mxu0 %v786
        %974 = vmatpush.msra.mxu0 %v784
        %975 = vmatpush.msra.mxu0 %v782
        %976 = vmatpush.msra.mxu0 %v780
        %977 = vmatpush.msra.mxu0 %v778
        %978 = vmatpush.msra.mxu0 %v776
        %979 = vmatpush.msra.mxu0 %v774
        %980 = vmatpush.msra.mxu0 %v772
        %981 = vmatpush.msra.mxu0 %v770
        %982 = vmatpush.msra.mxu0 %v768
        %983 = vmatpush.msra.mxu0 %v766
        %984 = vmatpush.msra.mxu0 %v764
        %985 = vmatpush.msra.mxu0 %v762
        %986 = vmatmul.f32.gmra.mxu0 %v744
        %v987 = vpop.f32.mrf.mxu0
        %v988 = vadd.f32 %v928, %v987
        %989 = vdwg.mxu0
        %990 = vmatpush.msra.mxu0 %v824
        %991 = vmatpush.msra.mxu0 %v822
        %992 = vmatpush.msra.mxu0 %v820
        %993 = vmatpush.msra.mxu0 %v818
        %994 = vmatpush.msra.mxu0 %v816
        %995 = vmatpush.msra.mxu0 %v814
        %996 = vmatpush.msra.mxu0 %v812
        %997 = vmatpush.msra.mxu0 %v810
        %998 = vmatpush.msra.mxu0 %v808
        %999 = vmatpush.msra.mxu0 %v806
        %1000 = vmatpush.msra.mxu0 %v804
        %1001 = vmatpush.msra.mxu0 %v802
        %1002 = vmatpush.msra.mxu0 %v800
        %1003 = vmatpush.msra.mxu0 %v798
        %1004 = vmatpush.msra.mxu0 %v796
        %1005 = vmatpush.msra.mxu0 %v794
        %1006 = vmatmul.f32.gmra.mxu0 %v745
        %v1007 = vpop.f32.mrf.mxu0
        %v1008 = vadd.f32 %v988, %v1007
        %1009 = vdwg.mxu0
        %1010 = vmatpush.msra.mxu0 %v793
        %1011 = vmatpush.msra.mxu0 %v791
        %1012 = vmatpush.msra.mxu0 %v789
        %1013 = vmatpush.msra.mxu0 %v787
        %1014 = vmatpush.msra.mxu0 %v785
        %1015 = vmatpush.msra.mxu0 %v783
        %1016 = vmatpush.msra.mxu0 %v781
        %1017 = vmatpush.msra.mxu0 %v779
        %1018 = vmatpush.msra.mxu0 %v777
        %1019 = vmatpush.msra.mxu0 %v775
        %1020 = vmatpush.msra.mxu0 %v773
        %1021 = vmatpush.msra.mxu0 %v771
        %1022 = vmatpush.msra.mxu0 %v769
        %1023 = vmatpush.msra.mxu0 %v767
        %1024 = vmatpush.msra.mxu0 %v765
        %1025 = vmatpush.msra.mxu0 %v763
        %1026 = vmatmul.f32.gmra.mxu0 %v744
        %v1027 = vpop.f32.mrf.mxu0
        %v1028 = vadd.f32 %v968, %v1027
        %1029 = vdwg.mxu0
        %1030 = vmatpush.msra.mxu0 %v825
        %1031 = vmatpush.msra.mxu0 %v823
        %1032 = vmatpush.msra.mxu0 %v821
        %1033 = vmatpush.msra.mxu0 %v819
        %1034 = vmatpush.msra.mxu0 %v817
        %1035 = vmatpush.msra.mxu0 %v815
        %1036 = vmatpush.msra.mxu0 %v813
        %1037 = vmatpush.msra.mxu0 %v811
        %1038 = vmatpush.msra.mxu0 %v809
        %1039 = vmatpush.msra.mxu0 %v807
        %1040 = vmatpush.msra.mxu0 %v805
        %1041 = vmatpush.msra.mxu0 %v803
        %1042 = vmatpush.msra.mxu0 %v801
        %1043 = vmatpush.msra.mxu0 %v799
        %1044 = vmatpush.msra.mxu0 %v797
        %1045 = vmatpush.msra.mxu0 %v795
        %1046 = vmatmul.f32.gmra.mxu0 %v745
        %v1047 = vpop.f32.mrf.mxu0
        %v1048 = vadd.f32 %v1028, %v1047
        %1049 = vdwg.mxu0
        %v1052 = vrot.slane %v1048, 4
        %vm1053 = vcmask 1043456
        %v1054 = vsel %vm1053, %v1008, %v1052
        %1056 = vst [vmem:[%s425] sm:$0xff] %v1054
        %s1057 = sand.u32 %s213, 1
        %s1058 = scalar_lea.sflag [#allocation4], %s1057
        %s1059 = sand.u32 %s213, 1
        %s1060 = smul.addr %s1059, 8
        %s1061 = scalar_lea.vmem [#allocation14], %s1060
        // Predicated region
        $region77: #{tpu_custom_call.1} parent=47 // pred_check
          %p1062 = pneg %p223
        $region78: #{tpu_custom_call.1} parent=47 // pred_check_branch
          %1064 = sbr.rel (%p1062) target = $region80
        $region79: #{tpu_custom_call.1} parent=47 // pred_region
          %1066 = vsyncadd %s1058, 0
          %s1067 = smul.addr %s31, 2
          %s1068 = smul.addr %s32, 2
          %s1069 = sadd.s32 %s1067, %s1068
          %s1070 = smul.addr %s1069, 4
          %s1071 = scalar_lea.hbm %s7, %s1070
          %s1073 = sshll.u32 %s1061, 4
          %s1074 = int_to_ptr.vmem [resolvable:$true] %s1073
          %s1075 = sshll.u32 %s1071, 4
          %s1076 = int_to_ptr.hbm [resolvable:$true] %s1075
          %1078 = dma.vmem_to_hbm [thread:$0]  %s1074, 128, %s1076, %s1058
        $region80: #{tpu_custom_call.1} parent=47 // pred_fallthru
          _
      $region48: #{tpu_custom_call.1} parent=5 // pred_fallthru
        _
      %p1079 = scmp.le.s32.totalorder 2, %s22
      // Predicated region
      $region81: #{tpu_custom_call.1} parent=5 // pred_check
        %p1080 = pneg %p1079
      $region82: #{tpu_custom_call.1} parent=5 // pred_check_branch
        %1082 = sbr.rel (%p1080) target = $region84
      $region83: #{tpu_custom_call.1} parent=5 // pred_region
        %s1083 = ssub.s32 %s22, 2
        // Predicated region
        $region85: #{tpu_custom_call.1} parent=83 // pred_check
          %p1084 = pneg %p229
        $region86: #{tpu_custom_call.1} parent=83 // pred_check_branch
          %1086 = sbr.rel (%p1084) target = $region88
        $region87: #{tpu_custom_call.1} parent=83 // pred_region
          %s1087 = sand.u32 %s214, 1
          %s1088 = scalar_lea.sflag [#allocation4], %s1087
          %s1089 = sand.u32 %s214, 1
          %s1090 = smul.addr %s1089, 8
          %s1091 = scalar_lea.vmem [#allocation14], %s1090
          %1093 = dma.done %s1088, 128
        $region88: #{tpu_custom_call.1} parent=83 // pred_fallthru
          _
      $region84: #{tpu_custom_call.1} parent=5 // pred_fallthru
        _
    $region6: #{tpu_custom_call.1} parent=1 // loop_footer
      %s26 = sadd.s32 1, %s22
    $region7: #{tpu_custom_call.1} parent=1 // loop_footer_branch
      %21 = sbr.rel target = $region3
    $region8: #{tpu_custom_call.1} parent=1 // loop_exit
      _
    %1094 = vsyncpa [#allocation3], 1
    %s1095 = scalar_lea.sflag [#allocation3], 1
    %1096 = vsyncpa %s1095, 1
    %1097 = vsyncpa [#allocation6], 1
    %1098 = vsyncpa [#allocation9], 1
    %1099 = vsyncpa [#allocation12], 1
    %1100 = vsyncpa [#allocation4], 1
    %s1101 = scalar_lea.sflag [#allocation4], 1
    %1102 = vsyncpa %s1101, 1

</llo_original>
